<compile_context>
chip_gen: v7x
topology: tpu7x:2x2x1
jax: 0.10.0
libtpu: 0.0.40
codegen_flags: <defaults>
</compile_context>

<pallas_src>
import functools

import jax
import jax.numpy as jnp
from jax.experimental import pallas as pl
from jax.experimental.pallas import tpu as pltpu

# ----------------------------- model config ---------------------------------
LAYER_NUMS = (1, 1)
LAYER_STRIDES = (1, 2)
NUM_FILTERS = (32, 64)
UPSAMPLE_STRIDES = (1, 2)
NUM_UPSAMPLE_FILTERS = (32, 32)
INPUT_CHANNELS = 256          # forced to 256 inside the module's __init__
BN_EPS = 1e-3

# The fused block kernel assumes "first conv + 1 extra conv" per block.
assert all(n == 1 for n in LAYER_NUMS)
assert len(UPSAMPLE_STRIDES) == len(LAYER_NUMS)   # no trailing extra deblock


# ------------------------------- kernels ------------------------------------
def _conv3x3_s1(x_flat, H, W, w9_ref, accp_ref):
    """3x3 / stride-1 / pad-1 conv via per-tap MXU matmuls with output-shift
    accumulation into a (H+2, W+2, Cout) padded f32 VMEM accumulator.

    x_flat: (H*W, Cin) bf16 value (never sliced -> no Cin-sized relayouts).
    Zero padding is implicit: contributions landing in the accumulator border
    are simply discarded.  Returns the (H, W, Cout) f32 pre-bias result.
    """
    Cout = accp_ref.shape[-1]
    accp_ref[...] = jnp.zeros_like(accp_ref)
    for ky in range(3):
        for kx in range(3):
            dy, dx = ky - 1, kx - 1
            y = jnp.dot(x_flat, w9_ref[ky * 3 + kx],
                        preferred_element_type=jnp.float32).reshape(H, W, Cout)
            # out[i, j] += y[i + dy, j + dx]  <=>  acc_pad[r - dy + 1, c - dx + 1] += y[r, c]
            accp_ref[1 - dy:1 - dy + H, 1 - dx:1 - dx + W, :] += y
    return accp_ref[1:H + 1, 1:W + 1, :]


def _block_kernel(x_ref, w1_ref, b1_ref, w2_ref, b2_ref, wd_ref, bd_ref,
                  o_blk_ref, o_up_ref, *scratch,
                  H, W, Ho, Wo, stride, s_up):
    """Fused block: conv1(3x3, stride) -> ReLU -> conv2(3x3) -> ReLU -> deblock.

    x_ref:   (H, W, Cin)            bf16
    w1_ref:  (9, Cin, Cmid)         bf16 (BN scale folded)   b1_ref: (1, Cmid) f32
    w2_ref:  (9, Cmid, Cmid)        bf16 (BN scale folded)   b2_ref: (1, Cmid) f32
    wd_ref:  (s_up, Cmid, s_up*Cup) bf16 (BN scale folded)   bd_ref: (1, s_up*Cup) f32
    o_blk_ref: (Ho, Wo, Cmid)            bf16  (block feature map)
    o_up_ref:  (Ho, s_up, Wo, s_up*Cup)  bf16  (pixel-shuffle memory order)
    scratch[0]: (Ho+2, Wo+2, Cmid) f32 padded accumulator
    scratch[1]: (H+2, W+2, Cin)    f32 padded input (stride>1 path only)
    """
    accp_ref = scratch[0]
    Cin = x_ref.shape[-1]
    Cmid = w1_ref.shape[-1]
    E = wd_ref.shape[-1]

    # ---- conv1: 3x3, stride `stride`, pad 1 (pad fused, BN scale pre-folded) ----
    if stride == 1:
        x_flat = x_ref[...].reshape(H * W, Cin)           # free leading-dim collapse
        acc1 = _conv3x3_s1(x_flat, H, W, w1_ref, accp_ref).reshape(Ho * Wo, Cmid)
    else:
        # Small-channel strided conv: pad in VMEM and use strided patch reads.
        xpad_ref = scratch[1]
        xpad_ref[...] = jnp.zeros_like(xpad_ref)
        xpad_ref[1:H + 1, 1:W + 1, :] = x_ref[...].astype(jnp.float32)
        acc1 = jnp.zeros((Ho * Wo, Cmid), jnp.float32)
        for ky in range(3):
            for kx in range(3):
                patch = xpad_ref[pl.ds(ky, Ho, stride), pl.ds(kx, Wo, stride), :]
                acc1 = acc1 + jnp.dot(
                    patch.reshape(Ho * Wo, Cin).astype(jnp.bfloat16),
                    w1_ref[ky * 3 + kx],
                    preferred_element_type=jnp.float32)
    h1 = jnp.maximum(acc1 + b1_ref[...], 0.0).astype(jnp.bfloat16)   # (Ho*Wo, Cmid)

    # ---- conv2: 3x3, stride 1, pad 1 ----
    acc2 = _conv3x3_s1(h1, Ho, Wo, w2_ref, accp_ref)                  # (Ho, Wo, Cmid) f32
    h2 = jnp.maximum(acc2.reshape(Ho * Wo, Cmid) + b2_ref[...], 0.0)
    o_blk_ref[...] = h2.reshape(Ho, Wo, Cmid).astype(o_blk_ref.dtype)

    # ---- deblock: ConvTranspose2d(k=s_up, stride=s_up) + BN + ReLU ----------
    # Output sub-row `a` of every 2x2 (or 1x1) patch is one matmul; stored in
    # (Ho, a, Wo, (b, co)) order so the wrapper's pixel shuffle is a plain
    # contiguous reshape (no transpose).
    h2b = h2.astype(jnp.bfloat16)
    for a in range(s_up):
        yd = jnp.dot(h2b, wd_ref[a], preferred_element_type=jnp.float32)
        yd = jnp.maximum(yd + bd_ref[...], 0.0)
        o_up_ref[:, a:a + 1, :, :] = yd.reshape(Ho, 1, Wo, E).astype(o_up_ref.dtype)


# ------------------------------ wrappers -------------------------------------
def _run_block(x, w1, b1, w2, b2, wd, bd, *, stride, s_up, cmid, cup):
    """x: (B, H, W, Cin) bf16 NHWC.  Returns (block_feature_map, upsampled)."""
    B, H, W, Cin = x.shape
    Ho = (H - 1) // stride + 1     # ZeroPad2d(1) + Conv(k=3, stride)
    Wo = (W - 1) // stride + 1
    E = s_up * cup

    kernel = functools.partial(_block_kernel, H=H, W=W, Ho=Ho, Wo=Wo,
                               stride=stride, s_up=s_up)
    scratch = [pltpu.VMEM((Ho + 2, Wo + 2, cmid), jnp.float32)]
    if stride != 1:
        scratch.append(pltpu.VMEM((H + 2, W + 2, Cin), jnp.float32))

    o_blk, o_up = pl.pallas_call(
        kernel,
        out_shape=(jax.ShapeDtypeStruct((B, Ho, Wo, cmid), jnp.bfloat16),
                   jax.ShapeDtypeStruct((B, Ho, s_up, Wo, E), jnp.bfloat16)),
        grid=(B,),
        in_specs=[
            pl.BlockSpec((pl.Squeezed(), H, W, Cin), lambda b: (b, 0, 0, 0)),
            pl.BlockSpec((9, Cin, cmid), lambda b: (0, 0, 0)),
            pl.BlockSpec((1, cmid), lambda b: (0, 0)),
            pl.BlockSpec((9, cmid, cmid), lambda b: (0, 0, 0)),
            pl.BlockSpec((1, cmid), lambda b: (0, 0)),
            pl.BlockSpec((s_up, cmid, E), lambda b: (0, 0, 0)),
            pl.BlockSpec((1, E), lambda b: (0, 0)),
        ],
        out_specs=(
            pl.BlockSpec((pl.Squeezed(), Ho, Wo, cmid), lambda b: (b, 0, 0, 0)),
            pl.BlockSpec((pl.Squeezed(), Ho, s_up, Wo, E),
                         lambda b: (b, 0, 0, 0, 0)),
        ),
        scratch_shapes=scratch,
        compiler_params=pltpu.CompilerParams(
            dimension_semantics=("parallel",)),   # batch items independent (v7x 2-TC)
    )(x, w1, b1, w2, b2, wd, bd)

    # Pixel shuffle is a pure contiguous reshape thanks to the in-kernel layout.
    up = o_up.reshape(B, Ho * s_up, Wo * s_up, cup)
    return o_blk, up


# --------------------------- parameter creation ------------------------------
def _fold_bn(gamma, beta, mean, var, eps=BN_EPS):
    scale = gamma / jnp.sqrt(var + eps)
    bias = beta - mean * scale
    return scale.reshape(1, -1), bias.reshape(1, -1)


def _rand_bn(key, c):
    k1, k2, k3, k4 = jax.random.split(key, 4)
    gamma = jax.random.uniform(k1, (c,), jnp.float32, 0.8, 1.2)
    beta = jax.random.normal(k2, (c,), jnp.float32) * 0.1
    mean = jax.random.normal(k3, (c,), jnp.float32) * 0.1
    var = jax.random.uniform(k4, (c,), jnp.float32, 0.5, 1.5)
    return _fold_bn(gamma, beta, mean, var)


def init_params(key):
    """BN scale is folded into the (bf16) weights; biases stay f32.

    Weight layouts (for loading a torch checkpoint one would transpose):
      conv  w: (9, Cin, Cout),        tap = ky*3 + kx,  w[tap, ci, co] = W_t[co, ci, ky, kx]
      deconv w: (s, Cin, s*Cout),     w[a, ci, b*Cout + co] = W_t[ci, co, a, b]
    """
    blocks = []
    c_in_list = [INPUT_CHANNELS, *NUM_FILTERS[:-1]]
    for idx in range(len(LAYER_NUMS)):
        cin, cmid = c_in_list[idx], NUM_FILTERS[idx]
        cup, s_up = NUM_UPSAMPLE_FILTERS[idx], UPSAMPLE_STRIDES[idx]

        key, k1, kb1 = jax.random.split(key, 3)
        w1 = jax.random.normal(k1, (9, cin, cmid), jnp.float32) * 0.05
        s1, b1 = _rand_bn(kb1, cmid)
        w1 = (w1 * s1.reshape(1, 1, cmid)).astype(jnp.bfloat16)

        key, k2, kb2 = jax.random.split(key, 3)
        w2 = jax.random.normal(k2, (9, cmid, cmid), jnp.float32) * 0.05
        s2, b2 = _rand_bn(kb2, cmid)
        w2 = (w2 * s2.reshape(1, 1, cmid)).astype(jnp.bfloat16)

        key, kd, kbd = jax.random.split(key, 3)
        wd = jax.random.normal(kd, (s_up, cmid, s_up * cup), jnp.float32) * 0.05
        sd, bd = _rand_bn(kbd, cup)
        wd = (wd * jnp.tile(sd, (1, s_up)).reshape(1, 1, s_up * cup)).astype(jnp.bfloat16)
        bd = jnp.tile(bd, (1, s_up))

        blocks.append((w1, b1, w2, b2, wd, bd))
    return {"blocks": blocks}


# ------------------------------- forward -------------------------------------
def bev_backbone_forward(spatial_features_nchw, params):
    """Mirrors BaseBEVBackbone_mf.forward.  data_dict tensors are NCHW f32."""
    data_dict = {"spatial_features": spatial_features_nchw}
    x = jnp.transpose(spatial_features_nchw, (0, 2, 3, 1)).astype(jnp.bfloat16)
    h_in = spatial_features_nchw.shape[2]

    ups = []
    for i, blk in enumerate(params["blocks"]):
        x, up = _run_block(x, *blk,
                           stride=LAYER_STRIDES[i], s_up=UPSAMPLE_STRIDES[i],
                           cmid=NUM_FILTERS[i], cup=NUM_UPSAMPLE_FILTERS[i])
        stride_key = int(h_in // x.shape[1])
        data_dict["spatial_features_%dx" % stride_key] = (
            jnp.transpose(x, (0, 3, 1, 2)).astype(jnp.float32))
        ups.append(up)

    if len(ups) > 1:
        out = jnp.concatenate(ups, axis=-1)   # channel concat (last axis NHWC)
    elif len(ups) == 1:
        out = ups[0]
    # len(UPSAMPLE_STRIDES) == num_levels -> no extra final deblock in this cfg.
    data_dict["spatial_features_2d"] = (
        jnp.transpose(out, (0, 3, 1, 2)).astype(jnp.float32))
    return data_dict


# --------------------------------- main ---------------------------------------
if __name__ == "__main__":
    key = jax.random.PRNGKey(0)
    k_params, k_x = jax.random.split(key)
    params = init_params(k_params)

    B, H, W = 2, 16, 16
    spatial_features = jax.random.normal(
        k_x, (B, INPUT_CHANNELS, H, W), jnp.float32)

    out = bev_backbone_forward(spatial_features, params)
    y = jax.block_until_ready(out["spatial_features_2d"])

    assert y.shape == (B, sum(NUM_UPSAMPLE_FILTERS), H, W), y.shape
    assert out["spatial_features_1x"].shape == (B, NUM_FILTERS[0], H, W)
    assert out["spatial_features_2x"].shape == (B, NUM_FILTERS[1], H // 2, W // 2)
    assert bool(jnp.all(jnp.isfinite(y)))
    print("KERNEL_OK")
</pallas_src>

<mosaic_0001>
module attributes {stable_mosaic.version = 11 : i64} {
  func.func @_block_kernel(%arg0: i32, %arg1: memref<1x16x16x256xbf16, #tpu.memory_space<vmem>>, %arg2: memref<9x256x32xbf16, #tpu.memory_space<vmem>>, %arg3: memref<1x32xf32, #tpu.memory_space<vmem>>, %arg4: memref<9x32x32xbf16, #tpu.memory_space<vmem>>, %arg5: memref<1x32xf32, #tpu.memory_space<vmem>>, %arg6: memref<1x32x32xbf16, #tpu.memory_space<vmem>>, %arg7: memref<1x32xf32, #tpu.memory_space<vmem>>, %arg8: memref<1x16x16x32xbf16, #tpu.memory_space<vmem>>, %arg9: memref<1x16x1x16x32xbf16, #tpu.memory_space<vmem>>, %arg10: memref<18x18x32xf32, #tpu.memory_space<vmem>>) attributes {dimension_semantics = [#tpu.dimension_semantics<parallel>], iteration_bounds = array<i64: 2>, scalar_prefetch = 0 : i64, scratch_operands = 1 : i64, tpu.core_type = #tpu.core_type<tc>, window_params = [{transform_indices = @transform_0, window_bounds = array<i64: 1, 16, 16, 256>}, {pipeline_mode = #tpu.pipeline_mode<synchronous>, transform_indices = @transform_1, window_bounds = array<i64: 9, 256, 32>}, {pipeline_mode = #tpu.pipeline_mode<synchronous>, transform_indices = @transform_2, window_bounds = array<i64: 1, 32>}, {pipeline_mode = #tpu.pipeline_mode<synchronous>, transform_indices = @transform_3, window_bounds = array<i64: 9, 32, 32>}, {pipeline_mode = #tpu.pipeline_mode<synchronous>, transform_indices = @transform_4, window_bounds = array<i64: 1, 32>}, {pipeline_mode = #tpu.pipeline_mode<synchronous>, transform_indices = @transform_5, window_bounds = array<i64: 1, 32, 32>}, {pipeline_mode = #tpu.pipeline_mode<synchronous>, transform_indices = @transform_6, window_bounds = array<i64: 1, 32>}, {transform_indices = @transform_7, window_bounds = array<i64: 1, 16, 16, 32>}, {transform_indices = @transform_8, window_bounds = array<i64: 1, 16, 1, 16, 32>}]} {
    %c0 = arith.constant 0 : index
    %c0_0 = arith.constant 0 : index
    %c0_1 = arith.constant 0 : index
    %c0_2 = arith.constant 0 : index
    %0 = vector.load %arg1[%c0, %c0_0, %c0_1, %c0_2] : memref<1x16x16x256xbf16, #tpu.memory_space<vmem>>, vector<1x16x16x256xbf16>
    %1 = vector.shape_cast %0 : vector<1x16x16x256xbf16> to vector<16x16x256xbf16>
    %2 = vector.shape_cast %1 : vector<16x16x256xbf16> to vector<256x256xbf16>
    %cst = arith.constant 0.000000e+00 : f32
    %3 = vector.broadcast %cst : f32 to vector<18x18x32xf32>
    %c0_3 = arith.constant 0 : index
    %c0_4 = arith.constant 0 : index
    %c0_5 = arith.constant 0 : index
    %4 = vector.load %arg10[%c0_3, %c0_4, %c0_5] : memref<18x18x32xf32, #tpu.memory_space<vmem>>, vector<18x18x32xf32>
    tpu.vector_store %arg10[%c0_3, %c0_4, %c0_5], %3 {strides = array<i32>} : memref<18x18x32xf32, #tpu.memory_space<vmem>>, vector<18x18x32xf32>,
    %c0_6 = arith.constant 0 : index
    %c0_7 = arith.constant 0 : index
    %c0_8 = arith.constant 0 : index
    %5 = vector.load %arg2[%c0_6, %c0_7, %c0_8] : memref<9x256x32xbf16, #tpu.memory_space<vmem>>, vector<1x256x32xbf16>
    %6 = vector.shape_cast %5 : vector<1x256x32xbf16> to vector<256x32xbf16>
    %cst_9 = arith.constant dense<0.000000e+00> : vector<256x32xf32>
    %7 = tpu.matmul %2, %6, %cst_9 {dimension_numbers = #tpu.dot_dimension_numbers<[1], [0], [0], [1], [0, 0, 1, 1], [], []>} : vector<256x256xbf16>, vector<256x32xbf16>, vector<256x32xf32> -> vector<256x32xf32>
    %8 = vector.shape_cast %7 : vector<256x32xf32> to vector<16x16x32xf32>
    %c2 = arith.constant 2 : index
    %c2_10 = arith.constant 2 : index
    %c0_11 = arith.constant 0 : index
    %9 = vector.load %arg10[%c2, %c2_10, %c0_11] : memref<18x18x32xf32, #tpu.memory_space<vmem>>, vector<16x16x32xf32>
    %10 = arith.addf %9, %8 : vector<16x16x32xf32>
    %c2_12 = arith.constant 2 : index
    %c2_13 = arith.constant 2 : index
    %c0_14 = arith.constant 0 : index
    %11 = vector.load %arg10[%c2_12, %c2_13, %c0_14] : memref<18x18x32xf32, #tpu.memory_space<vmem>>, vector<16x16x32xf32>
    tpu.vector_store %arg10[%c2_12, %c2_13, %c0_14], %10 {strides = array<i32>} : memref<18x18x32xf32, #tpu.memory_space<vmem>>, vector<16x16x32xf32>,
    %c1 = arith.constant 1 : index
    %c0_15 = arith.constant 0 : index
    %c0_16 = arith.constant 0 : index
    %12 = vector.load %arg2[%c1, %c0_15, %c0_16] : memref<9x256x32xbf16, #tpu.memory_space<vmem>>, vector<1x256x32xbf16>
    %13 = vector.shape_cast %12 : vector<1x256x32xbf16> to vector<256x32xbf16>
    %cst_17 = arith.constant dense<0.000000e+00> : vector<256x32xf32>
    %14 = tpu.matmul %2, %13, %cst_17 {dimension_numbers = #tpu.dot_dimension_numbers<[1], [0], [0], [1], [0, 0, 1, 1], [], []>} : vector<256x256xbf16>, vector<256x32xbf16>, vector<256x32xf32> -> vector<256x32xf32>
    %15 = vector.shape_cast %14 : vector<256x32xf32> to vector<16x16x32xf32>
    %c2_18 = arith.constant 2 : index
    %c1_19 = arith.constant 1 : index
    %c0_20 = arith.constant 0 : index
    %16 = vector.load %arg10[%c2_18, %c1_19, %c0_20] : memref<18x18x32xf32, #tpu.memory_space<vmem>>, vector<16x16x32xf32>
    %17 = arith.addf %16, %15 : vector<16x16x32xf32>
    %c2_21 = arith.constant 2 : index
    %c1_22 = arith.constant 1 : index
    %c0_23 = arith.constant 0 : index
    %18 = vector.load %arg10[%c2_21, %c1_22, %c0_23] : memref<18x18x32xf32, #tpu.memory_space<vmem>>, vector<16x16x32xf32>
    tpu.vector_store %arg10[%c2_21, %c1_22, %c0_23], %17 {strides = array<i32>} : memref<18x18x32xf32, #tpu.memory_space<vmem>>, vector<16x16x32xf32>,
    %c2_24 = arith.constant 2 : index
    %c0_25 = arith.constant 0 : index
    %c0_26 = arith.constant 0 : index
    %19 = vector.load %arg2[%c2_24, %c0_25, %c0_26] : memref<9x256x32xbf16, #tpu.memory_space<vmem>>, vector<1x256x32xbf16>
    %20 = vector.shape_cast %19 : vector<1x256x32xbf16> to vector<256x32xbf16>
    %cst_27 = arith.constant dense<0.000000e+00> : vector<256x32xf32>
    %21 = tpu.matmul %2, %20, %cst_27 {dimension_numbers = #tpu.dot_dimension_numbers<[1], [0], [0], [1], [0, 0, 1, 1], [], []>} : vector<256x256xbf16>, vector<256x32xbf16>, vector<256x32xf32> -> vector<256x32xf32>
    %22 = vector.shape_cast %21 : vector<256x32xf32> to vector<16x16x32xf32>
    %c2_28 = arith.constant 2 : index
    %c0_29 = arith.constant 0 : index
    %c0_30 = arith.constant 0 : index
    %23 = vector.load %arg10[%c2_28, %c0_29, %c0_30] : memref<18x18x32xf32, #tpu.memory_space<vmem>>, vector<16x16x32xf32>
    %24 = arith.addf %23, %22 : vector<16x16x32xf32>
    %c2_31 = arith.constant 2 : index
    %c0_32 = arith.constant 0 : index
    %c0_33 = arith.constant 0 : index
    %25 = vector.load %arg10[%c2_31, %c0_32, %c0_33] : memref<18x18x32xf32, #tpu.memory_space<vmem>>, vector<16x16x32xf32>
    tpu.vector_store %arg10[%c2_31, %c0_32, %c0_33], %24 {strides = array<i32>} : memref<18x18x32xf32, #tpu.memory_space<vmem>>, vector<16x16x32xf32>,
    %c3 = arith.constant 3 : index
    %c0_34 = arith.constant 0 : index
    %c0_35 = arith.constant 0 : index
    %26 = vector.load %arg2[%c3, %c0_34, %c0_35] : memref<9x256x32xbf16, #tpu.memory_space<vmem>>, vector<1x256x32xbf16>
    %27 = vector.shape_cast %26 : vector<1x256x32xbf16> to vector<256x32xbf16>
    %cst_36 = arith.constant dense<0.000000e+00> : vector<256x32xf32>
    %28 = tpu.matmul %2, %27, %cst_36 {dimension_numbers = #tpu.dot_dimension_numbers<[1], [0], [0], [1], [0, 0, 1, 1], [], []>} : vector<256x256xbf16>, vector<256x32xbf16>, vector<256x32xf32> -> vector<256x32xf32>
    %29 = vector.shape_cast %28 : vector<256x32xf32> to vector<16x16x32xf32>
    %c1_37 = arith.constant 1 : index
    %c2_38 = arith.constant 2 : index
    %c0_39 = arith.constant 0 : index
    %30 = vector.load %arg10[%c1_37, %c2_38, %c0_39] : memref<18x18x32xf32, #tpu.memory_space<vmem>>, vector<16x16x32xf32>
    %31 = arith.addf %30, %29 : vector<16x16x32xf32>
    %c1_40 = arith.constant 1 : index
    %c2_41 = arith.constant 2 : index
    %c0_42 = arith.constant 0 : index
    %32 = vector.load %arg10[%c1_40, %c2_41, %c0_42] : memref<18x18x32xf32, #tpu.memory_space<vmem>>, vector<16x16x32xf32>
    tpu.vector_store %arg10[%c1_40, %c2_41, %c0_42], %31 {strides = array<i32>} : memref<18x18x32xf32, #tpu.memory_space<vmem>>, vector<16x16x32xf32>,
    %c4 = arith.constant 4 : index
    %c0_43 = arith.constant 0 : index
    %c0_44 = arith.constant 0 : index
    %33 = vector.load %arg2[%c4, %c0_43, %c0_44] : memref<9x256x32xbf16, #tpu.memory_space<vmem>>, vector<1x256x32xbf16>
    %34 = vector.shape_cast %33 : vector<1x256x32xbf16> to vector<256x32xbf16>
    %cst_45 = arith.constant dense<0.000000e+00> : vector<256x32xf32>
    %35 = tpu.matmul %2, %34, %cst_45 {dimension_numbers = #tpu.dot_dimension_numbers<[1], [0], [0], [1], [0, 0, 1, 1], [], []>} : vector<256x256xbf16>, vector<256x32xbf16>, vector<256x32xf32> -> vector<256x32xf32>
    %36 = vector.shape_cast %35 : vector<256x32xf32> to vector<16x16x32xf32>
    %c1_46 = arith.constant 1 : index
    %c1_47 = arith.constant 1 : index
    %c0_48 = arith.constant 0 : index
    %37 = vector.load %arg10[%c1_46, %c1_47, %c0_48] : memref<18x18x32xf32, #tpu.memory_space<vmem>>, vector<16x16x32xf32>
    %38 = arith.addf %37, %36 : vector<16x16x32xf32>
    %c1_49 = arith.constant 1 : index
    %c1_50 = arith.constant 1 : index
    %c0_51 = arith.constant 0 : index
    %39 = vector.load %arg10[%c1_49, %c1_50, %c0_51] : memref<18x18x32xf32, #tpu.memory_space<vmem>>, vector<16x16x32xf32>
    tpu.vector_store %arg10[%c1_49, %c1_50, %c0_51], %38 {strides = array<i32>} : memref<18x18x32xf32, #tpu.memory_space<vmem>>, vector<16x16x32xf32>,
    %c5 = arith.constant 5 : index
    %c0_52 = arith.constant 0 : index
    %c0_53 = arith.constant 0 : index
    %40 = vector.load %arg2[%c5, %c0_52, %c0_53] : memref<9x256x32xbf16, #tpu.memory_space<vmem>>, vector<1x256x32xbf16>
    %41 = vector.shape_cast %40 : vector<1x256x32xbf16> to vector<256x32xbf16>
    %cst_54 = arith.constant dense<0.000000e+00> : vector<256x32xf32>
    %42 = tpu.matmul %2, %41, %cst_54 {dimension_numbers = #tpu.dot_dimension_numbers<[1], [0], [0], [1], [0, 0, 1, 1], [], []>} : vector<256x256xbf16>, vector<256x32xbf16>, vector<256x32xf32> -> vector<256x32xf32>
    %43 = vector.shape_cast %42 : vector<256x32xf32> to vector<16x16x32xf32>
    %c1_55 = arith.constant 1 : index
    %c0_56 = arith.constant 0 : index
    %c0_57 = arith.constant 0 : index
    %44 = vector.load %arg10[%c1_55, %c0_56, %c0_57] : memref<18x18x32xf32, #tpu.memory_space<vmem>>, vector<16x16x32xf32>
    %45 = arith.addf %44, %43 : vector<16x16x32xf32>
    %c1_58 = arith.constant 1 : index
    %c0_59 = arith.constant 0 : index
    %c0_60 = arith.constant 0 : index
    %46 = vector.load %arg10[%c1_58, %c0_59, %c0_60] : memref<18x18x32xf32, #tpu.memory_space<vmem>>, vector<16x16x32xf32>
    tpu.vector_store %arg10[%c1_58, %c0_59, %c0_60], %45 {strides = array<i32>} : memref<18x18x32xf32, #tpu.memory_space<vmem>>, vector<16x16x32xf32>,
    %c6 = arith.constant 6 : index
    %c0_61 = arith.constant 0 : index
    %c0_62 = arith.constant 0 : index
    %47 = vector.load %arg2[%c6, %c0_61, %c0_62] : memref<9x256x32xbf16, #tpu.memory_space<vmem>>, vector<1x256x32xbf16>
    %48 = vector.shape_cast %47 : vector<1x256x32xbf16> to vector<256x32xbf16>
    %cst_63 = arith.constant dense<0.000000e+00> : vector<256x32xf32>
    %49 = tpu.matmul %2, %48, %cst_63 {dimension_numbers = #tpu.dot_dimension_numbers<[1], [0], [0], [1], [0, 0, 1, 1], [], []>} : vector<256x256xbf16>, vector<256x32xbf16>, vector<256x32xf32> -> vector<256x32xf32>
    %50 = vector.shape_cast %49 : vector<256x32xf32> to vector<16x16x32xf32>
    %c0_64 = arith.constant 0 : index
    %c2_65 = arith.constant 2 : index
    %c0_66 = arith.constant 0 : index
    %51 = vector.load %arg10[%c0_64, %c2_65, %c0_66] : memref<18x18x32xf32, #tpu.memory_space<vmem>>, vector<16x16x32xf32>
    %52 = arith.addf %51, %50 : vector<16x16x32xf32>
    %c0_67 = arith.constant 0 : index
    %c2_68 = arith.constant 2 : index
    %c0_69 = arith.constant 0 : index
    %53 = vector.load %arg10[%c0_67, %c2_68, %c0_69] : memref<18x18x32xf32, #tpu.memory_space<vmem>>, vector<16x16x32xf32>
    tpu.vector_store %arg10[%c0_67, %c2_68, %c0_69], %52 {strides = array<i32>} : memref<18x18x32xf32, #tpu.memory_space<vmem>>, vector<16x16x32xf32>,
    %c7 = arith.constant 7 : index
    %c0_70 = arith.constant 0 : index
    %c0_71 = arith.constant 0 : index
    %54 = vector.load %arg2[%c7, %c0_70, %c0_71] : memref<9x256x32xbf16, #tpu.memory_space<vmem>>, vector<1x256x32xbf16>
    %55 = vector.shape_cast %54 : vector<1x256x32xbf16> to vector<256x32xbf16>
    %cst_72 = arith.constant dense<0.000000e+00> : vector<256x32xf32>
    %56 = tpu.matmul %2, %55, %cst_72 {dimension_numbers = #tpu.dot_dimension_numbers<[1], [0], [0], [1], [0, 0, 1, 1], [], []>} : vector<256x256xbf16>, vector<256x32xbf16>, vector<256x32xf32> -> vector<256x32xf32>
    %57 = vector.shape_cast %56 : vector<256x32xf32> to vector<16x16x32xf32>
    %c0_73 = arith.constant 0 : index
    %c1_74 = arith.constant 1 : index
    %c0_75 = arith.constant 0 : index
    %58 = vector.load %arg10[%c0_73, %c1_74, %c0_75] : memref<18x18x32xf32, #tpu.memory_space<vmem>>, vector<16x16x32xf32>
    %59 = arith.addf %58, %57 : vector<16x16x32xf32>
    %c0_76 = arith.constant 0 : index
    %c1_77 = arith.constant 1 : index
    %c0_78 = arith.constant 0 : index
    %60 = vector.load %arg10[%c0_76, %c1_77, %c0_78] : memref<18x18x32xf32, #tpu.memory_space<vmem>>, vector<16x16x32xf32>
    tpu.vector_store %arg10[%c0_76, %c1_77, %c0_78], %59 {strides = array<i32>} : memref<18x18x32xf32, #tpu.memory_space<vmem>>, vector<16x16x32xf32>,
    %c8 = arith.constant 8 : index
    %c0_79 = arith.constant 0 : index
    %c0_80 = arith.constant 0 : index
    %61 = vector.load %arg2[%c8, %c0_79, %c0_80] : memref<9x256x32xbf16, #tpu.memory_space<vmem>>, vector<1x256x32xbf16>
    %62 = vector.shape_cast %61 : vector<1x256x32xbf16> to vector<256x32xbf16>
    %cst_81 = arith.constant dense<0.000000e+00> : vector<256x32xf32>
    %63 = tpu.matmul %2, %62, %cst_81 {dimension_numbers = #tpu.dot_dimension_numbers<[1], [0], [0], [1], [0, 0, 1, 1], [], []>} : vector<256x256xbf16>, vector<256x32xbf16>, vector<256x32xf32> -> vector<256x32xf32>
    %64 = vector.shape_cast %63 : vector<256x32xf32> to vector<16x16x32xf32>
    %c0_82 = arith.constant 0 : index
    %c0_83 = arith.constant 0 : index
    %c0_84 = arith.constant 0 : index
    %65 = vector.load %arg10[%c0_82, %c0_83, %c0_84] : memref<18x18x32xf32, #tpu.memory_space<vmem>>, vector<16x16x32xf32>
    %66 = arith.addf %65, %64 : vector<16x16x32xf32>
    %c0_85 = arith.constant 0 : index
    %c0_86 = arith.constant 0 : index
    %c0_87 = arith.constant 0 : index
    %67 = vector.load %arg10[%c0_85, %c0_86, %c0_87] : memref<18x18x32xf32, #tpu.memory_space<vmem>>, vector<16x16x32xf32>
    tpu.vector_store %arg10[%c0_85, %c0_86, %c0_87], %66 {strides = array<i32>} : memref<18x18x32xf32, #tpu.memory_space<vmem>>, vector<16x16x32xf32>,
    %c1_88 = arith.constant 1 : index
    %c1_89 = arith.constant 1 : index
    %c0_90 = arith.constant 0 : index
    %68 = vector.load %arg10[%c1_88, %c1_89, %c0_90] : memref<18x18x32xf32, #tpu.memory_space<vmem>>, vector<16x16x32xf32>
    %69 = vector.shape_cast %68 : vector<16x16x32xf32> to vector<256x32xf32>
    %c0_91 = arith.constant 0 : index
    %c0_92 = arith.constant 0 : index
    %70 = vector.load %arg3[%c0_91, %c0_92] : memref<1x32xf32, #tpu.memory_space<vmem>>, vector<1x32xf32>
    %71 = vector.broadcast %70 : vector<1x32xf32> to vector<256x32xf32>
    %72 = arith.addf %69, %71 : vector<256x32xf32>
    %cst_93 = arith.constant 0.000000e+00 : f32
    %73 = vector.broadcast %cst_93 : f32 to vector<256x32xf32>
    %74 = arith.maximumf %72, %73 : vector<256x32xf32>
    %75 = arith.truncf %74 : vector<256x32xf32> to vector<256x32xbf16>
    %cst_94 = arith.constant 0.000000e+00 : f32
    %76 = vector.broadcast %cst_94 : f32 to vector<18x18x32xf32>
    %c0_95 = arith.constant 0 : index
    %c0_96 = arith.constant 0 : index
    %c0_97 = arith.constant 0 : index
    %77 = vector.load %arg10[%c0_95, %c0_96, %c0_97] : memref<18x18x32xf32, #tpu.memory_space<vmem>>, vector<18x18x32xf32>
    tpu.vector_store %arg10[%c0_95, %c0_96, %c0_97], %76 {strides = array<i32>} : memref<18x18x32xf32, #tpu.memory_space<vmem>>, vector<18x18x32xf32>,
    %c0_98 = arith.constant 0 : index
    %c0_99 = arith.constant 0 : index
    %c0_100 = arith.constant 0 : index
    %78 = vector.load %arg4[%c0_98, %c0_99, %c0_100] : memref<9x32x32xbf16, #tpu.memory_space<vmem>>, vector<1x32x32xbf16>
    %79 = vector.shape_cast %78 : vector<1x32x32xbf16> to vector<32x32xbf16>
    %cst_101 = arith.constant dense<0.000000e+00> : vector<256x32xf32>
    %80 = tpu.matmul %75, %79, %cst_101 {dimension_numbers = #tpu.dot_dimension_numbers<[1], [0], [0], [1], [0, 0, 1, 1], [], []>} : vector<256x32xbf16>, vector<32x32xbf16>, vector<256x32xf32> -> vector<256x32xf32>
    %81 = vector.shape_cast %80 : vector<256x32xf32> to vector<16x16x32xf32>
    %c2_102 = arith.constant 2 : index
    %c2_103 = arith.constant 2 : index
    %c0_104 = arith.constant 0 : index
    %82 = vector.load %arg10[%c2_102, %c2_103, %c0_104] : memref<18x18x32xf32, #tpu.memory_space<vmem>>, vector<16x16x32xf32>
    %83 = arith.addf %82, %81 : vector<16x16x32xf32>
    %c2_105 = arith.constant 2 : index
    %c2_106 = arith.constant 2 : index
    %c0_107 = arith.constant 0 : index
    %84 = vector.load %arg10[%c2_105, %c2_106, %c0_107] : memref<18x18x32xf32, #tpu.memory_space<vmem>>, vector<16x16x32xf32>
    tpu.vector_store %arg10[%c2_105, %c2_106, %c0_107], %83 {strides = array<i32>} : memref<18x18x32xf32, #tpu.memory_space<vmem>>, vector<16x16x32xf32>,
    %c1_108 = arith.constant 1 : index
    %c0_109 = arith.constant 0 : index
    %c0_110 = arith.constant 0 : index
    %85 = vector.load %arg4[%c1_108, %c0_109, %c0_110] : memref<9x32x32xbf16, #tpu.memory_space<vmem>>, vector<1x32x32xbf16>
    %86 = vector.shape_cast %85 : vector<1x32x32xbf16> to vector<32x32xbf16>
    %cst_111 = arith.constant dense<0.000000e+00> : vector<256x32xf32>
    %87 = tpu.matmul %75, %86, %cst_111 {dimension_numbers = #tpu.dot_dimension_numbers<[1], [0], [0], [1], [0, 0, 1, 1], [], []>} : vector<256x32xbf16>, vector<32x32xbf16>, vector<256x32xf32> -> vector<256x32xf32>
    %88 = vector.shape_cast %87 : vector<256x32xf32> to vector<16x16x32xf32>
    %c2_112 = arith.constant 2 : index
    %c1_113 = arith.constant 1 : index
    %c0_114 = arith.constant 0 : index
    %89 = vector.load %arg10[%c2_112, %c1_113, %c0_114] : memref<18x18x32xf32, #tpu.memory_space<vmem>>, vector<16x16x32xf32>
    %90 = arith.addf %89, %88 : vector<16x16x32xf32>
    %c2_115 = arith.constant 2 : index
    %c1_116 = arith.constant 1 : index
    %c0_117 = arith.constant 0 : index
    %91 = vector.load %arg10[%c2_115, %c1_116, %c0_117] : memref<18x18x32xf32, #tpu.memory_space<vmem>>, vector<16x16x32xf32>
    tpu.vector_store %arg10[%c2_115, %c1_116, %c0_117], %90 {strides = array<i32>} : memref<18x18x32xf32, #tpu.memory_space<vmem>>, vector<16x16x32xf32>,
    %c2_118 = arith.constant 2 : index
    %c0_119 = arith.constant 0 : index
    %c0_120 = arith.constant 0 : index
    %92 = vector.load %arg4[%c2_118, %c0_119, %c0_120] : memref<9x32x32xbf16, #tpu.memory_space<vmem>>, vector<1x32x32xbf16>
    %93 = vector.shape_cast %92 : vector<1x32x32xbf16> to vector<32x32xbf16>
    %cst_121 = arith.constant dense<0.000000e+00> : vector<256x32xf32>
    %94 = tpu.matmul %75, %93, %cst_121 {dimension_numbers = #tpu.dot_dimension_numbers<[1], [0], [0], [1], [0, 0, 1, 1], [], []>} : vector<256x32xbf16>, vector<32x32xbf16>, vector<256x32xf32> -> vector<256x32xf32>
    %95 = vector.shape_cast %94 : vector<256x32xf32> to vector<16x16x32xf32>
    %c2_122 = arith.constant 2 : index
    %c0_123 = arith.constant 0 : index
    %c0_124 = arith.constant 0 : index
    %96 = vector.load %arg10[%c2_122, %c0_123, %c0_124] : memref<18x18x32xf32, #tpu.memory_space<vmem>>, vector<16x16x32xf32>
    %97 = arith.addf %96, %95 : vector<16x16x32xf32>
    %c2_125 = arith.constant 2 : index
    %c0_126 = arith.constant 0 : index
    %c0_127 = arith.constant 0 : index
    %98 = vector.load %arg10[%c2_125, %c0_126, %c0_127] : memref<18x18x32xf32, #tpu.memory_space<vmem>>, vector<16x16x32xf32>
    tpu.vector_store %arg10[%c2_125, %c0_126, %c0_127], %97 {strides = array<i32>} : memref<18x18x32xf32, #tpu.memory_space<vmem>>, vector<16x16x32xf32>,
    %c3_128 = arith.constant 3 : index
    %c0_129 = arith.constant 0 : index
    %c0_130 = arith.constant 0 : index
    %99 = vector.load %arg4[%c3_128, %c0_129, %c0_130] : memref<9x32x32xbf16, #tpu.memory_space<vmem>>, vector<1x32x32xbf16>
    %100 = vector.shape_cast %99 : vector<1x32x32xbf16> to vector<32x32xbf16>
    %cst_131 = arith.constant dense<0.000000e+00> : vector<256x32xf32>
    %101 = tpu.matmul %75, %100, %cst_131 {dimension_numbers = #tpu.dot_dimension_numbers<[1], [0], [0], [1], [0, 0, 1, 1], [], []>} : vector<256x32xbf16>, vector<32x32xbf16>, vector<256x32xf32> -> vector<256x32xf32>
    %102 = vector.shape_cast %101 : vector<256x32xf32> to vector<16x16x32xf32>
    %c1_132 = arith.constant 1 : index
    %c2_133 = arith.constant 2 : index
    %c0_134 = arith.constant 0 : index
    %103 = vector.load %arg10[%c1_132, %c2_133, %c0_134] : memref<18x18x32xf32, #tpu.memory_space<vmem>>, vector<16x16x32xf32>
    %104 = arith.addf %103, %102 : vector<16x16x32xf32>
    %c1_135 = arith.constant 1 : index
    %c2_136 = arith.constant 2 : index
    %c0_137 = arith.constant 0 : index
    %105 = vector.load %arg10[%c1_135, %c2_136, %c0_137] : memref<18x18x32xf32, #tpu.memory_space<vmem>>, vector<16x16x32xf32>
    tpu.vector_store %arg10[%c1_135, %c2_136, %c0_137], %104 {strides = array<i32>} : memref<18x18x32xf32, #tpu.memory_space<vmem>>, vector<16x16x32xf32>,
    %c4_138 = arith.constant 4 : index
    %c0_139 = arith.constant 0 : index
    %c0_140 = arith.constant 0 : index
    %106 = vector.load %arg4[%c4_138, %c0_139, %c0_140] : memref<9x32x32xbf16, #tpu.memory_space<vmem>>, vector<1x32x32xbf16>
    %107 = vector.shape_cast %106 : vector<1x32x32xbf16> to vector<32x32xbf16>
    %cst_141 = arith.constant dense<0.000000e+00> : vector<256x32xf32>
    %108 = tpu.matmul %75, %107, %cst_141 {dimension_numbers = #tpu.dot_dimension_numbers<[1], [0], [0], [1], [0, 0, 1, 1], [], []>} : vector<256x32xbf16>, vector<32x32xbf16>, vector<256x32xf32> -> vector<256x32xf32>
    %109 = vector.shape_cast %108 : vector<256x32xf32> to vector<16x16x32xf32>
    %c1_142 = arith.constant 1 : index
    %c1_143 = arith.constant 1 : index
    %c0_144 = arith.constant 0 : index
    %110 = vector.load %arg10[%c1_142, %c1_143, %c0_144] : memref<18x18x32xf32, #tpu.memory_space<vmem>>, vector<16x16x32xf32>
    %111 = arith.addf %110, %109 : vector<16x16x32xf32>
    %c1_145 = arith.constant 1 : index
    %c1_146 = arith.constant 1 : index
    %c0_147 = arith.constant 0 : index
    %112 = vector.load %arg10[%c1_145, %c1_146, %c0_147] : memref<18x18x32xf32, #tpu.memory_space<vmem>>, vector<16x16x32xf32>
    tpu.vector_store %arg10[%c1_145, %c1_146, %c0_147], %111 {strides = array<i32>} : memref<18x18x32xf32, #tpu.memory_space<vmem>>, vector<16x16x32xf32>,
    %c5_148 = arith.constant 5 : index
    %c0_149 = arith.constant 0 : index
    %c0_150 = arith.constant 0 : index
    %113 = vector.load %arg4[%c5_148, %c0_149, %c0_150] : memref<9x32x32xbf16, #tpu.memory_space<vmem>>, vector<1x32x32xbf16>
    %114 = vector.shape_cast %113 : vector<1x32x32xbf16> to vector<32x32xbf16>
    %cst_151 = arith.constant dense<0.000000e+00> : vector<256x32xf32>
    %115 = tpu.matmul %75, %114, %cst_151 {dimension_numbers = #tpu.dot_dimension_numbers<[1], [0], [0], [1], [0, 0, 1, 1], [], []>} : vector<256x32xbf16>, vector<32x32xbf16>, vector<256x32xf32> -> vector<256x32xf32>
    %116 = vector.shape_cast %115 : vector<256x32xf32> to vector<16x16x32xf32>
    %c1_152 = arith.constant 1 : index
    %c0_153 = arith.constant 0 : index
    %c0_154 = arith.constant 0 : index
    %117 = vector.load %arg10[%c1_152, %c0_153, %c0_154] : memref<18x18x32xf32, #tpu.memory_space<vmem>>, vector<16x16x32xf32>
    %118 = arith.addf %117, %116 : vector<16x16x32xf32>
    %c1_155 = arith.constant 1 : index
    %c0_156 = arith.constant 0 : index
    %c0_157 = arith.constant 0 : index
    %119 = vector.load %arg10[%c1_155, %c0_156, %c0_157] : memref<18x18x32xf32, #tpu.memory_space<vmem>>, vector<16x16x32xf32>
    tpu.vector_store %arg10[%c1_155, %c0_156, %c0_157], %118 {strides = array<i32>} : memref<18x18x32xf32, #tpu.memory_space<vmem>>, vector<16x16x32xf32>,
    %c6_158 = arith.constant 6 : index
    %c0_159 = arith.constant 0 : index
    %c0_160 = arith.constant 0 : index
    %120 = vector.load %arg4[%c6_158, %c0_159, %c0_160] : memref<9x32x32xbf16, #tpu.memory_space<vmem>>, vector<1x32x32xbf16>
    %121 = vector.shape_cast %120 : vector<1x32x32xbf16> to vector<32x32xbf16>
    %cst_161 = arith.constant dense<0.000000e+00> : vector<256x32xf32>
    %122 = tpu.matmul %75, %121, %cst_161 {dimension_numbers = #tpu.dot_dimension_numbers<[1], [0], [0], [1], [0, 0, 1, 1], [], []>} : vector<256x32xbf16>, vector<32x32xbf16>, vector<256x32xf32> -> vector<256x32xf32>
    %123 = vector.shape_cast %122 : vector<256x32xf32> to vector<16x16x32xf32>
    %c0_162 = arith.constant 0 : index
    %c2_163 = arith.constant 2 : index
    %c0_164 = arith.constant 0 : index
    %124 = vector.load %arg10[%c0_162, %c2_163, %c0_164] : memref<18x18x32xf32, #tpu.memory_space<vmem>>, vector<16x16x32xf32>
    %125 = arith.addf %124, %123 : vector<16x16x32xf32>
    %c0_165 = arith.constant 0 : index
    %c2_166 = arith.constant 2 : index
    %c0_167 = arith.constant 0 : index
    %126 = vector.load %arg10[%c0_165, %c2_166, %c0_167] : memref<18x18x32xf32, #tpu.memory_space<vmem>>, vector<16x16x32xf32>
    tpu.vector_store %arg10[%c0_165, %c2_166, %c0_167], %125 {strides = array<i32>} : memref<18x18x32xf32, #tpu.memory_space<vmem>>, vector<16x16x32xf32>,
    %c7_168 = arith.constant 7 : index
    %c0_169 = arith.constant 0 : index
    %c0_170 = arith.constant 0 : index
    %127 = vector.load %arg4[%c7_168, %c0_169, %c0_170] : memref<9x32x32xbf16, #tpu.memory_space<vmem>>, vector<1x32x32xbf16>
    %128 = vector.shape_cast %127 : vector<1x32x32xbf16> to vector<32x32xbf16>
    %cst_171 = arith.constant dense<0.000000e+00> : vector<256x32xf32>
    %129 = tpu.matmul %75, %128, %cst_171 {dimension_numbers = #tpu.dot_dimension_numbers<[1], [0], [0], [1], [0, 0, 1, 1], [], []>} : vector<256x32xbf16>, vector<32x32xbf16>, vector<256x32xf32> -> vector<256x32xf32>
    %130 = vector.shape_cast %129 : vector<256x32xf32> to vector<16x16x32xf32>
    %c0_172 = arith.constant 0 : index
    %c1_173 = arith.constant 1 : index
    %c0_174 = arith.constant 0 : index
    %131 = vector.load %arg10[%c0_172, %c1_173, %c0_174] : memref<18x18x32xf32, #tpu.memory_space<vmem>>, vector<16x16x32xf32>
    %132 = arith.addf %131, %130 : vector<16x16x32xf32>
    %c0_175 = arith.constant 0 : index
    %c1_176 = arith.constant 1 : index
    %c0_177 = arith.constant 0 : index
    %133 = vector.load %arg10[%c0_175, %c1_176, %c0_177] : memref<18x18x32xf32, #tpu.memory_space<vmem>>, vector<16x16x32xf32>
    tpu.vector_store %arg10[%c0_175, %c1_176, %c0_177], %132 {strides = array<i32>} : memref<18x18x32xf32, #tpu.memory_space<vmem>>, vector<16x16x32xf32>,
    %c8_178 = arith.constant 8 : index
    %c0_179 = arith.constant 0 : index
    %c0_180 = arith.constant 0 : index
    %134 = vector.load %arg4[%c8_178, %c0_179, %c0_180] : memref<9x32x32xbf16, #tpu.memory_space<vmem>>, vector<1x32x32xbf16>
    %135 = vector.shape_cast %134 : vector<1x32x32xbf16> to vector<32x32xbf16>
    %cst_181 = arith.constant dense<0.000000e+00> : vector<256x32xf32>
    %136 = tpu.matmul %75, %135, %cst_181 {dimension_numbers = #tpu.dot_dimension_numbers<[1], [0], [0], [1], [0, 0, 1, 1], [], []>} : vector<256x32xbf16>, vector<32x32xbf16>, vector<256x32xf32> -> vector<256x32xf32>
    %137 = vector.shape_cast %136 : vector<256x32xf32> to vector<16x16x32xf32>
    %c0_182 = arith.constant 0 : index
    %c0_183 = arith.constant 0 : index
    %c0_184 = arith.constant 0 : index
    %138 = vector.load %arg10[%c0_182, %c0_183, %c0_184] : memref<18x18x32xf32, #tpu.memory_space<vmem>>, vector<16x16x32xf32>
    %139 = arith.addf %138, %137 : vector<16x16x32xf32>
    %c0_185 = arith.constant 0 : index
    %c0_186 = arith.constant 0 : index
    %c0_187 = arith.constant 0 : index
    %140 = vector.load %arg10[%c0_185, %c0_186, %c0_187] : memref<18x18x32xf32, #tpu.memory_space<vmem>>, vector<16x16x32xf32>
    tpu.vector_store %arg10[%c0_185, %c0_186, %c0_187], %139 {strides = array<i32>} : memref<18x18x32xf32, #tpu.memory_space<vmem>>, vector<16x16x32xf32>,
    %c1_188 = arith.constant 1 : index
    %c1_189 = arith.constant 1 : index
    %c0_190 = arith.constant 0 : index
    %141 = vector.load %arg10[%c1_188, %c1_189, %c0_190] : memref<18x18x32xf32, #tpu.memory_space<vmem>>, vector<16x16x32xf32>
    %142 = vector.shape_cast %141 : vector<16x16x32xf32> to vector<256x32xf32>
    %c0_191 = arith.constant 0 : index
    %c0_192 = arith.constant 0 : index
    %143 = vector.load %arg5[%c0_191, %c0_192] : memref<1x32xf32, #tpu.memory_space<vmem>>, vector<1x32xf32>
    %144 = vector.broadcast %143 : vector<1x32xf32> to vector<256x32xf32>
    %145 = arith.addf %142, %144 : vector<256x32xf32>
    %cst_193 = arith.constant 0.000000e+00 : f32
    %146 = vector.broadcast %cst_193 : f32 to vector<256x32xf32>
    %147 = arith.maximumf %145, %146 : vector<256x32xf32>
    %148 = vector.shape_cast %147 : vector<256x32xf32> to vector<16x16x32xf32>
    %149 = arith.truncf %148 : vector<16x16x32xf32> to vector<16x16x32xbf16>
    %c0_194 = arith.constant 0 : index
    %c0_195 = arith.constant 0 : index
    %c0_196 = arith.constant 0 : index
    %c0_197 = arith.constant 0 : index
    %150 = vector.load %arg8[%c0_194, %c0_195, %c0_196, %c0_197] : memref<1x16x16x32xbf16, #tpu.memory_space<vmem>>, vector<1x16x16x32xbf16>
    %151 = vector.shape_cast %150 : vector<1x16x16x32xbf16> to vector<16x16x32xbf16>
    %152 = vector.shape_cast %149 : vector<16x16x32xbf16> to vector<1x16x16x32xbf16>
    tpu.vector_store %arg8[%c0_194, %c0_195, %c0_196, %c0_197], %152 {strides = array<i32>} : memref<1x16x16x32xbf16, #tpu.memory_space<vmem>>, vector<1x16x16x32xbf16>,
    %153 = arith.truncf %147 : vector<256x32xf32> to vector<256x32xbf16>
    %c0_198 = arith.constant 0 : index
    %c0_199 = arith.constant 0 : index
    %c0_200 = arith.constant 0 : index
    %154 = vector.load %arg6[%c0_198, %c0_199, %c0_200] : memref<1x32x32xbf16, #tpu.memory_space<vmem>>, vector<1x32x32xbf16>
    %155 = vector.shape_cast %154 : vector<1x32x32xbf16> to vector<32x32xbf16>
    %cst_201 = arith.constant dense<0.000000e+00> : vector<256x32xf32>
    %156 = tpu.matmul %153, %155, %cst_201 {dimension_numbers = #tpu.dot_dimension_numbers<[1], [0], [0], [1], [0, 0, 1, 1], [], []>} : vector<256x32xbf16>, vector<32x32xbf16>, vector<256x32xf32> -> vector<256x32xf32>
    %c0_202 = arith.constant 0 : index
    %c0_203 = arith.constant 0 : index
    %157 = vector.load %arg7[%c0_202, %c0_203] : memref<1x32xf32, #tpu.memory_space<vmem>>, vector<1x32xf32>
    %158 = vector.broadcast %157 : vector<1x32xf32> to vector<256x32xf32>
    %159 = arith.addf %156, %158 : vector<256x32xf32>
    %cst_204 = arith.constant 0.000000e+00 : f32
    %160 = vector.broadcast %cst_204 : f32 to vector<256x32xf32>
    %161 = arith.maximumf %159, %160 : vector<256x32xf32>
    %162 = vector.shape_cast %161 : vector<256x32xf32> to vector<16x1x16x32xf32>
    %163 = arith.truncf %162 : vector<16x1x16x32xf32> to vector<16x1x16x32xbf16>
    %c0_205 = arith.constant 0 : index
    %c0_206 = arith.constant 0 : index
    %c0_207 = arith.constant 0 : index
    %c0_208 = arith.constant 0 : index
    %c0_209 = arith.constant 0 : index
    %164 = vector.load %arg9[%c0_205, %c0_206, %c0_207, %c0_208, %c0_209] : memref<1x16x1x16x32xbf16, #tpu.memory_space<vmem>>, vector<1x16x1x16x32xbf16>
    %165 = vector.shape_cast %164 : vector<1x16x1x16x32xbf16> to vector<16x1x16x32xbf16>
    %166 = vector.shape_cast %163 : vector<16x1x16x32xbf16> to vector<1x16x1x16x32xbf16>
    tpu.vector_store %arg9[%c0_205, %c0_206, %c0_207, %c0_208, %c0_209], %166 {strides = array<i32>} : memref<1x16x1x16x32xbf16, #tpu.memory_space<vmem>>, vector<1x16x1x16x32xbf16>,
    return
  }
  func.func @transform_0(%arg0: i32) -> (i32, i32, i32, i32) {
    %c0_i32 = arith.constant 0 : i32
    %c0_i32_0 = arith.constant 0 : i32
    %c0_i32_1 = arith.constant 0 : i32
    %c0_i32_2 = arith.constant 0 : i32
    return %arg0, %c0_i32, %c0_i32_0, %c0_i32_1 : i32, i32, i32, i32
  }
  func.func @transform_1(%arg0: i32) -> (i32, i32, i32) {
    %c0_i32 = arith.constant 0 : i32
    %c0_i32_0 = arith.constant 0 : i32
    %c0_i32_1 = arith.constant 0 : i32
    %c0_i32_2 = arith.constant 0 : i32
    return %c0_i32, %c0_i32_0, %c0_i32_1 : i32, i32, i32
  }
  func.func @transform_2(%arg0: i32) -> (i32, i32) {
    %c0_i32 = arith.constant 0 : i32
    %c0_i32_0 = arith.constant 0 : i32
    %c0_i32_1 = arith.constant 0 : i32
    return %c0_i32, %c0_i32_0 : i32, i32
  }
  func.func @transform_3(%arg0: i32) -> (i32, i32, i32) {
    %c0_i32 = arith.constant 0 : i32
    %c0_i32_0 = arith.constant 0 : i32
    %c0_i32_1 = arith.constant 0 : i32
    %c0_i32_2 = arith.constant 0 : i32
    return %c0_i32, %c0_i32_0, %c0_i32_1 : i32, i32, i32
  }
  func.func @transform_4(%arg0: i32) -> (i32, i32) {
    %c0_i32 = arith.constant 0 : i32
    %c0_i32_0 = arith.constant 0 : i32
    %c0_i32_1 = arith.constant 0 : i32
    return %c0_i32, %c0_i32_0 : i32, i32
  }
  func.func @transform_5(%arg0: i32) -> (i32, i32, i32) {
    %c0_i32 = arith.constant 0 : i32
    %c0_i32_0 = arith.constant 0 : i32
    %c0_i32_1 = arith.constant 0 : i32
    %c0_i32_2 = arith.constant 0 : i32
    return %c0_i32, %c0_i32_0, %c0_i32_1 : i32, i32, i32
  }
  func.func @transform_6(%arg0: i32) -> (i32, i32) {
    %c0_i32 = arith.constant 0 : i32
    %c0_i32_0 = arith.constant 0 : i32
    %c0_i32_1 = arith.constant 0 : i32
    return %c0_i32, %c0_i32_0 : i32, i32
  }
  func.func @transform_7(%arg0: i32) -> (i32, i32, i32, i32) {
    %c0_i32 = arith.constant 0 : i32
    %c0_i32_0 = arith.constant 0 : i32
    %c0_i32_1 = arith.constant 0 : i32
    %c0_i32_2 = arith.constant 0 : i32
    return %arg0, %c0_i32, %c0_i32_0, %c0_i32_1 : i32, i32, i32, i32
  }
  func.func @transform_8(%arg0: i32) -> (i32, i32, i32, i32, i32) {
    %c0_i32 = arith.constant 0 : i32
    %c0_i32_0 = arith.constant 0 : i32
    %c0_i32_1 = arith.constant 0 : i32
    %c0_i32_2 = arith.constant 0 : i32
    %c0_i32_3 = arith.constant 0 : i32
    return %arg0, %c0_i32, %c0_i32_0, %c0_i32_1, %c0_i32_2 : i32, i32, i32, i32, i32
  }
}

</mosaic_0001>

<llo_original>
// kernel: tpu_custom_call.1
$region0: #{tpu_custom_call.1}
  #allocation0 [shape = 'u32[]', space=smem, size = 0x4, offset = 0x4, fixed_abs, tag = 'smem constant byte address 0x4 - core index']
  #allocation1 [shape = 'u32[144,128]{1,0:T(1,128)}', space=vmem, size = 0x12000, scoped, tag = 'internal scratch']
  #allocation2 [shape = 'f32[18,18,32]{2,1,0:T(8,128)}', space=vmem, size = 0x36000, scoped, tag = 'scratch operand']
  %s0 = inlined_call_operand.vmem [shape: bf16[2,16,16,256], index: 0, kind: input, shape index: {}]
  %s1 = inlined_call_operand.vmem [shape: bf16[9,256,32], index: 1, kind: input, shape index: {}]
  %s2 = inlined_call_operand.vmem [shape: f32[1,32], index: 2, kind: input, shape index: {}]
  %s3 = inlined_call_operand.vmem [shape: bf16[9,32,32], index: 3, kind: input, shape index: {}]
  %s4 = inlined_call_operand.vmem [shape: f32[1,32], index: 4, kind: input, shape index: {}]
  %s5 = inlined_call_operand.vmem [shape: bf16[1,32,32], index: 5, kind: input, shape index: {}]
  %s6 = inlined_call_operand.vmem [shape: f32[1,32], index: 6, kind: input, shape index: {}]
  %s7 = inlined_call_operand.hbm [shape: bf16[2,16,16,32], index: 7, kind: output, shape index: {0}]
  %s8 = inlined_call_operand.hbm [shape: bf16[2,16,1,16,32], index: 8, kind: output, shape index: {1}]
  %9 = xla_tuple %s7, %s8
  %s10 = sld [smem:[#allocation0]]
  $region69: #{tpu_custom_call.1} parent=0
    _
  %s12 = ssub.s32 1, %s10
  %s13 = scalar_select 0, %s12, %s10
  $region1: #{tpu_custom_call.1} parent=0
    #allocation3 [shape = 'u8[131072]{0}', space=vmem, size = 0x20000, scoped, tag = 'output window, operand 0']
    #allocation4 [shape = 's32[2]{0}', space=sflag, size = 0x8, scoped, tag = 'scoped memory for tpu_custom_call.1']
    #allocation5 [shape = 'u8[131072]{0}', space=vmem, size = 0x20000, scoped, tag = 'output window, operand 1']
    #allocation6 [shape = 's32[2]{0}', space=sflag, size = 0x8, scoped, tag = 'scoped memory for tpu_custom_call.1']
    %14 = vsyncpa [#allocation4], 0
    %s15 = scalar_lea.sflag [#allocation4], 1
    %16 = vsyncpa %s15, 0
    %17 = vsyncpa [#allocation6], 0
    %s18 = scalar_lea.sflag [#allocation6], 1
    %19 = vsyncpa %s18, 0
    loop: start=0, step=1, limit=4
    $region2: #{tpu_custom_call.1} parent=1 // loop_pre_header
      _
    $region3: #{tpu_custom_call.1} parent=1 // loop_header
      %s21 = sphi 0, %s25
      %p22 = scmp.ge.s32.totalorder %s21, 4
      %s31 = sphi 0, %s33
      %s34 = sphi 0, %s31
      %s35 = sphi 0, %s34
      %s51 = sphi 0, %s35
      %s55 = sphi 0, %s55
      %s57 = sphi 0, %s55
      %s58 = sphi 0, %s57
      %s72 = sphi 0, %s58
      %s76 = sphi 0, %s76
      %s78 = sphi 0, %s76
      %s79 = sphi 0, %s78
      %s93 = sphi 0, %s79
      %s97 = sphi 0, %s97
      %s99 = sphi 0, %s97
      %s100 = sphi 0, %s99
      %s114 = sphi 0, %s100
      %s118 = sphi 0, %s118
      %s120 = sphi 0, %s118
      %s121 = sphi 0, %s120
      %s135 = sphi 0, %s121
      %s139 = sphi 0, %s139
      %s141 = sphi 0, %s139
      %s142 = sphi 0, %s141
      %s156 = sphi 0, %s142
      %s160 = sphi 0, %s160
      %s162 = sphi 0, %s160
      %s163 = sphi 0, %s162
      %s177 = sphi 0, %s163
      %s183 = sphi 0, %s185
      %s186 = sphi 0, %s183
      %s187 = sphi 0, %s186
      %s203 = sphi 0, %s187
      %s209 = sphi 0, %s211
      %s212 = sphi 0, %s209
      %s213 = sphi 0, %s212
      %s229 = sphi 0, %s213
    $region4: #{tpu_custom_call.1} parent=1 // loop_header_branch
      %24 = sbr.rel (%p22) target = $region8
    $region5: #{tpu_custom_call.1} parent=1 // loop_body
      %s26 = ssub.s32 %s21, 1
      %s27 = ssub.s32 %s21, 2
      %s28 = sadd.s32 %s21, 1
      %s29 = ssub.s32 %s21, %s28
      %p30 = scmp.eq.s32.totalorder %s29, 0
      %s32 = sadd.s32 %s31, 1
      %s33 = scalar_select %p30, %s31, %s32
      %p36 = pneg %p30
      %p37 = scmp.eq.s32.totalorder %s21, 1
      %p38 = por %p36, %p37
      %p39 = scmp.ne.s32.totalorder %s31, %s34
      %p40 = scmp.eq.s32.totalorder %s21, 0
      %p41 = por %p39, %p40
      %p42 = scmp.ne.s32.totalorder %s31, %s34
      %p43 = scmp.eq.s32.totalorder %s26, 1
      %p44 = por %p42, %p43
      %p45 = scmp.ne.s32.totalorder %s34, %s35
      %p46 = scmp.eq.s32.totalorder %s26, 0
      %p47 = por %p45, %p46
      %p48 = scmp.ne.s32.totalorder %s34, %s35
      %p49 = scmp.eq.s32.totalorder %s27, 1
      %p50 = por %p48, %p49
      %p52 = scmp.ne.s32.totalorder %s35, %s51
      %p53 = scmp.eq.s32.totalorder %s27, 0
      %p54 = por %p52, %p53
      %s56 = sadd.s32 %s55, 1
      %p59 = scmp.eq.s32.totalorder %s21, 1
      %p60 = scmp.ne.s32.totalorder %s55, %s57
      %p61 = scmp.eq.s32.totalorder %s21, 0
      %p62 = por %p60, %p61
      %p63 = scmp.ne.s32.totalorder %s55, %s57
      %p64 = scmp.eq.s32.totalorder %s26, 1
      %p65 = por %p63, %p64
      %p66 = scmp.ne.s32.totalorder %s57, %s58
      %p67 = scmp.eq.s32.totalorder %s26, 0
      %p68 = por %p66, %p67
      %p69 = scmp.ne.s32.totalorder %s57, %s58
      %p70 = scmp.eq.s32.totalorder %s27, 1
      %p71 = por %p69, %p70
      %p73 = scmp.ne.s32.totalorder %s58, %s72
      %p74 = scmp.eq.s32.totalorder %s27, 0
      %p75 = por %p73, %p74
      %s77 = sadd.s32 %s76, 1
      %p80 = scmp.eq.s32.totalorder %s21, 1
      %p81 = scmp.ne.s32.totalorder %s76, %s78
      %p82 = scmp.eq.s32.totalorder %s21, 0
      %p83 = por %p81, %p82
      %p84 = scmp.ne.s32.totalorder %s76, %s78
      %p85 = scmp.eq.s32.totalorder %s26, 1
      %p86 = por %p84, %p85
      %p87 = scmp.ne.s32.totalorder %s78, %s79
      %p88 = scmp.eq.s32.totalorder %s26, 0
      %p89 = por %p87, %p88
      %p90 = scmp.ne.s32.totalorder %s78, %s79
      %p91 = scmp.eq.s32.totalorder %s27, 1
      %p92 = por %p90, %p91
      %p94 = scmp.ne.s32.totalorder %s79, %s93
      %p95 = scmp.eq.s32.totalorder %s27, 0
      %p96 = por %p94, %p95
      %s98 = sadd.s32 %s97, 1
      %p101 = scmp.eq.s32.totalorder %s21, 1
      %p102 = scmp.ne.s32.totalorder %s97, %s99
      %p103 = scmp.eq.s32.totalorder %s21, 0
      %p104 = por %p102, %p103
      %p105 = scmp.ne.s32.totalorder %s97, %s99
      %p106 = scmp.eq.s32.totalorder %s26, 1
      %p107 = por %p105, %p106
      %p108 = scmp.ne.s32.totalorder %s99, %s100
      %p109 = scmp.eq.s32.totalorder %s26, 0
      %p110 = por %p108, %p109
      %p111 = scmp.ne.s32.totalorder %s99, %s100
      %p112 = scmp.eq.s32.totalorder %s27, 1
      %p113 = por %p111, %p112
      %p115 = scmp.ne.s32.totalorder %s100, %s114
      %p116 = scmp.eq.s32.totalorder %s27, 0
      %p117 = por %p115, %p116
      %s119 = sadd.s32 %s118, 1
      %p122 = scmp.eq.s32.totalorder %s21, 1
      %p123 = scmp.ne.s32.totalorder %s118, %s120
      %p124 = scmp.eq.s32.totalorder %s21, 0
      %p125 = por %p123, %p124
      %p126 = scmp.ne.s32.totalorder %s118, %s120
      %p127 = scmp.eq.s32.totalorder %s26, 1
      %p128 = por %p126, %p127
      %p129 = scmp.ne.s32.totalorder %s120, %s121
      %p130 = scmp.eq.s32.totalorder %s26, 0
      %p131 = por %p129, %p130
      %p132 = scmp.ne.s32.totalorder %s120, %s121
      %p133 = scmp.eq.s32.totalorder %s27, 1
      %p134 = por %p132, %p133
      %p136 = scmp.ne.s32.totalorder %s121, %s135
      %p137 = scmp.eq.s32.totalorder %s27, 0
      %p138 = por %p136, %p137
      %s140 = sadd.s32 %s139, 1
      %p143 = scmp.eq.s32.totalorder %s21, 1
      %p144 = scmp.ne.s32.totalorder %s139, %s141
      %p145 = scmp.eq.s32.totalorder %s21, 0
      %p146 = por %p144, %p145
      %p147 = scmp.ne.s32.totalorder %s139, %s141
      %p148 = scmp.eq.s32.totalorder %s26, 1
      %p149 = por %p147, %p148
      %p150 = scmp.ne.s32.totalorder %s141, %s142
      %p151 = scmp.eq.s32.totalorder %s26, 0
      %p152 = por %p150, %p151
      %p153 = scmp.ne.s32.totalorder %s141, %s142
      %p154 = scmp.eq.s32.totalorder %s27, 1
      %p155 = por %p153, %p154
      %p157 = scmp.ne.s32.totalorder %s142, %s156
      %p158 = scmp.eq.s32.totalorder %s27, 0
      %p159 = por %p157, %p158
      %s161 = sadd.s32 %s160, 1
      %p164 = scmp.eq.s32.totalorder %s21, 1
      %p165 = scmp.ne.s32.totalorder %s160, %s162
      %p166 = scmp.eq.s32.totalorder %s21, 0
      %p167 = por %p165, %p166
      %p168 = scmp.ne.s32.totalorder %s160, %s162
      %p169 = scmp.eq.s32.totalorder %s26, 1
      %p170 = por %p168, %p169
      %p171 = scmp.ne.s32.totalorder %s162, %s163
      %p172 = scmp.eq.s32.totalorder %s26, 0
      %p173 = por %p171, %p172
      %p174 = scmp.ne.s32.totalorder %s162, %s163
      %p175 = scmp.eq.s32.totalorder %s27, 1
      %p176 = por %p174, %p175
      %p178 = scmp.ne.s32.totalorder %s163, %s177
      %p179 = scmp.eq.s32.totalorder %s27, 0
      %p180 = por %p178, %p179
      %s181 = ssub.s32 %s21, %s28
      %p182 = scmp.eq.s32.totalorder %s181, 0
      %s184 = sadd.s32 %s183, 1
      %s185 = scalar_select %p182, %s183, %s184
      %p188 = pneg %p182
      %p189 = scmp.eq.s32.totalorder %s21, 1
      %p190 = por %p188, %p189
      %p191 = scmp.ne.s32.totalorder %s183, %s186
      %p192 = scmp.eq.s32.totalorder %s21, 0
      %p193 = por %p191, %p192
      %p194 = scmp.ne.s32.totalorder %s183, %s186
      %p195 = scmp.eq.s32.totalorder %s26, 1
      %p196 = por %p194, %p195
      %p197 = scmp.ne.s32.totalorder %s186, %s187
      %p198 = scmp.eq.s32.totalorder %s26, 0
      %p199 = por %p197, %p198
      %p200 = scmp.ne.s32.totalorder %s186, %s187
      %p201 = scmp.eq.s32.totalorder %s27, 1
      %p202 = por %p200, %p201
      %p204 = scmp.ne.s32.totalorder %s187, %s203
      %p205 = scmp.eq.s32.totalorder %s27, 0
      %p206 = por %p204, %p205
      %s207 = ssub.s32 %s21, %s28
      %p208 = scmp.eq.s32.totalorder %s207, 0
      %s210 = sadd.s32 %s209, 1
      %s211 = scalar_select %p208, %s209, %s210
      %p214 = pneg %p208
      %p215 = scmp.eq.s32.totalorder %s21, 1
      %p216 = por %p214, %p215
      %p217 = scmp.ne.s32.totalorder %s209, %s212
      %p218 = scmp.eq.s32.totalorder %s21, 0
      %p219 = por %p217, %p218
      %p220 = scmp.ne.s32.totalorder %s209, %s212
      %p221 = scmp.eq.s32.totalorder %s26, 1
      %p222 = por %p220, %p221
      %p223 = scmp.ne.s32.totalorder %s212, %s213
      %p224 = scmp.eq.s32.totalorder %s26, 0
      %p225 = por %p223, %p224
      %p226 = scmp.ne.s32.totalorder %s212, %s213
      %p227 = scmp.eq.s32.totalorder %s27, 1
      %p228 = por %p226, %p227
      %p230 = scmp.ne.s32.totalorder %s213, %s229
      %p231 = scmp.eq.s32.totalorder %s27, 0
      %p232 = por %p230, %p231
      %p233 = scmp.le.s32.totalorder 1, %s21
      %p234 = scmp.lt.s32.totalorder %s21, 3
      %p235 = pnand %p233, %p234
      %p236 = pneg %p235
      // Predicated region
      $region9: #{tpu_custom_call.1} parent=5 // pred_check
        _
      $region10: #{tpu_custom_call.1} parent=5 // pred_check_branch
        %238 = sbr.rel (%p235) target = $region12
      $region11: #{tpu_custom_call.1} parent=5 // pred_region
        %s239 = ssub.s32 %s21, 1
        // Predicated region
        $region13: #{tpu_custom_call.1} parent=11 // pred_check
          %p240 = pneg %p68
        $region14: #{tpu_custom_call.1} parent=11 // pred_check_branch
          %242 = sbr.rel (%p240) target = $region16
        $region15: #{tpu_custom_call.1} parent=11 // pred_region
          _
        $region16: #{tpu_custom_call.1} parent=11 // pred_fallthru
          _
        // Predicated region
        $region17: #{tpu_custom_call.1} parent=11 // pred_check
          %p243 = pneg %p89
        $region18: #{tpu_custom_call.1} parent=11 // pred_check_branch
          %245 = sbr.rel (%p243) target = $region20
        $region19: #{tpu_custom_call.1} parent=11 // pred_region
          _
        $region20: #{tpu_custom_call.1} parent=11 // pred_fallthru
          _
        // Predicated region
        $region21: #{tpu_custom_call.1} parent=11 // pred_check
          %p246 = pneg %p110
        $region22: #{tpu_custom_call.1} parent=11 // pred_check_branch
          %248 = sbr.rel (%p246) target = $region24
        $region23: #{tpu_custom_call.1} parent=11 // pred_region
          _
        $region24: #{tpu_custom_call.1} parent=11 // pred_fallthru
          _
        // Predicated region
        $region25: #{tpu_custom_call.1} parent=11 // pred_check
          %p249 = pneg %p131
        $region26: #{tpu_custom_call.1} parent=11 // pred_check_branch
          %251 = sbr.rel (%p249) target = $region28
        $region27: #{tpu_custom_call.1} parent=11 // pred_region
          _
        $region28: #{tpu_custom_call.1} parent=11 // pred_fallthru
          _
        // Predicated region
        $region29: #{tpu_custom_call.1} parent=11 // pred_check
          %p252 = pneg %p152
        $region30: #{tpu_custom_call.1} parent=11 // pred_check_branch
          %254 = sbr.rel (%p252) target = $region32
        $region31: #{tpu_custom_call.1} parent=11 // pred_region
          _
        $region32: #{tpu_custom_call.1} parent=11 // pred_fallthru
          _
        // Predicated region
        $region33: #{tpu_custom_call.1} parent=11 // pred_check
          %p255 = pneg %p173
        $region34: #{tpu_custom_call.1} parent=11 // pred_check_branch
          %257 = sbr.rel (%p255) target = $region36
        $region35: #{tpu_custom_call.1} parent=11 // pred_region
          _
        $region36: #{tpu_custom_call.1} parent=11 // pred_fallthru
          _
      $region12: #{tpu_custom_call.1} parent=5 // pred_fallthru
        _
      %p258 = scmp.lt.s32.totalorder %s21, 2
      // Predicated region
      $region37: #{tpu_custom_call.1} parent=5 // pred_check
        %p259 = pneg %p258
      $region38: #{tpu_custom_call.1} parent=5 // pred_check_branch
        %261 = sbr.rel (%p259) target = $region40
      $region39: #{tpu_custom_call.1} parent=5 // pred_region
        // Predicated region
        $region41: #{tpu_custom_call.1} parent=39 // pred_check
          %p262 = pneg %p41
        $region42: #{tpu_custom_call.1} parent=39 // pred_check_branch
          %264 = sbr.rel (%p262) target = $region44
        $region43: #{tpu_custom_call.1} parent=39 // pred_region
          %p265 = scmp.lt.s32.totalorder %s21, 1
          %s266 = scalar_select %p265, %s21, 1
          %s267 = smul.addr %s266, 64
          %s268 = smul.addr %s267, 4
          %s269 = scalar_lea.vmem %s0, %s268
        $region44: #{tpu_custom_call.1} parent=39 // pred_fallthru
          _
      $region40: #{tpu_custom_call.1} parent=5 // pred_fallthru
        _
      %p270 = scmp.le.s32.totalorder 1, %s21
      %p271 = scmp.lt.s32.totalorder %s21, 3
      %p272 = pnand %p270, %p271
      %p273 = pneg %p272
      // Predicated region
      $region45: #{tpu_custom_call.1} parent=5 // pred_check
        _
      $region46: #{tpu_custom_call.1} parent=5 // pred_check_branch
        %275 = sbr.rel (%p272) target = $region48
      $region47: #{tpu_custom_call.1} parent=5 // pred_region
        %s276 = ssub.s32 %s21, 1
        %p277 = scmp.lt.s32.totalorder %s26, 1
        %s278 = scalar_select %p277, %s26, 1
        %s279 = smul.addr %s278, 64
        %s280 = smul.addr %s279, 4
        %s281 = scalar_lea.vmem %s0, %s280
        %p282 = pneg %p47
        %p283 = pneg %p44
        %p284 = pneg %p68
        %p285 = pneg %p65
        %p286 = pneg %p89
        %p287 = pneg %p86
        %p288 = pneg %p110
        %p289 = pneg %p107
        %p290 = pneg %p131
        %p291 = pneg %p128
        %p292 = pneg %p152
        %p293 = pneg %p149
        %p294 = pneg %p173
        %p295 = pneg %p170
        %p296 = pneg %p199
        %p297 = pneg %p196
        %s298 = sand.u32 %s186, 1
        %s299 = scalar_lea.sflag [#allocation4], %s298
        %s300 = sand.u32 %s186, 1
        %s301 = smul.addr %s300, 128
        %s302 = scalar_lea.vmem [#allocation3], %s301
        %p303 = pneg %p225
        %p304 = pneg %p222
        %s305 = sand.u32 %s212, 1
        %s306 = scalar_lea.sflag [#allocation6], %s305
        %s307 = sand.u32 %s212, 1
        %s308 = smul.addr %s307, 128
        %s309 = scalar_lea.vmem [#allocation5], %s308
        %p310 = scmp.lt.s32.totalorder %s26, 1
        %s311 = scalar_select %p310, %s26, 1
        %s312 = smul.addr %s311, 64
        %s313 = smul.addr %s312, 4
        %s314 = scalar_lea.vmem %s0, %s313
        %v316 = vld [vmem:[%s314] sm:$0xff]
        %v317 = vld [vmem:[%s314 + $0x8] sm:$0xff]
        %v318 = vld [vmem:[%s314 + $0x10] sm:$0xff]
        %v319 = vld [vmem:[%s314 + $0x18] sm:$0xff]
        %v320 = vld [vmem:[%s314 + $0x20] sm:$0xff]
        %v321 = vld [vmem:[%s314 + $0x28] sm:$0xff]
        %v322 = vld [vmem:[%s314 + $0x30] sm:$0xff]
        %v323 = vld [vmem:[%s314 + $0x38] sm:$0xff]
        %v324 = vld [vmem:[%s314 + $0x40] sm:$0xff]
        %v325 = vld [vmem:[%s314 + $0x48] sm:$0xff]
        %v326 = vld [vmem:[%s314 + $0x50] sm:$0xff]
        %v327 = vld [vmem:[%s314 + $0x58] sm:$0xff]
        %v328 = vld [vmem:[%s314 + $0x60] sm:$0xff]
        %v329 = vld [vmem:[%s314 + $0x68] sm:$0xff]
        %v330 = vld [vmem:[%s314 + $0x70] sm:$0xff]
        %v331 = vld [vmem:[%s314 + $0x78] sm:$0xff]
        %v332 = vld [vmem:[%s314 + $0x80] sm:$0xff]
        %v333 = vld [vmem:[%s314 + $0x88] sm:$0xff]
        %v334 = vld [vmem:[%s314 + $0x90] sm:$0xff]
        %v335 = vld [vmem:[%s314 + $0x98] sm:$0xff]
        %v336 = vld [vmem:[%s314 + $0xa0] sm:$0xff]
        %v337 = vld [vmem:[%s314 + $0xa8] sm:$0xff]
        %v338 = vld [vmem:[%s314 + $0xb0] sm:$0xff]
        %v339 = vld [vmem:[%s314 + $0xb8] sm:$0xff]
        %v340 = vld [vmem:[%s314 + $0xc0] sm:$0xff]
        %v341 = vld [vmem:[%s314 + $0xc8] sm:$0xff]
        %v342 = vld [vmem:[%s314 + $0xd0] sm:$0xff]
        %v343 = vld [vmem:[%s314 + $0xd8] sm:$0xff]
        %v344 = vld [vmem:[%s314 + $0xe0] sm:$0xff]
        %v345 = vld [vmem:[%s314 + $0xe8] sm:$0xff]
        %v346 = vld [vmem:[%s314 + $0xf0] sm:$0xff]
        %v347 = vld [vmem:[%s314 + $0xf8] sm:$0xff]
        %vm348 = vcmask 261120
        %349 = vst.msk [vmem:[#allocation2] sm:$0xff] %vm348, 0.0
        %350 = vst.msk [vmem:[#allocation2 + $0x8] sm:$0xff] %vm348, 0.0
        %vm351 = vcmask 254976
        %352 = vst.msk [vmem:[#allocation2 + $0x10] sm:$0x3] %vm351, 0.0
        %353 = vst.msk [vmem:[#allocation2 + $0x18] sm:$0xff] %vm348, 0.0
        %354 = vst.msk [vmem:[#allocation2 + $0x20] sm:$0xff] %vm348, 0.0
        %355 = vst.msk [vmem:[#allocation2 + $0x28] sm:$0x3] %vm351, 0.0
        %356 = vst.msk [vmem:[#allocation2 + $0x30] sm:$0xff] %vm348, 0.0
        %357 = vst.msk [vmem:[#allocation2 + $0x38] sm:$0xff] %vm348, 0.0
        %358 = vst.msk [vmem:[#allocation2 + $0x40] sm:$0x3] %vm351, 0.0
        %359 = vst.msk [vmem:[#allocation2 + $0x48] sm:$0xff] %vm348, 0.0
        %360 = vst.msk [vmem:[#allocation2 + $0x50] sm:$0xff] %vm348, 0.0
        %361 = vst.msk [vmem:[#allocation2 + $0x58] sm:$0x3] %vm351, 0.0
        %362 = vst.msk [vmem:[#allocation2 + $0x60] sm:$0xff] %vm348, 0.0
        %363 = vst.msk [vmem:[#allocation2 + $0x68] sm:$0xff] %vm348, 0.0
        %364 = vst.msk [vmem:[#allocation2 + $0x70] sm:$0x3] %vm351, 0.0
        %365 = vst.msk [vmem:[#allocation2 + $0x78] sm:$0xff] %vm348, 0.0
        %366 = vst.msk [vmem:[#allocation2 + $0x80] sm:$0xff] %vm348, 0.0
        %367 = vst.msk [vmem:[#allocation2 + $0x88] sm:$0x3] %vm351, 0.0
        %368 = vst.msk [vmem:[#allocation2 + $0x90] sm:$0xff] %vm348, 0.0
        %369 = vst.msk [vmem:[#allocation2 + $0x98] sm:$0xff] %vm348, 0.0
        %370 = vst.msk [vmem:[#allocation2 + $0xa0] sm:$0x3] %vm351, 0.0
        %371 = vst.msk [vmem:[#allocation2 + $0xa8] sm:$0xff] %vm348, 0.0
        %372 = vst.msk [vmem:[#allocation2 + $0xb0] sm:$0xff] %vm348, 0.0
        %373 = vst.msk [vmem:[#allocation2 + $0xb8] sm:$0x3] %vm351, 0.0
        %374 = vst.msk [vmem:[#allocation2 + $0xc0] sm:$0xff] %vm348, 0.0
        %375 = vst.msk [vmem:[#allocation2 + $0xc8] sm:$0xff] %vm348, 0.0
        %376 = vst.msk [vmem:[#allocation2 + $0xd0] sm:$0x3] %vm351, 0.0
        %377 = vst.msk [vmem:[#allocation2 + $0xd8] sm:$0xff] %vm348, 0.0
        %378 = vst.msk [vmem:[#allocation2 + $0xe0] sm:$0xff] %vm348, 0.0
        %379 = vst.msk [vmem:[#allocation2 + $0xe8] sm:$0x3] %vm351, 0.0
        %380 = vst.msk [vmem:[#allocation2 + $0xf0] sm:$0xff] %vm348, 0.0
        %381 = vst.msk [vmem:[#allocation2 + $0xf8] sm:$0xff] %vm348, 0.0
        %382 = vst.msk [vmem:[#allocation2 + $0x100] sm:$0x3] %vm351, 0.0
        %383 = vst.msk [vmem:[#allocation2 + $0x108] sm:$0xff] %vm348, 0.0
        %384 = vst.msk [vmem:[#allocation2 + $0x110] sm:$0xff] %vm348, 0.0
        %385 = vst.msk [vmem:[#allocation2 + $0x118] sm:$0x3] %vm351, 0.0
        %386 = vst.msk [vmem:[#allocation2 + $0x120] sm:$0xff] %vm348, 0.0
        %387 = vst.msk [vmem:[#allocation2 + $0x128] sm:$0xff] %vm348, 0.0
        %388 = vst.msk [vmem:[#allocation2 + $0x130] sm:$0x3] %vm351, 0.0
        %389 = vst.msk [vmem:[#allocation2 + $0x138] sm:$0xff] %vm348, 0.0
        %390 = vst.msk [vmem:[#allocation2 + $0x140] sm:$0xff] %vm348, 0.0
        %391 = vst.msk [vmem:[#allocation2 + $0x148] sm:$0x3] %vm351, 0.0
        %392 = vst.msk [vmem:[#allocation2 + $0x150] sm:$0xff] %vm348, 0.0
        %393 = vst.msk [vmem:[#allocation2 + $0x158] sm:$0xff] %vm348, 0.0
        %394 = vst.msk [vmem:[#allocation2 + $0x160] sm:$0x3] %vm351, 0.0
        %395 = vst.msk [vmem:[#allocation2 + $0x168] sm:$0xff] %vm348, 0.0
        %396 = vst.msk [vmem:[#allocation2 + $0x170] sm:$0xff] %vm348, 0.0
        %397 = vst.msk [vmem:[#allocation2 + $0x178] sm:$0x3] %vm351, 0.0
        %398 = vst.msk [vmem:[#allocation2 + $0x180] sm:$0xff] %vm348, 0.0
        %399 = vst.msk [vmem:[#allocation2 + $0x188] sm:$0xff] %vm348, 0.0
        %400 = vst.msk [vmem:[#allocation2 + $0x190] sm:$0x3] %vm351, 0.0
        %401 = vst.msk [vmem:[#allocation2 + $0x198] sm:$0xff] %vm348, 0.0
        %402 = vst.msk [vmem:[#allocation2 + $0x1a0] sm:$0xff] %vm348, 0.0
        %403 = vst.msk [vmem:[#allocation2 + $0x1a8] sm:$0x3] %vm351, 0.0
        %v404 = vld [vmem:[%s1] sm:$0xf]
        %v405 = vld [vmem:[%s1 + $0x4] sm:$0xf]
        %v406 = vld [vmem:[%s1 + $0x8] sm:$0xf]
        %v407 = vld [vmem:[%s1 + $0xc] sm:$0xf]
        %v408 = vld [vmem:[%s1 + $0x10] sm:$0xf]
        %v409 = vld [vmem:[%s1 + $0x14] sm:$0xf]
        %v410 = vld [vmem:[%s1 + $0x18] sm:$0xf]
        %v411 = vld [vmem:[%s1 + $0x1c] sm:$0xf]
        %v412 = vld [vmem:[%s1 + $0x20] sm:$0xf]
        %v413 = vld [vmem:[%s1 + $0x24] sm:$0xf]
        %v414 = vld [vmem:[%s1 + $0x28] sm:$0xf]
        %v415 = vld [vmem:[%s1 + $0x2c] sm:$0xf]
        %v416 = vld [vmem:[%s1 + $0x30] sm:$0xf]
        %v417 = vld [vmem:[%s1 + $0x34] sm:$0xf]
        %v418 = vld [vmem:[%s1 + $0x38] sm:$0xf]
        %v419 = vld [vmem:[%s1 + $0x3c] sm:$0xf]
        %v420 = vld [vmem:[%s1 + $0x40] sm:$0xf]
        %v421 = vld [vmem:[%s1 + $0x44] sm:$0xf]
        %v422 = vld [vmem:[%s1 + $0x48] sm:$0xf]
        %v423 = vld [vmem:[%s1 + $0x4c] sm:$0xf]
        %v424 = vld [vmem:[%s1 + $0x50] sm:$0xf]
        %v425 = vld [vmem:[%s1 + $0x54] sm:$0xf]
        %v426 = vld [vmem:[%s1 + $0x58] sm:$0xf]
        %v427 = vld [vmem:[%s1 + $0x5c] sm:$0xf]
        %v428 = vld [vmem:[%s1 + $0x60] sm:$0xf]
        %v429 = vld [vmem:[%s1 + $0x64] sm:$0xf]
        %v430 = vld [vmem:[%s1 + $0x68] sm:$0xf]
        %v431 = vld [vmem:[%s1 + $0x6c] sm:$0xf]
        %v432 = vld [vmem:[%s1 + $0x70] sm:$0xf]
        %v433 = vld [vmem:[%s1 + $0x74] sm:$0xf]
        %v434 = vld [vmem:[%s1 + $0x78] sm:$0xf]
        %v435 = vld [vmem:[%s1 + $0x7c] sm:$0xf]
        %v468 = vunpack.c.l.b16 %v316
        %v469 = vunpack.c.h.b16 %v316
        %v470 = vunpack.c.l.b16 %v317
        %v471 = vunpack.c.h.b16 %v317
        %v472 = vunpack.c.l.b16 %v318
        %v473 = vunpack.c.h.b16 %v318
        %v474 = vunpack.c.l.b16 %v319
        %v475 = vunpack.c.h.b16 %v319
        %v476 = vunpack.c.l.b16 %v320
        %v477 = vunpack.c.h.b16 %v320
        %v478 = vunpack.c.l.b16 %v321
        %v479 = vunpack.c.h.b16 %v321
        %v480 = vunpack.c.l.b16 %v322
        %v481 = vunpack.c.h.b16 %v322
        %v482 = vunpack.c.l.b16 %v323
        %v483 = vunpack.c.h.b16 %v323
        %v484 = vunpack.c.l.b16 %v324
        %v485 = vunpack.c.h.b16 %v324
        %v486 = vunpack.c.l.b16 %v325
        %v487 = vunpack.c.h.b16 %v325
        %v488 = vunpack.c.l.b16 %v326
        %v489 = vunpack.c.h.b16 %v326
        %v490 = vunpack.c.l.b16 %v327
        %v491 = vunpack.c.h.b16 %v327
        %v492 = vunpack.c.l.b16 %v328
        %v493 = vunpack.c.h.b16 %v328
        %v494 = vunpack.c.l.b16 %v329
        %v495 = vunpack.c.h.b16 %v329
        %v496 = vunpack.c.l.b16 %v330
        %v497 = vunpack.c.h.b16 %v330
        %v498 = vunpack.c.l.b16 %v331
        %v499 = vunpack.c.h.b16 %v331
        %v500 = vunpack.c.l.b16 %v332
        %v501 = vunpack.c.h.b16 %v332
        %v502 = vunpack.c.l.b16 %v333
        %v503 = vunpack.c.h.b16 %v333
        %v504 = vunpack.c.l.b16 %v334
        %v505 = vunpack.c.h.b16 %v334
        %v506 = vunpack.c.l.b16 %v335
        %v507 = vunpack.c.h.b16 %v335
        %v508 = vunpack.c.l.b16 %v336
        %v509 = vunpack.c.h.b16 %v336
        %v510 = vunpack.c.l.b16 %v337
        %v511 = vunpack.c.h.b16 %v337
        %v512 = vunpack.c.l.b16 %v338
        %v513 = vunpack.c.h.b16 %v338
        %v514 = vunpack.c.l.b16 %v339
        %v515 = vunpack.c.h.b16 %v339
        %v516 = vunpack.c.l.b16 %v340
        %v517 = vunpack.c.h.b16 %v340
        %v518 = vunpack.c.l.b16 %v341
        %v519 = vunpack.c.h.b16 %v341
        %v520 = vunpack.c.l.b16 %v342
        %v521 = vunpack.c.h.b16 %v342
        %v522 = vunpack.c.l.b16 %v343
        %v523 = vunpack.c.h.b16 %v343
        %v524 = vunpack.c.l.b16 %v344
        %v525 = vunpack.c.h.b16 %v344
        %v526 = vunpack.c.l.b16 %v345
        %v527 = vunpack.c.h.b16 %v345
        %v528 = vunpack.c.l.b16 %v346
        %v529 = vunpack.c.h.b16 %v346
        %v530 = vunpack.c.l.b16 %v347
        %v531 = vunpack.c.h.b16 %v347
        %v532 = vpack.c.b16 %v470, %v468
        %v533 = vpack.c.b16 %v471, %v469
        %v534 = vpack.c.b16 %v474, %v472
        %v535 = vpack.c.b16 %v475, %v473
        %v536 = vpack.c.b16 %v478, %v476
        %v537 = vpack.c.b16 %v479, %v477
        %v538 = vpack.c.b16 %v482, %v480
        %v539 = vpack.c.b16 %v483, %v481
        %v540 = vpack.c.b16 %v486, %v484
        %v541 = vpack.c.b16 %v487, %v485
        %v542 = vpack.c.b16 %v490, %v488
        %v543 = vpack.c.b16 %v491, %v489
        %v544 = vpack.c.b16 %v494, %v492
        %v545 = vpack.c.b16 %v495, %v493
        %v546 = vpack.c.b16 %v498, %v496
        %v547 = vpack.c.b16 %v499, %v497
        %v548 = vpack.c.b16 %v502, %v500
        %v549 = vpack.c.b16 %v503, %v501
        %v550 = vpack.c.b16 %v506, %v504
        %v551 = vpack.c.b16 %v507, %v505
        %v552 = vpack.c.b16 %v510, %v508
        %v553 = vpack.c.b16 %v511, %v509
        %v554 = vpack.c.b16 %v514, %v512
        %v555 = vpack.c.b16 %v515, %v513
        %v556 = vpack.c.b16 %v518, %v516
        %v557 = vpack.c.b16 %v519, %v517
        %v558 = vpack.c.b16 %v522, %v520
        %v559 = vpack.c.b16 %v523, %v521
        %v560 = vpack.c.b16 %v526, %v524
        %v561 = vpack.c.b16 %v527, %v525
        %v562 = vpack.c.b16 %v530, %v528
        %v563 = vpack.c.b16 %v531, %v529
        %v628 = vunpack.c.l.b16 %v404
        %v629 = vunpack.c.l.b16 %v405
        %v630 = vunpack.c.l.b16 %v406
        %v631 = vunpack.c.l.b16 %v407
        %v632 = vunpack.c.l.b16 %v408
        %v633 = vunpack.c.l.b16 %v409
        %v634 = vunpack.c.l.b16 %v410
        %v635 = vunpack.c.l.b16 %v411
        %v636 = vunpack.c.l.b16 %v412
        %v637 = vunpack.c.l.b16 %v413
        %v638 = vunpack.c.l.b16 %v414
        %v639 = vunpack.c.l.b16 %v415
        %v640 = vunpack.c.l.b16 %v416
        %v641 = vunpack.c.l.b16 %v417
        %v642 = vunpack.c.l.b16 %v418
        %v643 = vunpack.c.l.b16 %v419
        %v644 = vunpack.c.l.b16 %v420
        %v645 = vunpack.c.l.b16 %v421
        %v646 = vunpack.c.l.b16 %v422
        %v647 = vunpack.c.l.b16 %v423
        %v648 = vunpack.c.l.b16 %v424
        %v649 = vunpack.c.l.b16 %v425
        %v650 = vunpack.c.l.b16 %v426
        %v651 = vunpack.c.l.b16 %v427
        %v652 = vunpack.c.l.b16 %v428
        %v653 = vunpack.c.l.b16 %v429
        %v654 = vunpack.c.l.b16 %v430
        %v655 = vunpack.c.l.b16 %v431
        %v656 = vunpack.c.l.b16 %v432
        %v657 = vunpack.c.l.b16 %v433
        %v658 = vunpack.c.l.b16 %v434
        %v659 = vunpack.c.l.b16 %v435
        %v660 = vpack.c.b16 %v629, %v628
        %v661 = vpack.c.b16 %v631, %v630
        %v662 = vpack.c.b16 %v633, %v632
        %v663 = vpack.c.b16 %v635, %v634
        %v664 = vpack.c.b16 %v637, %v636
        %v665 = vpack.c.b16 %v639, %v638
        %v666 = vpack.c.b16 %v641, %v640
        %v667 = vpack.c.b16 %v643, %v642
        %v668 = vpack.c.b16 %v645, %v644
        %v669 = vpack.c.b16 %v647, %v646
        %v670 = vpack.c.b16 %v649, %v648
        %v671 = vpack.c.b16 %v651, %v650
        %v672 = vpack.c.b16 %v653, %v652
        %v673 = vpack.c.b16 %v655, %v654
        %v674 = vpack.c.b16 %v657, %v656
        %v675 = vpack.c.b16 %v659, %v658
        %692 = vmatprep.subr.bf16.mxu0 0
        %693 = vmatpush1.bf16.msra.mxu0 %v660
        %694 = vmatprep.subr.bf16.mxu0 0
        %695 = vmatpush1.bf16.msra.mxu0 %v661
        %696 = vmatprep.subr.bf16.mxu0 0
        %697 = vmatpush1.bf16.msra.mxu0 %v662
        %698 = vmatprep.subr.bf16.mxu0 0
        %699 = vmatpush1.bf16.msra.mxu0 %v663
        %700 = vmatprep.subr.bf16.mxu0 0
        %701 = vmatpush1.bf16.msra.mxu0 %v664
        %702 = vmatprep.subr.bf16.mxu0 0
        %703 = vmatpush1.bf16.msra.mxu0 %v665
        %704 = vmatprep.subr.bf16.mxu0 0
        %705 = vmatpush1.bf16.msra.mxu0 %v666
        %706 = vmatprep.subr.bf16.mxu0 0
        %707 = vmatpush1.bf16.msra.mxu0 %v667
        %708 = vmatprep.subr.bf16.mxu0 0
        %709 = vmatpush1.bf16.msra.mxu0 %v668
        %710 = vmatprep.subr.bf16.mxu0 0
        %711 = vmatpush1.bf16.msra.mxu0 %v669
        %712 = vmatprep.subr.bf16.mxu0 0
        %713 = vmatpush1.bf16.msra.mxu0 %v670
        %714 = vmatprep.subr.bf16.mxu0 0
        %715 = vmatpush1.bf16.msra.mxu0 %v671
        %716 = vmatprep.subr.bf16.mxu0 0
        %717 = vmatpush1.bf16.msra.mxu0 %v672
        %718 = vmatprep.subr.bf16.mxu0 0
        %719 = vmatpush1.bf16.msra.mxu0 %v673
        %720 = vmatprep.subr.bf16.mxu0 0
        %721 = vmatpush1.bf16.msra.mxu0 %v674
        %722 = vmatprep.subr.bf16.mxu0 0
        %723 = vmatpush1.bf16.msra.mxu0 %v675
        %724 = vmatprep.mubr.bf16.mxu0 %v533
        %725 = vmatmul.mubr.bf16.gmra.mrb[0].mxu0 %v532
        %v726 = vpop.f32.mrb[0].mxu0
        %v727 = vadd.f32 0.0, %v726
        %v728 = vpop.f32.mrb[0].mxu0
        %v729 = vpop.f32.mrb[0].mxu0
        %v730 = vadd.f32 0.0, %v729
        %v731 = vpop.f32.mrb[0].mxu0
        %732 = vmatprep.mubr.bf16.mxu0 %v535
        %733 = vmatmul.mubr.bf16.gmra.mrb[0].mxu0 %v534
        %v734 = vpop.f32.mrb[0].mxu0
        %v735 = vadd.f32 0.0, %v734
        %v736 = vpop.f32.mrb[0].mxu0
        %v737 = vpop.f32.mrb[0].mxu0
        %v738 = vadd.f32 0.0, %v737
        %v739 = vpop.f32.mrb[0].mxu0
        %740 = vmatprep.mubr.bf16.mxu0 %v537
        %741 = vmatmul.mubr.bf16.gmra.mrb[0].mxu0 %v536
        %v742 = vpop.f32.mrb[0].mxu0
        %v743 = vadd.f32 0.0, %v742
        %v744 = vpop.f32.mrb[0].mxu0
        %v745 = vpop.f32.mrb[0].mxu0
        %v746 = vadd.f32 0.0, %v745
        %v747 = vpop.f32.mrb[0].mxu0
        %748 = vmatprep.mubr.bf16.mxu0 %v539
        %749 = vmatmul.mubr.bf16.gmra.mrb[0].mxu0 %v538
        %v750 = vpop.f32.mrb[0].mxu0
        %v751 = vadd.f32 0.0, %v750
        %v752 = vpop.f32.mrb[0].mxu0
        %v753 = vpop.f32.mrb[0].mxu0
        %v754 = vadd.f32 0.0, %v753
        %v755 = vpop.f32.mrb[0].mxu0
        %756 = vmatprep.mubr.bf16.mxu0 %v541
        %757 = vmatmul.mubr.bf16.gmra.mrb[0].mxu0 %v540
        %v758 = vpop.f32.mrb[0].mxu0
        %v759 = vadd.f32 0.0, %v758
        %v760 = vpop.f32.mrb[0].mxu0
        %v761 = vpop.f32.mrb[0].mxu0
        %v762 = vadd.f32 0.0, %v761
        %v763 = vpop.f32.mrb[0].mxu0
        %764 = vmatprep.mubr.bf16.mxu0 %v543
        %765 = vmatmul.mubr.bf16.gmra.mrb[0].mxu0 %v542
        %v766 = vpop.f32.mrb[0].mxu0
        %v767 = vadd.f32 0.0, %v766
        %v768 = vpop.f32.mrb[0].mxu0
        %v769 = vpop.f32.mrb[0].mxu0
        %v770 = vadd.f32 0.0, %v769
        %v771 = vpop.f32.mrb[0].mxu0
        %772 = vmatprep.mubr.bf16.mxu0 %v545
        %773 = vmatmul.mubr.bf16.gmra.mrb[0].mxu0 %v544
        %v774 = vpop.f32.mrb[0].mxu0
        %v775 = vadd.f32 0.0, %v774
        %v776 = vpop.f32.mrb[0].mxu0
        %v777 = vpop.f32.mrb[0].mxu0
        %v778 = vadd.f32 0.0, %v777
        %v779 = vpop.f32.mrb[0].mxu0
        %780 = vmatprep.mubr.bf16.mxu0 %v547
        %781 = vmatmul.mubr.bf16.gmra.mrb[0].mxu0 %v546
        %v782 = vpop.f32.mrb[0].mxu0
        %v783 = vadd.f32 0.0, %v782
        %v784 = vpop.f32.mrb[0].mxu0
        %v785 = vpop.f32.mrb[0].mxu0
        %v786 = vadd.f32 0.0, %v785
        %v787 = vpop.f32.mrb[0].mxu0
        %788 = vmatprep.mubr.bf16.mxu0 %v549
        %789 = vmatmul.mubr.bf16.gmra.mrb[0].mxu0 %v548
        %v790 = vpop.f32.mrb[0].mxu0
        %v791 = vadd.f32 0.0, %v790
        %v792 = vpop.f32.mrb[0].mxu0
        %v793 = vpop.f32.mrb[0].mxu0
        %v794 = vadd.f32 0.0, %v793
        %v795 = vpop.f32.mrb[0].mxu0
        %796 = vmatprep.mubr.bf16.mxu0 %v551
        %797 = vmatmul.mubr.bf16.gmra.mrb[0].mxu0 %v550
        %v798 = vpop.f32.mrb[0].mxu0
        %v799 = vadd.f32 0.0, %v798
        %v800 = vpop.f32.mrb[0].mxu0
        %v801 = vpop.f32.mrb[0].mxu0
        %v802 = vadd.f32 0.0, %v801
        %v803 = vpop.f32.mrb[0].mxu0
        %804 = vmatprep.mubr.bf16.mxu0 %v553
        %805 = vmatmul.mubr.bf16.gmra.mrb[0].mxu0 %v552
        %v806 = vpop.f32.mrb[0].mxu0
        %v807 = vadd.f32 0.0, %v806
        %v808 = vpop.f32.mrb[0].mxu0
        %v809 = vpop.f32.mrb[0].mxu0
        %v810 = vadd.f32 0.0, %v809
        %v811 = vpop.f32.mrb[0].mxu0
        %812 = vmatprep.mubr.bf16.mxu0 %v555
        %813 = vmatmul.mubr.bf16.gmra.mrb[0].mxu0 %v554
        %v814 = vpop.f32.mrb[0].mxu0
        %v815 = vadd.f32 0.0, %v814
        %v816 = vpop.f32.mrb[0].mxu0
        %v817 = vpop.f32.mrb[0].mxu0
        %v818 = vadd.f32 0.0, %v817
        %v819 = vpop.f32.mrb[0].mxu0
        %820 = vmatprep.mubr.bf16.mxu0 %v557
        %821 = vmatmul.mubr.bf16.gmra.mrb[0].mxu0 %v556
        %v822 = vpop.f32.mrb[0].mxu0
        %v823 = vadd.f32 0.0, %v822
        %v824 = vpop.f32.mrb[0].mxu0
        %v825 = vpop.f32.mrb[0].mxu0
        %v826 = vadd.f32 0.0, %v825
        %v827 = vpop.f32.mrb[0].mxu0
        %828 = vmatprep.mubr.bf16.mxu0 %v559
        %829 = vmatmul.mubr.bf16.gmra.mrb[0].mxu0 %v558
        %v830 = vpop.f32.mrb[0].mxu0
        %v831 = vadd.f32 0.0, %v830
        %v832 = vpop.f32.mrb[0].mxu0
        %v833 = vpop.f32.mrb[0].mxu0
        %v834 = vadd.f32 0.0, %v833
        %v835 = vpop.f32.mrb[0].mxu0
        %836 = vmatprep.mubr.bf16.mxu0 %v561
        %837 = vmatmul.mubr.bf16.gmra.mrb[0].mxu0 %v560
        %v838 = vpop.f32.mrb[0].mxu0
        %v839 = vadd.f32 0.0, %v838
        %v840 = vpop.f32.mrb[0].mxu0
        %v841 = vpop.f32.mrb[0].mxu0
        %v842 = vadd.f32 0.0, %v841
        %v843 = vpop.f32.mrb[0].mxu0
        %844 = vmatprep.mubr.bf16.mxu0 %v563
        %845 = vmatmul.mubr.bf16.gmra.mrb[0].mxu0 %v562
        %v846 = vpop.f32.mrb[0].mxu0
        %v847 = vadd.f32 0.0, %v846
        %v848 = vpop.f32.mrb[0].mxu0
        %v849 = vpop.f32.mrb[0].mxu0
        %v850 = vadd.f32 0.0, %v849
        %v851 = vpop.f32.mrb[0].mxu0
        %852 = vdwg.mxu0
        %s853 = scalar_lea.vmem [#allocation2], 48
        %v854 = vld [vmem:[%s853 + $0x2] sm:$0xff]
        %v855 = vld [vmem:[%s853 + $0xa] sm:$0xff]
        %v856 = vld [vmem:[%s853 + $0x1a] sm:$0xff]
        %v857 = vld [vmem:[%s853 + $0x22] sm:$0xff]
        %v858 = vld [vmem:[%s853 + $0x32] sm:$0xff]
        %v859 = vld [vmem:[%s853 + $0x3a] sm:$0xff]
        %v860 = vld [vmem:[%s853 + $0x4a] sm:$0xff]
        %v861 = vld [vmem:[%s853 + $0x52] sm:$0xff]
        %v862 = vld [vmem:[%s853 + $0x62] sm:$0xff]
        %v863 = vld [vmem:[%s853 + $0x6a] sm:$0xff]
        %v864 = vld [vmem:[%s853 + $0x7a] sm:$0xff]
        %v865 = vld [vmem:[%s853 + $0x82] sm:$0xff]
        %v866 = vld [vmem:[%s853 + $0x92] sm:$0xff]
        %v867 = vld [vmem:[%s853 + $0x9a] sm:$0xff]
        %v868 = vld [vmem:[%s853 + $0xaa] sm:$0xff]
        %v869 = vld [vmem:[%s853 + $0xb2] sm:$0xff]
        %v870 = vld [vmem:[%s853 + $0xc2] sm:$0xff]
        %v871 = vld [vmem:[%s853 + $0xca] sm:$0xff]
        %v872 = vld [vmem:[%s853 + $0xda] sm:$0xff]
        %v873 = vld [vmem:[%s853 + $0xe2] sm:$0xff]
        %v874 = vld [vmem:[%s853 + $0xf2] sm:$0xff]
        %v875 = vld [vmem:[%s853 + $0xfa] sm:$0xff]
        %v876 = vld [vmem:[%s853 + $0x10a] sm:$0xff]
        %v877 = vld [vmem:[%s853 + $0x112] sm:$0xff]
        %v878 = vld [vmem:[%s853 + $0x122] sm:$0xff]
        %v879 = vld [vmem:[%s853 + $0x12a] sm:$0xff]
        %v880 = vld [vmem:[%s853 + $0x13a] sm:$0xff]
        %v881 = vld [vmem:[%s853 + $0x142] sm:$0xff]
        %v882 = vld [vmem:[%s853 + $0x152] sm:$0xff]
        %v883 = vld [vmem:[%s853 + $0x15a] sm:$0xff]
        %v884 = vld [vmem:[%s853 + $0x16a] sm:$0xff]
        %v885 = vld [vmem:[%s853 + $0x172] sm:$0xff]
        %v886 = vadd.f32 %v854, %v727
        %v887 = vadd.f32 %v855, %v730
        %v888 = vadd.f32 %v856, %v735
        %v889 = vadd.f32 %v857, %v738
        %v890 = vadd.f32 %v858, %v743
        %v891 = vadd.f32 %v859, %v746
        %v892 = vadd.f32 %v860, %v751
        %v893 = vadd.f32 %v861, %v754
        %v894 = vadd.f32 %v862, %v759
        %v895 = vadd.f32 %v863, %v762
        %v896 = vadd.f32 %v864, %v767
        %v897 = vadd.f32 %v865, %v770
        %v898 = vadd.f32 %v866, %v775
        %v899 = vadd.f32 %v867, %v778
        %v900 = vadd.f32 %v868, %v783
        %v901 = vadd.f32 %v869, %v786
        %v902 = vadd.f32 %v870, %v791
        %v903 = vadd.f32 %v871, %v794
        %v904 = vadd.f32 %v872, %v799
        %v905 = vadd.f32 %v873, %v802
        %v906 = vadd.f32 %v874, %v807
        %v907 = vadd.f32 %v875, %v810
        %v908 = vadd.f32 %v876, %v815
        %v909 = vadd.f32 %v877, %v818
        %v910 = vadd.f32 %v878, %v823
        %v911 = vadd.f32 %v879, %v826
        %v912 = vadd.f32 %v880, %v831
        %v913 = vadd.f32 %v881, %v834
        %v914 = vadd.f32 %v882, %v839
        %v915 = vadd.f32 %v883, %v842
        %v916 = vadd.f32 %v884, %v847
        %v917 = vadd.f32 %v885, %v850
        %918 = vst.msk [vmem:[%s853 + $0x2] sm:$0xff] %vm348, %v886
        %919 = vst.msk [vmem:[%s853 + $0xa] sm:$0xff] %vm348, %v887
        %920 = vst.msk [vmem:[%s853 + $0x1a] sm:$0xff] %vm348, %v888
        %921 = vst.msk [vmem:[%s853 + $0x22] sm:$0xff] %vm348, %v889
        %922 = vst.msk [vmem:[%s853 + $0x32] sm:$0xff] %vm348, %v890
        %923 = vst.msk [vmem:[%s853 + $0x3a] sm:$0xff] %vm348, %v891
        %924 = vst.msk [vmem:[%s853 + $0x4a] sm:$0xff] %vm348, %v892
        %925 = vst.msk [vmem:[%s853 + $0x52] sm:$0xff] %vm348, %v893
        %926 = vst.msk [vmem:[%s853 + $0x62] sm:$0xff] %vm348, %v894
        %927 = vst.msk [vmem:[%s853 + $0x6a] sm:$0xff] %vm348, %v895
        %928 = vst.msk [vmem:[%s853 + $0x7a] sm:$0xff] %vm348, %v896
        %929 = vst.msk [vmem:[%s853 + $0x82] sm:$0xff] %vm348, %v897
        %930 = vst.msk [vmem:[%s853 + $0x92] sm:$0xff] %vm348, %v898
        %931 = vst.msk [vmem:[%s853 + $0x9a] sm:$0xff] %vm348, %v899
        %932 = vst.msk [vmem:[%s853 + $0xaa] sm:$0xff] %vm348, %v900
        %933 = vst.msk [vmem:[%s853 + $0xb2] sm:$0xff] %vm348, %v901
        %934 = vst.msk [vmem:[%s853 + $0xc2] sm:$0xff] %vm348, %v902
        %935 = vst.msk [vmem:[%s853 + $0xca] sm:$0xff] %vm348, %v903
        %936 = vst.msk [vmem:[%s853 + $0xda] sm:$0xff] %vm348, %v904
        %937 = vst.msk [vmem:[%s853 + $0xe2] sm:$0xff] %vm348, %v905
        %938 = vst.msk [vmem:[%s853 + $0xf2] sm:$0xff] %vm348, %v906
        %939 = vst.msk [vmem:[%s853 + $0xfa] sm:$0xff] %vm348, %v907
        %940 = vst.msk [vmem:[%s853 + $0x10a] sm:$0xff] %vm348, %v908
        %941 = vst.msk [vmem:[%s853 + $0x112] sm:$0xff] %vm348, %v909
        %942 = vst.msk [vmem:[%s853 + $0x122] sm:$0xff] %vm348, %v910
        %943 = vst.msk [vmem:[%s853 + $0x12a] sm:$0xff] %vm348, %v911
        %944 = vst.msk [vmem:[%s853 + $0x13a] sm:$0xff] %vm348, %v912
        %945 = vst.msk [vmem:[%s853 + $0x142] sm:$0xff] %vm348, %v913
        %946 = vst.msk [vmem:[%s853 + $0x152] sm:$0xff] %vm348, %v914
        %947 = vst.msk [vmem:[%s853 + $0x15a] sm:$0xff] %vm348, %v915
        %948 = vst.msk [vmem:[%s853 + $0x16a] sm:$0xff] %vm348, %v916
        %949 = vst.msk [vmem:[%s853 + $0x172] sm:$0xff] %vm348, %v917
        %s950 = scalar_lea.vmem %s1, 128
        %v951 = vld [vmem:[%s950] sm:$0xf]
        %v952 = vld [vmem:[%s950 + $0x4] sm:$0xf]
        %v953 = vld [vmem:[%s950 + $0x8] sm:$0xf]
        %v954 = vld [vmem:[%s950 + $0xc] sm:$0xf]
        %v955 = vld [vmem:[%s950 + $0x10] sm:$0xf]
        %v956 = vld [vmem:[%s950 + $0x14] sm:$0xf]
        %v957 = vld [vmem:[%s950 + $0x18] sm:$0xf]
        %v958 = vld [vmem:[%s950 + $0x1c] sm:$0xf]
        %v959 = vld [vmem:[%s950 + $0x20] sm:$0xf]
        %v960 = vld [vmem:[%s950 + $0x24] sm:$0xf]
        %v961 = vld [vmem:[%s950 + $0x28] sm:$0xf]
        %v962 = vld [vmem:[%s950 + $0x2c] sm:$0xf]
        %v963 = vld [vmem:[%s950 + $0x30] sm:$0xf]
        %v964 = vld [vmem:[%s950 + $0x34] sm:$0xf]
        %v965 = vld [vmem:[%s950 + $0x38] sm:$0xf]
        %v966 = vld [vmem:[%s950 + $0x3c] sm:$0xf]
        %v967 = vld [vmem:[%s950 + $0x40] sm:$0xf]
        %v968 = vld [vmem:[%s950 + $0x44] sm:$0xf]
        %v969 = vld [vmem:[%s950 + $0x48] sm:$0xf]
        %v970 = vld [vmem:[%s950 + $0x4c] sm:$0xf]
        %v971 = vld [vmem:[%s950 + $0x50] sm:$0xf]
        %v972 = vld [vmem:[%s950 + $0x54] sm:$0xf]
        %v973 = vld [vmem:[%s950 + $0x58] sm:$0xf]
        %v974 = vld [vmem:[%s950 + $0x5c] sm:$0xf]
        %v975 = vld [vmem:[%s950 + $0x60] sm:$0xf]
        %v976 = vld [vmem:[%s950 + $0x64] sm:$0xf]
        %v977 = vld [vmem:[%s950 + $0x68] sm:$0xf]
        %v978 = vld [vmem:[%s950 + $0x6c] sm:$0xf]
        %v979 = vld [vmem:[%s950 + $0x70] sm:$0xf]
        %v980 = vld [vmem:[%s950 + $0x74] sm:$0xf]
        %v981 = vld [vmem:[%s950 + $0x78] sm:$0xf]
        %v982 = vld [vmem:[%s950 + $0x7c] sm:$0xf]
        %v1015 = vunpack.c.l.b16 %v951
        %v1016 = vunpack.c.l.b16 %v952
        %v1017 = vunpack.c.l.b16 %v953
        %v1018 = vunpack.c.l.b16 %v954
        %v1019 = vunpack.c.l.b16 %v955
        %v1020 = vunpack.c.l.b16 %v956
        %v1021 = vunpack.c.l.b16 %v957
        %v1022 = vunpack.c.l.b16 %v958
        %v1023 = vunpack.c.l.b16 %v959
        %v1024 = vunpack.c.l.b16 %v960
        %v1025 = vunpack.c.l.b16 %v961
        %v1026 = vunpack.c.l.b16 %v962
        %v1027 = vunpack.c.l.b16 %v963
        %v1028 = vunpack.c.l.b16 %v964
        %v1029 = vunpack.c.l.b16 %v965
        %v1030 = vunpack.c.l.b16 %v966
        %v1031 = vunpack.c.l.b16 %v967
        %v1032 = vunpack.c.l.b16 %v968
        %v1033 = vunpack.c.l.b16 %v969
        %v1034 = vunpack.c.l.b16 %v970
        %v1035 = vunpack.c.l.b16 %v971
        %v1036 = vunpack.c.l.b16 %v972
        %v1037 = vunpack.c.l.b16 %v973
        %v1038 = vunpack.c.l.b16 %v974
        %v1039 = vunpack.c.l.b16 %v975
        %v1040 = vunpack.c.l.b16 %v976
        %v1041 = vunpack.c.l.b16 %v977
        %v1042 = vunpack.c.l.b16 %v978
        %v1043 = vunpack.c.l.b16 %v979
        %v1044 = vunpack.c.l.b16 %v980
        %v1045 = vunpack.c.l.b16 %v981
        %v1046 = vunpack.c.l.b16 %v982
        %v1047 = vpack.c.b16 %v1016, %v1015
        %v1048 = vpack.c.b16 %v1018, %v1017
        %v1049 = vpack.c.b16 %v1020, %v1019
        %v1050 = vpack.c.b16 %v1022, %v1021
        %v1051 = vpack.c.b16 %v1024, %v1023
        %v1052 = vpack.c.b16 %v1026, %v1025
        %v1053 = vpack.c.b16 %v1028, %v1027
        %v1054 = vpack.c.b16 %v1030, %v1029
        %v1055 = vpack.c.b16 %v1032, %v1031
        %v1056 = vpack.c.b16 %v1034, %v1033
        %v1057 = vpack.c.b16 %v1036, %v1035
        %v1058 = vpack.c.b16 %v1038, %v1037
        %v1059 = vpack.c.b16 %v1040, %v1039
        %v1060 = vpack.c.b16 %v1042, %v1041
        %v1061 = vpack.c.b16 %v1044, %v1043
        %v1062 = vpack.c.b16 %v1046, %v1045
        %1079 = vmatprep.subr.bf16.mxu0 0
        %1080 = vmatpush1.bf16.msra.mxu0 %v1047
        %1081 = vmatprep.subr.bf16.mxu0 0
        %1082 = vmatpush1.bf16.msra.mxu0 %v1048
        %1083 = vmatprep.subr.bf16.mxu0 0
        %1084 = vmatpush1.bf16.msra.mxu0 %v1049
        %1085 = vmatprep.subr.bf16.mxu0 0
        %1086 = vmatpush1.bf16.msra.mxu0 %v1050
        %1087 = vmatprep.subr.bf16.mxu0 0
        %1088 = vmatpush1.bf16.msra.mxu0 %v1051
        %1089 = vmatprep.subr.bf16.mxu0 0
        %1090 = vmatpush1.bf16.msra.mxu0 %v1052
        %1091 = vmatprep.subr.bf16.mxu0 0
        %1092 = vmatpush1.bf16.msra.mxu0 %v1053
        %1093 = vmatprep.subr.bf16.mxu0 0
        %1094 = vmatpush1.bf16.msra.mxu0 %v1054
        %1095 = vmatprep.subr.bf16.mxu0 0
        %1096 = vmatpush1.bf16.msra.mxu0 %v1055
        %1097 = vmatprep.subr.bf16.mxu0 0
        %1098 = vmatpush1.bf16.msra.mxu0 %v1056
        %1099 = vmatprep.subr.bf16.mxu0 0
        %1100 = vmatpush1.bf16.msra.mxu0 %v1057
        %1101 = vmatprep.subr.bf16.mxu0 0
        %1102 = vmatpush1.bf16.msra.mxu0 %v1058
        %1103 = vmatprep.subr.bf16.mxu0 0
        %1104 = vmatpush1.bf16.msra.mxu0 %v1059
        %1105 = vmatprep.subr.bf16.mxu0 0
        %1106 = vmatpush1.bf16.msra.mxu0 %v1060
        %1107 = vmatprep.subr.bf16.mxu0 0
        %1108 = vmatpush1.bf16.msra.mxu0 %v1061
        %1109 = vmatprep.subr.bf16.mxu0 0
        %1110 = vmatpush1.bf16.msra.mxu0 %v1062
        %1111 = vmatprep.mubr.bf16.mxu0 %v533
        %1112 = vmatmul.mubr.bf16.gmra.mrb[0].mxu0 %v532
        %v1113 = vpop.f32.mrb[0].mxu0
        %v1114 = vadd.f32 0.0, %v1113
        %v1115 = vpop.f32.mrb[0].mxu0
        %v1116 = vpop.f32.mrb[0].mxu0
        %v1117 = vadd.f32 0.0, %v1116
        %v1118 = vpop.f32.mrb[0].mxu0
        %1119 = vmatprep.mubr.bf16.mxu0 %v535
        %1120 = vmatmul.mubr.bf16.gmra.mrb[0].mxu0 %v534
        %v1121 = vpop.f32.mrb[0].mxu0
        %v1122 = vadd.f32 0.0, %v1121
        %v1123 = vpop.f32.mrb[0].mxu0
        %v1124 = vpop.f32.mrb[0].mxu0
        %v1125 = vadd.f32 0.0, %v1124
        %v1126 = vpop.f32.mrb[0].mxu0
        %1127 = vmatprep.mubr.bf16.mxu0 %v537
        %1128 = vmatmul.mubr.bf16.gmra.mrb[0].mxu0 %v536
        %v1129 = vpop.f32.mrb[0].mxu0
        %v1130 = vadd.f32 0.0, %v1129
        %v1131 = vpop.f32.mrb[0].mxu0
        %v1132 = vpop.f32.mrb[0].mxu0
        %v1133 = vadd.f32 0.0, %v1132
        %v1134 = vpop.f32.mrb[0].mxu0
        %1135 = vmatprep.mubr.bf16.mxu0 %v539
        %1136 = vmatmul.mubr.bf16.gmra.mrb[0].mxu0 %v538
        %v1137 = vpop.f32.mrb[0].mxu0
        %v1138 = vadd.f32 0.0, %v1137
        %v1139 = vpop.f32.mrb[0].mxu0
        %v1140 = vpop.f32.mrb[0].mxu0
        %v1141 = vadd.f32 0.0, %v1140
        %v1142 = vpop.f32.mrb[0].mxu0
        %1143 = vmatprep.mubr.bf16.mxu0 %v541
        %1144 = vmatmul.mubr.bf16.gmra.mrb[0].mxu0 %v540
        %v1145 = vpop.f32.mrb[0].mxu0
        %v1146 = vadd.f32 0.0, %v1145
        %v1147 = vpop.f32.mrb[0].mxu0
        %v1148 = vpop.f32.mrb[0].mxu0
        %v1149 = vadd.f32 0.0, %v1148
        %v1150 = vpop.f32.mrb[0].mxu0
        %1151 = vmatprep.mubr.bf16.mxu0 %v543
        %1152 = vmatmul.mubr.bf16.gmra.mrb[0].mxu0 %v542
        %v1153 = vpop.f32.mrb[0].mxu0
        %v1154 = vadd.f32 0.0, %v1153
        %v1155 = vpop.f32.mrb[0].mxu0
        %v1156 = vpop.f32.mrb[0].mxu0
        %v1157 = vadd.f32 0.0, %v1156
        %v1158 = vpop.f32.mrb[0].mxu0
        %1159 = vmatprep.mubr.bf16.mxu0 %v545
        %1160 = vmatmul.mubr.bf16.gmra.mrb[0].mxu0 %v544
        %v1161 = vpop.f32.mrb[0].mxu0
        %v1162 = vadd.f32 0.0, %v1161
        %v1163 = vpop.f32.mrb[0].mxu0
        %v1164 = vpop.f32.mrb[0].mxu0
        %v1165 = vadd.f32 0.0, %v1164
        %v1166 = vpop.f32.mrb[0].mxu0
        %1167 = vmatprep.mubr.bf16.mxu0 %v547
        %1168 = vmatmul.mubr.bf16.gmra.mrb[0].mxu0 %v546
        %v1169 = vpop.f32.mrb[0].mxu0
        %v1170 = vadd.f32 0.0, %v1169
        %v1171 = vpop.f32.mrb[0].mxu0
        %v1172 = vpop.f32.mrb[0].mxu0
        %v1173 = vadd.f32 0.0, %v1172
        %v1174 = vpop.f32.mrb[0].mxu0
        %1175 = vmatprep.mubr.bf16.mxu0 %v549
        %1176 = vmatmul.mubr.bf16.gmra.mrb[0].mxu0 %v548
        %v1177 = vpop.f32.mrb[0].mxu0
        %v1178 = vadd.f32 0.0, %v1177
        %v1179 = vpop.f32.mrb[0].mxu0
        %v1180 = vpop.f32.mrb[0].mxu0
        %v1181 = vadd.f32 0.0, %v1180
        %v1182 = vpop.f32.mrb[0].mxu0
        %1183 = vmatprep.mubr.bf16.mxu0 %v551
        %1184 = vmatmul.mubr.bf16.gmra.mrb[0].mxu0 %v550
        %v1185 = vpop.f32.mrb[0].mxu0
        %v1186 = vadd.f32 0.0, %v1185
        %v1187 = vpop.f32.mrb[0].mxu0
        %v1188 = vpop.f32.mrb[0].mxu0
        %v1189 = vadd.f32 0.0, %v1188
        %v1190 = vpop.f32.mrb[0].mxu0
        %1191 = vmatprep.mubr.bf16.mxu0 %v553
        %1192 = vmatmul.mubr.bf16.gmra.mrb[0].mxu0 %v552
        %v1193 = vpop.f32.mrb[0].mxu0
        %v1194 = vadd.f32 0.0, %v1193
        %v1195 = vpop.f32.mrb[0].mxu0
        %v1196 = vpop.f32.mrb[0].mxu0
        %v1197 = vadd.f32 0.0, %v1196
        %v1198 = vpop.f32.mrb[0].mxu0
        %1199 = vmatprep.mubr.bf16.mxu0 %v555
        %1200 = vmatmul.mubr.bf16.gmra.mrb[0].mxu0 %v554
        %v1201 = vpop.f32.mrb[0].mxu0
        %v1202 = vadd.f32 0.0, %v1201
        %v1203 = vpop.f32.mrb[0].mxu0
        %v1204 = vpop.f32.mrb[0].mxu0
        %v1205 = vadd.f32 0.0, %v1204
        %v1206 = vpop.f32.mrb[0].mxu0
        %1207 = vmatprep.mubr.bf16.mxu0 %v557
        %1208 = vmatmul.mubr.bf16.gmra.mrb[0].mxu0 %v556
        %v1209 = vpop.f32.mrb[0].mxu0
        %v1210 = vadd.f32 0.0, %v1209
        %v1211 = vpop.f32.mrb[0].mxu0
        %v1212 = vpop.f32.mrb[0].mxu0
        %v1213 = vadd.f32 0.0, %v1212
        %v1214 = vpop.f32.mrb[0].mxu0
        %1215 = vmatprep.mubr.bf16.mxu0 %v559
        %1216 = vmatmul.mubr.bf16.gmra.mrb[0].mxu0 %v558
        %v1217 = vpop.f32.mrb[0].mxu0
        %v1218 = vadd.f32 0.0, %v1217
        %v1219 = vpop.f32.mrb[0].mxu0
        %v1220 = vpop.f32.mrb[0].mxu0
        %v1221 = vadd.f32 0.0, %v1220
        %v1222 = vpop.f32.mrb[0].mxu0
        %1223 = vmatprep.mubr.bf16.mxu0 %v561
        %1224 = vmatmul.mubr.bf16.gmra.mrb[0].mxu0 %v560
        %v1225 = vpop.f32.mrb[0].mxu0
        %v1226 = vadd.f32 0.0, %v1225
        %v1227 = vpop.f32.mrb[0].mxu0
        %v1228 = vpop.f32.mrb[0].mxu0
        %v1229 = vadd.f32 0.0, %v1228
        %v1230 = vpop.f32.mrb[0].mxu0
        %1231 = vmatprep.mubr.bf16.mxu0 %v563
        %1232 = vmatmul.mubr.bf16.gmra.mrb[0].mxu0 %v562
        %v1233 = vpop.f32.mrb[0].mxu0
        %v1234 = vadd.f32 0.0, %v1233
        %v1235 = vpop.f32.mrb[0].mxu0
        %v1236 = vpop.f32.mrb[0].mxu0
        %v1237 = vadd.f32 0.0, %v1236
        %v1238 = vpop.f32.mrb[0].mxu0
        %1239 = vdwg.mxu0
        %v1240 = vld [vmem:[%s853 + $0x1] sm:$0xff]
        %v1241 = vld [vmem:[%s853 + $0x9] sm:$0xff]
        %v1242 = vld [vmem:[%s853 + $0x19] sm:$0xff]
        %v1243 = vld [vmem:[%s853 + $0x21] sm:$0xff]
        %v1244 = vld [vmem:[%s853 + $0x31] sm:$0xff]
        %v1245 = vld [vmem:[%s853 + $0x39] sm:$0xff]
        %v1246 = vld [vmem:[%s853 + $0x49] sm:$0xff]
        %v1247 = vld [vmem:[%s853 + $0x51] sm:$0xff]
        %v1248 = vld [vmem:[%s853 + $0x61] sm:$0xff]
        %v1249 = vld [vmem:[%s853 + $0x69] sm:$0xff]
        %v1250 = vld [vmem:[%s853 + $0x79] sm:$0xff]
        %v1251 = vld [vmem:[%s853 + $0x81] sm:$0xff]
        %v1252 = vld [vmem:[%s853 + $0x91] sm:$0xff]
        %v1253 = vld [vmem:[%s853 + $0x99] sm:$0xff]
        %v1254 = vld [vmem:[%s853 + $0xa9] sm:$0xff]
        %v1255 = vld [vmem:[%s853 + $0xb1] sm:$0xff]
        %v1256 = vld [vmem:[%s853 + $0xc1] sm:$0xff]
        %v1257 = vld [vmem:[%s853 + $0xc9] sm:$0xff]
        %v1258 = vld [vmem:[%s853 + $0xd9] sm:$0xff]
        %v1259 = vld [vmem:[%s853 + $0xe1] sm:$0xff]
        %v1260 = vld [vmem:[%s853 + $0xf1] sm:$0xff]
        %v1261 = vld [vmem:[%s853 + $0xf9] sm:$0xff]
        %v1262 = vld [vmem:[%s853 + $0x109] sm:$0xff]
        %v1263 = vld [vmem:[%s853 + $0x111] sm:$0xff]
        %v1264 = vld [vmem:[%s853 + $0x121] sm:$0xff]
        %v1265 = vld [vmem:[%s853 + $0x129] sm:$0xff]
        %v1266 = vld [vmem:[%s853 + $0x139] sm:$0xff]
        %v1267 = vld [vmem:[%s853 + $0x141] sm:$0xff]
        %v1268 = vld [vmem:[%s853 + $0x151] sm:$0xff]
        %v1269 = vld [vmem:[%s853 + $0x159] sm:$0xff]
        %v1270 = vld [vmem:[%s853 + $0x169] sm:$0xff]
        %v1271 = vld [vmem:[%s853 + $0x171] sm:$0xff]
        %v1272 = vadd.f32 %v1240, %v1114
        %v1273 = vadd.f32 %v1241, %v1117
        %v1274 = vadd.f32 %v1242, %v1122
        %v1275 = vadd.f32 %v1243, %v1125
        %v1276 = vadd.f32 %v1244, %v1130
        %v1277 = vadd.f32 %v1245, %v1133
        %v1278 = vadd.f32 %v1246, %v1138
        %v1279 = vadd.f32 %v1247, %v1141
        %v1280 = vadd.f32 %v1248, %v1146
        %v1281 = vadd.f32 %v1249, %v1149
        %v1282 = vadd.f32 %v1250, %v1154
        %v1283 = vadd.f32 %v1251, %v1157
        %v1284 = vadd.f32 %v1252, %v1162
        %v1285 = vadd.f32 %v1253, %v1165
        %v1286 = vadd.f32 %v1254, %v1170
        %v1287 = vadd.f32 %v1255, %v1173
        %v1288 = vadd.f32 %v1256, %v1178
        %v1289 = vadd.f32 %v1257, %v1181
        %v1290 = vadd.f32 %v1258, %v1186
        %v1291 = vadd.f32 %v1259, %v1189
        %v1292 = vadd.f32 %v1260, %v1194
        %v1293 = vadd.f32 %v1261, %v1197
        %v1294 = vadd.f32 %v1262, %v1202
        %v1295 = vadd.f32 %v1263, %v1205
        %v1296 = vadd.f32 %v1264, %v1210
        %v1297 = vadd.f32 %v1265, %v1213
        %v1298 = vadd.f32 %v1266, %v1218
        %v1299 = vadd.f32 %v1267, %v1221
        %v1300 = vadd.f32 %v1268, %v1226
        %v1301 = vadd.f32 %v1269, %v1229
        %v1302 = vadd.f32 %v1270, %v1234
        %v1303 = vadd.f32 %v1271, %v1237
        %1304 = vst.msk [vmem:[%s853 + $0x1] sm:$0xff] %vm348, %v1272
        %1305 = vst.msk [vmem:[%s853 + $0x9] sm:$0xff] %vm348, %v1273
        %1306 = vst.msk [vmem:[%s853 + $0x19] sm:$0xff] %vm348, %v1274
        %1307 = vst.msk [vmem:[%s853 + $0x21] sm:$0xff] %vm348, %v1275
        %1308 = vst.msk [vmem:[%s853 + $0x31] sm:$0xff] %vm348, %v1276
        %1309 = vst.msk [vmem:[%s853 + $0x39] sm:$0xff] %vm348, %v1277
        %1310 = vst.msk [vmem:[%s853 + $0x49] sm:$0xff] %vm348, %v1278
        %1311 = vst.msk [vmem:[%s853 + $0x51] sm:$0xff] %vm348, %v1279
        %1312 = vst.msk [vmem:[%s853 + $0x61] sm:$0xff] %vm348, %v1280
        %1313 = vst.msk [vmem:[%s853 + $0x69] sm:$0xff] %vm348, %v1281
        %1314 = vst.msk [vmem:[%s853 + $0x79] sm:$0xff] %vm348, %v1282
        %1315 = vst.msk [vmem:[%s853 + $0x81] sm:$0xff] %vm348, %v1283
        %1316 = vst.msk [vmem:[%s853 + $0x91] sm:$0xff] %vm348, %v1284
        %1317 = vst.msk [vmem:[%s853 + $0x99] sm:$0xff] %vm348, %v1285
        %1318 = vst.msk [vmem:[%s853 + $0xa9] sm:$0xff] %vm348, %v1286
        %1319 = vst.msk [vmem:[%s853 + $0xb1] sm:$0xff] %vm348, %v1287
        %1320 = vst.msk [vmem:[%s853 + $0xc1] sm:$0xff] %vm348, %v1288
        %1321 = vst.msk [vmem:[%s853 + $0xc9] sm:$0xff] %vm348, %v1289
        %1322 = vst.msk [vmem:[%s853 + $0xd9] sm:$0xff] %vm348, %v1290
        %1323 = vst.msk [vmem:[%s853 + $0xe1] sm:$0xff] %vm348, %v1291
        %1324 = vst.msk [vmem:[%s853 + $0xf1] sm:$0xff] %vm348, %v1292
        %1325 = vst.msk [vmem:[%s853 + $0xf9] sm:$0xff] %vm348, %v1293
        %1326 = vst.msk [vmem:[%s853 + $0x109] sm:$0xff] %vm348, %v1294
        %1327 = vst.msk [vmem:[%s853 + $0x111] sm:$0xff] %vm348, %v1295
        %1328 = vst.msk [vmem:[%s853 + $0x121] sm:$0xff] %vm348, %v1296
        %1329 = vst.msk [vmem:[%s853 + $0x129] sm:$0xff] %vm348, %v1297
        %1330 = vst.msk [vmem:[%s853 + $0x139] sm:$0xff] %vm348, %v1298
        %1331 = vst.msk [vmem:[%s853 + $0x141] sm:$0xff] %vm348, %v1299
        %1332 = vst.msk [vmem:[%s853 + $0x151] sm:$0xff] %vm348, %v1300
        %1333 = vst.msk [vmem:[%s853 + $0x159] sm:$0xff] %vm348, %v1301
        %1334 = vst.msk [vmem:[%s853 + $0x169] sm:$0xff] %vm348, %v1302
        %1335 = vst.msk [vmem:[%s853 + $0x171] sm:$0xff] %vm348, %v1303
        %s1336 = scalar_lea.vmem %s1, 256
        %v1337 = vld [vmem:[%s1336] sm:$0xf]
        %v1338 = vld [vmem:[%s1336 + $0x4] sm:$0xf]
        %v1339 = vld [vmem:[%s1336 + $0x8] sm:$0xf]
        %v1340 = vld [vmem:[%s1336 + $0xc] sm:$0xf]
        %v1341 = vld [vmem:[%s1336 + $0x10] sm:$0xf]
        %v1342 = vld [vmem:[%s1336 + $0x14] sm:$0xf]
        %v1343 = vld [vmem:[%s1336 + $0x18] sm:$0xf]
        %v1344 = vld [vmem:[%s1336 + $0x1c] sm:$0xf]
        %v1345 = vld [vmem:[%s1336 + $0x20] sm:$0xf]
        %v1346 = vld [vmem:[%s1336 + $0x24] sm:$0xf]
        %v1347 = vld [vmem:[%s1336 + $0x28] sm:$0xf]
        %v1348 = vld [vmem:[%s1336 + $0x2c] sm:$0xf]
        %v1349 = vld [vmem:[%s1336 + $0x30] sm:$0xf]
        %v1350 = vld [vmem:[%s1336 + $0x34] sm:$0xf]
        %v1351 = vld [vmem:[%s1336 + $0x38] sm:$0xf]
        %v1352 = vld [vmem:[%s1336 + $0x3c] sm:$0xf]
        %v1353 = vld [vmem:[%s1336 + $0x40] sm:$0xf]
        %v1354 = vld [vmem:[%s1336 + $0x44] sm:$0xf]
        %v1355 = vld [vmem:[%s1336 + $0x48] sm:$0xf]
        %v1356 = vld [vmem:[%s1336 + $0x4c] sm:$0xf]
        %v1357 = vld [vmem:[%s1336 + $0x50] sm:$0xf]
        %v1358 = vld [vmem:[%s1336 + $0x54] sm:$0xf]
        %v1359 = vld [vmem:[%s1336 + $0x58] sm:$0xf]
        %v1360 = vld [vmem:[%s1336 + $0x5c] sm:$0xf]
        %v1361 = vld [vmem:[%s1336 + $0x60] sm:$0xf]
        %v1362 = vld [vmem:[%s1336 + $0x64] sm:$0xf]
        %v1363 = vld [vmem:[%s1336 + $0x68] sm:$0xf]
        %v1364 = vld [vmem:[%s1336 + $0x6c] sm:$0xf]
        %v1365 = vld [vmem:[%s1336 + $0x70] sm:$0xf]
        %v1366 = vld [vmem:[%s1336 + $0x74] sm:$0xf]
        %v1367 = vld [vmem:[%s1336 + $0x78] sm:$0xf]
        %v1368 = vld [vmem:[%s1336 + $0x7c] sm:$0xf]
        %v1401 = vunpack.c.l.b16 %v1337
        %v1402 = vunpack.c.l.b16 %v1338
        %v1403 = vunpack.c.l.b16 %v1339
        %v1404 = vunpack.c.l.b16 %v1340
        %v1405 = vunpack.c.l.b16 %v1341
        %v1406 = vunpack.c.l.b16 %v1342
        %v1407 = vunpack.c.l.b16 %v1343
        %v1408 = vunpack.c.l.b16 %v1344
        %v1409 = vunpack.c.l.b16 %v1345
        %v1410 = vunpack.c.l.b16 %v1346
        %v1411 = vunpack.c.l.b16 %v1347
        %v1412 = vunpack.c.l.b16 %v1348
        %v1413 = vunpack.c.l.b16 %v1349
        %v1414 = vunpack.c.l.b16 %v1350
        %v1415 = vunpack.c.l.b16 %v1351
        %v1416 = vunpack.c.l.b16 %v1352
        %v1417 = vunpack.c.l.b16 %v1353
        %v1418 = vunpack.c.l.b16 %v1354
        %v1419 = vunpack.c.l.b16 %v1355
        %v1420 = vunpack.c.l.b16 %v1356
        %v1421 = vunpack.c.l.b16 %v1357
        %v1422 = vunpack.c.l.b16 %v1358
        %v1423 = vunpack.c.l.b16 %v1359
        %v1424 = vunpack.c.l.b16 %v1360
        %v1425 = vunpack.c.l.b16 %v1361
        %v1426 = vunpack.c.l.b16 %v1362
        %v1427 = vunpack.c.l.b16 %v1363
        %v1428 = vunpack.c.l.b16 %v1364
        %v1429 = vunpack.c.l.b16 %v1365
        %v1430 = vunpack.c.l.b16 %v1366
        %v1431 = vunpack.c.l.b16 %v1367
        %v1432 = vunpack.c.l.b16 %v1368
        %v1433 = vpack.c.b16 %v1402, %v1401
        %v1434 = vpack.c.b16 %v1404, %v1403
        %v1435 = vpack.c.b16 %v1406, %v1405
        %v1436 = vpack.c.b16 %v1408, %v1407
        %v1437 = vpack.c.b16 %v1410, %v1409
        %v1438 = vpack.c.b16 %v1412, %v1411
        %v1439 = vpack.c.b16 %v1414, %v1413
        %v1440 = vpack.c.b16 %v1416, %v1415
        %v1441 = vpack.c.b16 %v1418, %v1417
        %v1442 = vpack.c.b16 %v1420, %v1419
        %v1443 = vpack.c.b16 %v1422, %v1421
        %v1444 = vpack.c.b16 %v1424, %v1423
        %v1445 = vpack.c.b16 %v1426, %v1425
        %v1446 = vpack.c.b16 %v1428, %v1427
        %v1447 = vpack.c.b16 %v1430, %v1429
        %v1448 = vpack.c.b16 %v1432, %v1431
        %1465 = vmatprep.subr.bf16.mxu0 0
        %1466 = vmatpush1.bf16.msra.mxu0 %v1433
        %1467 = vmatprep.subr.bf16.mxu0 0
        %1468 = vmatpush1.bf16.msra.mxu0 %v1434
        %1469 = vmatprep.subr.bf16.mxu0 0
        %1470 = vmatpush1.bf16.msra.mxu0 %v1435
        %1471 = vmatprep.subr.bf16.mxu0 0
        %1472 = vmatpush1.bf16.msra.mxu0 %v1436
        %1473 = vmatprep.subr.bf16.mxu0 0
        %1474 = vmatpush1.bf16.msra.mxu0 %v1437
        %1475 = vmatprep.subr.bf16.mxu0 0
        %1476 = vmatpush1.bf16.msra.mxu0 %v1438
        %1477 = vmatprep.subr.bf16.mxu0 0
        %1478 = vmatpush1.bf16.msra.mxu0 %v1439
        %1479 = vmatprep.subr.bf16.mxu0 0
        %1480 = vmatpush1.bf16.msra.mxu0 %v1440
        %1481 = vmatprep.subr.bf16.mxu0 0
        %1482 = vmatpush1.bf16.msra.mxu0 %v1441
        %1483 = vmatprep.subr.bf16.mxu0 0
        %1484 = vmatpush1.bf16.msra.mxu0 %v1442
        %1485 = vmatprep.subr.bf16.mxu0 0
        %1486 = vmatpush1.bf16.msra.mxu0 %v1443
        %1487 = vmatprep.subr.bf16.mxu0 0
        %1488 = vmatpush1.bf16.msra.mxu0 %v1444
        %1489 = vmatprep.subr.bf16.mxu0 0
        %1490 = vmatpush1.bf16.msra.mxu0 %v1445
        %1491 = vmatprep.subr.bf16.mxu0 0
        %1492 = vmatpush1.bf16.msra.mxu0 %v1446
        %1493 = vmatprep.subr.bf16.mxu0 0
        %1494 = vmatpush1.bf16.msra.mxu0 %v1447
        %1495 = vmatprep.subr.bf16.mxu0 0
        %1496 = vmatpush1.bf16.msra.mxu0 %v1448
        %1497 = vmatprep.mubr.bf16.mxu0 %v533
        %1498 = vmatmul.mubr.bf16.gmra.mrb[0].mxu0 %v532
        %v1499 = vpop.f32.mrb[0].mxu0
        %v1500 = vadd.f32 0.0, %v1499
        %v1501 = vpop.f32.mrb[0].mxu0
        %v1502 = vpop.f32.mrb[0].mxu0
        %v1503 = vadd.f32 0.0, %v1502
        %v1504 = vpop.f32.mrb[0].mxu0
        %1505 = vmatprep.mubr.bf16.mxu0 %v535
        %1506 = vmatmul.mubr.bf16.gmra.mrb[0].mxu0 %v534
        %v1507 = vpop.f32.mrb[0].mxu0
        %v1508 = vadd.f32 0.0, %v1507
        %v1509 = vpop.f32.mrb[0].mxu0
        %v1510 = vpop.f32.mrb[0].mxu0
        %v1511 = vadd.f32 0.0, %v1510
        %v1512 = vpop.f32.mrb[0].mxu0
        %1513 = vmatprep.mubr.bf16.mxu0 %v537
        %1514 = vmatmul.mubr.bf16.gmra.mrb[0].mxu0 %v536
        %v1515 = vpop.f32.mrb[0].mxu0
        %v1516 = vadd.f32 0.0, %v1515
        %v1517 = vpop.f32.mrb[0].mxu0
        %v1518 = vpop.f32.mrb[0].mxu0
        %v1519 = vadd.f32 0.0, %v1518
        %v1520 = vpop.f32.mrb[0].mxu0
        %1521 = vmatprep.mubr.bf16.mxu0 %v539
        %1522 = vmatmul.mubr.bf16.gmra.mrb[0].mxu0 %v538
        %v1523 = vpop.f32.mrb[0].mxu0
        %v1524 = vadd.f32 0.0, %v1523
        %v1525 = vpop.f32.mrb[0].mxu0
        %v1526 = vpop.f32.mrb[0].mxu0
        %v1527 = vadd.f32 0.0, %v1526
        %v1528 = vpop.f32.mrb[0].mxu0
        %1529 = vmatprep.mubr.bf16.mxu0 %v541
        %1530 = vmatmul.mubr.bf16.gmra.mrb[0].mxu0 %v540
        %v1531 = vpop.f32.mrb[0].mxu0
        %v1532 = vadd.f32 0.0, %v1531
        %v1533 = vpop.f32.mrb[0].mxu0
        %v1534 = vpop.f32.mrb[0].mxu0
        %v1535 = vadd.f32 0.0, %v1534
        %v1536 = vpop.f32.mrb[0].mxu0
        %1537 = vmatprep.mubr.bf16.mxu0 %v543
        %1538 = vmatmul.mubr.bf16.gmra.mrb[0].mxu0 %v542
        %v1539 = vpop.f32.mrb[0].mxu0
        %v1540 = vadd.f32 0.0, %v1539
        %v1541 = vpop.f32.mrb[0].mxu0
        %v1542 = vpop.f32.mrb[0].mxu0
        %v1543 = vadd.f32 0.0, %v1542
        %v1544 = vpop.f32.mrb[0].mxu0
        %1545 = vmatprep.mubr.bf16.mxu0 %v545
        %1546 = vmatmul.mubr.bf16.gmra.mrb[0].mxu0 %v544
        %v1547 = vpop.f32.mrb[0].mxu0
        %v1548 = vadd.f32 0.0, %v1547
        %v1549 = vpop.f32.mrb[0].mxu0
        %v1550 = vpop.f32.mrb[0].mxu0
        %v1551 = vadd.f32 0.0, %v1550
        %v1552 = vpop.f32.mrb[0].mxu0
        %1553 = vmatprep.mubr.bf16.mxu0 %v547
        %1554 = vmatmul.mubr.bf16.gmra.mrb[0].mxu0 %v546
        %v1555 = vpop.f32.mrb[0].mxu0
        %v1556 = vadd.f32 0.0, %v1555
        %v1557 = vpop.f32.mrb[0].mxu0
        %v1558 = vpop.f32.mrb[0].mxu0
        %v1559 = vadd.f32 0.0, %v1558
        %v1560 = vpop.f32.mrb[0].mxu0
        %1561 = vmatprep.mubr.bf16.mxu0 %v549
        %1562 = vmatmul.mubr.bf16.gmra.mrb[0].mxu0 %v548
        %v1563 = vpop.f32.mrb[0].mxu0
        %v1564 = vadd.f32 0.0, %v1563
        %v1565 = vpop.f32.mrb[0].mxu0
        %v1566 = vpop.f32.mrb[0].mxu0
        %v1567 = vadd.f32 0.0, %v1566
        %v1568 = vpop.f32.mrb[0].mxu0
        %1569 = vmatprep.mubr.bf16.mxu0 %v551
        %1570 = vmatmul.mubr.bf16.gmra.mrb[0].mxu0 %v550
        %v1571 = vpop.f32.mrb[0].mxu0
        %v1572 = vadd.f32 0.0, %v1571
        %v1573 = vpop.f32.mrb[0].mxu0
        %v1574 = vpop.f32.mrb[0].mxu0
        %v1575 = vadd.f32 0.0, %v1574
        %v1576 = vpop.f32.mrb[0].mxu0
        %1577 = vmatprep.mubr.bf16.mxu0 %v553
        %1578 = vmatmul.mubr.bf16.gmra.mrb[0].mxu0 %v552
        %v1579 = vpop.f32.mrb[0].mxu0
        %v1580 = vadd.f32 0.0, %v1579
        %v1581 = vpop.f32.mrb[0].mxu0
        %v1582 = vpop.f32.mrb[0].mxu0
        %v1583 = vadd.f32 0.0, %v1582
        %v1584 = vpop.f32.mrb[0].mxu0
        %1585 = vmatprep.mubr.bf16.mxu0 %v555
        %1586 = vmatmul.mubr.bf16.gmra.mrb[0].mxu0 %v554
        %v1587 = vpop.f32.mrb[0].mxu0
        %v1588 = vadd.f32 0.0, %v1587
        %v1589 = vpop.f32.mrb[0].mxu0
        %v1590 = vpop.f32.mrb[0].mxu0
        %v1591 = vadd.f32 0.0, %v1590
        %v1592 = vpop.f32.mrb[0].mxu0
        %1593 = vmatprep.mubr.bf16.mxu0 %v557
        %1594 = vmatmul.mubr.bf16.gmra.mrb[0].mxu0 %v556
        %v1595 = vpop.f32.mrb[0].mxu0
        %v1596 = vadd.f32 0.0, %v1595
        %v1597 = vpop.f32.mrb[0].mxu0
        %v1598 = vpop.f32.mrb[0].mxu0
        %v1599 = vadd.f32 0.0, %v1598
        %v1600 = vpop.f32.mrb[0].mxu0
        %1601 = vmatprep.mubr.bf16.mxu0 %v559
        %1602 = vmatmul.mubr.bf16.gmra.mrb[0].mxu0 %v558
        %v1603 = vpop.f32.mrb[0].mxu0
        %v1604 = vadd.f32 0.0, %v1603
        %v1605 = vpop.f32.mrb[0].mxu0
        %v1606 = vpop.f32.mrb[0].mxu0
        %v1607 = vadd.f32 0.0, %v1606
        %v1608 = vpop.f32.mrb[0].mxu0
        %1609 = vmatprep.mubr.bf16.mxu0 %v561
        %1610 = vmatmul.mubr.bf16.gmra.mrb[0].mxu0 %v560
        %v1611 = vpop.f32.mrb[0].mxu0
        %v1612 = vadd.f32 0.0, %v1611
        %v1613 = vpop.f32.mrb[0].mxu0
        %v1614 = vpop.f32.mrb[0].mxu0
        %v1615 = vadd.f32 0.0, %v1614
        %v1616 = vpop.f32.mrb[0].mxu0
        %1617 = vmatprep.mubr.bf16.mxu0 %v563
        %1618 = vmatmul.mubr.bf16.gmra.mrb[0].mxu0 %v562
        %v1619 = vpop.f32.mrb[0].mxu0
        %v1620 = vadd.f32 0.0, %v1619
        %v1621 = vpop.f32.mrb[0].mxu0
        %v1622 = vpop.f32.mrb[0].mxu0
        %v1623 = vadd.f32 0.0, %v1622
        %v1624 = vpop.f32.mrb[0].mxu0
        %1625 = vdwg.mxu0
        %v1626 = vld [vmem:[%s853] sm:$0xff]
        %v1627 = vld [vmem:[%s853 + $0x8] sm:$0xff]
        %v1628 = vld [vmem:[%s853 + $0x18] sm:$0xff]
        %v1629 = vld [vmem:[%s853 + $0x20] sm:$0xff]
        %v1630 = vld [vmem:[%s853 + $0x30] sm:$0xff]
        %v1631 = vld [vmem:[%s853 + $0x38] sm:$0xff]
        %v1632 = vld [vmem:[%s853 + $0x48] sm:$0xff]
        %v1633 = vld [vmem:[%s853 + $0x50] sm:$0xff]
        %v1634 = vld [vmem:[%s853 + $0x60] sm:$0xff]
        %v1635 = vld [vmem:[%s853 + $0x68] sm:$0xff]
        %v1636 = vld [vmem:[%s853 + $0x78] sm:$0xff]
        %v1637 = vld [vmem:[%s853 + $0x80] sm:$0xff]
        %v1638 = vld [vmem:[%s853 + $0x90] sm:$0xff]
        %v1639 = vld [vmem:[%s853 + $0x98] sm:$0xff]
        %v1640 = vld [vmem:[%s853 + $0xa8] sm:$0xff]
        %v1641 = vld [vmem:[%s853 + $0xb0] sm:$0xff]
        %v1642 = vld [vmem:[%s853 + $0xc0] sm:$0xff]
        %v1643 = vld [vmem:[%s853 + $0xc8] sm:$0xff]
        %v1644 = vld [vmem:[%s853 + $0xd8] sm:$0xff]
        %v1645 = vld [vmem:[%s853 + $0xe0] sm:$0xff]
        %v1646 = vld [vmem:[%s853 + $0xf0] sm:$0xff]
        %v1647 = vld [vmem:[%s853 + $0xf8] sm:$0xff]
        %v1648 = vld [vmem:[%s853 + $0x108] sm:$0xff]
        %v1649 = vld [vmem:[%s853 + $0x110] sm:$0xff]
        %v1650 = vld [vmem:[%s853 + $0x120] sm:$0xff]
        %v1651 = vld [vmem:[%s853 + $0x128] sm:$0xff]
        %v1652 = vld [vmem:[%s853 + $0x138] sm:$0xff]
        %v1653 = vld [vmem:[%s853 + $0x140] sm:$0xff]
        %v1654 = vld [vmem:[%s853 + $0x150] sm:$0xff]
        %v1655 = vld [vmem:[%s853 + $0x158] sm:$0xff]
        %v1656 = vld [vmem:[%s853 + $0x168] sm:$0xff]
        %v1657 = vld [vmem:[%s853 + $0x170] sm:$0xff]
        %v1658 = vadd.f32 %v1626, %v1500
        %v1659 = vadd.f32 %v1627, %v1503
        %v1660 = vadd.f32 %v1628, %v1508
        %v1661 = vadd.f32 %v1629, %v1511
        %v1662 = vadd.f32 %v1630, %v1516
        %v1663 = vadd.f32 %v1631, %v1519
        %v1664 = vadd.f32 %v1632, %v1524
        %v1665 = vadd.f32 %v1633, %v1527
        %v1666 = vadd.f32 %v1634, %v1532
        %v1667 = vadd.f32 %v1635, %v1535
        %v1668 = vadd.f32 %v1636, %v1540
        %v1669 = vadd.f32 %v1637, %v1543
        %v1670 = vadd.f32 %v1638, %v1548
        %v1671 = vadd.f32 %v1639, %v1551
        %v1672 = vadd.f32 %v1640, %v1556
        %v1673 = vadd.f32 %v1641, %v1559
        %v1674 = vadd.f32 %v1642, %v1564
        %v1675 = vadd.f32 %v1643, %v1567
        %v1676 = vadd.f32 %v1644, %v1572
        %v1677 = vadd.f32 %v1645, %v1575
        %v1678 = vadd.f32 %v1646, %v1580
        %v1679 = vadd.f32 %v1647, %v1583
        %v1680 = vadd.f32 %v1648, %v1588
        %v1681 = vadd.f32 %v1649, %v1591
        %v1682 = vadd.f32 %v1650, %v1596
        %v1683 = vadd.f32 %v1651, %v1599
        %v1684 = vadd.f32 %v1652, %v1604
        %v1685 = vadd.f32 %v1653, %v1607
        %v1686 = vadd.f32 %v1654, %v1612
        %v1687 = vadd.f32 %v1655, %v1615
        %v1688 = vadd.f32 %v1656, %v1620
        %v1689 = vadd.f32 %v1657, %v1623
        %1690 = vst.msk [vmem:[%s853] sm:$0xff] %vm348, %v1658
        %1691 = vst.msk [vmem:[%s853 + $0x8] sm:$0xff] %vm348, %v1659
        %1692 = vst.msk [vmem:[%s853 + $0x18] sm:$0xff] %vm348, %v1660
        %1693 = vst.msk [vmem:[%s853 + $0x20] sm:$0xff] %vm348, %v1661
        %1694 = vst.msk [vmem:[%s853 + $0x30] sm:$0xff] %vm348, %v1662
        %1695 = vst.msk [vmem:[%s853 + $0x38] sm:$0xff] %vm348, %v1663
        %1696 = vst.msk [vmem:[%s853 + $0x48] sm:$0xff] %vm348, %v1664
        %1697 = vst.msk [vmem:[%s853 + $0x50] sm:$0xff] %vm348, %v1665
        %1698 = vst.msk [vmem:[%s853 + $0x60] sm:$0xff] %vm348, %v1666
        %1699 = vst.msk [vmem:[%s853 + $0x68] sm:$0xff] %vm348, %v1667
        %1700 = vst.msk [vmem:[%s853 + $0x78] sm:$0xff] %vm348, %v1668
        %1701 = vst.msk [vmem:[%s853 + $0x80] sm:$0xff] %vm348, %v1669
        %1702 = vst.msk [vmem:[%s853 + $0x90] sm:$0xff] %vm348, %v1670
        %1703 = vst.msk [vmem:[%s853 + $0x98] sm:$0xff] %vm348, %v1671
        %1704 = vst.msk [vmem:[%s853 + $0xa8] sm:$0xff] %vm348, %v1672
        %1705 = vst.msk [vmem:[%s853 + $0xb0] sm:$0xff] %vm348, %v1673
        %1706 = vst.msk [vmem:[%s853 + $0xc0] sm:$0xff] %vm348, %v1674
        %1707 = vst.msk [vmem:[%s853 + $0xc8] sm:$0xff] %vm348, %v1675
        %1708 = vst.msk [vmem:[%s853 + $0xd8] sm:$0xff] %vm348, %v1676
        %1709 = vst.msk [vmem:[%s853 + $0xe0] sm:$0xff] %vm348, %v1677
        %1710 = vst.msk [vmem:[%s853 + $0xf0] sm:$0xff] %vm348, %v1678
        %1711 = vst.msk [vmem:[%s853 + $0xf8] sm:$0xff] %vm348, %v1679
        %1712 = vst.msk [vmem:[%s853 + $0x108] sm:$0xff] %vm348, %v1680
        %1713 = vst.msk [vmem:[%s853 + $0x110] sm:$0xff] %vm348, %v1681
        %1714 = vst.msk [vmem:[%s853 + $0x120] sm:$0xff] %vm348, %v1682
        %1715 = vst.msk [vmem:[%s853 + $0x128] sm:$0xff] %vm348, %v1683
        %1716 = vst.msk [vmem:[%s853 + $0x138] sm:$0xff] %vm348, %v1684
        %1717 = vst.msk [vmem:[%s853 + $0x140] sm:$0xff] %vm348, %v1685
        %1718 = vst.msk [vmem:[%s853 + $0x150] sm:$0xff] %vm348, %v1686
        %1719 = vst.msk [vmem:[%s853 + $0x158] sm:$0xff] %vm348, %v1687
        %1720 = vst.msk [vmem:[%s853 + $0x168] sm:$0xff] %vm348, %v1688
        %1721 = vst.msk [vmem:[%s853 + $0x170] sm:$0xff] %vm348, %v1689
        %s1722 = scalar_lea.vmem %s1, 384
        %v1723 = vld [vmem:[%s1722] sm:$0xf]
        %v1724 = vld [vmem:[%s1722 + $0x4] sm:$0xf]
        %v1725 = vld [vmem:[%s1722 + $0x8] sm:$0xf]
        %v1726 = vld [vmem:[%s1722 + $0xc] sm:$0xf]
        %v1727 = vld [vmem:[%s1722 + $0x10] sm:$0xf]
        %v1728 = vld [vmem:[%s1722 + $0x14] sm:$0xf]
        %v1729 = vld [vmem:[%s1722 + $0x18] sm:$0xf]
        %v1730 = vld [vmem:[%s1722 + $0x1c] sm:$0xf]
        %v1731 = vld [vmem:[%s1722 + $0x20] sm:$0xf]
        %v1732 = vld [vmem:[%s1722 + $0x24] sm:$0xf]
        %v1733 = vld [vmem:[%s1722 + $0x28] sm:$0xf]
        %v1734 = vld [vmem:[%s1722 + $0x2c] sm:$0xf]
        %v1735 = vld [vmem:[%s1722 + $0x30] sm:$0xf]
        %v1736 = vld [vmem:[%s1722 + $0x34] sm:$0xf]
        %v1737 = vld [vmem:[%s1722 + $0x38] sm:$0xf]
        %v1738 = vld [vmem:[%s1722 + $0x3c] sm:$0xf]
        %v1739 = vld [vmem:[%s1722 + $0x40] sm:$0xf]
        %v1740 = vld [vmem:[%s1722 + $0x44] sm:$0xf]
        %v1741 = vld [vmem:[%s1722 + $0x48] sm:$0xf]
        %v1742 = vld [vmem:[%s1722 + $0x4c] sm:$0xf]
        %v1743 = vld [vmem:[%s1722 + $0x50] sm:$0xf]
        %v1744 = vld [vmem:[%s1722 + $0x54] sm:$0xf]
        %v1745 = vld [vmem:[%s1722 + $0x58] sm:$0xf]
        %v1746 = vld [vmem:[%s1722 + $0x5c] sm:$0xf]
        %v1747 = vld [vmem:[%s1722 + $0x60] sm:$0xf]
        %v1748 = vld [vmem:[%s1722 + $0x64] sm:$0xf]
        %v1749 = vld [vmem:[%s1722 + $0x68] sm:$0xf]
        %v1750 = vld [vmem:[%s1722 + $0x6c] sm:$0xf]
        %v1751 = vld [vmem:[%s1722 + $0x70] sm:$0xf]
        %v1752 = vld [vmem:[%s1722 + $0x74] sm:$0xf]
        %v1753 = vld [vmem:[%s1722 + $0x78] sm:$0xf]
        %v1754 = vld [vmem:[%s1722 + $0x7c] sm:$0xf]
        %v1787 = vunpack.c.l.b16 %v1723
        %v1788 = vunpack.c.l.b16 %v1724
        %v1789 = vunpack.c.l.b16 %v1725
        %v1790 = vunpack.c.l.b16 %v1726
        %v1791 = vunpack.c.l.b16 %v1727
        %v1792 = vunpack.c.l.b16 %v1728
        %v1793 = vunpack.c.l.b16 %v1729
        %v1794 = vunpack.c.l.b16 %v1730
        %v1795 = vunpack.c.l.b16 %v1731
        %v1796 = vunpack.c.l.b16 %v1732
        %v1797 = vunpack.c.l.b16 %v1733
        %v1798 = vunpack.c.l.b16 %v1734
        %v1799 = vunpack.c.l.b16 %v1735
        %v1800 = vunpack.c.l.b16 %v1736
        %v1801 = vunpack.c.l.b16 %v1737
        %v1802 = vunpack.c.l.b16 %v1738
        %v1803 = vunpack.c.l.b16 %v1739
        %v1804 = vunpack.c.l.b16 %v1740
        %v1805 = vunpack.c.l.b16 %v1741
        %v1806 = vunpack.c.l.b16 %v1742
        %v1807 = vunpack.c.l.b16 %v1743
        %v1808 = vunpack.c.l.b16 %v1744
        %v1809 = vunpack.c.l.b16 %v1745
        %v1810 = vunpack.c.l.b16 %v1746
        %v1811 = vunpack.c.l.b16 %v1747
        %v1812 = vunpack.c.l.b16 %v1748
        %v1813 = vunpack.c.l.b16 %v1749
        %v1814 = vunpack.c.l.b16 %v1750
        %v1815 = vunpack.c.l.b16 %v1751
        %v1816 = vunpack.c.l.b16 %v1752
        %v1817 = vunpack.c.l.b16 %v1753
        %v1818 = vunpack.c.l.b16 %v1754
        %v1819 = vpack.c.b16 %v1788, %v1787
        %v1820 = vpack.c.b16 %v1790, %v1789
        %v1821 = vpack.c.b16 %v1792, %v1791
        %v1822 = vpack.c.b16 %v1794, %v1793
        %v1823 = vpack.c.b16 %v1796, %v1795
        %v1824 = vpack.c.b16 %v1798, %v1797
        %v1825 = vpack.c.b16 %v1800, %v1799
        %v1826 = vpack.c.b16 %v1802, %v1801
        %v1827 = vpack.c.b16 %v1804, %v1803
        %v1828 = vpack.c.b16 %v1806, %v1805
        %v1829 = vpack.c.b16 %v1808, %v1807
        %v1830 = vpack.c.b16 %v1810, %v1809
        %v1831 = vpack.c.b16 %v1812, %v1811
        %v1832 = vpack.c.b16 %v1814, %v1813
        %v1833 = vpack.c.b16 %v1816, %v1815
        %v1834 = vpack.c.b16 %v1818, %v1817
        %1851 = vmatprep.subr.bf16.mxu0 0
        %1852 = vmatpush1.bf16.msra.mxu0 %v1819
        %1853 = vmatprep.subr.bf16.mxu0 0
        %1854 = vmatpush1.bf16.msra.mxu0 %v1820
        %1855 = vmatprep.subr.bf16.mxu0 0
        %1856 = vmatpush1.bf16.msra.mxu0 %v1821
        %1857 = vmatprep.subr.bf16.mxu0 0
        %1858 = vmatpush1.bf16.msra.mxu0 %v1822
        %1859 = vmatprep.subr.bf16.mxu0 0
        %1860 = vmatpush1.bf16.msra.mxu0 %v1823
        %1861 = vmatprep.subr.bf16.mxu0 0
        %1862 = vmatpush1.bf16.msra.mxu0 %v1824
        %1863 = vmatprep.subr.bf16.mxu0 0
        %1864 = vmatpush1.bf16.msra.mxu0 %v1825
        %1865 = vmatprep.subr.bf16.mxu0 0
        %1866 = vmatpush1.bf16.msra.mxu0 %v1826
        %1867 = vmatprep.subr.bf16.mxu0 0
        %1868 = vmatpush1.bf16.msra.mxu0 %v1827
        %1869 = vmatprep.subr.bf16.mxu0 0
        %1870 = vmatpush1.bf16.msra.mxu0 %v1828
        %1871 = vmatprep.subr.bf16.mxu0 0
        %1872 = vmatpush1.bf16.msra.mxu0 %v1829
        %1873 = vmatprep.subr.bf16.mxu0 0
        %1874 = vmatpush1.bf16.msra.mxu0 %v1830
        %1875 = vmatprep.subr.bf16.mxu0 0
        %1876 = vmatpush1.bf16.msra.mxu0 %v1831
        %1877 = vmatprep.subr.bf16.mxu0 0
        %1878 = vmatpush1.bf16.msra.mxu0 %v1832
        %1879 = vmatprep.subr.bf16.mxu0 0
        %1880 = vmatpush1.bf16.msra.mxu0 %v1833
        %1881 = vmatprep.subr.bf16.mxu0 0
        %1882 = vmatpush1.bf16.msra.mxu0 %v1834
        %1883 = vmatprep.mubr.bf16.mxu0 %v533
        %1884 = vmatmul.mubr.bf16.gmra.mrb[0].mxu0 %v532
        %v1885 = vpop.f32.mrb[0].mxu0
        %v1886 = vadd.f32 0.0, %v1885
        %v1887 = vpop.f32.mrb[0].mxu0
        %v1888 = vpop.f32.mrb[0].mxu0
        %v1889 = vadd.f32 0.0, %v1888
        %v1890 = vpop.f32.mrb[0].mxu0
        %1891 = vmatprep.mubr.bf16.mxu0 %v535
        %1892 = vmatmul.mubr.bf16.gmra.mrb[0].mxu0 %v534
        %v1893 = vpop.f32.mrb[0].mxu0
        %v1894 = vadd.f32 0.0, %v1893
        %v1895 = vpop.f32.mrb[0].mxu0
        %v1896 = vpop.f32.mrb[0].mxu0
        %v1897 = vadd.f32 0.0, %v1896
        %v1898 = vpop.f32.mrb[0].mxu0
        %1899 = vmatprep.mubr.bf16.mxu0 %v537
        %1900 = vmatmul.mubr.bf16.gmra.mrb[0].mxu0 %v536
        %v1901 = vpop.f32.mrb[0].mxu0
        %v1902 = vadd.f32 0.0, %v1901
        %v1903 = vpop.f32.mrb[0].mxu0
        %v1904 = vpop.f32.mrb[0].mxu0
        %v1905 = vadd.f32 0.0, %v1904
        %v1906 = vpop.f32.mrb[0].mxu0
        %1907 = vmatprep.mubr.bf16.mxu0 %v539
        %1908 = vmatmul.mubr.bf16.gmra.mrb[0].mxu0 %v538
        %v1909 = vpop.f32.mrb[0].mxu0
        %v1910 = vadd.f32 0.0, %v1909
        %v1911 = vpop.f32.mrb[0].mxu0
        %v1912 = vpop.f32.mrb[0].mxu0
        %v1913 = vadd.f32 0.0, %v1912
        %v1914 = vpop.f32.mrb[0].mxu0
        %1915 = vmatprep.mubr.bf16.mxu0 %v541
        %1916 = vmatmul.mubr.bf16.gmra.mrb[0].mxu0 %v540
        %v1917 = vpop.f32.mrb[0].mxu0
        %v1918 = vadd.f32 0.0, %v1917
        %v1919 = vpop.f32.mrb[0].mxu0
        %v1920 = vpop.f32.mrb[0].mxu0
        %v1921 = vadd.f32 0.0, %v1920
        %v1922 = vpop.f32.mrb[0].mxu0
        %1923 = vmatprep.mubr.bf16.mxu0 %v543
        %1924 = vmatmul.mubr.bf16.gmra.mrb[0].mxu0 %v542
        %v1925 = vpop.f32.mrb[0].mxu0
        %v1926 = vadd.f32 0.0, %v1925
        %v1927 = vpop.f32.mrb[0].mxu0
        %v1928 = vpop.f32.mrb[0].mxu0
        %v1929 = vadd.f32 0.0, %v1928
        %v1930 = vpop.f32.mrb[0].mxu0
        %1931 = vmatprep.mubr.bf16.mxu0 %v545
        %1932 = vmatmul.mubr.bf16.gmra.mrb[0].mxu0 %v544
        %v1933 = vpop.f32.mrb[0].mxu0
        %v1934 = vadd.f32 0.0, %v1933
        %v1935 = vpop.f32.mrb[0].mxu0
        %v1936 = vpop.f32.mrb[0].mxu0
        %v1937 = vadd.f32 0.0, %v1936
        %v1938 = vpop.f32.mrb[0].mxu0
        %1939 = vmatprep.mubr.bf16.mxu0 %v547
        %1940 = vmatmul.mubr.bf16.gmra.mrb[0].mxu0 %v546
        %v1941 = vpop.f32.mrb[0].mxu0
        %v1942 = vadd.f32 0.0, %v1941
        %v1943 = vpop.f32.mrb[0].mxu0
        %v1944 = vpop.f32.mrb[0].mxu0
        %v1945 = vadd.f32 0.0, %v1944
        %v1946 = vpop.f32.mrb[0].mxu0
        %1947 = vmatprep.mubr.bf16.mxu0 %v549
        %1948 = vmatmul.mubr.bf16.gmra.mrb[0].mxu0 %v548
        %v1949 = vpop.f32.mrb[0].mxu0
        %v1950 = vadd.f32 0.0, %v1949
        %v1951 = vpop.f32.mrb[0].mxu0
        %v1952 = vpop.f32.mrb[0].mxu0
        %v1953 = vadd.f32 0.0, %v1952
        %v1954 = vpop.f32.mrb[0].mxu0
        %1955 = vmatprep.mubr.bf16.mxu0 %v551
        %1956 = vmatmul.mubr.bf16.gmra.mrb[0].mxu0 %v550
        %v1957 = vpop.f32.mrb[0].mxu0
        %v1958 = vadd.f32 0.0, %v1957
        %v1959 = vpop.f32.mrb[0].mxu0
        %v1960 = vpop.f32.mrb[0].mxu0
        %v1961 = vadd.f32 0.0, %v1960
        %v1962 = vpop.f32.mrb[0].mxu0
        %1963 = vmatprep.mubr.bf16.mxu0 %v553
        %1964 = vmatmul.mubr.bf16.gmra.mrb[0].mxu0 %v552
        %v1965 = vpop.f32.mrb[0].mxu0
        %v1966 = vadd.f32 0.0, %v1965
        %v1967 = vpop.f32.mrb[0].mxu0
        %v1968 = vpop.f32.mrb[0].mxu0
        %v1969 = vadd.f32 0.0, %v1968
        %v1970 = vpop.f32.mrb[0].mxu0
        %1971 = vmatprep.mubr.bf16.mxu0 %v555
        %1972 = vmatmul.mubr.bf16.gmra.mrb[0].mxu0 %v554
        %v1973 = vpop.f32.mrb[0].mxu0
        %v1974 = vadd.f32 0.0, %v1973
        %v1975 = vpop.f32.mrb[0].mxu0
        %v1976 = vpop.f32.mrb[0].mxu0
        %v1977 = vadd.f32 0.0, %v1976
        %v1978 = vpop.f32.mrb[0].mxu0
        %1979 = vmatprep.mubr.bf16.mxu0 %v557
        %1980 = vmatmul.mubr.bf16.gmra.mrb[0].mxu0 %v556
        %v1981 = vpop.f32.mrb[0].mxu0
        %v1982 = vadd.f32 0.0, %v1981
        %v1983 = vpop.f32.mrb[0].mxu0
        %v1984 = vpop.f32.mrb[0].mxu0
        %v1985 = vadd.f32 0.0, %v1984
        %v1986 = vpop.f32.mrb[0].mxu0
        %1987 = vmatprep.mubr.bf16.mxu0 %v559
        %1988 = vmatmul.mubr.bf16.gmra.mrb[0].mxu0 %v558
        %v1989 = vpop.f32.mrb[0].mxu0
        %v1990 = vadd.f32 0.0, %v1989
        %v1991 = vpop.f32.mrb[0].mxu0
        %v1992 = vpop.f32.mrb[0].mxu0
        %v1993 = vadd.f32 0.0, %v1992
        %v1994 = vpop.f32.mrb[0].mxu0
        %1995 = vmatprep.mubr.bf16.mxu0 %v561
        %1996 = vmatmul.mubr.bf16.gmra.mrb[0].mxu0 %v560
        %v1997 = vpop.f32.mrb[0].mxu0
        %v1998 = vadd.f32 0.0, %v1997
        %v1999 = vpop.f32.mrb[0].mxu0
        %v2000 = vpop.f32.mrb[0].mxu0
        %v2001 = vadd.f32 0.0, %v2000
        %v2002 = vpop.f32.mrb[0].mxu0
        %2003 = vmatprep.mubr.bf16.mxu0 %v563
        %2004 = vmatmul.mubr.bf16.gmra.mrb[0].mxu0 %v562
        %v2005 = vpop.f32.mrb[0].mxu0
        %v2006 = vadd.f32 0.0, %v2005
        %v2007 = vpop.f32.mrb[0].mxu0
        %v2008 = vpop.f32.mrb[0].mxu0
        %v2009 = vadd.f32 0.0, %v2008
        %v2010 = vpop.f32.mrb[0].mxu0
        %2011 = vdwg.mxu0
        %s2012 = scalar_lea.vmem [#allocation2], 24
        %v2013 = vld [vmem:[%s2012 + $0x2] sm:$0xff]
        %v2014 = vld [vmem:[%s2012 + $0xa] sm:$0xff]
        %v2015 = vld [vmem:[%s2012 + $0x1a] sm:$0xff]
        %v2016 = vld [vmem:[%s2012 + $0x22] sm:$0xff]
        %v2017 = vld [vmem:[%s2012 + $0x32] sm:$0xff]
        %v2018 = vld [vmem:[%s2012 + $0x3a] sm:$0xff]
        %v2019 = vld [vmem:[%s2012 + $0x4a] sm:$0xff]
        %v2020 = vld [vmem:[%s2012 + $0x52] sm:$0xff]
        %v2021 = vld [vmem:[%s2012 + $0x62] sm:$0xff]
        %v2022 = vld [vmem:[%s2012 + $0x6a] sm:$0xff]
        %v2023 = vld [vmem:[%s2012 + $0x7a] sm:$0xff]
        %v2024 = vld [vmem:[%s2012 + $0x82] sm:$0xff]
        %v2025 = vld [vmem:[%s2012 + $0x92] sm:$0xff]
        %v2026 = vld [vmem:[%s2012 + $0x9a] sm:$0xff]
        %v2027 = vld [vmem:[%s2012 + $0xaa] sm:$0xff]
        %v2028 = vld [vmem:[%s2012 + $0xb2] sm:$0xff]
        %v2029 = vld [vmem:[%s2012 + $0xc2] sm:$0xff]
        %v2030 = vld [vmem:[%s2012 + $0xca] sm:$0xff]
        %v2031 = vld [vmem:[%s2012 + $0xda] sm:$0xff]
        %v2032 = vld [vmem:[%s2012 + $0xe2] sm:$0xff]
        %v2033 = vld [vmem:[%s2012 + $0xf2] sm:$0xff]
        %v2034 = vld [vmem:[%s2012 + $0xfa] sm:$0xff]
        %v2035 = vld [vmem:[%s2012 + $0x10a] sm:$0xff]
        %v2036 = vld [vmem:[%s2012 + $0x112] sm:$0xff]
        %v2037 = vld [vmem:[%s2012 + $0x122] sm:$0xff]
        %v2038 = vld [vmem:[%s2012 + $0x12a] sm:$0xff]
        %v2039 = vld [vmem:[%s2012 + $0x13a] sm:$0xff]
        %v2040 = vld [vmem:[%s2012 + $0x142] sm:$0xff]
        %v2041 = vld [vmem:[%s2012 + $0x152] sm:$0xff]
        %v2042 = vld [vmem:[%s2012 + $0x15a] sm:$0xff]
        %v2043 = vld [vmem:[%s2012 + $0x16a] sm:$0xff]
        %v2044 = vld [vmem:[%s2012 + $0x172] sm:$0xff]
        %v2045 = vadd.f32 %v2013, %v1886
        %v2046 = vadd.f32 %v2014, %v1889
        %v2047 = vadd.f32 %v2015, %v1894
        %v2048 = vadd.f32 %v2016, %v1897
        %v2049 = vadd.f32 %v2017, %v1902
        %v2050 = vadd.f32 %v2018, %v1905
        %v2051 = vadd.f32 %v2019, %v1910
        %v2052 = vadd.f32 %v2020, %v1913
        %v2053 = vadd.f32 %v2021, %v1918
        %v2054 = vadd.f32 %v2022, %v1921
        %v2055 = vadd.f32 %v2023, %v1926
        %v2056 = vadd.f32 %v2024, %v1929
        %v2057 = vadd.f32 %v2025, %v1934
        %v2058 = vadd.f32 %v2026, %v1937
        %v2059 = vadd.f32 %v2027, %v1942
        %v2060 = vadd.f32 %v2028, %v1945
        %v2061 = vadd.f32 %v2029, %v1950
        %v2062 = vadd.f32 %v2030, %v1953
        %v2063 = vadd.f32 %v2031, %v1958
        %v2064 = vadd.f32 %v2032, %v1961
        %v2065 = vadd.f32 %v2033, %v1966
        %v2066 = vadd.f32 %v2034, %v1969
        %v2067 = vadd.f32 %v2035, %v1974
        %v2068 = vadd.f32 %v2036, %v1977
        %v2069 = vadd.f32 %v2037, %v1982
        %v2070 = vadd.f32 %v2038, %v1985
        %v2071 = vadd.f32 %v2039, %v1990
        %v2072 = vadd.f32 %v2040, %v1993
        %v2073 = vadd.f32 %v2041, %v1998
        %v2074 = vadd.f32 %v2042, %v2001
        %v2075 = vadd.f32 %v2043, %v2006
        %v2076 = vadd.f32 %v2044, %v2009
        %2077 = vst.msk [vmem:[%s2012 + $0x2] sm:$0xff] %vm348, %v2045
        %2078 = vst.msk [vmem:[%s2012 + $0xa] sm:$0xff] %vm348, %v2046
        %2079 = vst.msk [vmem:[%s2012 + $0x1a] sm:$0xff] %vm348, %v2047
        %2080 = vst.msk [vmem:[%s2012 + $0x22] sm:$0xff] %vm348, %v2048
        %2081 = vst.msk [vmem:[%s2012 + $0x32] sm:$0xff] %vm348, %v2049
        %2082 = vst.msk [vmem:[%s2012 + $0x3a] sm:$0xff] %vm348, %v2050
        %2083 = vst.msk [vmem:[%s2012 + $0x4a] sm:$0xff] %vm348, %v2051
        %2084 = vst.msk [vmem:[%s2012 + $0x52] sm:$0xff] %vm348, %v2052
        %2085 = vst.msk [vmem:[%s2012 + $0x62] sm:$0xff] %vm348, %v2053
        %2086 = vst.msk [vmem:[%s2012 + $0x6a] sm:$0xff] %vm348, %v2054
        %2087 = vst.msk [vmem:[%s2012 + $0x7a] sm:$0xff] %vm348, %v2055
        %2088 = vst.msk [vmem:[%s2012 + $0x82] sm:$0xff] %vm348, %v2056
        %2089 = vst.msk [vmem:[%s2012 + $0x92] sm:$0xff] %vm348, %v2057
        %2090 = vst.msk [vmem:[%s2012 + $0x9a] sm:$0xff] %vm348, %v2058
        %2091 = vst.msk [vmem:[%s2012 + $0xaa] sm:$0xff] %vm348, %v2059
        %2092 = vst.msk [vmem:[%s2012 + $0xb2] sm:$0xff] %vm348, %v2060
        %2093 = vst.msk [vmem:[%s2012 + $0xc2] sm:$0xff] %vm348, %v2061
        %2094 = vst.msk [vmem:[%s2012 + $0xca] sm:$0xff] %vm348, %v2062
        %2095 = vst.msk [vmem:[%s2012 + $0xda] sm:$0xff] %vm348, %v2063
        %2096 = vst.msk [vmem:[%s2012 + $0xe2] sm:$0xff] %vm348, %v2064
        %2097 = vst.msk [vmem:[%s2012 + $0xf2] sm:$0xff] %vm348, %v2065
        %2098 = vst.msk [vmem:[%s2012 + $0xfa] sm:$0xff] %vm348, %v2066
        %2099 = vst.msk [vmem:[%s2012 + $0x10a] sm:$0xff] %vm348, %v2067
        %2100 = vst.msk [vmem:[%s2012 + $0x112] sm:$0xff] %vm348, %v2068
        %2101 = vst.msk [vmem:[%s2012 + $0x122] sm:$0xff] %vm348, %v2069
        %2102 = vst.msk [vmem:[%s2012 + $0x12a] sm:$0xff] %vm348, %v2070
        %2103 = vst.msk [vmem:[%s2012 + $0x13a] sm:$0xff] %vm348, %v2071
        %2104 = vst.msk [vmem:[%s2012 + $0x142] sm:$0xff] %vm348, %v2072
        %2105 = vst.msk [vmem:[%s2012 + $0x152] sm:$0xff] %vm348, %v2073
        %2106 = vst.msk [vmem:[%s2012 + $0x15a] sm:$0xff] %vm348, %v2074
        %2107 = vst.msk [vmem:[%s2012 + $0x16a] sm:$0xff] %vm348, %v2075
        %2108 = vst.msk [vmem:[%s2012 + $0x172] sm:$0xff] %vm348, %v2076
        %s2109 = scalar_lea.vmem %s1, 512
        %v2110 = vld [vmem:[%s2109] sm:$0xf]
        %v2111 = vld [vmem:[%s2109 + $0x4] sm:$0xf]
        %v2112 = vld [vmem:[%s2109 + $0x8] sm:$0xf]
        %v2113 = vld [vmem:[%s2109 + $0xc] sm:$0xf]
        %v2114 = vld [vmem:[%s2109 + $0x10] sm:$0xf]
        %v2115 = vld [vmem:[%s2109 + $0x14] sm:$0xf]
        %v2116 = vld [vmem:[%s2109 + $0x18] sm:$0xf]
        %v2117 = vld [vmem:[%s2109 + $0x1c] sm:$0xf]
        %v2118 = vld [vmem:[%s2109 + $0x20] sm:$0xf]
        %v2119 = vld [vmem:[%s2109 + $0x24] sm:$0xf]
        %v2120 = vld [vmem:[%s2109 + $0x28] sm:$0xf]
        %v2121 = vld [vmem:[%s2109 + $0x2c] sm:$0xf]
        %v2122 = vld [vmem:[%s2109 + $0x30] sm:$0xf]
        %v2123 = vld [vmem:[%s2109 + $0x34] sm:$0xf]
        %v2124 = vld [vmem:[%s2109 + $0x38] sm:$0xf]
        %v2125 = vld [vmem:[%s2109 + $0x3c] sm:$0xf]
        %v2126 = vld [vmem:[%s2109 + $0x40] sm:$0xf]
        %v2127 = vld [vmem:[%s2109 + $0x44] sm:$0xf]
        %v2128 = vld [vmem:[%s2109 + $0x48] sm:$0xf]
        %v2129 = vld [vmem:[%s2109 + $0x4c] sm:$0xf]
        %v2130 = vld [vmem:[%s2109 + $0x50] sm:$0xf]
        %v2131 = vld [vmem:[%s2109 + $0x54] sm:$0xf]
        %v2132 = vld [vmem:[%s2109 + $0x58] sm:$0xf]
        %v2133 = vld [vmem:[%s2109 + $0x5c] sm:$0xf]
        %v2134 = vld [vmem:[%s2109 + $0x60] sm:$0xf]
        %v2135 = vld [vmem:[%s2109 + $0x64] sm:$0xf]
        %v2136 = vld [vmem:[%s2109 + $0x68] sm:$0xf]
        %v2137 = vld [vmem:[%s2109 + $0x6c] sm:$0xf]
        %v2138 = vld [vmem:[%s2109 + $0x70] sm:$0xf]
        %v2139 = vld [vmem:[%s2109 + $0x74] sm:$0xf]
        %v2140 = vld [vmem:[%s2109 + $0x78] sm:$0xf]
        %v2141 = vld [vmem:[%s2109 + $0x7c] sm:$0xf]
        %v2174 = vunpack.c.l.b16 %v2110
        %v2175 = vunpack.c.l.b16 %v2111
        %v2176 = vunpack.c.l.b16 %v2112
        %v2177 = vunpack.c.l.b16 %v2113
        %v2178 = vunpack.c.l.b16 %v2114
        %v2179 = vunpack.c.l.b16 %v2115
        %v2180 = vunpack.c.l.b16 %v2116
        %v2181 = vunpack.c.l.b16 %v2117
        %v2182 = vunpack.c.l.b16 %v2118
        %v2183 = vunpack.c.l.b16 %v2119
        %v2184 = vunpack.c.l.b16 %v2120
        %v2185 = vunpack.c.l.b16 %v2121
        %v2186 = vunpack.c.l.b16 %v2122
        %v2187 = vunpack.c.l.b16 %v2123
        %v2188 = vunpack.c.l.b16 %v2124
        %v2189 = vunpack.c.l.b16 %v2125
        %v2190 = vunpack.c.l.b16 %v2126
        %v2191 = vunpack.c.l.b16 %v2127
        %v2192 = vunpack.c.l.b16 %v2128
        %v2193 = vunpack.c.l.b16 %v2129
        %v2194 = vunpack.c.l.b16 %v2130
        %v2195 = vunpack.c.l.b16 %v2131
        %v2196 = vunpack.c.l.b16 %v2132
        %v2197 = vunpack.c.l.b16 %v2133
        %v2198 = vunpack.c.l.b16 %v2134
        %v2199 = vunpack.c.l.b16 %v2135
        %v2200 = vunpack.c.l.b16 %v2136
        %v2201 = vunpack.c.l.b16 %v2137
        %v2202 = vunpack.c.l.b16 %v2138
        %v2203 = vunpack.c.l.b16 %v2139
        %v2204 = vunpack.c.l.b16 %v2140
        %v2205 = vunpack.c.l.b16 %v2141
        %v2206 = vpack.c.b16 %v2175, %v2174
        %v2207 = vpack.c.b16 %v2177, %v2176
        %v2208 = vpack.c.b16 %v2179, %v2178
        %v2209 = vpack.c.b16 %v2181, %v2180
        %v2210 = vpack.c.b16 %v2183, %v2182
        %v2211 = vpack.c.b16 %v2185, %v2184
        %v2212 = vpack.c.b16 %v2187, %v2186
        %v2213 = vpack.c.b16 %v2189, %v2188
        %v2214 = vpack.c.b16 %v2191, %v2190
        %v2215 = vpack.c.b16 %v2193, %v2192
        %v2216 = vpack.c.b16 %v2195, %v2194
        %v2217 = vpack.c.b16 %v2197, %v2196
        %v2218 = vpack.c.b16 %v2199, %v2198
        %v2219 = vpack.c.b16 %v2201, %v2200
        %v2220 = vpack.c.b16 %v2203, %v2202
        %v2221 = vpack.c.b16 %v2205, %v2204
        %2238 = vmatprep.subr.bf16.mxu0 0
        %2239 = vmatpush1.bf16.msra.mxu0 %v2206
        %2240 = vmatprep.subr.bf16.mxu0 0
        %2241 = vmatpush1.bf16.msra.mxu0 %v2207
        %2242 = vmatprep.subr.bf16.mxu0 0
        %2243 = vmatpush1.bf16.msra.mxu0 %v2208
        %2244 = vmatprep.subr.bf16.mxu0 0
        %2245 = vmatpush1.bf16.msra.mxu0 %v2209
        %2246 = vmatprep.subr.bf16.mxu0 0
        %2247 = vmatpush1.bf16.msra.mxu0 %v2210
        %2248 = vmatprep.subr.bf16.mxu0 0
        %2249 = vmatpush1.bf16.msra.mxu0 %v2211
        %2250 = vmatprep.subr.bf16.mxu0 0
        %2251 = vmatpush1.bf16.msra.mxu0 %v2212
        %2252 = vmatprep.subr.bf16.mxu0 0
        %2253 = vmatpush1.bf16.msra.mxu0 %v2213
        %2254 = vmatprep.subr.bf16.mxu0 0
        %2255 = vmatpush1.bf16.msra.mxu0 %v2214
        %2256 = vmatprep.subr.bf16.mxu0 0
        %2257 = vmatpush1.bf16.msra.mxu0 %v2215
        %2258 = vmatprep.subr.bf16.mxu0 0
        %2259 = vmatpush1.bf16.msra.mxu0 %v2216
        %2260 = vmatprep.subr.bf16.mxu0 0
        %2261 = vmatpush1.bf16.msra.mxu0 %v2217
        %2262 = vmatprep.subr.bf16.mxu0 0
        %2263 = vmatpush1.bf16.msra.mxu0 %v2218
        %2264 = vmatprep.subr.bf16.mxu0 0
        %2265 = vmatpush1.bf16.msra.mxu0 %v2219
        %2266 = vmatprep.subr.bf16.mxu0 0
        %2267 = vmatpush1.bf16.msra.mxu0 %v2220
        %2268 = vmatprep.subr.bf16.mxu0 0
        %2269 = vmatpush1.bf16.msra.mxu0 %v2221
        %2270 = vmatprep.mubr.bf16.mxu0 %v533
        %2271 = vmatmul.mubr.bf16.gmra.mrb[0].mxu0 %v532
        %v2272 = vpop.f32.mrb[0].mxu0
        %v2273 = vadd.f32 0.0, %v2272
        %v2274 = vpop.f32.mrb[0].mxu0
        %v2275 = vpop.f32.mrb[0].mxu0
        %v2276 = vadd.f32 0.0, %v2275
        %v2277 = vpop.f32.mrb[0].mxu0
        %2278 = vmatprep.mubr.bf16.mxu0 %v535
        %2279 = vmatmul.mubr.bf16.gmra.mrb[0].mxu0 %v534
        %v2280 = vpop.f32.mrb[0].mxu0
        %v2281 = vadd.f32 0.0, %v2280
        %v2282 = vpop.f32.mrb[0].mxu0
        %v2283 = vpop.f32.mrb[0].mxu0
        %v2284 = vadd.f32 0.0, %v2283
        %v2285 = vpop.f32.mrb[0].mxu0
        %2286 = vmatprep.mubr.bf16.mxu0 %v537
        %2287 = vmatmul.mubr.bf16.gmra.mrb[0].mxu0 %v536
        %v2288 = vpop.f32.mrb[0].mxu0
        %v2289 = vadd.f32 0.0, %v2288
        %v2290 = vpop.f32.mrb[0].mxu0
        %v2291 = vpop.f32.mrb[0].mxu0
        %v2292 = vadd.f32 0.0, %v2291
        %v2293 = vpop.f32.mrb[0].mxu0
        %2294 = vmatprep.mubr.bf16.mxu0 %v539
        %2295 = vmatmul.mubr.bf16.gmra.mrb[0].mxu0 %v538
        %v2296 = vpop.f32.mrb[0].mxu0
        %v2297 = vadd.f32 0.0, %v2296
        %v2298 = vpop.f32.mrb[0].mxu0
        %v2299 = vpop.f32.mrb[0].mxu0
        %v2300 = vadd.f32 0.0, %v2299
        %v2301 = vpop.f32.mrb[0].mxu0
        %2302 = vmatprep.mubr.bf16.mxu0 %v541
        %2303 = vmatmul.mubr.bf16.gmra.mrb[0].mxu0 %v540
        %v2304 = vpop.f32.mrb[0].mxu0
        %v2305 = vadd.f32 0.0, %v2304
        %v2306 = vpop.f32.mrb[0].mxu0
        %v2307 = vpop.f32.mrb[0].mxu0
        %v2308 = vadd.f32 0.0, %v2307
        %v2309 = vpop.f32.mrb[0].mxu0
        %2310 = vmatprep.mubr.bf16.mxu0 %v543
        %2311 = vmatmul.mubr.bf16.gmra.mrb[0].mxu0 %v542
        %v2312 = vpop.f32.mrb[0].mxu0
        %v2313 = vadd.f32 0.0, %v2312
        %v2314 = vpop.f32.mrb[0].mxu0
        %v2315 = vpop.f32.mrb[0].mxu0
        %v2316 = vadd.f32 0.0, %v2315
        %v2317 = vpop.f32.mrb[0].mxu0
        %2318 = vmatprep.mubr.bf16.mxu0 %v545
        %2319 = vmatmul.mubr.bf16.gmra.mrb[0].mxu0 %v544
        %v2320 = vpop.f32.mrb[0].mxu0
        %v2321 = vadd.f32 0.0, %v2320
        %v2322 = vpop.f32.mrb[0].mxu0
        %v2323 = vpop.f32.mrb[0].mxu0
        %v2324 = vadd.f32 0.0, %v2323
        %v2325 = vpop.f32.mrb[0].mxu0
        %2326 = vmatprep.mubr.bf16.mxu0 %v547
        %2327 = vmatmul.mubr.bf16.gmra.mrb[0].mxu0 %v546
        %v2328 = vpop.f32.mrb[0].mxu0
        %v2329 = vadd.f32 0.0, %v2328
        %v2330 = vpop.f32.mrb[0].mxu0
        %v2331 = vpop.f32.mrb[0].mxu0
        %v2332 = vadd.f32 0.0, %v2331
        %v2333 = vpop.f32.mrb[0].mxu0
        %2334 = vmatprep.mubr.bf16.mxu0 %v549
        %2335 = vmatmul.mubr.bf16.gmra.mrb[0].mxu0 %v548
        %v2336 = vpop.f32.mrb[0].mxu0
        %v2337 = vadd.f32 0.0, %v2336
        %v2338 = vpop.f32.mrb[0].mxu0
        %v2339 = vpop.f32.mrb[0].mxu0
        %v2340 = vadd.f32 0.0, %v2339
        %v2341 = vpop.f32.mrb[0].mxu0
        %2342 = vmatprep.mubr.bf16.mxu0 %v551
        %2343 = vmatmul.mubr.bf16.gmra.mrb[0].mxu0 %v550
        %v2344 = vpop.f32.mrb[0].mxu0
        %v2345 = vadd.f32 0.0, %v2344
        %v2346 = vpop.f32.mrb[0].mxu0
        %v2347 = vpop.f32.mrb[0].mxu0
        %v2348 = vadd.f32 0.0, %v2347
        %v2349 = vpop.f32.mrb[0].mxu0
        %2350 = vmatprep.mubr.bf16.mxu0 %v553
        %2351 = vmatmul.mubr.bf16.gmra.mrb[0].mxu0 %v552
        %v2352 = vpop.f32.mrb[0].mxu0
        %v2353 = vadd.f32 0.0, %v2352
        %v2354 = vpop.f32.mrb[0].mxu0
        %v2355 = vpop.f32.mrb[0].mxu0
        %v2356 = vadd.f32 0.0, %v2355
        %v2357 = vpop.f32.mrb[0].mxu0
        %2358 = vmatprep.mubr.bf16.mxu0 %v555
        %2359 = vmatmul.mubr.bf16.gmra.mrb[0].mxu0 %v554
        %v2360 = vpop.f32.mrb[0].mxu0
        %v2361 = vadd.f32 0.0, %v2360
        %v2362 = vpop.f32.mrb[0].mxu0
        %v2363 = vpop.f32.mrb[0].mxu0
        %v2364 = vadd.f32 0.0, %v2363
        %v2365 = vpop.f32.mrb[0].mxu0
        %2366 = vmatprep.mubr.bf16.mxu0 %v557
        %2367 = vmatmul.mubr.bf16.gmra.mrb[0].mxu0 %v556
        %v2368 = vpop.f32.mrb[0].mxu0
        %v2369 = vadd.f32 0.0, %v2368
        %v2370 = vpop.f32.mrb[0].mxu0
        %v2371 = vpop.f32.mrb[0].mxu0
        %v2372 = vadd.f32 0.0, %v2371
        %v2373 = vpop.f32.mrb[0].mxu0
        %2374 = vmatprep.mubr.bf16.mxu0 %v559
        %2375 = vmatmul.mubr.bf16.gmra.mrb[0].mxu0 %v558
        %v2376 = vpop.f32.mrb[0].mxu0
        %v2377 = vadd.f32 0.0, %v2376
        %v2378 = vpop.f32.mrb[0].mxu0
        %v2379 = vpop.f32.mrb[0].mxu0
        %v2380 = vadd.f32 0.0, %v2379
        %v2381 = vpop.f32.mrb[0].mxu0
        %2382 = vmatprep.mubr.bf16.mxu0 %v561
        %2383 = vmatmul.mubr.bf16.gmra.mrb[0].mxu0 %v560
        %v2384 = vpop.f32.mrb[0].mxu0
        %v2385 = vadd.f32 0.0, %v2384
        %v2386 = vpop.f32.mrb[0].mxu0
        %v2387 = vpop.f32.mrb[0].mxu0
        %v2388 = vadd.f32 0.0, %v2387
        %v2389 = vpop.f32.mrb[0].mxu0
        %2390 = vmatprep.mubr.bf16.mxu0 %v563
        %2391 = vmatmul.mubr.bf16.gmra.mrb[0].mxu0 %v562
        %v2392 = vpop.f32.mrb[0].mxu0
        %v2393 = vadd.f32 0.0, %v2392
        %v2394 = vpop.f32.mrb[0].mxu0
        %v2395 = vpop.f32.mrb[0].mxu0
        %v2396 = vadd.f32 0.0, %v2395
        %v2397 = vpop.f32.mrb[0].mxu0
        %2398 = vdwg.mxu0
        %v2399 = vld [vmem:[%s2012 + $0x1] sm:$0xff]
        %v2400 = vld [vmem:[%s2012 + $0x9] sm:$0xff]
        %v2401 = vld [vmem:[%s2012 + $0x19] sm:$0xff]
        %v2402 = vld [vmem:[%s2012 + $0x21] sm:$0xff]
        %v2403 = vld [vmem:[%s2012 + $0x31] sm:$0xff]
        %v2404 = vld [vmem:[%s2012 + $0x39] sm:$0xff]
        %v2405 = vld [vmem:[%s2012 + $0x49] sm:$0xff]
        %v2406 = vld [vmem:[%s2012 + $0x51] sm:$0xff]
        %v2407 = vld [vmem:[%s2012 + $0x61] sm:$0xff]
        %v2408 = vld [vmem:[%s2012 + $0x69] sm:$0xff]
        %v2409 = vld [vmem:[%s2012 + $0x79] sm:$0xff]
        %v2410 = vld [vmem:[%s2012 + $0x81] sm:$0xff]
        %v2411 = vld [vmem:[%s2012 + $0x91] sm:$0xff]
        %v2412 = vld [vmem:[%s2012 + $0x99] sm:$0xff]
        %v2413 = vld [vmem:[%s2012 + $0xa9] sm:$0xff]
        %v2414 = vld [vmem:[%s2012 + $0xb1] sm:$0xff]
        %v2415 = vld [vmem:[%s2012 + $0xc1] sm:$0xff]
        %v2416 = vld [vmem:[%s2012 + $0xc9] sm:$0xff]
        %v2417 = vld [vmem:[%s2012 + $0xd9] sm:$0xff]
        %v2418 = vld [vmem:[%s2012 + $0xe1] sm:$0xff]
        %v2419 = vld [vmem:[%s2012 + $0xf1] sm:$0xff]
        %v2420 = vld [vmem:[%s2012 + $0xf9] sm:$0xff]
        %v2421 = vld [vmem:[%s2012 + $0x109] sm:$0xff]
        %v2422 = vld [vmem:[%s2012 + $0x111] sm:$0xff]
        %v2423 = vld [vmem:[%s2012 + $0x121] sm:$0xff]
        %v2424 = vld [vmem:[%s2012 + $0x129] sm:$0xff]
        %v2425 = vld [vmem:[%s2012 + $0x139] sm:$0xff]
        %v2426 = vld [vmem:[%s2012 + $0x141] sm:$0xff]
        %v2427 = vld [vmem:[%s2012 + $0x151] sm:$0xff]
        %v2428 = vld [vmem:[%s2012 + $0x159] sm:$0xff]
        %v2429 = vld [vmem:[%s2012 + $0x169] sm:$0xff]
        %v2430 = vld [vmem:[%s2012 + $0x171] sm:$0xff]
        %v2431 = vadd.f32 %v2399, %v2273
        %v2432 = vadd.f32 %v2400, %v2276
        %v2433 = vadd.f32 %v2401, %v2281
        %v2434 = vadd.f32 %v2402, %v2284
        %v2435 = vadd.f32 %v2403, %v2289
        %v2436 = vadd.f32 %v2404, %v2292
        %v2437 = vadd.f32 %v2405, %v2297
        %v2438 = vadd.f32 %v2406, %v2300
        %v2439 = vadd.f32 %v2407, %v2305
        %v2440 = vadd.f32 %v2408, %v2308
        %v2441 = vadd.f32 %v2409, %v2313
        %v2442 = vadd.f32 %v2410, %v2316
        %v2443 = vadd.f32 %v2411, %v2321
        %v2444 = vadd.f32 %v2412, %v2324
        %v2445 = vadd.f32 %v2413, %v2329
        %v2446 = vadd.f32 %v2414, %v2332
        %v2447 = vadd.f32 %v2415, %v2337
        %v2448 = vadd.f32 %v2416, %v2340
        %v2449 = vadd.f32 %v2417, %v2345
        %v2450 = vadd.f32 %v2418, %v2348
        %v2451 = vadd.f32 %v2419, %v2353
        %v2452 = vadd.f32 %v2420, %v2356
        %v2453 = vadd.f32 %v2421, %v2361
        %v2454 = vadd.f32 %v2422, %v2364
        %v2455 = vadd.f32 %v2423, %v2369
        %v2456 = vadd.f32 %v2424, %v2372
        %v2457 = vadd.f32 %v2425, %v2377
        %v2458 = vadd.f32 %v2426, %v2380
        %v2459 = vadd.f32 %v2427, %v2385
        %v2460 = vadd.f32 %v2428, %v2388
        %v2461 = vadd.f32 %v2429, %v2393
        %v2462 = vadd.f32 %v2430, %v2396
        %2463 = vst.msk [vmem:[%s2012 + $0x1] sm:$0xff] %vm348, %v2431
        %2464 = vst.msk [vmem:[%s2012 + $0x9] sm:$0xff] %vm348, %v2432
        %2465 = vst.msk [vmem:[%s2012 + $0x19] sm:$0xff] %vm348, %v2433
        %2466 = vst.msk [vmem:[%s2012 + $0x21] sm:$0xff] %vm348, %v2434
        %2467 = vst.msk [vmem:[%s2012 + $0x31] sm:$0xff] %vm348, %v2435
        %2468 = vst.msk [vmem:[%s2012 + $0x39] sm:$0xff] %vm348, %v2436
        %2469 = vst.msk [vmem:[%s2012 + $0x49] sm:$0xff] %vm348, %v2437
        %2470 = vst.msk [vmem:[%s2012 + $0x51] sm:$0xff] %vm348, %v2438
        %2471 = vst.msk [vmem:[%s2012 + $0x61] sm:$0xff] %vm348, %v2439
        %2472 = vst.msk [vmem:[%s2012 + $0x69] sm:$0xff] %vm348, %v2440
        %2473 = vst.msk [vmem:[%s2012 + $0x79] sm:$0xff] %vm348, %v2441
        %2474 = vst.msk [vmem:[%s2012 + $0x81] sm:$0xff] %vm348, %v2442
        %2475 = vst.msk [vmem:[%s2012 + $0x91] sm:$0xff] %vm348, %v2443
        %2476 = vst.msk [vmem:[%s2012 + $0x99] sm:$0xff] %vm348, %v2444
        %2477 = vst.msk [vmem:[%s2012 + $0xa9] sm:$0xff] %vm348, %v2445
        %2478 = vst.msk [vmem:[%s2012 + $0xb1] sm:$0xff] %vm348, %v2446
        %2479 = vst.msk [vmem:[%s2012 + $0xc1] sm:$0xff] %vm348, %v2447
        %2480 = vst.msk [vmem:[%s2012 + $0xc9] sm:$0xff] %vm348, %v2448
        %2481 = vst.msk [vmem:[%s2012 + $0xd9] sm:$0xff] %vm348, %v2449
        %2482 = vst.msk [vmem:[%s2012 + $0xe1] sm:$0xff] %vm348, %v2450
        %2483 = vst.msk [vmem:[%s2012 + $0xf1] sm:$0xff] %vm348, %v2451
        %2484 = vst.msk [vmem:[%s2012 + $0xf9] sm:$0xff] %vm348, %v2452
        %2485 = vst.msk [vmem:[%s2012 + $0x109] sm:$0xff] %vm348, %v2453
        %2486 = vst.msk [vmem:[%s2012 + $0x111] sm:$0xff] %vm348, %v2454
        %2487 = vst.msk [vmem:[%s2012 + $0x121] sm:$0xff] %vm348, %v2455
        %2488 = vst.msk [vmem:[%s2012 + $0x129] sm:$0xff] %vm348, %v2456
        %2489 = vst.msk [vmem:[%s2012 + $0x139] sm:$0xff] %vm348, %v2457
        %2490 = vst.msk [vmem:[%s2012 + $0x141] sm:$0xff] %vm348, %v2458
        %2491 = vst.msk [vmem:[%s2012 + $0x151] sm:$0xff] %vm348, %v2459
        %2492 = vst.msk [vmem:[%s2012 + $0x159] sm:$0xff] %vm348, %v2460
        %2493 = vst.msk [vmem:[%s2012 + $0x169] sm:$0xff] %vm348, %v2461
        %2494 = vst.msk [vmem:[%s2012 + $0x171] sm:$0xff] %vm348, %v2462
        %s2495 = scalar_lea.vmem %s1, 640
        %v2496 = vld [vmem:[%s2495] sm:$0xf]
        %v2497 = vld [vmem:[%s2495 + $0x4] sm:$0xf]
        %v2498 = vld [vmem:[%s2495 + $0x8] sm:$0xf]
        %v2499 = vld [vmem:[%s2495 + $0xc] sm:$0xf]
        %v2500 = vld [vmem:[%s2495 + $0x10] sm:$0xf]
        %v2501 = vld [vmem:[%s2495 + $0x14] sm:$0xf]
        %v2502 = vld [vmem:[%s2495 + $0x18] sm:$0xf]
        %v2503 = vld [vmem:[%s2495 + $0x1c] sm:$0xf]
        %v2504 = vld [vmem:[%s2495 + $0x20] sm:$0xf]
        %v2505 = vld [vmem:[%s2495 + $0x24] sm:$0xf]
        %v2506 = vld [vmem:[%s2495 + $0x28] sm:$0xf]
        %v2507 = vld [vmem:[%s2495 + $0x2c] sm:$0xf]
        %v2508 = vld [vmem:[%s2495 + $0x30] sm:$0xf]
        %v2509 = vld [vmem:[%s2495 + $0x34] sm:$0xf]
        %v2510 = vld [vmem:[%s2495 + $0x38] sm:$0xf]
        %v2511 = vld [vmem:[%s2495 + $0x3c] sm:$0xf]
        %v2512 = vld [vmem:[%s2495 + $0x40] sm:$0xf]
        %v2513 = vld [vmem:[%s2495 + $0x44] sm:$0xf]
        %v2514 = vld [vmem:[%s2495 + $0x48] sm:$0xf]
        %v2515 = vld [vmem:[%s2495 + $0x4c] sm:$0xf]
        %v2516 = vld [vmem:[%s2495 + $0x50] sm:$0xf]
        %v2517 = vld [vmem:[%s2495 + $0x54] sm:$0xf]
        %v2518 = vld [vmem:[%s2495 + $0x58] sm:$0xf]
        %v2519 = vld [vmem:[%s2495 + $0x5c] sm:$0xf]
        %v2520 = vld [vmem:[%s2495 + $0x60] sm:$0xf]
        %v2521 = vld [vmem:[%s2495 + $0x64] sm:$0xf]
        %v2522 = vld [vmem:[%s2495 + $0x68] sm:$0xf]
        %v2523 = vld [vmem:[%s2495 + $0x6c] sm:$0xf]
        %v2524 = vld [vmem:[%s2495 + $0x70] sm:$0xf]
        %v2525 = vld [vmem:[%s2495 + $0x74] sm:$0xf]
        %v2526 = vld [vmem:[%s2495 + $0x78] sm:$0xf]
        %v2527 = vld [vmem:[%s2495 + $0x7c] sm:$0xf]
        %v2560 = vunpack.c.l.b16 %v2496
        %v2561 = vunpack.c.l.b16 %v2497
        %v2562 = vunpack.c.l.b16 %v2498
        %v2563 = vunpack.c.l.b16 %v2499
        %v2564 = vunpack.c.l.b16 %v2500
        %v2565 = vunpack.c.l.b16 %v2501
        %v2566 = vunpack.c.l.b16 %v2502
        %v2567 = vunpack.c.l.b16 %v2503
        %v2568 = vunpack.c.l.b16 %v2504
        %v2569 = vunpack.c.l.b16 %v2505
        %v2570 = vunpack.c.l.b16 %v2506
        %v2571 = vunpack.c.l.b16 %v2507
        %v2572 = vunpack.c.l.b16 %v2508
        %v2573 = vunpack.c.l.b16 %v2509
        %v2574 = vunpack.c.l.b16 %v2510
        %v2575 = vunpack.c.l.b16 %v2511
        %v2576 = vunpack.c.l.b16 %v2512
        %v2577 = vunpack.c.l.b16 %v2513
        %v2578 = vunpack.c.l.b16 %v2514
        %v2579 = vunpack.c.l.b16 %v2515
        %v2580 = vunpack.c.l.b16 %v2516
        %v2581 = vunpack.c.l.b16 %v2517
        %v2582 = vunpack.c.l.b16 %v2518
        %v2583 = vunpack.c.l.b16 %v2519
        %v2584 = vunpack.c.l.b16 %v2520
        %v2585 = vunpack.c.l.b16 %v2521
        %v2586 = vunpack.c.l.b16 %v2522
        %v2587 = vunpack.c.l.b16 %v2523
        %v2588 = vunpack.c.l.b16 %v2524
        %v2589 = vunpack.c.l.b16 %v2525
        %v2590 = vunpack.c.l.b16 %v2526
        %v2591 = vunpack.c.l.b16 %v2527
        %v2592 = vpack.c.b16 %v2561, %v2560
        %v2593 = vpack.c.b16 %v2563, %v2562
        %v2594 = vpack.c.b16 %v2565, %v2564
        %v2595 = vpack.c.b16 %v2567, %v2566
        %v2596 = vpack.c.b16 %v2569, %v2568
        %v2597 = vpack.c.b16 %v2571, %v2570
        %v2598 = vpack.c.b16 %v2573, %v2572
        %v2599 = vpack.c.b16 %v2575, %v2574
        %v2600 = vpack.c.b16 %v2577, %v2576
        %v2601 = vpack.c.b16 %v2579, %v2578
        %v2602 = vpack.c.b16 %v2581, %v2580
        %v2603 = vpack.c.b16 %v2583, %v2582
        %v2604 = vpack.c.b16 %v2585, %v2584
        %v2605 = vpack.c.b16 %v2587, %v2586
        %v2606 = vpack.c.b16 %v2589, %v2588
        %v2607 = vpack.c.b16 %v2591, %v2590
        %2624 = vmatprep.subr.bf16.mxu0 0
        %2625 = vmatpush1.bf16.msra.mxu0 %v2592
        %2626 = vmatprep.subr.bf16.mxu0 0
        %2627 = vmatpush1.bf16.msra.mxu0 %v2593
        %2628 = vmatprep.subr.bf16.mxu0 0
        %2629 = vmatpush1.bf16.msra.mxu0 %v2594
        %2630 = vmatprep.subr.bf16.mxu0 0
        %2631 = vmatpush1.bf16.msra.mxu0 %v2595
        %2632 = vmatprep.subr.bf16.mxu0 0
        %2633 = vmatpush1.bf16.msra.mxu0 %v2596
        %2634 = vmatprep.subr.bf16.mxu0 0
        %2635 = vmatpush1.bf16.msra.mxu0 %v2597
        %2636 = vmatprep.subr.bf16.mxu0 0
        %2637 = vmatpush1.bf16.msra.mxu0 %v2598
        %2638 = vmatprep.subr.bf16.mxu0 0
        %2639 = vmatpush1.bf16.msra.mxu0 %v2599
        %2640 = vmatprep.subr.bf16.mxu0 0
        %2641 = vmatpush1.bf16.msra.mxu0 %v2600
        %2642 = vmatprep.subr.bf16.mxu0 0
        %2643 = vmatpush1.bf16.msra.mxu0 %v2601
        %2644 = vmatprep.subr.bf16.mxu0 0
        %2645 = vmatpush1.bf16.msra.mxu0 %v2602
        %2646 = vmatprep.subr.bf16.mxu0 0
        %2647 = vmatpush1.bf16.msra.mxu0 %v2603
        %2648 = vmatprep.subr.bf16.mxu0 0
        %2649 = vmatpush1.bf16.msra.mxu0 %v2604
        %2650 = vmatprep.subr.bf16.mxu0 0
        %2651 = vmatpush1.bf16.msra.mxu0 %v2605
        %2652 = vmatprep.subr.bf16.mxu0 0
        %2653 = vmatpush1.bf16.msra.mxu0 %v2606
        %2654 = vmatprep.subr.bf16.mxu0 0
        %2655 = vmatpush1.bf16.msra.mxu0 %v2607
        %2656 = vmatprep.mubr.bf16.mxu0 %v533
        %2657 = vmatmul.mubr.bf16.gmra.mrb[0].mxu0 %v532
        %v2658 = vpop.f32.mrb[0].mxu0
        %v2659 = vadd.f32 0.0, %v2658
        %v2660 = vpop.f32.mrb[0].mxu0
        %v2661 = vpop.f32.mrb[0].mxu0
        %v2662 = vadd.f32 0.0, %v2661
        %v2663 = vpop.f32.mrb[0].mxu0
        %2664 = vmatprep.mubr.bf16.mxu0 %v535
        %2665 = vmatmul.mubr.bf16.gmra.mrb[0].mxu0 %v534
        %v2666 = vpop.f32.mrb[0].mxu0
        %v2667 = vadd.f32 0.0, %v2666
        %v2668 = vpop.f32.mrb[0].mxu0
        %v2669 = vpop.f32.mrb[0].mxu0
        %v2670 = vadd.f32 0.0, %v2669
        %v2671 = vpop.f32.mrb[0].mxu0
        %2672 = vmatprep.mubr.bf16.mxu0 %v537
        %2673 = vmatmul.mubr.bf16.gmra.mrb[0].mxu0 %v536
        %v2674 = vpop.f32.mrb[0].mxu0
        %v2675 = vadd.f32 0.0, %v2674
        %v2676 = vpop.f32.mrb[0].mxu0
        %v2677 = vpop.f32.mrb[0].mxu0
        %v2678 = vadd.f32 0.0, %v2677
        %v2679 = vpop.f32.mrb[0].mxu0
        %2680 = vmatprep.mubr.bf16.mxu0 %v539
        %2681 = vmatmul.mubr.bf16.gmra.mrb[0].mxu0 %v538
        %v2682 = vpop.f32.mrb[0].mxu0
        %v2683 = vadd.f32 0.0, %v2682
        %v2684 = vpop.f32.mrb[0].mxu0
        %v2685 = vpop.f32.mrb[0].mxu0
        %v2686 = vadd.f32 0.0, %v2685
        %v2687 = vpop.f32.mrb[0].mxu0
        %2688 = vmatprep.mubr.bf16.mxu0 %v541
        %2689 = vmatmul.mubr.bf16.gmra.mrb[0].mxu0 %v540
        %v2690 = vpop.f32.mrb[0].mxu0
        %v2691 = vadd.f32 0.0, %v2690
        %v2692 = vpop.f32.mrb[0].mxu0
        %v2693 = vpop.f32.mrb[0].mxu0
        %v2694 = vadd.f32 0.0, %v2693
        %v2695 = vpop.f32.mrb[0].mxu0
        %2696 = vmatprep.mubr.bf16.mxu0 %v543
        %2697 = vmatmul.mubr.bf16.gmra.mrb[0].mxu0 %v542
        %v2698 = vpop.f32.mrb[0].mxu0
        %v2699 = vadd.f32 0.0, %v2698
        %v2700 = vpop.f32.mrb[0].mxu0
        %v2701 = vpop.f32.mrb[0].mxu0
        %v2702 = vadd.f32 0.0, %v2701
        %v2703 = vpop.f32.mrb[0].mxu0
        %2704 = vmatprep.mubr.bf16.mxu0 %v545
        %2705 = vmatmul.mubr.bf16.gmra.mrb[0].mxu0 %v544
        %v2706 = vpop.f32.mrb[0].mxu0
        %v2707 = vadd.f32 0.0, %v2706
        %v2708 = vpop.f32.mrb[0].mxu0
        %v2709 = vpop.f32.mrb[0].mxu0
        %v2710 = vadd.f32 0.0, %v2709
        %v2711 = vpop.f32.mrb[0].mxu0
        %2712 = vmatprep.mubr.bf16.mxu0 %v547
        %2713 = vmatmul.mubr.bf16.gmra.mrb[0].mxu0 %v546
        %v2714 = vpop.f32.mrb[0].mxu0
        %v2715 = vadd.f32 0.0, %v2714
        %v2716 = vpop.f32.mrb[0].mxu0
        %v2717 = vpop.f32.mrb[0].mxu0
        %v2718 = vadd.f32 0.0, %v2717
        %v2719 = vpop.f32.mrb[0].mxu0
        %2720 = vmatprep.mubr.bf16.mxu0 %v549
        %2721 = vmatmul.mubr.bf16.gmra.mrb[0].mxu0 %v548
        %v2722 = vpop.f32.mrb[0].mxu0
        %v2723 = vadd.f32 0.0, %v2722
        %v2724 = vpop.f32.mrb[0].mxu0
        %v2725 = vpop.f32.mrb[0].mxu0
        %v2726 = vadd.f32 0.0, %v2725
        %v2727 = vpop.f32.mrb[0].mxu0
        %2728 = vmatprep.mubr.bf16.mxu0 %v551
        %2729 = vmatmul.mubr.bf16.gmra.mrb[0].mxu0 %v550
        %v2730 = vpop.f32.mrb[0].mxu0
        %v2731 = vadd.f32 0.0, %v2730
        %v2732 = vpop.f32.mrb[0].mxu0
        %v2733 = vpop.f32.mrb[0].mxu0
        %v2734 = vadd.f32 0.0, %v2733
        %v2735 = vpop.f32.mrb[0].mxu0
        %2736 = vmatprep.mubr.bf16.mxu0 %v553
        %2737 = vmatmul.mubr.bf16.gmra.mrb[0].mxu0 %v552
        %v2738 = vpop.f32.mrb[0].mxu0
        %v2739 = vadd.f32 0.0, %v2738
        %v2740 = vpop.f32.mrb[0].mxu0
        %v2741 = vpop.f32.mrb[0].mxu0
        %v2742 = vadd.f32 0.0, %v2741
        %v2743 = vpop.f32.mrb[0].mxu0
        %2744 = vmatprep.mubr.bf16.mxu0 %v555
        %2745 = vmatmul.mubr.bf16.gmra.mrb[0].mxu0 %v554
        %v2746 = vpop.f32.mrb[0].mxu0
        %v2747 = vadd.f32 0.0, %v2746
        %v2748 = vpop.f32.mrb[0].mxu0
        %v2749 = vpop.f32.mrb[0].mxu0
        %v2750 = vadd.f32 0.0, %v2749
        %v2751 = vpop.f32.mrb[0].mxu0
        %2752 = vmatprep.mubr.bf16.mxu0 %v557
        %2753 = vmatmul.mubr.bf16.gmra.mrb[0].mxu0 %v556
        %v2754 = vpop.f32.mrb[0].mxu0
        %v2755 = vadd.f32 0.0, %v2754
        %v2756 = vpop.f32.mrb[0].mxu0
        %v2757 = vpop.f32.mrb[0].mxu0
        %v2758 = vadd.f32 0.0, %v2757
        %v2759 = vpop.f32.mrb[0].mxu0
        %2760 = vmatprep.mubr.bf16.mxu0 %v559
        %2761 = vmatmul.mubr.bf16.gmra.mrb[0].mxu0 %v558
        %v2762 = vpop.f32.mrb[0].mxu0
        %v2763 = vadd.f32 0.0, %v2762
        %v2764 = vpop.f32.mrb[0].mxu0
        %v2765 = vpop.f32.mrb[0].mxu0
        %v2766 = vadd.f32 0.0, %v2765
        %v2767 = vpop.f32.mrb[0].mxu0
        %2768 = vmatprep.mubr.bf16.mxu0 %v561
        %2769 = vmatmul.mubr.bf16.gmra.mrb[0].mxu0 %v560
        %v2770 = vpop.f32.mrb[0].mxu0
        %v2771 = vadd.f32 0.0, %v2770
        %v2772 = vpop.f32.mrb[0].mxu0
        %v2773 = vpop.f32.mrb[0].mxu0
        %v2774 = vadd.f32 0.0, %v2773
        %v2775 = vpop.f32.mrb[0].mxu0
        %2776 = vmatprep.mubr.bf16.mxu0 %v563
        %2777 = vmatmul.mubr.bf16.gmra.mrb[0].mxu0 %v562
        %v2778 = vpop.f32.mrb[0].mxu0
        %v2779 = vadd.f32 0.0, %v2778
        %v2780 = vpop.f32.mrb[0].mxu0
        %v2781 = vpop.f32.mrb[0].mxu0
        %v2782 = vadd.f32 0.0, %v2781
        %v2783 = vpop.f32.mrb[0].mxu0
        %2784 = vdwg.mxu0
        %v2785 = vld [vmem:[%s2012] sm:$0xff]
        %v2786 = vld [vmem:[%s2012 + $0x8] sm:$0xff]
        %v2787 = vld [vmem:[%s2012 + $0x18] sm:$0xff]
        %v2788 = vld [vmem:[%s2012 + $0x20] sm:$0xff]
        %v2789 = vld [vmem:[%s2012 + $0x30] sm:$0xff]
        %v2790 = vld [vmem:[%s2012 + $0x38] sm:$0xff]
        %v2791 = vld [vmem:[%s2012 + $0x48] sm:$0xff]
        %v2792 = vld [vmem:[%s2012 + $0x50] sm:$0xff]
        %v2793 = vld [vmem:[%s2012 + $0x60] sm:$0xff]
        %v2794 = vld [vmem:[%s2012 + $0x68] sm:$0xff]
        %v2795 = vld [vmem:[%s2012 + $0x78] sm:$0xff]
        %v2796 = vld [vmem:[%s2012 + $0x80] sm:$0xff]
        %v2797 = vld [vmem:[%s2012 + $0x90] sm:$0xff]
        %v2798 = vld [vmem:[%s2012 + $0x98] sm:$0xff]
        %v2799 = vld [vmem:[%s2012 + $0xa8] sm:$0xff]
        %v2800 = vld [vmem:[%s2012 + $0xb0] sm:$0xff]
        %v2801 = vld [vmem:[%s2012 + $0xc0] sm:$0xff]
        %v2802 = vld [vmem:[%s2012 + $0xc8] sm:$0xff]
        %v2803 = vld [vmem:[%s2012 + $0xd8] sm:$0xff]
        %v2804 = vld [vmem:[%s2012 + $0xe0] sm:$0xff]
        %v2805 = vld [vmem:[%s2012 + $0xf0] sm:$0xff]
        %v2806 = vld [vmem:[%s2012 + $0xf8] sm:$0xff]
        %v2807 = vld [vmem:[%s2012 + $0x108] sm:$0xff]
        %v2808 = vld [vmem:[%s2012 + $0x110] sm:$0xff]
        %v2809 = vld [vmem:[%s2012 + $0x120] sm:$0xff]
        %v2810 = vld [vmem:[%s2012 + $0x128] sm:$0xff]
        %v2811 = vld [vmem:[%s2012 + $0x138] sm:$0xff]
        %v2812 = vld [vmem:[%s2012 + $0x140] sm:$0xff]
        %v2813 = vld [vmem:[%s2012 + $0x150] sm:$0xff]
        %v2814 = vld [vmem:[%s2012 + $0x158] sm:$0xff]
        %v2815 = vld [vmem:[%s2012 + $0x168] sm:$0xff]
        %v2816 = vld [vmem:[%s2012 + $0x170] sm:$0xff]
        %v2817 = vadd.f32 %v2785, %v2659
        %v2818 = vadd.f32 %v2786, %v2662
        %v2819 = vadd.f32 %v2787, %v2667
        %v2820 = vadd.f32 %v2788, %v2670
        %v2821 = vadd.f32 %v2789, %v2675
        %v2822 = vadd.f32 %v2790, %v2678
        %v2823 = vadd.f32 %v2791, %v2683
        %v2824 = vadd.f32 %v2792, %v2686
        %v2825 = vadd.f32 %v2793, %v2691
        %v2826 = vadd.f32 %v2794, %v2694
        %v2827 = vadd.f32 %v2795, %v2699
        %v2828 = vadd.f32 %v2796, %v2702
        %v2829 = vadd.f32 %v2797, %v2707
        %v2830 = vadd.f32 %v2798, %v2710
        %v2831 = vadd.f32 %v2799, %v2715
        %v2832 = vadd.f32 %v2800, %v2718
        %v2833 = vadd.f32 %v2801, %v2723
        %v2834 = vadd.f32 %v2802, %v2726
        %v2835 = vadd.f32 %v2803, %v2731
        %v2836 = vadd.f32 %v2804, %v2734
        %v2837 = vadd.f32 %v2805, %v2739
        %v2838 = vadd.f32 %v2806, %v2742
        %v2839 = vadd.f32 %v2807, %v2747
        %v2840 = vadd.f32 %v2808, %v2750
        %v2841 = vadd.f32 %v2809, %v2755
        %v2842 = vadd.f32 %v2810, %v2758
        %v2843 = vadd.f32 %v2811, %v2763
        %v2844 = vadd.f32 %v2812, %v2766
        %v2845 = vadd.f32 %v2813, %v2771
        %v2846 = vadd.f32 %v2814, %v2774
        %v2847 = vadd.f32 %v2815, %v2779
        %v2848 = vadd.f32 %v2816, %v2782
        %2849 = vst.msk [vmem:[%s2012] sm:$0xff] %vm348, %v2817
        %2850 = vst.msk [vmem:[%s2012 + $0x8] sm:$0xff] %vm348, %v2818
        %2851 = vst.msk [vmem:[%s2012 + $0x18] sm:$0xff] %vm348, %v2819
        %2852 = vst.msk [vmem:[%s2012 + $0x20] sm:$0xff] %vm348, %v2820
        %2853 = vst.msk [vmem:[%s2012 + $0x30] sm:$0xff] %vm348, %v2821
        %2854 = vst.msk [vmem:[%s2012 + $0x38] sm:$0xff] %vm348, %v2822
        %2855 = vst.msk [vmem:[%s2012 + $0x48] sm:$0xff] %vm348, %v2823
        %2856 = vst.msk [vmem:[%s2012 + $0x50] sm:$0xff] %vm348, %v2824
        %2857 = vst.msk [vmem:[%s2012 + $0x60] sm:$0xff] %vm348, %v2825
        %2858 = vst.msk [vmem:[%s2012 + $0x68] sm:$0xff] %vm348, %v2826
        %2859 = vst.msk [vmem:[%s2012 + $0x78] sm:$0xff] %vm348, %v2827
        %2860 = vst.msk [vmem:[%s2012 + $0x80] sm:$0xff] %vm348, %v2828
        %2861 = vst.msk [vmem:[%s2012 + $0x90] sm:$0xff] %vm348, %v2829
        %2862 = vst.msk [vmem:[%s2012 + $0x98] sm:$0xff] %vm348, %v2830
        %2863 = vst.msk [vmem:[%s2012 + $0xa8] sm:$0xff] %vm348, %v2831
        %2864 = vst.msk [vmem:[%s2012 + $0xb0] sm:$0xff] %vm348, %v2832
        %2865 = vst.msk [vmem:[%s2012 + $0xc0] sm:$0xff] %vm348, %v2833
        %2866 = vst.msk [vmem:[%s2012 + $0xc8] sm:$0xff] %vm348, %v2834
        %2867 = vst.msk [vmem:[%s2012 + $0xd8] sm:$0xff] %vm348, %v2835
        %2868 = vst.msk [vmem:[%s2012 + $0xe0] sm:$0xff] %vm348, %v2836
        %2869 = vst.msk [vmem:[%s2012 + $0xf0] sm:$0xff] %vm348, %v2837
        %2870 = vst.msk [vmem:[%s2012 + $0xf8] sm:$0xff] %vm348, %v2838
        %2871 = vst.msk [vmem:[%s2012 + $0x108] sm:$0xff] %vm348, %v2839
        %2872 = vst.msk [vmem:[%s2012 + $0x110] sm:$0xff] %vm348, %v2840
        %2873 = vst.msk [vmem:[%s2012 + $0x120] sm:$0xff] %vm348, %v2841
        %2874 = vst.msk [vmem:[%s2012 + $0x128] sm:$0xff] %vm348, %v2842
        %2875 = vst.msk [vmem:[%s2012 + $0x138] sm:$0xff] %vm348, %v2843
        %2876 = vst.msk [vmem:[%s2012 + $0x140] sm:$0xff] %vm348, %v2844
        %2877 = vst.msk [vmem:[%s2012 + $0x150] sm:$0xff] %vm348, %v2845
        %2878 = vst.msk [vmem:[%s2012 + $0x158] sm:$0xff] %vm348, %v2846
        %2879 = vst.msk [vmem:[%s2012 + $0x168] sm:$0xff] %vm348, %v2847
        %2880 = vst.msk [vmem:[%s2012 + $0x170] sm:$0xff] %vm348, %v2848
        %s2881 = scalar_lea.vmem %s1, 768
        %v2882 = vld [vmem:[%s2881] sm:$0xf]
        %v2883 = vld [vmem:[%s2881 + $0x4] sm:$0xf]
        %v2884 = vld [vmem:[%s2881 + $0x8] sm:$0xf]
        %v2885 = vld [vmem:[%s2881 + $0xc] sm:$0xf]
        %v2886 = vld [vmem:[%s2881 + $0x10] sm:$0xf]
        %v2887 = vld [vmem:[%s2881 + $0x14] sm:$0xf]
        %v2888 = vld [vmem:[%s2881 + $0x18] sm:$0xf]
        %v2889 = vld [vmem:[%s2881 + $0x1c] sm:$0xf]
        %v2890 = vld [vmem:[%s2881 + $0x20] sm:$0xf]
        %v2891 = vld [vmem:[%s2881 + $0x24] sm:$0xf]
        %v2892 = vld [vmem:[%s2881 + $0x28] sm:$0xf]
        %v2893 = vld [vmem:[%s2881 + $0x2c] sm:$0xf]
        %v2894 = vld [vmem:[%s2881 + $0x30] sm:$0xf]
        %v2895 = vld [vmem:[%s2881 + $0x34] sm:$0xf]
        %v2896 = vld [vmem:[%s2881 + $0x38] sm:$0xf]
        %v2897 = vld [vmem:[%s2881 + $0x3c] sm:$0xf]
        %v2898 = vld [vmem:[%s2881 + $0x40] sm:$0xf]
        %v2899 = vld [vmem:[%s2881 + $0x44] sm:$0xf]
        %v2900 = vld [vmem:[%s2881 + $0x48] sm:$0xf]
        %v2901 = vld [vmem:[%s2881 + $0x4c] sm:$0xf]
        %v2902 = vld [vmem:[%s2881 + $0x50] sm:$0xf]
        %v2903 = vld [vmem:[%s2881 + $0x54] sm:$0xf]
        %v2904 = vld [vmem:[%s2881 + $0x58] sm:$0xf]
        %v2905 = vld [vmem:[%s2881 + $0x5c] sm:$0xf]
        %v2906 = vld [vmem:[%s2881 + $0x60] sm:$0xf]
        %v2907 = vld [vmem:[%s2881 + $0x64] sm:$0xf]
        %v2908 = vld [vmem:[%s2881 + $0x68] sm:$0xf]
        %v2909 = vld [vmem:[%s2881 + $0x6c] sm:$0xf]
        %v2910 = vld [vmem:[%s2881 + $0x70] sm:$0xf]
        %v2911 = vld [vmem:[%s2881 + $0x74] sm:$0xf]
        %v2912 = vld [vmem:[%s2881 + $0x78] sm:$0xf]
        %v2913 = vld [vmem:[%s2881 + $0x7c] sm:$0xf]
        %v2946 = vunpack.c.l.b16 %v2882
        %v2947 = vunpack.c.l.b16 %v2883
        %v2948 = vunpack.c.l.b16 %v2884
        %v2949 = vunpack.c.l.b16 %v2885
        %v2950 = vunpack.c.l.b16 %v2886
        %v2951 = vunpack.c.l.b16 %v2887
        %v2952 = vunpack.c.l.b16 %v2888
        %v2953 = vunpack.c.l.b16 %v2889
        %v2954 = vunpack.c.l.b16 %v2890
        %v2955 = vunpack.c.l.b16 %v2891
        %v2956 = vunpack.c.l.b16 %v2892
        %v2957 = vunpack.c.l.b16 %v2893
        %v2958 = vunpack.c.l.b16 %v2894
        %v2959 = vunpack.c.l.b16 %v2895
        %v2960 = vunpack.c.l.b16 %v2896
        %v2961 = vunpack.c.l.b16 %v2897
        %v2962 = vunpack.c.l.b16 %v2898
        %v2963 = vunpack.c.l.b16 %v2899
        %v2964 = vunpack.c.l.b16 %v2900
        %v2965 = vunpack.c.l.b16 %v2901
        %v2966 = vunpack.c.l.b16 %v2902
        %v2967 = vunpack.c.l.b16 %v2903
        %v2968 = vunpack.c.l.b16 %v2904
        %v2969 = vunpack.c.l.b16 %v2905
        %v2970 = vunpack.c.l.b16 %v2906
        %v2971 = vunpack.c.l.b16 %v2907
        %v2972 = vunpack.c.l.b16 %v2908
        %v2973 = vunpack.c.l.b16 %v2909
        %v2974 = vunpack.c.l.b16 %v2910
        %v2975 = vunpack.c.l.b16 %v2911
        %v2976 = vunpack.c.l.b16 %v2912
        %v2977 = vunpack.c.l.b16 %v2913
        %v2978 = vpack.c.b16 %v2947, %v2946
        %v2979 = vpack.c.b16 %v2949, %v2948
        %v2980 = vpack.c.b16 %v2951, %v2950
        %v2981 = vpack.c.b16 %v2953, %v2952
        %v2982 = vpack.c.b16 %v2955, %v2954
        %v2983 = vpack.c.b16 %v2957, %v2956
        %v2984 = vpack.c.b16 %v2959, %v2958
        %v2985 = vpack.c.b16 %v2961, %v2960
        %v2986 = vpack.c.b16 %v2963, %v2962
        %v2987 = vpack.c.b16 %v2965, %v2964
        %v2988 = vpack.c.b16 %v2967, %v2966
        %v2989 = vpack.c.b16 %v2969, %v2968
        %v2990 = vpack.c.b16 %v2971, %v2970
        %v2991 = vpack.c.b16 %v2973, %v2972
        %v2992 = vpack.c.b16 %v2975, %v2974
        %v2993 = vpack.c.b16 %v2977, %v2976
        %3010 = vmatprep.subr.bf16.mxu0 0
        %3011 = vmatpush1.bf16.msra.mxu0 %v2978
        %3012 = vmatprep.subr.bf16.mxu0 0
        %3013 = vmatpush1.bf16.msra.mxu0 %v2979
        %3014 = vmatprep.subr.bf16.mxu0 0
        %3015 = vmatpush1.bf16.msra.mxu0 %v2980
        %3016 = vmatprep.subr.bf16.mxu0 0
        %3017 = vmatpush1.bf16.msra.mxu0 %v2981
        %3018 = vmatprep.subr.bf16.mxu0 0
        %3019 = vmatpush1.bf16.msra.mxu0 %v2982
        %3020 = vmatprep.subr.bf16.mxu0 0
        %3021 = vmatpush1.bf16.msra.mxu0 %v2983
        %3022 = vmatprep.subr.bf16.mxu0 0
        %3023 = vmatpush1.bf16.msra.mxu0 %v2984
        %3024 = vmatprep.subr.bf16.mxu0 0
        %3025 = vmatpush1.bf16.msra.mxu0 %v2985
        %3026 = vmatprep.subr.bf16.mxu0 0
        %3027 = vmatpush1.bf16.msra.mxu0 %v2986
        %3028 = vmatprep.subr.bf16.mxu0 0
        %3029 = vmatpush1.bf16.msra.mxu0 %v2987
        %3030 = vmatprep.subr.bf16.mxu0 0
        %3031 = vmatpush1.bf16.msra.mxu0 %v2988
        %3032 = vmatprep.subr.bf16.mxu0 0
        %3033 = vmatpush1.bf16.msra.mxu0 %v2989
        %3034 = vmatprep.subr.bf16.mxu0 0
        %3035 = vmatpush1.bf16.msra.mxu0 %v2990
        %3036 = vmatprep.subr.bf16.mxu0 0
        %3037 = vmatpush1.bf16.msra.mxu0 %v2991
        %3038 = vmatprep.subr.bf16.mxu0 0
        %3039 = vmatpush1.bf16.msra.mxu0 %v2992
        %3040 = vmatprep.subr.bf16.mxu0 0
        %3041 = vmatpush1.bf16.msra.mxu0 %v2993
        %3042 = vmatprep.mubr.bf16.mxu0 %v533
        %3043 = vmatmul.mubr.bf16.gmra.mrb[0].mxu0 %v532
        %v3044 = vpop.f32.mrb[0].mxu0
        %v3045 = vadd.f32 0.0, %v3044
        %v3046 = vpop.f32.mrb[0].mxu0
        %v3047 = vpop.f32.mrb[0].mxu0
        %v3048 = vadd.f32 0.0, %v3047
        %v3049 = vpop.f32.mrb[0].mxu0
        %3050 = vmatprep.mubr.bf16.mxu0 %v535
        %3051 = vmatmul.mubr.bf16.gmra.mrb[0].mxu0 %v534
        %v3052 = vpop.f32.mrb[0].mxu0
        %v3053 = vadd.f32 0.0, %v3052
        %v3054 = vpop.f32.mrb[0].mxu0
        %v3055 = vpop.f32.mrb[0].mxu0
        %v3056 = vadd.f32 0.0, %v3055
        %v3057 = vpop.f32.mrb[0].mxu0
        %3058 = vmatprep.mubr.bf16.mxu0 %v537
        %3059 = vmatmul.mubr.bf16.gmra.mrb[0].mxu0 %v536
        %v3060 = vpop.f32.mrb[0].mxu0
        %v3061 = vadd.f32 0.0, %v3060
        %v3062 = vpop.f32.mrb[0].mxu0
        %v3063 = vpop.f32.mrb[0].mxu0
        %v3064 = vadd.f32 0.0, %v3063
        %v3065 = vpop.f32.mrb[0].mxu0
        %3066 = vmatprep.mubr.bf16.mxu0 %v539
        %3067 = vmatmul.mubr.bf16.gmra.mrb[0].mxu0 %v538
        %v3068 = vpop.f32.mrb[0].mxu0
        %v3069 = vadd.f32 0.0, %v3068
        %v3070 = vpop.f32.mrb[0].mxu0
        %v3071 = vpop.f32.mrb[0].mxu0
        %v3072 = vadd.f32 0.0, %v3071
        %v3073 = vpop.f32.mrb[0].mxu0
        %3074 = vmatprep.mubr.bf16.mxu0 %v541
        %3075 = vmatmul.mubr.bf16.gmra.mrb[0].mxu0 %v540
        %v3076 = vpop.f32.mrb[0].mxu0
        %v3077 = vadd.f32 0.0, %v3076
        %v3078 = vpop.f32.mrb[0].mxu0
        %v3079 = vpop.f32.mrb[0].mxu0
        %v3080 = vadd.f32 0.0, %v3079
        %v3081 = vpop.f32.mrb[0].mxu0
        %3082 = vmatprep.mubr.bf16.mxu0 %v543
        %3083 = vmatmul.mubr.bf16.gmra.mrb[0].mxu0 %v542
        %v3084 = vpop.f32.mrb[0].mxu0
        %v3085 = vadd.f32 0.0, %v3084
        %v3086 = vpop.f32.mrb[0].mxu0
        %v3087 = vpop.f32.mrb[0].mxu0
        %v3088 = vadd.f32 0.0, %v3087
        %v3089 = vpop.f32.mrb[0].mxu0
        %3090 = vmatprep.mubr.bf16.mxu0 %v545
        %3091 = vmatmul.mubr.bf16.gmra.mrb[0].mxu0 %v544
        %v3092 = vpop.f32.mrb[0].mxu0
        %v3093 = vadd.f32 0.0, %v3092
        %v3094 = vpop.f32.mrb[0].mxu0
        %v3095 = vpop.f32.mrb[0].mxu0
        %v3096 = vadd.f32 0.0, %v3095
        %v3097 = vpop.f32.mrb[0].mxu0
        %3098 = vmatprep.mubr.bf16.mxu0 %v547
        %3099 = vmatmul.mubr.bf16.gmra.mrb[0].mxu0 %v546
        %v3100 = vpop.f32.mrb[0].mxu0
        %v3101 = vadd.f32 0.0, %v3100
        %v3102 = vpop.f32.mrb[0].mxu0
        %v3103 = vpop.f32.mrb[0].mxu0
        %v3104 = vadd.f32 0.0, %v3103
        %v3105 = vpop.f32.mrb[0].mxu0
        %3106 = vmatprep.mubr.bf16.mxu0 %v549
        %3107 = vmatmul.mubr.bf16.gmra.mrb[0].mxu0 %v548
        %v3108 = vpop.f32.mrb[0].mxu0
        %v3109 = vadd.f32 0.0, %v3108
        %v3110 = vpop.f32.mrb[0].mxu0
        %v3111 = vpop.f32.mrb[0].mxu0
        %v3112 = vadd.f32 0.0, %v3111
        %v3113 = vpop.f32.mrb[0].mxu0
        %3114 = vmatprep.mubr.bf16.mxu0 %v551
        %3115 = vmatmul.mubr.bf16.gmra.mrb[0].mxu0 %v550
        %v3116 = vpop.f32.mrb[0].mxu0
        %v3117 = vadd.f32 0.0, %v3116
        %v3118 = vpop.f32.mrb[0].mxu0
        %v3119 = vpop.f32.mrb[0].mxu0
        %v3120 = vadd.f32 0.0, %v3119
        %v3121 = vpop.f32.mrb[0].mxu0
        %3122 = vmatprep.mubr.bf16.mxu0 %v553
        %3123 = vmatmul.mubr.bf16.gmra.mrb[0].mxu0 %v552
        %v3124 = vpop.f32.mrb[0].mxu0
        %v3125 = vadd.f32 0.0, %v3124
        %v3126 = vpop.f32.mrb[0].mxu0
        %v3127 = vpop.f32.mrb[0].mxu0
        %v3128 = vadd.f32 0.0, %v3127
        %v3129 = vpop.f32.mrb[0].mxu0
        %3130 = vmatprep.mubr.bf16.mxu0 %v555
        %3131 = vmatmul.mubr.bf16.gmra.mrb[0].mxu0 %v554
        %v3132 = vpop.f32.mrb[0].mxu0
        %v3133 = vadd.f32 0.0, %v3132
        %v3134 = vpop.f32.mrb[0].mxu0
        %v3135 = vpop.f32.mrb[0].mxu0
        %v3136 = vadd.f32 0.0, %v3135
        %v3137 = vpop.f32.mrb[0].mxu0
        %3138 = vmatprep.mubr.bf16.mxu0 %v557
        %3139 = vmatmul.mubr.bf16.gmra.mrb[0].mxu0 %v556
        %v3140 = vpop.f32.mrb[0].mxu0
        %v3141 = vadd.f32 0.0, %v3140
        %v3142 = vpop.f32.mrb[0].mxu0
        %v3143 = vpop.f32.mrb[0].mxu0
        %v3144 = vadd.f32 0.0, %v3143
        %v3145 = vpop.f32.mrb[0].mxu0
        %3146 = vmatprep.mubr.bf16.mxu0 %v559
        %3147 = vmatmul.mubr.bf16.gmra.mrb[0].mxu0 %v558
        %v3148 = vpop.f32.mrb[0].mxu0
        %v3149 = vadd.f32 0.0, %v3148
        %v3150 = vpop.f32.mrb[0].mxu0
        %v3151 = vpop.f32.mrb[0].mxu0
        %v3152 = vadd.f32 0.0, %v3151
        %v3153 = vpop.f32.mrb[0].mxu0
        %3154 = vmatprep.mubr.bf16.mxu0 %v561
        %3155 = vmatmul.mubr.bf16.gmra.mrb[0].mxu0 %v560
        %v3156 = vpop.f32.mrb[0].mxu0
        %v3157 = vadd.f32 0.0, %v3156
        %v3158 = vpop.f32.mrb[0].mxu0
        %v3159 = vpop.f32.mrb[0].mxu0
        %v3160 = vadd.f32 0.0, %v3159
        %v3161 = vpop.f32.mrb[0].mxu0
        %3162 = vmatprep.mubr.bf16.mxu0 %v563
        %3163 = vmatmul.mubr.bf16.gmra.mrb[0].mxu0 %v562
        %v3164 = vpop.f32.mrb[0].mxu0
        %v3165 = vadd.f32 0.0, %v3164
        %v3166 = vpop.f32.mrb[0].mxu0
        %v3167 = vpop.f32.mrb[0].mxu0
        %v3168 = vadd.f32 0.0, %v3167
        %v3169 = vpop.f32.mrb[0].mxu0
        %3170 = vdwg.mxu0
        %v3171 = vld [vmem:[#allocation2 + $0x2] sm:$0xff]
        %v3172 = vld [vmem:[#allocation2 + $0xa] sm:$0xff]
        %v3173 = vld [vmem:[#allocation2 + $0x1a] sm:$0xff]
        %v3174 = vld [vmem:[#allocation2 + $0x22] sm:$0xff]
        %v3175 = vld [vmem:[#allocation2 + $0x32] sm:$0xff]
        %v3176 = vld [vmem:[#allocation2 + $0x3a] sm:$0xff]
        %v3177 = vld [vmem:[#allocation2 + $0x4a] sm:$0xff]
        %v3178 = vld [vmem:[#allocation2 + $0x52] sm:$0xff]
        %v3179 = vld [vmem:[#allocation2 + $0x62] sm:$0xff]
        %v3180 = vld [vmem:[#allocation2 + $0x6a] sm:$0xff]
        %v3181 = vld [vmem:[#allocation2 + $0x7a] sm:$0xff]
        %v3182 = vld [vmem:[#allocation2 + $0x82] sm:$0xff]
        %v3183 = vld [vmem:[#allocation2 + $0x92] sm:$0xff]
        %v3184 = vld [vmem:[#allocation2 + $0x9a] sm:$0xff]
        %v3185 = vld [vmem:[#allocation2 + $0xaa] sm:$0xff]
        %v3186 = vld [vmem:[#allocation2 + $0xb2] sm:$0xff]
        %v3187 = vld [vmem:[#allocation2 + $0xc2] sm:$0xff]
        %v3188 = vld [vmem:[#allocation2 + $0xca] sm:$0xff]
        %v3189 = vld [vmem:[#allocation2 + $0xda] sm:$0xff]
        %v3190 = vld [vmem:[#allocation2 + $0xe2] sm:$0xff]
        %v3191 = vld [vmem:[#allocation2 + $0xf2] sm:$0xff]
        %v3192 = vld [vmem:[#allocation2 + $0xfa] sm:$0xff]
        %v3193 = vld [vmem:[#allocation2 + $0x10a] sm:$0xff]
        %v3194 = vld [vmem:[#allocation2 + $0x112] sm:$0xff]
        %v3195 = vld [vmem:[#allocation2 + $0x122] sm:$0xff]
        %v3196 = vld [vmem:[#allocation2 + $0x12a] sm:$0xff]
        %v3197 = vld [vmem:[#allocation2 + $0x13a] sm:$0xff]
        %v3198 = vld [vmem:[#allocation2 + $0x142] sm:$0xff]
        %v3199 = vld [vmem:[#allocation2 + $0x152] sm:$0xff]
        %v3200 = vld [vmem:[#allocation2 + $0x15a] sm:$0xff]
        %v3201 = vld [vmem:[#allocation2 + $0x16a] sm:$0xff]
        %v3202 = vld [vmem:[#allocation2 + $0x172] sm:$0xff]
        %v3203 = vadd.f32 %v3171, %v3045
        %v3204 = vadd.f32 %v3172, %v3048
        %v3205 = vadd.f32 %v3173, %v3053
        %v3206 = vadd.f32 %v3174, %v3056
        %v3207 = vadd.f32 %v3175, %v3061
        %v3208 = vadd.f32 %v3176, %v3064
        %v3209 = vadd.f32 %v3177, %v3069
        %v3210 = vadd.f32 %v3178, %v3072
        %v3211 = vadd.f32 %v3179, %v3077
        %v3212 = vadd.f32 %v3180, %v3080
        %v3213 = vadd.f32 %v3181, %v3085
        %v3214 = vadd.f32 %v3182, %v3088
        %v3215 = vadd.f32 %v3183, %v3093
        %v3216 = vadd.f32 %v3184, %v3096
        %v3217 = vadd.f32 %v3185, %v3101
        %v3218 = vadd.f32 %v3186, %v3104
        %v3219 = vadd.f32 %v3187, %v3109
        %v3220 = vadd.f32 %v3188, %v3112
        %v3221 = vadd.f32 %v3189, %v3117
        %v3222 = vadd.f32 %v3190, %v3120
        %v3223 = vadd.f32 %v3191, %v3125
        %v3224 = vadd.f32 %v3192, %v3128
        %v3225 = vadd.f32 %v3193, %v3133
        %v3226 = vadd.f32 %v3194, %v3136
        %v3227 = vadd.f32 %v3195, %v3141
        %v3228 = vadd.f32 %v3196, %v3144
        %v3229 = vadd.f32 %v3197, %v3149
        %v3230 = vadd.f32 %v3198, %v3152
        %v3231 = vadd.f32 %v3199, %v3157
        %v3232 = vadd.f32 %v3200, %v3160
        %v3233 = vadd.f32 %v3201, %v3165
        %v3234 = vadd.f32 %v3202, %v3168
        %3235 = vst.msk [vmem:[#allocation2 + $0x2] sm:$0xff] %vm348, %v3203
        %3236 = vst.msk [vmem:[#allocation2 + $0xa] sm:$0xff] %vm348, %v3204
        %3237 = vst.msk [vmem:[#allocation2 + $0x1a] sm:$0xff] %vm348, %v3205
        %3238 = vst.msk [vmem:[#allocation2 + $0x22] sm:$0xff] %vm348, %v3206
        %3239 = vst.msk [vmem:[#allocation2 + $0x32] sm:$0xff] %vm348, %v3207
        %3240 = vst.msk [vmem:[#allocation2 + $0x3a] sm:$0xff] %vm348, %v3208
        %3241 = vst.msk [vmem:[#allocation2 + $0x4a] sm:$0xff] %vm348, %v3209
        %3242 = vst.msk [vmem:[#allocation2 + $0x52] sm:$0xff] %vm348, %v3210
        %3243 = vst.msk [vmem:[#allocation2 + $0x62] sm:$0xff] %vm348, %v3211
        %3244 = vst.msk [vmem:[#allocation2 + $0x6a] sm:$0xff] %vm348, %v3212
        %3245 = vst.msk [vmem:[#allocation2 + $0x7a] sm:$0xff] %vm348, %v3213
        %3246 = vst.msk [vmem:[#allocation2 + $0x82] sm:$0xff] %vm348, %v3214
        %3247 = vst.msk [vmem:[#allocation2 + $0x92] sm:$0xff] %vm348, %v3215
        %3248 = vst.msk [vmem:[#allocation2 + $0x9a] sm:$0xff] %vm348, %v3216
        %3249 = vst.msk [vmem:[#allocation2 + $0xaa] sm:$0xff] %vm348, %v3217
        %3250 = vst.msk [vmem:[#allocation2 + $0xb2] sm:$0xff] %vm348, %v3218
        %3251 = vst.msk [vmem:[#allocation2 + $0xc2] sm:$0xff] %vm348, %v3219
        %3252 = vst.msk [vmem:[#allocation2 + $0xca] sm:$0xff] %vm348, %v3220
        %3253 = vst.msk [vmem:[#allocation2 + $0xda] sm:$0xff] %vm348, %v3221
        %3254 = vst.msk [vmem:[#allocation2 + $0xe2] sm:$0xff] %vm348, %v3222
        %3255 = vst.msk [vmem:[#allocation2 + $0xf2] sm:$0xff] %vm348, %v3223
        %3256 = vst.msk [vmem:[#allocation2 + $0xfa] sm:$0xff] %vm348, %v3224
        %3257 = vst.msk [vmem:[#allocation2 + $0x10a] sm:$0xff] %vm348, %v3225
        %3258 = vst.msk [vmem:[#allocation2 + $0x112] sm:$0xff] %vm348, %v3226
        %3259 = vst.msk [vmem:[#allocation2 + $0x122] sm:$0xff] %vm348, %v3227
        %3260 = vst.msk [vmem:[#allocation2 + $0x12a] sm:$0xff] %vm348, %v3228
        %3261 = vst.msk [vmem:[#allocation2 + $0x13a] sm:$0xff] %vm348, %v3229
        %3262 = vst.msk [vmem:[#allocation2 + $0x142] sm:$0xff] %vm348, %v3230
        %3263 = vst.msk [vmem:[#allocation2 + $0x152] sm:$0xff] %vm348, %v3231
        %3264 = vst.msk [vmem:[#allocation2 + $0x15a] sm:$0xff] %vm348, %v3232
        %3265 = vst.msk [vmem:[#allocation2 + $0x16a] sm:$0xff] %vm348, %v3233
        %3266 = vst.msk [vmem:[#allocation2 + $0x172] sm:$0xff] %vm348, %v3234
        %s3267 = scalar_lea.vmem %s1, 896
        %v3268 = vld [vmem:[%s3267] sm:$0xf]
        %v3269 = vld [vmem:[%s3267 + $0x4] sm:$0xf]
        %v3270 = vld [vmem:[%s3267 + $0x8] sm:$0xf]
        %v3271 = vld [vmem:[%s3267 + $0xc] sm:$0xf]
        %v3272 = vld [vmem:[%s3267 + $0x10] sm:$0xf]
        %v3273 = vld [vmem:[%s3267 + $0x14] sm:$0xf]
        %v3274 = vld [vmem:[%s3267 + $0x18] sm:$0xf]
        %v3275 = vld [vmem:[%s3267 + $0x1c] sm:$0xf]
        %v3276 = vld [vmem:[%s3267 + $0x20] sm:$0xf]
        %v3277 = vld [vmem:[%s3267 + $0x24] sm:$0xf]
        %v3278 = vld [vmem:[%s3267 + $0x28] sm:$0xf]
        %v3279 = vld [vmem:[%s3267 + $0x2c] sm:$0xf]
        %v3280 = vld [vmem:[%s3267 + $0x30] sm:$0xf]
        %v3281 = vld [vmem:[%s3267 + $0x34] sm:$0xf]
        %v3282 = vld [vmem:[%s3267 + $0x38] sm:$0xf]
        %v3283 = vld [vmem:[%s3267 + $0x3c] sm:$0xf]
        %v3284 = vld [vmem:[%s3267 + $0x40] sm:$0xf]
        %v3285 = vld [vmem:[%s3267 + $0x44] sm:$0xf]
        %v3286 = vld [vmem:[%s3267 + $0x48] sm:$0xf]
        %v3287 = vld [vmem:[%s3267 + $0x4c] sm:$0xf]
        %v3288 = vld [vmem:[%s3267 + $0x50] sm:$0xf]
        %v3289 = vld [vmem:[%s3267 + $0x54] sm:$0xf]
        %v3290 = vld [vmem:[%s3267 + $0x58] sm:$0xf]
        %v3291 = vld [vmem:[%s3267 + $0x5c] sm:$0xf]
        %v3292 = vld [vmem:[%s3267 + $0x60] sm:$0xf]
        %v3293 = vld [vmem:[%s3267 + $0x64] sm:$0xf]
        %v3294 = vld [vmem:[%s3267 + $0x68] sm:$0xf]
        %v3295 = vld [vmem:[%s3267 + $0x6c] sm:$0xf]
        %v3296 = vld [vmem:[%s3267 + $0x70] sm:$0xf]
        %v3297 = vld [vmem:[%s3267 + $0x74] sm:$0xf]
        %v3298 = vld [vmem:[%s3267 + $0x78] sm:$0xf]
        %v3299 = vld [vmem:[%s3267 + $0x7c] sm:$0xf]
        %v3332 = vunpack.c.l.b16 %v3268
        %v3333 = vunpack.c.l.b16 %v3269
        %v3334 = vunpack.c.l.b16 %v3270
        %v3335 = vunpack.c.l.b16 %v3271
        %v3336 = vunpack.c.l.b16 %v3272
        %v3337 = vunpack.c.l.b16 %v3273
        %v3338 = vunpack.c.l.b16 %v3274
        %v3339 = vunpack.c.l.b16 %v3275
        %v3340 = vunpack.c.l.b16 %v3276
        %v3341 = vunpack.c.l.b16 %v3277
        %v3342 = vunpack.c.l.b16 %v3278
        %v3343 = vunpack.c.l.b16 %v3279
        %v3344 = vunpack.c.l.b16 %v3280
        %v3345 = vunpack.c.l.b16 %v3281
        %v3346 = vunpack.c.l.b16 %v3282
        %v3347 = vunpack.c.l.b16 %v3283
        %v3348 = vunpack.c.l.b16 %v3284
        %v3349 = vunpack.c.l.b16 %v3285
        %v3350 = vunpack.c.l.b16 %v3286
        %v3351 = vunpack.c.l.b16 %v3287
        %v3352 = vunpack.c.l.b16 %v3288
        %v3353 = vunpack.c.l.b16 %v3289
        %v3354 = vunpack.c.l.b16 %v3290
        %v3355 = vunpack.c.l.b16 %v3291
        %v3356 = vunpack.c.l.b16 %v3292
        %v3357 = vunpack.c.l.b16 %v3293
        %v3358 = vunpack.c.l.b16 %v3294
        %v3359 = vunpack.c.l.b16 %v3295
        %v3360 = vunpack.c.l.b16 %v3296
        %v3361 = vunpack.c.l.b16 %v3297
        %v3362 = vunpack.c.l.b16 %v3298
        %v3363 = vunpack.c.l.b16 %v3299
        %v3364 = vpack.c.b16 %v3333, %v3332
        %v3365 = vpack.c.b16 %v3335, %v3334
        %v3366 = vpack.c.b16 %v3337, %v3336
        %v3367 = vpack.c.b16 %v3339, %v3338
        %v3368 = vpack.c.b16 %v3341, %v3340
        %v3369 = vpack.c.b16 %v3343, %v3342
        %v3370 = vpack.c.b16 %v3345, %v3344
        %v3371 = vpack.c.b16 %v3347, %v3346
        %v3372 = vpack.c.b16 %v3349, %v3348
        %v3373 = vpack.c.b16 %v3351, %v3350
        %v3374 = vpack.c.b16 %v3353, %v3352
        %v3375 = vpack.c.b16 %v3355, %v3354
        %v3376 = vpack.c.b16 %v3357, %v3356
        %v3377 = vpack.c.b16 %v3359, %v3358
        %v3378 = vpack.c.b16 %v3361, %v3360
        %v3379 = vpack.c.b16 %v3363, %v3362
        %3396 = vmatprep.subr.bf16.mxu0 0
        %3397 = vmatpush1.bf16.msra.mxu0 %v3364
        %3398 = vmatprep.subr.bf16.mxu0 0
        %3399 = vmatpush1.bf16.msra.mxu0 %v3365
        %3400 = vmatprep.subr.bf16.mxu0 0
        %3401 = vmatpush1.bf16.msra.mxu0 %v3366
        %3402 = vmatprep.subr.bf16.mxu0 0
        %3403 = vmatpush1.bf16.msra.mxu0 %v3367
        %3404 = vmatprep.subr.bf16.mxu0 0
        %3405 = vmatpush1.bf16.msra.mxu0 %v3368
        %3406 = vmatprep.subr.bf16.mxu0 0
        %3407 = vmatpush1.bf16.msra.mxu0 %v3369
        %3408 = vmatprep.subr.bf16.mxu0 0
        %3409 = vmatpush1.bf16.msra.mxu0 %v3370
        %3410 = vmatprep.subr.bf16.mxu0 0
        %3411 = vmatpush1.bf16.msra.mxu0 %v3371
        %3412 = vmatprep.subr.bf16.mxu0 0
        %3413 = vmatpush1.bf16.msra.mxu0 %v3372
        %3414 = vmatprep.subr.bf16.mxu0 0
        %3415 = vmatpush1.bf16.msra.mxu0 %v3373
        %3416 = vmatprep.subr.bf16.mxu0 0
        %3417 = vmatpush1.bf16.msra.mxu0 %v3374
        %3418 = vmatprep.subr.bf16.mxu0 0
        %3419 = vmatpush1.bf16.msra.mxu0 %v3375
        %3420 = vmatprep.subr.bf16.mxu0 0
        %3421 = vmatpush1.bf16.msra.mxu0 %v3376
        %3422 = vmatprep.subr.bf16.mxu0 0
        %3423 = vmatpush1.bf16.msra.mxu0 %v3377
        %3424 = vmatprep.subr.bf16.mxu0 0
        %3425 = vmatpush1.bf16.msra.mxu0 %v3378
        %3426 = vmatprep.subr.bf16.mxu0 0
        %3427 = vmatpush1.bf16.msra.mxu0 %v3379
        %3428 = vmatprep.mubr.bf16.mxu0 %v533
        %3429 = vmatmul.mubr.bf16.gmra.mrb[0].mxu0 %v532
        %v3430 = vpop.f32.mrb[0].mxu0
        %v3431 = vadd.f32 0.0, %v3430
        %v3432 = vpop.f32.mrb[0].mxu0
        %v3433 = vpop.f32.mrb[0].mxu0
        %v3434 = vadd.f32 0.0, %v3433
        %v3435 = vpop.f32.mrb[0].mxu0
        %3436 = vmatprep.mubr.bf16.mxu0 %v535
        %3437 = vmatmul.mubr.bf16.gmra.mrb[0].mxu0 %v534
        %v3438 = vpop.f32.mrb[0].mxu0
        %v3439 = vadd.f32 0.0, %v3438
        %v3440 = vpop.f32.mrb[0].mxu0
        %v3441 = vpop.f32.mrb[0].mxu0
        %v3442 = vadd.f32 0.0, %v3441
        %v3443 = vpop.f32.mrb[0].mxu0
        %3444 = vmatprep.mubr.bf16.mxu0 %v537
        %3445 = vmatmul.mubr.bf16.gmra.mrb[0].mxu0 %v536
        %v3446 = vpop.f32.mrb[0].mxu0
        %v3447 = vadd.f32 0.0, %v3446
        %v3448 = vpop.f32.mrb[0].mxu0
        %v3449 = vpop.f32.mrb[0].mxu0
        %v3450 = vadd.f32 0.0, %v3449
        %v3451 = vpop.f32.mrb[0].mxu0
        %3452 = vmatprep.mubr.bf16.mxu0 %v539
        %3453 = vmatmul.mubr.bf16.gmra.mrb[0].mxu0 %v538
        %v3454 = vpop.f32.mrb[0].mxu0
        %v3455 = vadd.f32 0.0, %v3454
        %v3456 = vpop.f32.mrb[0].mxu0
        %v3457 = vpop.f32.mrb[0].mxu0
        %v3458 = vadd.f32 0.0, %v3457
        %v3459 = vpop.f32.mrb[0].mxu0
        %3460 = vmatprep.mubr.bf16.mxu0 %v541
        %3461 = vmatmul.mubr.bf16.gmra.mrb[0].mxu0 %v540
        %v3462 = vpop.f32.mrb[0].mxu0
        %v3463 = vadd.f32 0.0, %v3462
        %v3464 = vpop.f32.mrb[0].mxu0
        %v3465 = vpop.f32.mrb[0].mxu0
        %v3466 = vadd.f32 0.0, %v3465
        %v3467 = vpop.f32.mrb[0].mxu0
        %3468 = vmatprep.mubr.bf16.mxu0 %v543
        %3469 = vmatmul.mubr.bf16.gmra.mrb[0].mxu0 %v542
        %v3470 = vpop.f32.mrb[0].mxu0
        %v3471 = vadd.f32 0.0, %v3470
        %v3472 = vpop.f32.mrb[0].mxu0
        %v3473 = vpop.f32.mrb[0].mxu0
        %v3474 = vadd.f32 0.0, %v3473
        %v3475 = vpop.f32.mrb[0].mxu0
        %3476 = vmatprep.mubr.bf16.mxu0 %v545
        %3477 = vmatmul.mubr.bf16.gmra.mrb[0].mxu0 %v544
        %v3478 = vpop.f32.mrb[0].mxu0
        %v3479 = vadd.f32 0.0, %v3478
        %v3480 = vpop.f32.mrb[0].mxu0
        %v3481 = vpop.f32.mrb[0].mxu0
        %v3482 = vadd.f32 0.0, %v3481
        %v3483 = vpop.f32.mrb[0].mxu0
        %3484 = vmatprep.mubr.bf16.mxu0 %v547
        %3485 = vmatmul.mubr.bf16.gmra.mrb[0].mxu0 %v546
        %v3486 = vpop.f32.mrb[0].mxu0
        %v3487 = vadd.f32 0.0, %v3486
        %v3488 = vpop.f32.mrb[0].mxu0
        %v3489 = vpop.f32.mrb[0].mxu0
        %v3490 = vadd.f32 0.0, %v3489
        %v3491 = vpop.f32.mrb[0].mxu0
        %3492 = vmatprep.mubr.bf16.mxu0 %v549
        %3493 = vmatmul.mubr.bf16.gmra.mrb[0].mxu0 %v548
        %v3494 = vpop.f32.mrb[0].mxu0
        %v3495 = vadd.f32 0.0, %v3494
        %v3496 = vpop.f32.mrb[0].mxu0
        %v3497 = vpop.f32.mrb[0].mxu0
        %v3498 = vadd.f32 0.0, %v3497
        %v3499 = vpop.f32.mrb[0].mxu0
        %3500 = vmatprep.mubr.bf16.mxu0 %v551
        %3501 = vmatmul.mubr.bf16.gmra.mrb[0].mxu0 %v550
        %v3502 = vpop.f32.mrb[0].mxu0
        %v3503 = vadd.f32 0.0, %v3502
        %v3504 = vpop.f32.mrb[0].mxu0
        %v3505 = vpop.f32.mrb[0].mxu0
        %v3506 = vadd.f32 0.0, %v3505
        %v3507 = vpop.f32.mrb[0].mxu0
        %3508 = vmatprep.mubr.bf16.mxu0 %v553
        %3509 = vmatmul.mubr.bf16.gmra.mrb[0].mxu0 %v552
        %v3510 = vpop.f32.mrb[0].mxu0
        %v3511 = vadd.f32 0.0, %v3510
        %v3512 = vpop.f32.mrb[0].mxu0
        %v3513 = vpop.f32.mrb[0].mxu0
        %v3514 = vadd.f32 0.0, %v3513
        %v3515 = vpop.f32.mrb[0].mxu0
        %3516 = vmatprep.mubr.bf16.mxu0 %v555
        %3517 = vmatmul.mubr.bf16.gmra.mrb[0].mxu0 %v554
        %v3518 = vpop.f32.mrb[0].mxu0
        %v3519 = vadd.f32 0.0, %v3518
        %v3520 = vpop.f32.mrb[0].mxu0
        %v3521 = vpop.f32.mrb[0].mxu0
        %v3522 = vadd.f32 0.0, %v3521
        %v3523 = vpop.f32.mrb[0].mxu0
        %3524 = vmatprep.mubr.bf16.mxu0 %v557
        %3525 = vmatmul.mubr.bf16.gmra.mrb[0].mxu0 %v556
        %v3526 = vpop.f32.mrb[0].mxu0
        %v3527 = vadd.f32 0.0, %v3526
        %v3528 = vpop.f32.mrb[0].mxu0
        %v3529 = vpop.f32.mrb[0].mxu0
        %v3530 = vadd.f32 0.0, %v3529
        %v3531 = vpop.f32.mrb[0].mxu0
        %3532 = vmatprep.mubr.bf16.mxu0 %v559
        %3533 = vmatmul.mubr.bf16.gmra.mrb[0].mxu0 %v558
        %v3534 = vpop.f32.mrb[0].mxu0
        %v3535 = vadd.f32 0.0, %v3534
        %v3536 = vpop.f32.mrb[0].mxu0
        %v3537 = vpop.f32.mrb[0].mxu0
        %v3538 = vadd.f32 0.0, %v3537
        %v3539 = vpop.f32.mrb[0].mxu0
        %3540 = vmatprep.mubr.bf16.mxu0 %v561
        %3541 = vmatmul.mubr.bf16.gmra.mrb[0].mxu0 %v560
        %v3542 = vpop.f32.mrb[0].mxu0
        %v3543 = vadd.f32 0.0, %v3542
        %v3544 = vpop.f32.mrb[0].mxu0
        %v3545 = vpop.f32.mrb[0].mxu0
        %v3546 = vadd.f32 0.0, %v3545
        %v3547 = vpop.f32.mrb[0].mxu0
        %3548 = vmatprep.mubr.bf16.mxu0 %v563
        %3549 = vmatmul.mubr.bf16.gmra.mrb[0].mxu0 %v562
        %v3550 = vpop.f32.mrb[0].mxu0
        %v3551 = vadd.f32 0.0, %v3550
        %v3552 = vpop.f32.mrb[0].mxu0
        %v3553 = vpop.f32.mrb[0].mxu0
        %v3554 = vadd.f32 0.0, %v3553
        %v3555 = vpop.f32.mrb[0].mxu0
        %3556 = vdwg.mxu0
        %v3557 = vld [vmem:[#allocation2 + $0x1] sm:$0xff]
        %v3558 = vld [vmem:[#allocation2 + $0x9] sm:$0xff]
        %v3559 = vld [vmem:[#allocation2 + $0x19] sm:$0xff]
        %v3560 = vld [vmem:[#allocation2 + $0x21] sm:$0xff]
        %v3561 = vld [vmem:[#allocation2 + $0x31] sm:$0xff]
        %v3562 = vld [vmem:[#allocation2 + $0x39] sm:$0xff]
        %v3563 = vld [vmem:[#allocation2 + $0x49] sm:$0xff]
        %v3564 = vld [vmem:[#allocation2 + $0x51] sm:$0xff]
        %v3565 = vld [vmem:[#allocation2 + $0x61] sm:$0xff]
        %v3566 = vld [vmem:[#allocation2 + $0x69] sm:$0xff]
        %v3567 = vld [vmem:[#allocation2 + $0x79] sm:$0xff]
        %v3568 = vld [vmem:[#allocation2 + $0x81] sm:$0xff]
        %v3569 = vld [vmem:[#allocation2 + $0x91] sm:$0xff]
        %v3570 = vld [vmem:[#allocation2 + $0x99] sm:$0xff]
        %v3571 = vld [vmem:[#allocation2 + $0xa9] sm:$0xff]
        %v3572 = vld [vmem:[#allocation2 + $0xb1] sm:$0xff]
        %v3573 = vld [vmem:[#allocation2 + $0xc1] sm:$0xff]
        %v3574 = vld [vmem:[#allocation2 + $0xc9] sm:$0xff]
        %v3575 = vld [vmem:[#allocation2 + $0xd9] sm:$0xff]
        %v3576 = vld [vmem:[#allocation2 + $0xe1] sm:$0xff]
        %v3577 = vld [vmem:[#allocation2 + $0xf1] sm:$0xff]
        %v3578 = vld [vmem:[#allocation2 + $0xf9] sm:$0xff]
        %v3579 = vld [vmem:[#allocation2 + $0x109] sm:$0xff]
        %v3580 = vld [vmem:[#allocation2 + $0x111] sm:$0xff]
        %v3581 = vld [vmem:[#allocation2 + $0x121] sm:$0xff]
        %v3582 = vld [vmem:[#allocation2 + $0x129] sm:$0xff]
        %v3583 = vld [vmem:[#allocation2 + $0x139] sm:$0xff]
        %v3584 = vld [vmem:[#allocation2 + $0x141] sm:$0xff]
        %v3585 = vld [vmem:[#allocation2 + $0x151] sm:$0xff]
        %v3586 = vld [vmem:[#allocation2 + $0x159] sm:$0xff]
        %v3587 = vld [vmem:[#allocation2 + $0x169] sm:$0xff]
        %v3588 = vld [vmem:[#allocation2 + $0x171] sm:$0xff]
        %v3589 = vadd.f32 %v3557, %v3431
        %v3590 = vadd.f32 %v3558, %v3434
        %v3591 = vadd.f32 %v3559, %v3439
        %v3592 = vadd.f32 %v3560, %v3442
        %v3593 = vadd.f32 %v3561, %v3447
        %v3594 = vadd.f32 %v3562, %v3450
        %v3595 = vadd.f32 %v3563, %v3455
        %v3596 = vadd.f32 %v3564, %v3458
        %v3597 = vadd.f32 %v3565, %v3463
        %v3598 = vadd.f32 %v3566, %v3466
        %v3599 = vadd.f32 %v3567, %v3471
        %v3600 = vadd.f32 %v3568, %v3474
        %v3601 = vadd.f32 %v3569, %v3479
        %v3602 = vadd.f32 %v3570, %v3482
        %v3603 = vadd.f32 %v3571, %v3487
        %v3604 = vadd.f32 %v3572, %v3490
        %v3605 = vadd.f32 %v3573, %v3495
        %v3606 = vadd.f32 %v3574, %v3498
        %v3607 = vadd.f32 %v3575, %v3503
        %v3608 = vadd.f32 %v3576, %v3506
        %v3609 = vadd.f32 %v3577, %v3511
        %v3610 = vadd.f32 %v3578, %v3514
        %v3611 = vadd.f32 %v3579, %v3519
        %v3612 = vadd.f32 %v3580, %v3522
        %v3613 = vadd.f32 %v3581, %v3527
        %v3614 = vadd.f32 %v3582, %v3530
        %v3615 = vadd.f32 %v3583, %v3535
        %v3616 = vadd.f32 %v3584, %v3538
        %v3617 = vadd.f32 %v3585, %v3543
        %v3618 = vadd.f32 %v3586, %v3546
        %v3619 = vadd.f32 %v3587, %v3551
        %v3620 = vadd.f32 %v3588, %v3554
        %3621 = vst.msk [vmem:[#allocation2 + $0x1] sm:$0xff] %vm348, %v3589
        %3622 = vst.msk [vmem:[#allocation2 + $0x9] sm:$0xff] %vm348, %v3590
        %3623 = vst.msk [vmem:[#allocation2 + $0x19] sm:$0xff] %vm348, %v3591
        %3624 = vst.msk [vmem:[#allocation2 + $0x21] sm:$0xff] %vm348, %v3592
        %3625 = vst.msk [vmem:[#allocation2 + $0x31] sm:$0xff] %vm348, %v3593
        %3626 = vst.msk [vmem:[#allocation2 + $0x39] sm:$0xff] %vm348, %v3594
        %3627 = vst.msk [vmem:[#allocation2 + $0x49] sm:$0xff] %vm348, %v3595
        %3628 = vst.msk [vmem:[#allocation2 + $0x51] sm:$0xff] %vm348, %v3596
        %3629 = vst.msk [vmem:[#allocation2 + $0x61] sm:$0xff] %vm348, %v3597
        %3630 = vst.msk [vmem:[#allocation2 + $0x69] sm:$0xff] %vm348, %v3598
        %3631 = vst.msk [vmem:[#allocation2 + $0x79] sm:$0xff] %vm348, %v3599
        %3632 = vst.msk [vmem:[#allocation2 + $0x81] sm:$0xff] %vm348, %v3600
        %3633 = vst.msk [vmem:[#allocation2 + $0x91] sm:$0xff] %vm348, %v3601
        %3634 = vst.msk [vmem:[#allocation2 + $0x99] sm:$0xff] %vm348, %v3602
        %3635 = vst.msk [vmem:[#allocation2 + $0xa9] sm:$0xff] %vm348, %v3603
        %3636 = vst.msk [vmem:[#allocation2 + $0xb1] sm:$0xff] %vm348, %v3604
        %3637 = vst.msk [vmem:[#allocation2 + $0xc1] sm:$0xff] %vm348, %v3605
        %3638 = vst.msk [vmem:[#allocation2 + $0xc9] sm:$0xff] %vm348, %v3606
        %3639 = vst.msk [vmem:[#allocation2 + $0xd9] sm:$0xff] %vm348, %v3607
        %3640 = vst.msk [vmem:[#allocation2 + $0xe1] sm:$0xff] %vm348, %v3608
        %3641 = vst.msk [vmem:[#allocation2 + $0xf1] sm:$0xff] %vm348, %v3609
        %3642 = vst.msk [vmem:[#allocation2 + $0xf9] sm:$0xff] %vm348, %v3610
        %3643 = vst.msk [vmem:[#allocation2 + $0x109] sm:$0xff] %vm348, %v3611
        %3644 = vst.msk [vmem:[#allocation2 + $0x111] sm:$0xff] %vm348, %v3612
        %3645 = vst.msk [vmem:[#allocation2 + $0x121] sm:$0xff] %vm348, %v3613
        %3646 = vst.msk [vmem:[#allocation2 + $0x129] sm:$0xff] %vm348, %v3614
        %3647 = vst.msk [vmem:[#allocation2 + $0x139] sm:$0xff] %vm348, %v3615
        %3648 = vst.msk [vmem:[#allocation2 + $0x141] sm:$0xff] %vm348, %v3616
        %3649 = vst.msk [vmem:[#allocation2 + $0x151] sm:$0xff] %vm348, %v3617
        %3650 = vst.msk [vmem:[#allocation2 + $0x159] sm:$0xff] %vm348, %v3618
        %3651 = vst.msk [vmem:[#allocation2 + $0x169] sm:$0xff] %vm348, %v3619
        %3652 = vst.msk [vmem:[#allocation2 + $0x171] sm:$0xff] %vm348, %v3620
        %s3653 = scalar_lea.vmem %s1, 1024
        %v3654 = vld [vmem:[%s3653] sm:$0xf]
        %v3655 = vld [vmem:[%s3653 + $0x4] sm:$0xf]
        %v3656 = vld [vmem:[%s3653 + $0x8] sm:$0xf]
        %v3657 = vld [vmem:[%s3653 + $0xc] sm:$0xf]
        %v3658 = vld [vmem:[%s3653 + $0x10] sm:$0xf]
        %v3659 = vld [vmem:[%s3653 + $0x14] sm:$0xf]
        %v3660 = vld [vmem:[%s3653 + $0x18] sm:$0xf]
        %v3661 = vld [vmem:[%s3653 + $0x1c] sm:$0xf]
        %v3662 = vld [vmem:[%s3653 + $0x20] sm:$0xf]
        %v3663 = vld [vmem:[%s3653 + $0x24] sm:$0xf]
        %v3664 = vld [vmem:[%s3653 + $0x28] sm:$0xf]
        %v3665 = vld [vmem:[%s3653 + $0x2c] sm:$0xf]
        %v3666 = vld [vmem:[%s3653 + $0x30] sm:$0xf]
        %v3667 = vld [vmem:[%s3653 + $0x34] sm:$0xf]
        %v3668 = vld [vmem:[%s3653 + $0x38] sm:$0xf]
        %v3669 = vld [vmem:[%s3653 + $0x3c] sm:$0xf]
        %v3670 = vld [vmem:[%s3653 + $0x40] sm:$0xf]
        %v3671 = vld [vmem:[%s3653 + $0x44] sm:$0xf]
        %v3672 = vld [vmem:[%s3653 + $0x48] sm:$0xf]
        %v3673 = vld [vmem:[%s3653 + $0x4c] sm:$0xf]
        %v3674 = vld [vmem:[%s3653 + $0x50] sm:$0xf]
        %v3675 = vld [vmem:[%s3653 + $0x54] sm:$0xf]
        %v3676 = vld [vmem:[%s3653 + $0x58] sm:$0xf]
        %v3677 = vld [vmem:[%s3653 + $0x5c] sm:$0xf]
        %v3678 = vld [vmem:[%s3653 + $0x60] sm:$0xf]
        %v3679 = vld [vmem:[%s3653 + $0x64] sm:$0xf]
        %v3680 = vld [vmem:[%s3653 + $0x68] sm:$0xf]
        %v3681 = vld [vmem:[%s3653 + $0x6c] sm:$0xf]
        %v3682 = vld [vmem:[%s3653 + $0x70] sm:$0xf]
        %v3683 = vld [vmem:[%s3653 + $0x74] sm:$0xf]
        %v3684 = vld [vmem:[%s3653 + $0x78] sm:$0xf]
        %v3685 = vld [vmem:[%s3653 + $0x7c] sm:$0xf]
        %v3718 = vunpack.c.l.b16 %v3654
        %v3719 = vunpack.c.l.b16 %v3655
        %v3720 = vunpack.c.l.b16 %v3656
        %v3721 = vunpack.c.l.b16 %v3657
        %v3722 = vunpack.c.l.b16 %v3658
        %v3723 = vunpack.c.l.b16 %v3659
        %v3724 = vunpack.c.l.b16 %v3660
        %v3725 = vunpack.c.l.b16 %v3661
        %v3726 = vunpack.c.l.b16 %v3662
        %v3727 = vunpack.c.l.b16 %v3663
        %v3728 = vunpack.c.l.b16 %v3664
        %v3729 = vunpack.c.l.b16 %v3665
        %v3730 = vunpack.c.l.b16 %v3666
        %v3731 = vunpack.c.l.b16 %v3667
        %v3732 = vunpack.c.l.b16 %v3668
        %v3733 = vunpack.c.l.b16 %v3669
        %v3734 = vunpack.c.l.b16 %v3670
        %v3735 = vunpack.c.l.b16 %v3671
        %v3736 = vunpack.c.l.b16 %v3672
        %v3737 = vunpack.c.l.b16 %v3673
        %v3738 = vunpack.c.l.b16 %v3674
        %v3739 = vunpack.c.l.b16 %v3675
        %v3740 = vunpack.c.l.b16 %v3676
        %v3741 = vunpack.c.l.b16 %v3677
        %v3742 = vunpack.c.l.b16 %v3678
        %v3743 = vunpack.c.l.b16 %v3679
        %v3744 = vunpack.c.l.b16 %v3680
        %v3745 = vunpack.c.l.b16 %v3681
        %v3746 = vunpack.c.l.b16 %v3682
        %v3747 = vunpack.c.l.b16 %v3683
        %v3748 = vunpack.c.l.b16 %v3684
        %v3749 = vunpack.c.l.b16 %v3685
        %v3750 = vpack.c.b16 %v3719, %v3718
        %v3751 = vpack.c.b16 %v3721, %v3720
        %v3752 = vpack.c.b16 %v3723, %v3722
        %v3753 = vpack.c.b16 %v3725, %v3724
        %v3754 = vpack.c.b16 %v3727, %v3726
        %v3755 = vpack.c.b16 %v3729, %v3728
        %v3756 = vpack.c.b16 %v3731, %v3730
        %v3757 = vpack.c.b16 %v3733, %v3732
        %v3758 = vpack.c.b16 %v3735, %v3734
        %v3759 = vpack.c.b16 %v3737, %v3736
        %v3760 = vpack.c.b16 %v3739, %v3738
        %v3761 = vpack.c.b16 %v3741, %v3740
        %v3762 = vpack.c.b16 %v3743, %v3742
        %v3763 = vpack.c.b16 %v3745, %v3744
        %v3764 = vpack.c.b16 %v3747, %v3746
        %v3765 = vpack.c.b16 %v3749, %v3748
        %3782 = vmatprep.subr.bf16.mxu0 0
        %3783 = vmatpush1.bf16.msra.mxu0 %v3750
        %3784 = vmatprep.subr.bf16.mxu0 0
        %3785 = vmatpush1.bf16.msra.mxu0 %v3751
        %3786 = vmatprep.subr.bf16.mxu0 0
        %3787 = vmatpush1.bf16.msra.mxu0 %v3752
        %3788 = vmatprep.subr.bf16.mxu0 0
        %3789 = vmatpush1.bf16.msra.mxu0 %v3753
        %3790 = vmatprep.subr.bf16.mxu0 0
        %3791 = vmatpush1.bf16.msra.mxu0 %v3754
        %3792 = vmatprep.subr.bf16.mxu0 0
        %3793 = vmatpush1.bf16.msra.mxu0 %v3755
        %3794 = vmatprep.subr.bf16.mxu0 0
        %3795 = vmatpush1.bf16.msra.mxu0 %v3756
        %3796 = vmatprep.subr.bf16.mxu0 0
        %3797 = vmatpush1.bf16.msra.mxu0 %v3757
        %3798 = vmatprep.subr.bf16.mxu0 0
        %3799 = vmatpush1.bf16.msra.mxu0 %v3758
        %3800 = vmatprep.subr.bf16.mxu0 0
        %3801 = vmatpush1.bf16.msra.mxu0 %v3759
        %3802 = vmatprep.subr.bf16.mxu0 0
        %3803 = vmatpush1.bf16.msra.mxu0 %v3760
        %3804 = vmatprep.subr.bf16.mxu0 0
        %3805 = vmatpush1.bf16.msra.mxu0 %v3761
        %3806 = vmatprep.subr.bf16.mxu0 0
        %3807 = vmatpush1.bf16.msra.mxu0 %v3762
        %3808 = vmatprep.subr.bf16.mxu0 0
        %3809 = vmatpush1.bf16.msra.mxu0 %v3763
        %3810 = vmatprep.subr.bf16.mxu0 0
        %3811 = vmatpush1.bf16.msra.mxu0 %v3764
        %3812 = vmatprep.subr.bf16.mxu0 0
        %3813 = vmatpush1.bf16.msra.mxu0 %v3765
        %3814 = vmatprep.mubr.bf16.mxu0 %v533
        %3815 = vmatmul.mubr.bf16.gmra.mrb[0].mxu0 %v532
        %v3816 = vpop.f32.mrb[0].mxu0
        %v3817 = vadd.f32 0.0, %v3816
        %v3818 = vpop.f32.mrb[0].mxu0
        %v3819 = vpop.f32.mrb[0].mxu0
        %v3820 = vadd.f32 0.0, %v3819
        %v3821 = vpop.f32.mrb[0].mxu0
        %3822 = vmatprep.mubr.bf16.mxu0 %v535
        %3823 = vmatmul.mubr.bf16.gmra.mrb[0].mxu0 %v534
        %v3824 = vpop.f32.mrb[0].mxu0
        %v3825 = vadd.f32 0.0, %v3824
        %v3826 = vpop.f32.mrb[0].mxu0
        %v3827 = vpop.f32.mrb[0].mxu0
        %v3828 = vadd.f32 0.0, %v3827
        %v3829 = vpop.f32.mrb[0].mxu0
        %3830 = vmatprep.mubr.bf16.mxu0 %v537
        %3831 = vmatmul.mubr.bf16.gmra.mrb[0].mxu0 %v536
        %v3832 = vpop.f32.mrb[0].mxu0
        %v3833 = vadd.f32 0.0, %v3832
        %v3834 = vpop.f32.mrb[0].mxu0
        %v3835 = vpop.f32.mrb[0].mxu0
        %v3836 = vadd.f32 0.0, %v3835
        %v3837 = vpop.f32.mrb[0].mxu0
        %3838 = vmatprep.mubr.bf16.mxu0 %v539
        %3839 = vmatmul.mubr.bf16.gmra.mrb[0].mxu0 %v538
        %v3840 = vpop.f32.mrb[0].mxu0
        %v3841 = vadd.f32 0.0, %v3840
        %v3842 = vpop.f32.mrb[0].mxu0
        %v3843 = vpop.f32.mrb[0].mxu0
        %v3844 = vadd.f32 0.0, %v3843
        %v3845 = vpop.f32.mrb[0].mxu0
        %3846 = vmatprep.mubr.bf16.mxu0 %v541
        %3847 = vmatmul.mubr.bf16.gmra.mrb[0].mxu0 %v540
        %v3848 = vpop.f32.mrb[0].mxu0
        %v3849 = vadd.f32 0.0, %v3848
        %v3850 = vpop.f32.mrb[0].mxu0
        %v3851 = vpop.f32.mrb[0].mxu0
        %v3852 = vadd.f32 0.0, %v3851
        %v3853 = vpop.f32.mrb[0].mxu0
        %3854 = vmatprep.mubr.bf16.mxu0 %v543
        %3855 = vmatmul.mubr.bf16.gmra.mrb[0].mxu0 %v542
        %v3856 = vpop.f32.mrb[0].mxu0
        %v3857 = vadd.f32 0.0, %v3856
        %v3858 = vpop.f32.mrb[0].mxu0
        %v3859 = vpop.f32.mrb[0].mxu0
        %v3860 = vadd.f32 0.0, %v3859
        %v3861 = vpop.f32.mrb[0].mxu0
        %3862 = vmatprep.mubr.bf16.mxu0 %v545
        %3863 = vmatmul.mubr.bf16.gmra.mrb[0].mxu0 %v544
        %v3864 = vpop.f32.mrb[0].mxu0
        %v3865 = vadd.f32 0.0, %v3864
        %v3866 = vpop.f32.mrb[0].mxu0
        %v3867 = vpop.f32.mrb[0].mxu0
        %v3868 = vadd.f32 0.0, %v3867
        %v3869 = vpop.f32.mrb[0].mxu0
        %3870 = vmatprep.mubr.bf16.mxu0 %v547
        %3871 = vmatmul.mubr.bf16.gmra.mrb[0].mxu0 %v546
        %v3872 = vpop.f32.mrb[0].mxu0
        %v3873 = vadd.f32 0.0, %v3872
        %v3874 = vpop.f32.mrb[0].mxu0
        %v3875 = vpop.f32.mrb[0].mxu0
        %v3876 = vadd.f32 0.0, %v3875
        %v3877 = vpop.f32.mrb[0].mxu0
        %3878 = vmatprep.mubr.bf16.mxu0 %v549
        %3879 = vmatmul.mubr.bf16.gmra.mrb[0].mxu0 %v548
        %v3880 = vpop.f32.mrb[0].mxu0
        %v3881 = vadd.f32 0.0, %v3880
        %v3882 = vpop.f32.mrb[0].mxu0
        %v3883 = vpop.f32.mrb[0].mxu0
        %v3884 = vadd.f32 0.0, %v3883
        %v3885 = vpop.f32.mrb[0].mxu0
        %3886 = vmatprep.mubr.bf16.mxu0 %v551
        %3887 = vmatmul.mubr.bf16.gmra.mrb[0].mxu0 %v550
        %v3888 = vpop.f32.mrb[0].mxu0
        %v3889 = vadd.f32 0.0, %v3888
        %v3890 = vpop.f32.mrb[0].mxu0
        %v3891 = vpop.f32.mrb[0].mxu0
        %v3892 = vadd.f32 0.0, %v3891
        %v3893 = vpop.f32.mrb[0].mxu0
        %3894 = vmatprep.mubr.bf16.mxu0 %v553
        %3895 = vmatmul.mubr.bf16.gmra.mrb[0].mxu0 %v552
        %v3896 = vpop.f32.mrb[0].mxu0
        %v3897 = vadd.f32 0.0, %v3896
        %v3898 = vpop.f32.mrb[0].mxu0
        %v3899 = vpop.f32.mrb[0].mxu0
        %v3900 = vadd.f32 0.0, %v3899
        %v3901 = vpop.f32.mrb[0].mxu0
        %3902 = vmatprep.mubr.bf16.mxu0 %v555
        %3903 = vmatmul.mubr.bf16.gmra.mrb[0].mxu0 %v554
        %v3904 = vpop.f32.mrb[0].mxu0
        %v3905 = vadd.f32 0.0, %v3904
        %v3906 = vpop.f32.mrb[0].mxu0
        %v3907 = vpop.f32.mrb[0].mxu0
        %v3908 = vadd.f32 0.0, %v3907
        %v3909 = vpop.f32.mrb[0].mxu0
        %3910 = vmatprep.mubr.bf16.mxu0 %v557
        %3911 = vmatmul.mubr.bf16.gmra.mrb[0].mxu0 %v556
        %v3912 = vpop.f32.mrb[0].mxu0
        %v3913 = vadd.f32 0.0, %v3912
        %v3914 = vpop.f32.mrb[0].mxu0
        %v3915 = vpop.f32.mrb[0].mxu0
        %v3916 = vadd.f32 0.0, %v3915
        %v3917 = vpop.f32.mrb[0].mxu0
        %3918 = vmatprep.mubr.bf16.mxu0 %v559
        %3919 = vmatmul.mubr.bf16.gmra.mrb[0].mxu0 %v558
        %v3920 = vpop.f32.mrb[0].mxu0
        %v3921 = vadd.f32 0.0, %v3920
        %v3922 = vpop.f32.mrb[0].mxu0
        %v3923 = vpop.f32.mrb[0].mxu0
        %v3924 = vadd.f32 0.0, %v3923
        %v3925 = vpop.f32.mrb[0].mxu0
        %3926 = vmatprep.mubr.bf16.mxu0 %v561
        %3927 = vmatmul.mubr.bf16.gmra.mrb[0].mxu0 %v560
        %v3928 = vpop.f32.mrb[0].mxu0
        %v3929 = vadd.f32 0.0, %v3928
        %v3930 = vpop.f32.mrb[0].mxu0
        %v3931 = vpop.f32.mrb[0].mxu0
        %v3932 = vadd.f32 0.0, %v3931
        %v3933 = vpop.f32.mrb[0].mxu0
        %3934 = vmatprep.mubr.bf16.mxu0 %v563
        %3935 = vmatmul.mubr.bf16.gmra.mrb[0].mxu0 %v562
        %v3936 = vpop.f32.mrb[0].mxu0
        %v3937 = vadd.f32 0.0, %v3936
        %v3938 = vpop.f32.mrb[0].mxu0
        %v3939 = vpop.f32.mrb[0].mxu0
        %v3940 = vadd.f32 0.0, %v3939
        %v3941 = vpop.f32.mrb[0].mxu0
        %3942 = vdwg.mxu0
        %v3943 = vld [vmem:[#allocation2] sm:$0xff]
        %v3944 = vld [vmem:[#allocation2 + $0x8] sm:$0xff]
        %v3945 = vld [vmem:[#allocation2 + $0x18] sm:$0xff]
        %v3946 = vld [vmem:[#allocation2 + $0x20] sm:$0xff]
        %v3947 = vld [vmem:[#allocation2 + $0x30] sm:$0xff]
        %v3948 = vld [vmem:[#allocation2 + $0x38] sm:$0xff]
        %v3949 = vld [vmem:[#allocation2 + $0x48] sm:$0xff]
        %v3950 = vld [vmem:[#allocation2 + $0x50] sm:$0xff]
        %v3951 = vld [vmem:[#allocation2 + $0x60] sm:$0xff]
        %v3952 = vld [vmem:[#allocation2 + $0x68] sm:$0xff]
        %v3953 = vld [vmem:[#allocation2 + $0x78] sm:$0xff]
        %v3954 = vld [vmem:[#allocation2 + $0x80] sm:$0xff]
        %v3955 = vld [vmem:[#allocation2 + $0x90] sm:$0xff]
        %v3956 = vld [vmem:[#allocation2 + $0x98] sm:$0xff]
        %v3957 = vld [vmem:[#allocation2 + $0xa8] sm:$0xff]
        %v3958 = vld [vmem:[#allocation2 + $0xb0] sm:$0xff]
        %v3959 = vld [vmem:[#allocation2 + $0xc0] sm:$0xff]
        %v3960 = vld [vmem:[#allocation2 + $0xc8] sm:$0xff]
        %v3961 = vld [vmem:[#allocation2 + $0xd8] sm:$0xff]
        %v3962 = vld [vmem:[#allocation2 + $0xe0] sm:$0xff]
        %v3963 = vld [vmem:[#allocation2 + $0xf0] sm:$0xff]
        %v3964 = vld [vmem:[#allocation2 + $0xf8] sm:$0xff]
        %v3965 = vld [vmem:[#allocation2 + $0x108] sm:$0xff]
        %v3966 = vld [vmem:[#allocation2 + $0x110] sm:$0xff]
        %v3967 = vld [vmem:[#allocation2 + $0x120] sm:$0xff]
        %v3968 = vld [vmem:[#allocation2 + $0x128] sm:$0xff]
        %v3969 = vld [vmem:[#allocation2 + $0x138] sm:$0xff]
        %v3970 = vld [vmem:[#allocation2 + $0x140] sm:$0xff]
        %v3971 = vld [vmem:[#allocation2 + $0x150] sm:$0xff]
        %v3972 = vld [vmem:[#allocation2 + $0x158] sm:$0xff]
        %v3973 = vld [vmem:[#allocation2 + $0x168] sm:$0xff]
        %v3974 = vld [vmem:[#allocation2 + $0x170] sm:$0xff]
        %v3975 = vadd.f32 %v3943, %v3817
        %v3976 = vadd.f32 %v3944, %v3820
        %v3977 = vadd.f32 %v3945, %v3825
        %v3978 = vadd.f32 %v3946, %v3828
        %v3979 = vadd.f32 %v3947, %v3833
        %v3980 = vadd.f32 %v3948, %v3836
        %v3981 = vadd.f32 %v3949, %v3841
        %v3982 = vadd.f32 %v3950, %v3844
        %v3983 = vadd.f32 %v3951, %v3849
        %v3984 = vadd.f32 %v3952, %v3852
        %v3985 = vadd.f32 %v3953, %v3857
        %v3986 = vadd.f32 %v3954, %v3860
        %v3987 = vadd.f32 %v3955, %v3865
        %v3988 = vadd.f32 %v3956, %v3868
        %v3989 = vadd.f32 %v3957, %v3873
        %v3990 = vadd.f32 %v3958, %v3876
        %v3991 = vadd.f32 %v3959, %v3881
        %v3992 = vadd.f32 %v3960, %v3884
        %v3993 = vadd.f32 %v3961, %v3889
        %v3994 = vadd.f32 %v3962, %v3892
        %v3995 = vadd.f32 %v3963, %v3897
        %v3996 = vadd.f32 %v3964, %v3900
        %v3997 = vadd.f32 %v3965, %v3905
        %v3998 = vadd.f32 %v3966, %v3908
        %v3999 = vadd.f32 %v3967, %v3913
        %v4000 = vadd.f32 %v3968, %v3916
        %v4001 = vadd.f32 %v3969, %v3921
        %v4002 = vadd.f32 %v3970, %v3924
        %v4003 = vadd.f32 %v3971, %v3929
        %v4004 = vadd.f32 %v3972, %v3932
        %v4005 = vadd.f32 %v3973, %v3937
        %v4006 = vadd.f32 %v3974, %v3940
        %4007 = vst.msk [vmem:[#allocation2] sm:$0xff] %vm348, %v3975
        %4008 = vst.msk [vmem:[#allocation2 + $0x8] sm:$0xff] %vm348, %v3976
        %4009 = vst.msk [vmem:[#allocation2 + $0x18] sm:$0xff] %vm348, %v3977
        %4010 = vst.msk [vmem:[#allocation2 + $0x20] sm:$0xff] %vm348, %v3978
        %4011 = vst.msk [vmem:[#allocation2 + $0x30] sm:$0xff] %vm348, %v3979
        %4012 = vst.msk [vmem:[#allocation2 + $0x38] sm:$0xff] %vm348, %v3980
        %4013 = vst.msk [vmem:[#allocation2 + $0x48] sm:$0xff] %vm348, %v3981
        %4014 = vst.msk [vmem:[#allocation2 + $0x50] sm:$0xff] %vm348, %v3982
        %4015 = vst.msk [vmem:[#allocation2 + $0x60] sm:$0xff] %vm348, %v3983
        %4016 = vst.msk [vmem:[#allocation2 + $0x68] sm:$0xff] %vm348, %v3984
        %4017 = vst.msk [vmem:[#allocation2 + $0x78] sm:$0xff] %vm348, %v3985
        %4018 = vst.msk [vmem:[#allocation2 + $0x80] sm:$0xff] %vm348, %v3986
        %4019 = vst.msk [vmem:[#allocation2 + $0x90] sm:$0xff] %vm348, %v3987
        %4020 = vst.msk [vmem:[#allocation2 + $0x98] sm:$0xff] %vm348, %v3988
        %4021 = vst.msk [vmem:[#allocation2 + $0xa8] sm:$0xff] %vm348, %v3989
        %4022 = vst.msk [vmem:[#allocation2 + $0xb0] sm:$0xff] %vm348, %v3990
        %4023 = vst.msk [vmem:[#allocation2 + $0xc0] sm:$0xff] %vm348, %v3991
        %4024 = vst.msk [vmem:[#allocation2 + $0xc8] sm:$0xff] %vm348, %v3992
        %4025 = vst.msk [vmem:[#allocation2 + $0xd8] sm:$0xff] %vm348, %v3993
        %4026 = vst.msk [vmem:[#allocation2 + $0xe0] sm:$0xff] %vm348, %v3994
        %4027 = vst.msk [vmem:[#allocation2 + $0xf0] sm:$0xff] %vm348, %v3995
        %4028 = vst.msk [vmem:[#allocation2 + $0xf8] sm:$0xff] %vm348, %v3996
        %4029 = vst.msk [vmem:[#allocation2 + $0x108] sm:$0xff] %vm348, %v3997
        %4030 = vst.msk [vmem:[#allocation2 + $0x110] sm:$0xff] %vm348, %v3998
        %4031 = vst.msk [vmem:[#allocation2 + $0x120] sm:$0xff] %vm348, %v3999
        %4032 = vst.msk [vmem:[#allocation2 + $0x128] sm:$0xff] %vm348, %v4000
        %4033 = vst.msk [vmem:[#allocation2 + $0x138] sm:$0xff] %vm348, %v4001
        %4034 = vst.msk [vmem:[#allocation2 + $0x140] sm:$0xff] %vm348, %v4002
        %4035 = vst.msk [vmem:[#allocation2 + $0x150] sm:$0xff] %vm348, %v4003
        %4036 = vst.msk [vmem:[#allocation2 + $0x158] sm:$0xff] %vm348, %v4004
        %4037 = vst.msk [vmem:[#allocation2 + $0x168] sm:$0xff] %vm348, %v4005
        %4038 = vst.msk [vmem:[#allocation2 + $0x170] sm:$0xff] %vm348, %v4006
        %v4039 = vld [vmem:[%s2012 + $0x1] sm:$0xff]
        %v4040 = vld [vmem:[%s2012 + $0x9] sm:$0xff]
        %v4041 = vld [vmem:[%s2012 + $0x19] sm:$0xff]
        %v4042 = vld [vmem:[%s2012 + $0x21] sm:$0xff]
        %v4043 = vld [vmem:[%s2012 + $0x31] sm:$0xff]
        %v4044 = vld [vmem:[%s2012 + $0x39] sm:$0xff]
        %v4045 = vld [vmem:[%s2012 + $0x49] sm:$0xff]
        %v4046 = vld [vmem:[%s2012 + $0x51] sm:$0xff]
        %v4047 = vld [vmem:[%s2012 + $0x61] sm:$0xff]
        %v4048 = vld [vmem:[%s2012 + $0x69] sm:$0xff]
        %v4049 = vld [vmem:[%s2012 + $0x79] sm:$0xff]
        %v4050 = vld [vmem:[%s2012 + $0x81] sm:$0xff]
        %v4051 = vld [vmem:[%s2012 + $0x91] sm:$0xff]
        %v4052 = vld [vmem:[%s2012 + $0x99] sm:$0xff]
        %v4053 = vld [vmem:[%s2012 + $0xa9] sm:$0xff]
        %v4054 = vld [vmem:[%s2012 + $0xb1] sm:$0xff]
        %v4055 = vld [vmem:[%s2012 + $0xc1] sm:$0xff]
        %v4056 = vld [vmem:[%s2012 + $0xc9] sm:$0xff]
        %v4057 = vld [vmem:[%s2012 + $0xd9] sm:$0xff]
        %v4058 = vld [vmem:[%s2012 + $0xe1] sm:$0xff]
        %v4059 = vld [vmem:[%s2012 + $0xf1] sm:$0xff]
        %v4060 = vld [vmem:[%s2012 + $0xf9] sm:$0xff]
        %v4061 = vld [vmem:[%s2012 + $0x109] sm:$0xff]
        %v4062 = vld [vmem:[%s2012 + $0x111] sm:$0xff]
        %v4063 = vld [vmem:[%s2012 + $0x121] sm:$0xff]
        %v4064 = vld [vmem:[%s2012 + $0x129] sm:$0xff]
        %v4065 = vld [vmem:[%s2012 + $0x139] sm:$0xff]
        %v4066 = vld [vmem:[%s2012 + $0x141] sm:$0xff]
        %v4067 = vld [vmem:[%s2012 + $0x151] sm:$0xff]
        %v4068 = vld [vmem:[%s2012 + $0x159] sm:$0xff]
        %v4069 = vld [vmem:[%s2012 + $0x169] sm:$0xff]
        %v4070 = vld [vmem:[%s2012 + $0x171] sm:$0xff]
        %v4071 = vld [vmem:[%s2] sm:$0x1]
        %v4073 = vlaneseq
        %v4074 = vshrl.u32 %v4073, 7
        %v4075 = vsub.s32 0, %v4074
        %v4076 = vrot.slane %v4071, %v4075
        %v4078 = vadd.f32 %v4039, %v4076
        %v4079 = vadd.f32 %v4040, %v4076
        %v4080 = vadd.f32 %v4041, %v4076
        %v4081 = vadd.f32 %v4042, %v4076
        %v4082 = vadd.f32 %v4043, %v4076
        %v4083 = vadd.f32 %v4044, %v4076
        %v4084 = vadd.f32 %v4045, %v4076
        %v4085 = vadd.f32 %v4046, %v4076
        %v4086 = vadd.f32 %v4047, %v4076
        %v4087 = vadd.f32 %v4048, %v4076
        %v4088 = vadd.f32 %v4049, %v4076
        %v4089 = vadd.f32 %v4050, %v4076
        %v4090 = vadd.f32 %v4051, %v4076
        %v4091 = vadd.f32 %v4052, %v4076
        %v4092 = vadd.f32 %v4053, %v4076
        %v4093 = vadd.f32 %v4054, %v4076
        %v4094 = vadd.f32 %v4055, %v4076
        %v4095 = vadd.f32 %v4056, %v4076
        %v4096 = vadd.f32 %v4057, %v4076
        %v4097 = vadd.f32 %v4058, %v4076
        %v4098 = vadd.f32 %v4059, %v4076
        %v4099 = vadd.f32 %v4060, %v4076
        %v4100 = vadd.f32 %v4061, %v4076
        %v4101 = vadd.f32 %v4062, %v4076
        %v4102 = vadd.f32 %v4063, %v4076
        %v4103 = vadd.f32 %v4064, %v4076
        %v4104 = vadd.f32 %v4065, %v4076
        %v4105 = vadd.f32 %v4066, %v4076
        %v4106 = vadd.f32 %v4067, %v4076
        %v4107 = vadd.f32 %v4068, %v4076
        %v4108 = vadd.f32 %v4069, %v4076
        %v4109 = vadd.f32 %v4070, %v4076
        %v4110 = vmax.f32 %v4078, 0.0
        %v4111 = vmax.f32 %v4079, 0.0
        %v4112 = vmax.f32 %v4080, 0.0
        %v4113 = vmax.f32 %v4081, 0.0
        %v4114 = vmax.f32 %v4082, 0.0
        %v4115 = vmax.f32 %v4083, 0.0
        %v4116 = vmax.f32 %v4084, 0.0
        %v4117 = vmax.f32 %v4085, 0.0
        %v4118 = vmax.f32 %v4086, 0.0
        %v4119 = vmax.f32 %v4087, 0.0
        %v4120 = vmax.f32 %v4088, 0.0
        %v4121 = vmax.f32 %v4089, 0.0
        %v4122 = vmax.f32 %v4090, 0.0
        %v4123 = vmax.f32 %v4091, 0.0
        %v4124 = vmax.f32 %v4092, 0.0
        %v4125 = vmax.f32 %v4093, 0.0
        %v4126 = vmax.f32 %v4094, 0.0
        %v4127 = vmax.f32 %v4095, 0.0
        %v4128 = vmax.f32 %v4096, 0.0
        %v4129 = vmax.f32 %v4097, 0.0
        %v4130 = vmax.f32 %v4098, 0.0
        %v4131 = vmax.f32 %v4099, 0.0
        %v4132 = vmax.f32 %v4100, 0.0
        %v4133 = vmax.f32 %v4101, 0.0
        %v4134 = vmax.f32 %v4102, 0.0
        %v4135 = vmax.f32 %v4103, 0.0
        %v4136 = vmax.f32 %v4104, 0.0
        %v4137 = vmax.f32 %v4105, 0.0
        %v4138 = vmax.f32 %v4106, 0.0
        %v4139 = vmax.f32 %v4107, 0.0
        %v4140 = vmax.f32 %v4108, 0.0
        %v4141 = vmax.f32 %v4109, 0.0
        %v4142 = vpack.c.bf16 %v4111, %v4110
        %v4143 = vpack.c.bf16 %v4113, %v4112
        %v4144 = vpack.c.bf16 %v4115, %v4114
        %v4145 = vpack.c.bf16 %v4117, %v4116
        %v4146 = vpack.c.bf16 %v4119, %v4118
        %v4147 = vpack.c.bf16 %v4121, %v4120
        %v4148 = vpack.c.bf16 %v4123, %v4122
        %v4149 = vpack.c.bf16 %v4125, %v4124
        %v4150 = vpack.c.bf16 %v4127, %v4126
        %v4151 = vpack.c.bf16 %v4129, %v4128
        %v4152 = vpack.c.bf16 %v4131, %v4130
        %v4153 = vpack.c.bf16 %v4133, %v4132
        %v4154 = vpack.c.bf16 %v4135, %v4134
        %v4155 = vpack.c.bf16 %v4137, %v4136
        %v4156 = vpack.c.bf16 %v4139, %v4138
        %v4157 = vpack.c.bf16 %v4141, %v4140
        %4158 = vst.msk [vmem:[#allocation2] sm:$0xff] %vm348, 0.0
        %4159 = vst.msk [vmem:[#allocation2 + $0x8] sm:$0xff] %vm348, 0.0
        %4160 = vst.msk [vmem:[#allocation2 + $0x10] sm:$0x3] %vm351, 0.0
        %4161 = vst.msk [vmem:[#allocation2 + $0x18] sm:$0xff] %vm348, 0.0
        %4162 = vst.msk [vmem:[#allocation2 + $0x20] sm:$0xff] %vm348, 0.0
        %4163 = vst.msk [vmem:[#allocation2 + $0x28] sm:$0x3] %vm351, 0.0
        %4164 = vst.msk [vmem:[#allocation2 + $0x30] sm:$0xff] %vm348, 0.0
        %4165 = vst.msk [vmem:[#allocation2 + $0x38] sm:$0xff] %vm348, 0.0
        %4166 = vst.msk [vmem:[#allocation2 + $0x40] sm:$0x3] %vm351, 0.0
        %4167 = vst.msk [vmem:[#allocation2 + $0x48] sm:$0xff] %vm348, 0.0
        %4168 = vst.msk [vmem:[#allocation2 + $0x50] sm:$0xff] %vm348, 0.0
        %4169 = vst.msk [vmem:[#allocation2 + $0x58] sm:$0x3] %vm351, 0.0
        %4170 = vst.msk [vmem:[#allocation2 + $0x60] sm:$0xff] %vm348, 0.0
        %4171 = vst.msk [vmem:[#allocation2 + $0x68] sm:$0xff] %vm348, 0.0
        %4172 = vst.msk [vmem:[#allocation2 + $0x70] sm:$0x3] %vm351, 0.0
        %4173 = vst.msk [vmem:[#allocation2 + $0x78] sm:$0xff] %vm348, 0.0
        %4174 = vst.msk [vmem:[#allocation2 + $0x80] sm:$0xff] %vm348, 0.0
        %4175 = vst.msk [vmem:[#allocation2 + $0x88] sm:$0x3] %vm351, 0.0
        %4176 = vst.msk [vmem:[#allocation2 + $0x90] sm:$0xff] %vm348, 0.0
        %4177 = vst.msk [vmem:[#allocation2 + $0x98] sm:$0xff] %vm348, 0.0
        %4178 = vst.msk [vmem:[#allocation2 + $0xa0] sm:$0x3] %vm351, 0.0
        %4179 = vst.msk [vmem:[#allocation2 + $0xa8] sm:$0xff] %vm348, 0.0
        %4180 = vst.msk [vmem:[#allocation2 + $0xb0] sm:$0xff] %vm348, 0.0
        %4181 = vst.msk [vmem:[#allocation2 + $0xb8] sm:$0x3] %vm351, 0.0
        %4182 = vst.msk [vmem:[#allocation2 + $0xc0] sm:$0xff] %vm348, 0.0
        %4183 = vst.msk [vmem:[#allocation2 + $0xc8] sm:$0xff] %vm348, 0.0
        %4184 = vst.msk [vmem:[#allocation2 + $0xd0] sm:$0x3] %vm351, 0.0
        %4185 = vst.msk [vmem:[#allocation2 + $0xd8] sm:$0xff] %vm348, 0.0
        %4186 = vst.msk [vmem:[#allocation2 + $0xe0] sm:$0xff] %vm348, 0.0
        %4187 = vst.msk [vmem:[#allocation2 + $0xe8] sm:$0x3] %vm351, 0.0
        %4188 = vst.msk [vmem:[#allocation2 + $0xf0] sm:$0xff] %vm348, 0.0
        %4189 = vst.msk [vmem:[#allocation2 + $0xf8] sm:$0xff] %vm348, 0.0
        %4190 = vst.msk [vmem:[#allocation2 + $0x100] sm:$0x3] %vm351, 0.0
        %4191 = vst.msk [vmem:[#allocation2 + $0x108] sm:$0xff] %vm348, 0.0
        %4192 = vst.msk [vmem:[#allocation2 + $0x110] sm:$0xff] %vm348, 0.0
        %4193 = vst.msk [vmem:[#allocation2 + $0x118] sm:$0x3] %vm351, 0.0
        %4194 = vst.msk [vmem:[#allocation2 + $0x120] sm:$0xff] %vm348, 0.0
        %4195 = vst.msk [vmem:[#allocation2 + $0x128] sm:$0xff] %vm348, 0.0
        %4196 = vst.msk [vmem:[#allocation2 + $0x130] sm:$0x3] %vm351, 0.0
        %4197 = vst.msk [vmem:[#allocation2 + $0x138] sm:$0xff] %vm348, 0.0
        %4198 = vst.msk [vmem:[#allocation2 + $0x140] sm:$0xff] %vm348, 0.0
        %4199 = vst.msk [vmem:[#allocation2 + $0x148] sm:$0x3] %vm351, 0.0
        %4200 = vst.msk [vmem:[#allocation2 + $0x150] sm:$0xff] %vm348, 0.0
        %4201 = vst.msk [vmem:[#allocation2 + $0x158] sm:$0xff] %vm348, 0.0
        %4202 = vst.msk [vmem:[#allocation2 + $0x160] sm:$0x3] %vm351, 0.0
        %4203 = vst.msk [vmem:[#allocation2 + $0x168] sm:$0xff] %vm348, 0.0
        %4204 = vst.msk [vmem:[#allocation2 + $0x170] sm:$0xff] %vm348, 0.0
        %4205 = vst.msk [vmem:[#allocation2 + $0x178] sm:$0x3] %vm351, 0.0
        %4206 = vst.msk [vmem:[#allocation2 + $0x180] sm:$0xff] %vm348, 0.0
        %4207 = vst.msk [vmem:[#allocation2 + $0x188] sm:$0xff] %vm348, 0.0
        %4208 = vst.msk [vmem:[#allocation2 + $0x190] sm:$0x3] %vm351, 0.0
        %4209 = vst.msk [vmem:[#allocation2 + $0x198] sm:$0xff] %vm348, 0.0
        %4210 = vst.msk [vmem:[#allocation2 + $0x1a0] sm:$0xff] %vm348, 0.0
        %4211 = vst.msk [vmem:[#allocation2 + $0x1a8] sm:$0x3] %vm351, 0.0
        %v4212 = vld [vmem:[%s3] sm:$0xf]
        %v4213 = vld [vmem:[%s3 + $0x4] sm:$0xf]
        %v4214 = vld [vmem:[%s3 + $0x8] sm:$0xf]
        %v4215 = vld [vmem:[%s3 + $0xc] sm:$0xf]
        %v4220 = vunpack.c.l.b16 %v4212
        %v4221 = vunpack.c.l.b16 %v4213
        %v4222 = vunpack.c.l.b16 %v4214
        %v4223 = vunpack.c.l.b16 %v4215
        %v4224 = vpack.c.b16 %v4221, %v4220
        %v4225 = vpack.c.b16 %v4223, %v4222
        %v4229 = vsel %vm348, %v4142, 0
        %v4232 = vsel %vm348, %v4143, 0
        %v4235 = vsel %vm348, %v4144, 0
        %v4238 = vsel %vm348, %v4145, 0
        %v4241 = vsel %vm348, %v4146, 0
        %v4244 = vsel %vm348, %v4147, 0
        %v4247 = vsel %vm348, %v4148, 0
        %v4250 = vsel %vm348, %v4149, 0
        %v4253 = vsel %vm348, %v4150, 0
        %v4256 = vsel %vm348, %v4151, 0
        %v4259 = vsel %vm348, %v4152, 0
        %v4262 = vsel %vm348, %v4153, 0
        %v4265 = vsel %vm348, %v4154, 0
        %v4268 = vsel %vm348, %v4155, 0
        %v4271 = vsel %vm348, %v4156, 0
        %v4274 = vsel %vm348, %v4157, 0
        %4276 = vmatprep.subr.bf16.mxu0 0
        %4277 = vmatpush1.bf16.msra.mxu0 %v4224
        %4278 = vmatprep.subr.bf16.mxu0 0
        %4279 = vmatpush1.bf16.msra.mxu0 %v4225
        %4280 = vmatprep.subr.bf16.mxu0 0
        %4281 = vmatpush1.bf16.msra.mxu0 0
        %4282 = vmatprep.subr.bf16.mxu0 0
        %4283 = vmatpush1.bf16.msra.mxu0 0
        %4284 = vmatprep.subr.bf16.mxu0 0
        %4285 = vmatpush1.bf16.msra.mxu0 0
        %4286 = vmatprep.subr.bf16.mxu0 0
        %4287 = vmatpush1.bf16.msra.mxu0 0
        %4288 = vmatprep.subr.bf16.mxu0 0
        %4289 = vmatpush1.bf16.msra.mxu0 0
        %4290 = vmatprep.subr.bf16.mxu0 0
        %4291 = vmatpush1.bf16.msra.mxu0 0
        %4292 = vmatprep.subr.bf16.mxu0 0
        %4293 = vmatpush1.bf16.msra.mxu0 0
        %4294 = vmatprep.subr.bf16.mxu0 0
        %4295 = vmatpush1.bf16.msra.mxu0 0
        %4296 = vmatprep.subr.bf16.mxu0 0
        %4297 = vmatpush1.bf16.msra.mxu0 0
        %4298 = vmatprep.subr.bf16.mxu0 0
        %4299 = vmatpush1.bf16.msra.mxu0 0
        %4300 = vmatprep.subr.bf16.mxu0 0
        %4301 = vmatpush1.bf16.msra.mxu0 0
        %4302 = vmatprep.subr.bf16.mxu0 0
        %4303 = vmatpush1.bf16.msra.mxu0 0
        %4304 = vmatprep.subr.bf16.mxu0 0
        %4305 = vmatpush1.bf16.msra.mxu0 0
        %4306 = vmatprep.subr.bf16.mxu0 0
        %4307 = vmatpush1.bf16.msra.mxu0 0
        %4308 = vmatprep.mubr.bf16.mxu0 0
        %4309 = vmatmul.mubr.bf16.gmra.mrb[0].mxu0 %v4229
        %v4310 = vpop.f32.mrb[0].mxu0
        %v4311 = vadd.f32 0.0, %v4310
        %v4312 = vpop.f32.mrb[0].mxu0
        %v4313 = vpop.f32.mrb[0].mxu0
        %v4314 = vadd.f32 0.0, %v4313
        %v4315 = vpop.f32.mrb[0].mxu0
        %4316 = vmatprep.mubr.bf16.mxu0 0
        %4317 = vmatmul.mubr.bf16.gmra.mrb[0].mxu0 %v4232
        %v4318 = vpop.f32.mrb[0].mxu0
        %v4319 = vadd.f32 0.0, %v4318
        %v4320 = vpop.f32.mrb[0].mxu0
        %v4321 = vpop.f32.mrb[0].mxu0
        %v4322 = vadd.f32 0.0, %v4321
        %v4323 = vpop.f32.mrb[0].mxu0
        %4324 = vmatprep.mubr.bf16.mxu0 0
        %4325 = vmatmul.mubr.bf16.gmra.mrb[0].mxu0 %v4235
        %v4326 = vpop.f32.mrb[0].mxu0
        %v4327 = vadd.f32 0.0, %v4326
        %v4328 = vpop.f32.mrb[0].mxu0
        %v4329 = vpop.f32.mrb[0].mxu0
        %v4330 = vadd.f32 0.0, %v4329
        %v4331 = vpop.f32.mrb[0].mxu0
        %4332 = vmatprep.mubr.bf16.mxu0 0
        %4333 = vmatmul.mubr.bf16.gmra.mrb[0].mxu0 %v4238
        %v4334 = vpop.f32.mrb[0].mxu0
        %v4335 = vadd.f32 0.0, %v4334
        %v4336 = vpop.f32.mrb[0].mxu0
        %v4337 = vpop.f32.mrb[0].mxu0
        %v4338 = vadd.f32 0.0, %v4337
        %v4339 = vpop.f32.mrb[0].mxu0
        %4340 = vmatprep.mubr.bf16.mxu0 0
        %4341 = vmatmul.mubr.bf16.gmra.mrb[0].mxu0 %v4241
        %v4342 = vpop.f32.mrb[0].mxu0
        %v4343 = vadd.f32 0.0, %v4342
        %v4344 = vpop.f32.mrb[0].mxu0
        %v4345 = vpop.f32.mrb[0].mxu0
        %v4346 = vadd.f32 0.0, %v4345
        %v4347 = vpop.f32.mrb[0].mxu0
        %4348 = vmatprep.mubr.bf16.mxu0 0
        %4349 = vmatmul.mubr.bf16.gmra.mrb[0].mxu0 %v4244
        %v4350 = vpop.f32.mrb[0].mxu0
        %v4351 = vadd.f32 0.0, %v4350
        %v4352 = vpop.f32.mrb[0].mxu0
        %v4353 = vpop.f32.mrb[0].mxu0
        %v4354 = vadd.f32 0.0, %v4353
        %v4355 = vpop.f32.mrb[0].mxu0
        %4356 = vmatprep.mubr.bf16.mxu0 0
        %4357 = vmatmul.mubr.bf16.gmra.mrb[0].mxu0 %v4247
        %v4358 = vpop.f32.mrb[0].mxu0
        %v4359 = vadd.f32 0.0, %v4358
        %v4360 = vpop.f32.mrb[0].mxu0
        %v4361 = vpop.f32.mrb[0].mxu0
        %v4362 = vadd.f32 0.0, %v4361
        %v4363 = vpop.f32.mrb[0].mxu0
        %4364 = vmatprep.mubr.bf16.mxu0 0
        %4365 = vmatmul.mubr.bf16.gmra.mrb[0].mxu0 %v4250
        %v4366 = vpop.f32.mrb[0].mxu0
        %v4367 = vadd.f32 0.0, %v4366
        %v4368 = vpop.f32.mrb[0].mxu0
        %v4369 = vpop.f32.mrb[0].mxu0
        %v4370 = vadd.f32 0.0, %v4369
        %v4371 = vpop.f32.mrb[0].mxu0
        %4372 = vmatprep.mubr.bf16.mxu0 0
        %4373 = vmatmul.mubr.bf16.gmra.mrb[0].mxu0 %v4253
        %v4374 = vpop.f32.mrb[0].mxu0
        %v4375 = vadd.f32 0.0, %v4374
        %v4376 = vpop.f32.mrb[0].mxu0
        %v4377 = vpop.f32.mrb[0].mxu0
        %v4378 = vadd.f32 0.0, %v4377
        %v4379 = vpop.f32.mrb[0].mxu0
        %4380 = vmatprep.mubr.bf16.mxu0 0
        %4381 = vmatmul.mubr.bf16.gmra.mrb[0].mxu0 %v4256
        %v4382 = vpop.f32.mrb[0].mxu0
        %v4383 = vadd.f32 0.0, %v4382
        %v4384 = vpop.f32.mrb[0].mxu0
        %v4385 = vpop.f32.mrb[0].mxu0
        %v4386 = vadd.f32 0.0, %v4385
        %v4387 = vpop.f32.mrb[0].mxu0
        %4388 = vmatprep.mubr.bf16.mxu0 0
        %4389 = vmatmul.mubr.bf16.gmra.mrb[0].mxu0 %v4259
        %v4390 = vpop.f32.mrb[0].mxu0
        %v4391 = vadd.f32 0.0, %v4390
        %v4392 = vpop.f32.mrb[0].mxu0
        %v4393 = vpop.f32.mrb[0].mxu0
        %v4394 = vadd.f32 0.0, %v4393
        %v4395 = vpop.f32.mrb[0].mxu0
        %4396 = vmatprep.mubr.bf16.mxu0 0
        %4397 = vmatmul.mubr.bf16.gmra.mrb[0].mxu0 %v4262
        %v4398 = vpop.f32.mrb[0].mxu0
        %v4399 = vadd.f32 0.0, %v4398
        %v4400 = vpop.f32.mrb[0].mxu0
        %v4401 = vpop.f32.mrb[0].mxu0
        %v4402 = vadd.f32 0.0, %v4401
        %v4403 = vpop.f32.mrb[0].mxu0
        %4404 = vmatprep.mubr.bf16.mxu0 0
        %4405 = vmatmul.mubr.bf16.gmra.mrb[0].mxu0 %v4265
        %v4406 = vpop.f32.mrb[0].mxu0
        %v4407 = vadd.f32 0.0, %v4406
        %v4408 = vpop.f32.mrb[0].mxu0
        %v4409 = vpop.f32.mrb[0].mxu0
        %v4410 = vadd.f32 0.0, %v4409
        %v4411 = vpop.f32.mrb[0].mxu0
        %4412 = vmatprep.mubr.bf16.mxu0 0
        %4413 = vmatmul.mubr.bf16.gmra.mrb[0].mxu0 %v4268
        %v4414 = vpop.f32.mrb[0].mxu0
        %v4415 = vadd.f32 0.0, %v4414
        %v4416 = vpop.f32.mrb[0].mxu0
        %v4417 = vpop.f32.mrb[0].mxu0
        %v4418 = vadd.f32 0.0, %v4417
        %v4419 = vpop.f32.mrb[0].mxu0
        %4420 = vmatprep.mubr.bf16.mxu0 0
        %4421 = vmatmul.mubr.bf16.gmra.mrb[0].mxu0 %v4271
        %v4422 = vpop.f32.mrb[0].mxu0
        %v4423 = vadd.f32 0.0, %v4422
        %v4424 = vpop.f32.mrb[0].mxu0
        %v4425 = vpop.f32.mrb[0].mxu0
        %v4426 = vadd.f32 0.0, %v4425
        %v4427 = vpop.f32.mrb[0].mxu0
        %4428 = vmatprep.mubr.bf16.mxu0 0
        %4429 = vmatmul.mubr.bf16.gmra.mrb[0].mxu0 %v4274
        %v4430 = vpop.f32.mrb[0].mxu0
        %v4431 = vadd.f32 0.0, %v4430
        %v4432 = vpop.f32.mrb[0].mxu0
        %v4433 = vpop.f32.mrb[0].mxu0
        %v4434 = vadd.f32 0.0, %v4433
        %v4435 = vpop.f32.mrb[0].mxu0
        %4436 = vdwg.mxu0
        %v4437 = vld [vmem:[%s853 + $0x2] sm:$0xff]
        %v4438 = vld [vmem:[%s853 + $0xa] sm:$0xff]
        %v4439 = vld [vmem:[%s853 + $0x1a] sm:$0xff]
        %v4440 = vld [vmem:[%s853 + $0x22] sm:$0xff]
        %v4441 = vld [vmem:[%s853 + $0x32] sm:$0xff]
        %v4442 = vld [vmem:[%s853 + $0x3a] sm:$0xff]
        %v4443 = vld [vmem:[%s853 + $0x4a] sm:$0xff]
        %v4444 = vld [vmem:[%s853 + $0x52] sm:$0xff]
        %v4445 = vld [vmem:[%s853 + $0x62] sm:$0xff]
        %v4446 = vld [vmem:[%s853 + $0x6a] sm:$0xff]
        %v4447 = vld [vmem:[%s853 + $0x7a] sm:$0xff]
        %v4448 = vld [vmem:[%s853 + $0x82] sm:$0xff]
        %v4449 = vld [vmem:[%s853 + $0x92] sm:$0xff]
        %v4450 = vld [vmem:[%s853 + $0x9a] sm:$0xff]
        %v4451 = vld [vmem:[%s853 + $0xaa] sm:$0xff]
        %v4452 = vld [vmem:[%s853 + $0xb2] sm:$0xff]
        %v4453 = vld [vmem:[%s853 + $0xc2] sm:$0xff]
        %v4454 = vld [vmem:[%s853 + $0xca] sm:$0xff]
        %v4455 = vld [vmem:[%s853 + $0xda] sm:$0xff]
        %v4456 = vld [vmem:[%s853 + $0xe2] sm:$0xff]
        %v4457 = vld [vmem:[%s853 + $0xf2] sm:$0xff]
        %v4458 = vld [vmem:[%s853 + $0xfa] sm:$0xff]
        %v4459 = vld [vmem:[%s853 + $0x10a] sm:$0xff]
        %v4460 = vld [vmem:[%s853 + $0x112] sm:$0xff]
        %v4461 = vld [vmem:[%s853 + $0x122] sm:$0xff]
        %v4462 = vld [vmem:[%s853 + $0x12a] sm:$0xff]
        %v4463 = vld [vmem:[%s853 + $0x13a] sm:$0xff]
        %v4464 = vld [vmem:[%s853 + $0x142] sm:$0xff]
        %v4465 = vld [vmem:[%s853 + $0x152] sm:$0xff]
        %v4466 = vld [vmem:[%s853 + $0x15a] sm:$0xff]
        %v4467 = vld [vmem:[%s853 + $0x16a] sm:$0xff]
        %v4468 = vld [vmem:[%s853 + $0x172] sm:$0xff]
        %v4469 = vadd.f32 %v4437, %v4311
        %v4470 = vadd.f32 %v4438, %v4314
        %v4471 = vadd.f32 %v4439, %v4319
        %v4472 = vadd.f32 %v4440, %v4322
        %v4473 = vadd.f32 %v4441, %v4327
        %v4474 = vadd.f32 %v4442, %v4330
        %v4475 = vadd.f32 %v4443, %v4335
        %v4476 = vadd.f32 %v4444, %v4338
        %v4477 = vadd.f32 %v4445, %v4343
        %v4478 = vadd.f32 %v4446, %v4346
        %v4479 = vadd.f32 %v4447, %v4351
        %v4480 = vadd.f32 %v4448, %v4354
        %v4481 = vadd.f32 %v4449, %v4359
        %v4482 = vadd.f32 %v4450, %v4362
        %v4483 = vadd.f32 %v4451, %v4367
        %v4484 = vadd.f32 %v4452, %v4370
        %v4485 = vadd.f32 %v4453, %v4375
        %v4486 = vadd.f32 %v4454, %v4378
        %v4487 = vadd.f32 %v4455, %v4383
        %v4488 = vadd.f32 %v4456, %v4386
        %v4489 = vadd.f32 %v4457, %v4391
        %v4490 = vadd.f32 %v4458, %v4394
        %v4491 = vadd.f32 %v4459, %v4399
        %v4492 = vadd.f32 %v4460, %v4402
        %v4493 = vadd.f32 %v4461, %v4407
        %v4494 = vadd.f32 %v4462, %v4410
        %v4495 = vadd.f32 %v4463, %v4415
        %v4496 = vadd.f32 %v4464, %v4418
        %v4497 = vadd.f32 %v4465, %v4423
        %v4498 = vadd.f32 %v4466, %v4426
        %v4499 = vadd.f32 %v4467, %v4431
        %v4500 = vadd.f32 %v4468, %v4434
        %4501 = vst.msk [vmem:[%s853 + $0x2] sm:$0xff] %vm348, %v4469
        %4502 = vst.msk [vmem:[%s853 + $0xa] sm:$0xff] %vm348, %v4470
        %4503 = vst.msk [vmem:[%s853 + $0x1a] sm:$0xff] %vm348, %v4471
        %4504 = vst.msk [vmem:[%s853 + $0x22] sm:$0xff] %vm348, %v4472
        %4505 = vst.msk [vmem:[%s853 + $0x32] sm:$0xff] %vm348, %v4473
        %4506 = vst.msk [vmem:[%s853 + $0x3a] sm:$0xff] %vm348, %v4474
        %4507 = vst.msk [vmem:[%s853 + $0x4a] sm:$0xff] %vm348, %v4475
        %4508 = vst.msk [vmem:[%s853 + $0x52] sm:$0xff] %vm348, %v4476
        %4509 = vst.msk [vmem:[%s853 + $0x62] sm:$0xff] %vm348, %v4477
        %4510 = vst.msk [vmem:[%s853 + $0x6a] sm:$0xff] %vm348, %v4478
        %4511 = vst.msk [vmem:[%s853 + $0x7a] sm:$0xff] %vm348, %v4479
        %4512 = vst.msk [vmem:[%s853 + $0x82] sm:$0xff] %vm348, %v4480
        %4513 = vst.msk [vmem:[%s853 + $0x92] sm:$0xff] %vm348, %v4481
        %4514 = vst.msk [vmem:[%s853 + $0x9a] sm:$0xff] %vm348, %v4482
        %4515 = vst.msk [vmem:[%s853 + $0xaa] sm:$0xff] %vm348, %v4483
        %4516 = vst.msk [vmem:[%s853 + $0xb2] sm:$0xff] %vm348, %v4484
        %4517 = vst.msk [vmem:[%s853 + $0xc2] sm:$0xff] %vm348, %v4485
        %4518 = vst.msk [vmem:[%s853 + $0xca] sm:$0xff] %vm348, %v4486
        %4519 = vst.msk [vmem:[%s853 + $0xda] sm:$0xff] %vm348, %v4487
        %4520 = vst.msk [vmem:[%s853 + $0xe2] sm:$0xff] %vm348, %v4488
        %4521 = vst.msk [vmem:[%s853 + $0xf2] sm:$0xff] %vm348, %v4489
        %4522 = vst.msk [vmem:[%s853 + $0xfa] sm:$0xff] %vm348, %v4490
        %4523 = vst.msk [vmem:[%s853 + $0x10a] sm:$0xff] %vm348, %v4491
        %4524 = vst.msk [vmem:[%s853 + $0x112] sm:$0xff] %vm348, %v4492
        %4525 = vst.msk [vmem:[%s853 + $0x122] sm:$0xff] %vm348, %v4493
        %4526 = vst.msk [vmem:[%s853 + $0x12a] sm:$0xff] %vm348, %v4494
        %4527 = vst.msk [vmem:[%s853 + $0x13a] sm:$0xff] %vm348, %v4495
        %4528 = vst.msk [vmem:[%s853 + $0x142] sm:$0xff] %vm348, %v4496
        %4529 = vst.msk [vmem:[%s853 + $0x152] sm:$0xff] %vm348, %v4497
        %4530 = vst.msk [vmem:[%s853 + $0x15a] sm:$0xff] %vm348, %v4498
        %4531 = vst.msk [vmem:[%s853 + $0x16a] sm:$0xff] %vm348, %v4499
        %4532 = vst.msk [vmem:[%s853 + $0x172] sm:$0xff] %vm348, %v4500
        %s4533 = scalar_lea.vmem %s3, 16
        %v4534 = vld [vmem:[%s4533] sm:$0xf]
        %v4535 = vld [vmem:[%s4533 + $0x4] sm:$0xf]
        %v4536 = vld [vmem:[%s4533 + $0x8] sm:$0xf]
        %v4537 = vld [vmem:[%s4533 + $0xc] sm:$0xf]
        %v4542 = vunpack.c.l.b16 %v4534
        %v4543 = vunpack.c.l.b16 %v4535
        %v4544 = vunpack.c.l.b16 %v4536
        %v4545 = vunpack.c.l.b16 %v4537
        %v4546 = vpack.c.b16 %v4543, %v4542
        %v4547 = vpack.c.b16 %v4545, %v4544
        %4550 = vmatprep.subr.bf16.mxu0 0
        %4551 = vmatpush1.bf16.msra.mxu0 %v4546
        %4552 = vmatprep.subr.bf16.mxu0 0
        %4553 = vmatpush1.bf16.msra.mxu0 %v4547
        %4554 = vmatprep.subr.bf16.mxu0 0
        %4555 = vmatpush1.bf16.msra.mxu0 0
        %4556 = vmatprep.subr.bf16.mxu0 0
        %4557 = vmatpush1.bf16.msra.mxu0 0
        %4558 = vmatprep.subr.bf16.mxu0 0
        %4559 = vmatpush1.bf16.msra.mxu0 0
        %4560 = vmatprep.subr.bf16.mxu0 0
        %4561 = vmatpush1.bf16.msra.mxu0 0
        %4562 = vmatprep.subr.bf16.mxu0 0
        %4563 = vmatpush1.bf16.msra.mxu0 0
        %4564 = vmatprep.subr.bf16.mxu0 0
        %4565 = vmatpush1.bf16.msra.mxu0 0
        %4566 = vmatprep.subr.bf16.mxu0 0
        %4567 = vmatpush1.bf16.msra.mxu0 0
        %4568 = vmatprep.subr.bf16.mxu0 0
        %4569 = vmatpush1.bf16.msra.mxu0 0
        %4570 = vmatprep.subr.bf16.mxu0 0
        %4571 = vmatpush1.bf16.msra.mxu0 0
        %4572 = vmatprep.subr.bf16.mxu0 0
        %4573 = vmatpush1.bf16.msra.mxu0 0
        %4574 = vmatprep.subr.bf16.mxu0 0
        %4575 = vmatpush1.bf16.msra.mxu0 0
        %4576 = vmatprep.subr.bf16.mxu0 0
        %4577 = vmatpush1.bf16.msra.mxu0 0
        %4578 = vmatprep.subr.bf16.mxu0 0
        %4579 = vmatpush1.bf16.msra.mxu0 0
        %4580 = vmatprep.subr.bf16.mxu0 0
        %4581 = vmatpush1.bf16.msra.mxu0 0
        %4582 = vmatprep.mubr.bf16.mxu0 0
        %4583 = vmatmul.mubr.bf16.gmra.mrb[0].mxu0 %v4229
        %v4584 = vpop.f32.mrb[0].mxu0
        %v4585 = vadd.f32 0.0, %v4584
        %v4586 = vpop.f32.mrb[0].mxu0
        %v4587 = vpop.f32.mrb[0].mxu0
        %v4588 = vadd.f32 0.0, %v4587
        %v4589 = vpop.f32.mrb[0].mxu0
        %4590 = vmatprep.mubr.bf16.mxu0 0
        %4591 = vmatmul.mubr.bf16.gmra.mrb[0].mxu0 %v4232
        %v4592 = vpop.f32.mrb[0].mxu0
        %v4593 = vadd.f32 0.0, %v4592
        %v4594 = vpop.f32.mrb[0].mxu0
        %v4595 = vpop.f32.mrb[0].mxu0
        %v4596 = vadd.f32 0.0, %v4595
        %v4597 = vpop.f32.mrb[0].mxu0
        %4598 = vmatprep.mubr.bf16.mxu0 0
        %4599 = vmatmul.mubr.bf16.gmra.mrb[0].mxu0 %v4235
        %v4600 = vpop.f32.mrb[0].mxu0
        %v4601 = vadd.f32 0.0, %v4600
        %v4602 = vpop.f32.mrb[0].mxu0
        %v4603 = vpop.f32.mrb[0].mxu0
        %v4604 = vadd.f32 0.0, %v4603
        %v4605 = vpop.f32.mrb[0].mxu0
        %4606 = vmatprep.mubr.bf16.mxu0 0
        %4607 = vmatmul.mubr.bf16.gmra.mrb[0].mxu0 %v4238
        %v4608 = vpop.f32.mrb[0].mxu0
        %v4609 = vadd.f32 0.0, %v4608
        %v4610 = vpop.f32.mrb[0].mxu0
        %v4611 = vpop.f32.mrb[0].mxu0
        %v4612 = vadd.f32 0.0, %v4611
        %v4613 = vpop.f32.mrb[0].mxu0
        %4614 = vmatprep.mubr.bf16.mxu0 0
        %4615 = vmatmul.mubr.bf16.gmra.mrb[0].mxu0 %v4241
        %v4616 = vpop.f32.mrb[0].mxu0
        %v4617 = vadd.f32 0.0, %v4616
        %v4618 = vpop.f32.mrb[0].mxu0
        %v4619 = vpop.f32.mrb[0].mxu0
        %v4620 = vadd.f32 0.0, %v4619
        %v4621 = vpop.f32.mrb[0].mxu0
        %4622 = vmatprep.mubr.bf16.mxu0 0
        %4623 = vmatmul.mubr.bf16.gmra.mrb[0].mxu0 %v4244
        %v4624 = vpop.f32.mrb[0].mxu0
        %v4625 = vadd.f32 0.0, %v4624
        %v4626 = vpop.f32.mrb[0].mxu0
        %v4627 = vpop.f32.mrb[0].mxu0
        %v4628 = vadd.f32 0.0, %v4627
        %v4629 = vpop.f32.mrb[0].mxu0
        %4630 = vmatprep.mubr.bf16.mxu0 0
        %4631 = vmatmul.mubr.bf16.gmra.mrb[0].mxu0 %v4247
        %v4632 = vpop.f32.mrb[0].mxu0
        %v4633 = vadd.f32 0.0, %v4632
        %v4634 = vpop.f32.mrb[0].mxu0
        %v4635 = vpop.f32.mrb[0].mxu0
        %v4636 = vadd.f32 0.0, %v4635
        %v4637 = vpop.f32.mrb[0].mxu0
        %4638 = vmatprep.mubr.bf16.mxu0 0
        %4639 = vmatmul.mubr.bf16.gmra.mrb[0].mxu0 %v4250
        %v4640 = vpop.f32.mrb[0].mxu0
        %v4641 = vadd.f32 0.0, %v4640
        %v4642 = vpop.f32.mrb[0].mxu0
        %v4643 = vpop.f32.mrb[0].mxu0
        %v4644 = vadd.f32 0.0, %v4643
        %v4645 = vpop.f32.mrb[0].mxu0
        %4646 = vmatprep.mubr.bf16.mxu0 0
        %4647 = vmatmul.mubr.bf16.gmra.mrb[0].mxu0 %v4253
        %v4648 = vpop.f32.mrb[0].mxu0
        %v4649 = vadd.f32 0.0, %v4648
        %v4650 = vpop.f32.mrb[0].mxu0
        %v4651 = vpop.f32.mrb[0].mxu0
        %v4652 = vadd.f32 0.0, %v4651
        %v4653 = vpop.f32.mrb[0].mxu0
        %4654 = vmatprep.mubr.bf16.mxu0 0
        %4655 = vmatmul.mubr.bf16.gmra.mrb[0].mxu0 %v4256
        %v4656 = vpop.f32.mrb[0].mxu0
        %v4657 = vadd.f32 0.0, %v4656
        %v4658 = vpop.f32.mrb[0].mxu0
        %v4659 = vpop.f32.mrb[0].mxu0
        %v4660 = vadd.f32 0.0, %v4659
        %v4661 = vpop.f32.mrb[0].mxu0
        %4662 = vmatprep.mubr.bf16.mxu0 0
        %4663 = vmatmul.mubr.bf16.gmra.mrb[0].mxu0 %v4259
        %v4664 = vpop.f32.mrb[0].mxu0
        %v4665 = vadd.f32 0.0, %v4664
        %v4666 = vpop.f32.mrb[0].mxu0
        %v4667 = vpop.f32.mrb[0].mxu0
        %v4668 = vadd.f32 0.0, %v4667
        %v4669 = vpop.f32.mrb[0].mxu0
        %4670 = vmatprep.mubr.bf16.mxu0 0
        %4671 = vmatmul.mubr.bf16.gmra.mrb[0].mxu0 %v4262
        %v4672 = vpop.f32.mrb[0].mxu0
        %v4673 = vadd.f32 0.0, %v4672
        %v4674 = vpop.f32.mrb[0].mxu0
        %v4675 = vpop.f32.mrb[0].mxu0
        %v4676 = vadd.f32 0.0, %v4675
        %v4677 = vpop.f32.mrb[0].mxu0
        %4678 = vmatprep.mubr.bf16.mxu0 0
        %4679 = vmatmul.mubr.bf16.gmra.mrb[0].mxu0 %v4265
        %v4680 = vpop.f32.mrb[0].mxu0
        %v4681 = vadd.f32 0.0, %v4680
        %v4682 = vpop.f32.mrb[0].mxu0
        %v4683 = vpop.f32.mrb[0].mxu0
        %v4684 = vadd.f32 0.0, %v4683
        %v4685 = vpop.f32.mrb[0].mxu0
        %4686 = vmatprep.mubr.bf16.mxu0 0
        %4687 = vmatmul.mubr.bf16.gmra.mrb[0].mxu0 %v4268
        %v4688 = vpop.f32.mrb[0].mxu0
        %v4689 = vadd.f32 0.0, %v4688
        %v4690 = vpop.f32.mrb[0].mxu0
        %v4691 = vpop.f32.mrb[0].mxu0
        %v4692 = vadd.f32 0.0, %v4691
        %v4693 = vpop.f32.mrb[0].mxu0
        %4694 = vmatprep.mubr.bf16.mxu0 0
        %4695 = vmatmul.mubr.bf16.gmra.mrb[0].mxu0 %v4271
        %v4696 = vpop.f32.mrb[0].mxu0
        %v4697 = vadd.f32 0.0, %v4696
        %v4698 = vpop.f32.mrb[0].mxu0
        %v4699 = vpop.f32.mrb[0].mxu0
        %v4700 = vadd.f32 0.0, %v4699
        %v4701 = vpop.f32.mrb[0].mxu0
        %4702 = vmatprep.mubr.bf16.mxu0 0
        %4703 = vmatmul.mubr.bf16.gmra.mrb[0].mxu0 %v4274
        %v4704 = vpop.f32.mrb[0].mxu0
        %v4705 = vadd.f32 0.0, %v4704
        %v4706 = vpop.f32.mrb[0].mxu0
        %v4707 = vpop.f32.mrb[0].mxu0
        %v4708 = vadd.f32 0.0, %v4707
        %v4709 = vpop.f32.mrb[0].mxu0
        %4710 = vdwg.mxu0
        %v4711 = vld [vmem:[%s853 + $0x1] sm:$0xff]
        %v4712 = vld [vmem:[%s853 + $0x9] sm:$0xff]
        %v4713 = vld [vmem:[%s853 + $0x19] sm:$0xff]
        %v4714 = vld [vmem:[%s853 + $0x21] sm:$0xff]
        %v4715 = vld [vmem:[%s853 + $0x31] sm:$0xff]
        %v4716 = vld [vmem:[%s853 + $0x39] sm:$0xff]
        %v4717 = vld [vmem:[%s853 + $0x49] sm:$0xff]
        %v4718 = vld [vmem:[%s853 + $0x51] sm:$0xff]
        %v4719 = vld [vmem:[%s853 + $0x61] sm:$0xff]
        %v4720 = vld [vmem:[%s853 + $0x69] sm:$0xff]
        %v4721 = vld [vmem:[%s853 + $0x79] sm:$0xff]
        %v4722 = vld [vmem:[%s853 + $0x81] sm:$0xff]
        %v4723 = vld [vmem:[%s853 + $0x91] sm:$0xff]
        %v4724 = vld [vmem:[%s853 + $0x99] sm:$0xff]
        %v4725 = vld [vmem:[%s853 + $0xa9] sm:$0xff]
        %v4726 = vld [vmem:[%s853 + $0xb1] sm:$0xff]
        %v4727 = vld [vmem:[%s853 + $0xc1] sm:$0xff]
        %v4728 = vld [vmem:[%s853 + $0xc9] sm:$0xff]
        %v4729 = vld [vmem:[%s853 + $0xd9] sm:$0xff]
        %v4730 = vld [vmem:[%s853 + $0xe1] sm:$0xff]
        %v4731 = vld [vmem:[%s853 + $0xf1] sm:$0xff]
        %v4732 = vld [vmem:[%s853 + $0xf9] sm:$0xff]
        %v4733 = vld [vmem:[%s853 + $0x109] sm:$0xff]
        %v4734 = vld [vmem:[%s853 + $0x111] sm:$0xff]
        %v4735 = vld [vmem:[%s853 + $0x121] sm:$0xff]
        %v4736 = vld [vmem:[%s853 + $0x129] sm:$0xff]
        %v4737 = vld [vmem:[%s853 + $0x139] sm:$0xff]
        %v4738 = vld [vmem:[%s853 + $0x141] sm:$0xff]
        %v4739 = vld [vmem:[%s853 + $0x151] sm:$0xff]
        %v4740 = vld [vmem:[%s853 + $0x159] sm:$0xff]
        %v4741 = vld [vmem:[%s853 + $0x169] sm:$0xff]
        %v4742 = vld [vmem:[%s853 + $0x171] sm:$0xff]
        %v4743 = vadd.f32 %v4711, %v4585
        %v4744 = vadd.f32 %v4712, %v4588
        %v4745 = vadd.f32 %v4713, %v4593
        %v4746 = vadd.f32 %v4714, %v4596
        %v4747 = vadd.f32 %v4715, %v4601
        %v4748 = vadd.f32 %v4716, %v4604
        %v4749 = vadd.f32 %v4717, %v4609
        %v4750 = vadd.f32 %v4718, %v4612
        %v4751 = vadd.f32 %v4719, %v4617
        %v4752 = vadd.f32 %v4720, %v4620
        %v4753 = vadd.f32 %v4721, %v4625
        %v4754 = vadd.f32 %v4722, %v4628
        %v4755 = vadd.f32 %v4723, %v4633
        %v4756 = vadd.f32 %v4724, %v4636
        %v4757 = vadd.f32 %v4725, %v4641
        %v4758 = vadd.f32 %v4726, %v4644
        %v4759 = vadd.f32 %v4727, %v4649
        %v4760 = vadd.f32 %v4728, %v4652
        %v4761 = vadd.f32 %v4729, %v4657
        %v4762 = vadd.f32 %v4730, %v4660
        %v4763 = vadd.f32 %v4731, %v4665
        %v4764 = vadd.f32 %v4732, %v4668
        %v4765 = vadd.f32 %v4733, %v4673
        %v4766 = vadd.f32 %v4734, %v4676
        %v4767 = vadd.f32 %v4735, %v4681
        %v4768 = vadd.f32 %v4736, %v4684
        %v4769 = vadd.f32 %v4737, %v4689
        %v4770 = vadd.f32 %v4738, %v4692
        %v4771 = vadd.f32 %v4739, %v4697
        %v4772 = vadd.f32 %v4740, %v4700
        %v4773 = vadd.f32 %v4741, %v4705
        %v4774 = vadd.f32 %v4742, %v4708
        %4775 = vst.msk [vmem:[%s853 + $0x1] sm:$0xff] %vm348, %v4743
        %4776 = vst.msk [vmem:[%s853 + $0x9] sm:$0xff] %vm348, %v4744
        %4777 = vst.msk [vmem:[%s853 + $0x19] sm:$0xff] %vm348, %v4745
        %4778 = vst.msk [vmem:[%s853 + $0x21] sm:$0xff] %vm348, %v4746
        %4779 = vst.msk [vmem:[%s853 + $0x31] sm:$0xff] %vm348, %v4747
        %4780 = vst.msk [vmem:[%s853 + $0x39] sm:$0xff] %vm348, %v4748
        %4781 = vst.msk [vmem:[%s853 + $0x49] sm:$0xff] %vm348, %v4749
        %4782 = vst.msk [vmem:[%s853 + $0x51] sm:$0xff] %vm348, %v4750
        %4783 = vst.msk [vmem:[%s853 + $0x61] sm:$0xff] %vm348, %v4751
        %4784 = vst.msk [vmem:[%s853 + $0x69] sm:$0xff] %vm348, %v4752
        %4785 = vst.msk [vmem:[%s853 + $0x79] sm:$0xff] %vm348, %v4753
        %4786 = vst.msk [vmem:[%s853 + $0x81] sm:$0xff] %vm348, %v4754
        %4787 = vst.msk [vmem:[%s853 + $0x91] sm:$0xff] %vm348, %v4755
        %4788 = vst.msk [vmem:[%s853 + $0x99] sm:$0xff] %vm348, %v4756
        %4789 = vst.msk [vmem:[%s853 + $0xa9] sm:$0xff] %vm348, %v4757
        %4790 = vst.msk [vmem:[%s853 + $0xb1] sm:$0xff] %vm348, %v4758
        %4791 = vst.msk [vmem:[%s853 + $0xc1] sm:$0xff] %vm348, %v4759
        %4792 = vst.msk [vmem:[%s853 + $0xc9] sm:$0xff] %vm348, %v4760
        %4793 = vst.msk [vmem:[%s853 + $0xd9] sm:$0xff] %vm348, %v4761
        %4794 = vst.msk [vmem:[%s853 + $0xe1] sm:$0xff] %vm348, %v4762
        %4795 = vst.msk [vmem:[%s853 + $0xf1] sm:$0xff] %vm348, %v4763
        %4796 = vst.msk [vmem:[%s853 + $0xf9] sm:$0xff] %vm348, %v4764
        %4797 = vst.msk [vmem:[%s853 + $0x109] sm:$0xff] %vm348, %v4765
        %4798 = vst.msk [vmem:[%s853 + $0x111] sm:$0xff] %vm348, %v4766
        %4799 = vst.msk [vmem:[%s853 + $0x121] sm:$0xff] %vm348, %v4767
        %4800 = vst.msk [vmem:[%s853 + $0x129] sm:$0xff] %vm348, %v4768
        %4801 = vst.msk [vmem:[%s853 + $0x139] sm:$0xff] %vm348, %v4769
        %4802 = vst.msk [vmem:[%s853 + $0x141] sm:$0xff] %vm348, %v4770
        %4803 = vst.msk [vmem:[%s853 + $0x151] sm:$0xff] %vm348, %v4771
        %4804 = vst.msk [vmem:[%s853 + $0x159] sm:$0xff] %vm348, %v4772
        %4805 = vst.msk [vmem:[%s853 + $0x169] sm:$0xff] %vm348, %v4773
        %4806 = vst.msk [vmem:[%s853 + $0x171] sm:$0xff] %vm348, %v4774
        %s4807 = scalar_lea.vmem %s3, 32
        %v4808 = vld [vmem:[%s4807] sm:$0xf]
        %v4809 = vld [vmem:[%s4807 + $0x4] sm:$0xf]
        %v4810 = vld [vmem:[%s4807 + $0x8] sm:$0xf]
        %v4811 = vld [vmem:[%s4807 + $0xc] sm:$0xf]
        %v4816 = vunpack.c.l.b16 %v4808
        %v4817 = vunpack.c.l.b16 %v4809
        %v4818 = vunpack.c.l.b16 %v4810
        %v4819 = vunpack.c.l.b16 %v4811
        %v4820 = vpack.c.b16 %v4817, %v4816
        %v4821 = vpack.c.b16 %v4819, %v4818
        %4824 = vmatprep.subr.bf16.mxu0 0
        %4825 = vmatpush1.bf16.msra.mxu0 %v4820
        %4826 = vmatprep.subr.bf16.mxu0 0
        %4827 = vmatpush1.bf16.msra.mxu0 %v4821
        %4828 = vmatprep.subr.bf16.mxu0 0
        %4829 = vmatpush1.bf16.msra.mxu0 0
        %4830 = vmatprep.subr.bf16.mxu0 0
        %4831 = vmatpush1.bf16.msra.mxu0 0
        %4832 = vmatprep.subr.bf16.mxu0 0
        %4833 = vmatpush1.bf16.msra.mxu0 0
        %4834 = vmatprep.subr.bf16.mxu0 0
        %4835 = vmatpush1.bf16.msra.mxu0 0
        %4836 = vmatprep.subr.bf16.mxu0 0
        %4837 = vmatpush1.bf16.msra.mxu0 0
        %4838 = vmatprep.subr.bf16.mxu0 0
        %4839 = vmatpush1.bf16.msra.mxu0 0
        %4840 = vmatprep.subr.bf16.mxu0 0
        %4841 = vmatpush1.bf16.msra.mxu0 0
        %4842 = vmatprep.subr.bf16.mxu0 0
        %4843 = vmatpush1.bf16.msra.mxu0 0
        %4844 = vmatprep.subr.bf16.mxu0 0
        %4845 = vmatpush1.bf16.msra.mxu0 0
        %4846 = vmatprep.subr.bf16.mxu0 0
        %4847 = vmatpush1.bf16.msra.mxu0 0
        %4848 = vmatprep.subr.bf16.mxu0 0
        %4849 = vmatpush1.bf16.msra.mxu0 0
        %4850 = vmatprep.subr.bf16.mxu0 0
        %4851 = vmatpush1.bf16.msra.mxu0 0
        %4852 = vmatprep.subr.bf16.mxu0 0
        %4853 = vmatpush1.bf16.msra.mxu0 0
        %4854 = vmatprep.subr.bf16.mxu0 0
        %4855 = vmatpush1.bf16.msra.mxu0 0
        %4856 = vmatprep.mubr.bf16.mxu0 0
        %4857 = vmatmul.mubr.bf16.gmra.mrb[0].mxu0 %v4229
        %v4858 = vpop.f32.mrb[0].mxu0
        %v4859 = vadd.f32 0.0, %v4858
        %v4860 = vpop.f32.mrb[0].mxu0
        %v4861 = vpop.f32.mrb[0].mxu0
        %v4862 = vadd.f32 0.0, %v4861
        %v4863 = vpop.f32.mrb[0].mxu0
        %4864 = vmatprep.mubr.bf16.mxu0 0
        %4865 = vmatmul.mubr.bf16.gmra.mrb[0].mxu0 %v4232
        %v4866 = vpop.f32.mrb[0].mxu0
        %v4867 = vadd.f32 0.0, %v4866
        %v4868 = vpop.f32.mrb[0].mxu0
        %v4869 = vpop.f32.mrb[0].mxu0
        %v4870 = vadd.f32 0.0, %v4869
        %v4871 = vpop.f32.mrb[0].mxu0
        %4872 = vmatprep.mubr.bf16.mxu0 0
        %4873 = vmatmul.mubr.bf16.gmra.mrb[0].mxu0 %v4235
        %v4874 = vpop.f32.mrb[0].mxu0
        %v4875 = vadd.f32 0.0, %v4874
        %v4876 = vpop.f32.mrb[0].mxu0
        %v4877 = vpop.f32.mrb[0].mxu0
        %v4878 = vadd.f32 0.0, %v4877
        %v4879 = vpop.f32.mrb[0].mxu0
        %4880 = vmatprep.mubr.bf16.mxu0 0
        %4881 = vmatmul.mubr.bf16.gmra.mrb[0].mxu0 %v4238
        %v4882 = vpop.f32.mrb[0].mxu0
        %v4883 = vadd.f32 0.0, %v4882
        %v4884 = vpop.f32.mrb[0].mxu0
        %v4885 = vpop.f32.mrb[0].mxu0
        %v4886 = vadd.f32 0.0, %v4885
        %v4887 = vpop.f32.mrb[0].mxu0
        %4888 = vmatprep.mubr.bf16.mxu0 0
        %4889 = vmatmul.mubr.bf16.gmra.mrb[0].mxu0 %v4241
        %v4890 = vpop.f32.mrb[0].mxu0
        %v4891 = vadd.f32 0.0, %v4890
        %v4892 = vpop.f32.mrb[0].mxu0
        %v4893 = vpop.f32.mrb[0].mxu0
        %v4894 = vadd.f32 0.0, %v4893
        %v4895 = vpop.f32.mrb[0].mxu0
        %4896 = vmatprep.mubr.bf16.mxu0 0
        %4897 = vmatmul.mubr.bf16.gmra.mrb[0].mxu0 %v4244
        %v4898 = vpop.f32.mrb[0].mxu0
        %v4899 = vadd.f32 0.0, %v4898
        %v4900 = vpop.f32.mrb[0].mxu0
        %v4901 = vpop.f32.mrb[0].mxu0
        %v4902 = vadd.f32 0.0, %v4901
        %v4903 = vpop.f32.mrb[0].mxu0
        %4904 = vmatprep.mubr.bf16.mxu0 0
        %4905 = vmatmul.mubr.bf16.gmra.mrb[0].mxu0 %v4247
        %v4906 = vpop.f32.mrb[0].mxu0
        %v4907 = vadd.f32 0.0, %v4906
        %v4908 = vpop.f32.mrb[0].mxu0
        %v4909 = vpop.f32.mrb[0].mxu0
        %v4910 = vadd.f32 0.0, %v4909
        %v4911 = vpop.f32.mrb[0].mxu0
        %4912 = vmatprep.mubr.bf16.mxu0 0
        %4913 = vmatmul.mubr.bf16.gmra.mrb[0].mxu0 %v4250
        %v4914 = vpop.f32.mrb[0].mxu0
        %v4915 = vadd.f32 0.0, %v4914
        %v4916 = vpop.f32.mrb[0].mxu0
        %v4917 = vpop.f32.mrb[0].mxu0
        %v4918 = vadd.f32 0.0, %v4917
        %v4919 = vpop.f32.mrb[0].mxu0
        %4920 = vmatprep.mubr.bf16.mxu0 0
        %4921 = vmatmul.mubr.bf16.gmra.mrb[0].mxu0 %v4253
        %v4922 = vpop.f32.mrb[0].mxu0
        %v4923 = vadd.f32 0.0, %v4922
        %v4924 = vpop.f32.mrb[0].mxu0
        %v4925 = vpop.f32.mrb[0].mxu0
        %v4926 = vadd.f32 0.0, %v4925
        %v4927 = vpop.f32.mrb[0].mxu0
        %4928 = vmatprep.mubr.bf16.mxu0 0
        %4929 = vmatmul.mubr.bf16.gmra.mrb[0].mxu0 %v4256
        %v4930 = vpop.f32.mrb[0].mxu0
        %v4931 = vadd.f32 0.0, %v4930
        %v4932 = vpop.f32.mrb[0].mxu0
        %v4933 = vpop.f32.mrb[0].mxu0
        %v4934 = vadd.f32 0.0, %v4933
        %v4935 = vpop.f32.mrb[0].mxu0
        %4936 = vmatprep.mubr.bf16.mxu0 0
        %4937 = vmatmul.mubr.bf16.gmra.mrb[0].mxu0 %v4259
        %v4938 = vpop.f32.mrb[0].mxu0
        %v4939 = vadd.f32 0.0, %v4938
        %v4940 = vpop.f32.mrb[0].mxu0
        %v4941 = vpop.f32.mrb[0].mxu0
        %v4942 = vadd.f32 0.0, %v4941
        %v4943 = vpop.f32.mrb[0].mxu0
        %4944 = vmatprep.mubr.bf16.mxu0 0
        %4945 = vmatmul.mubr.bf16.gmra.mrb[0].mxu0 %v4262
        %v4946 = vpop.f32.mrb[0].mxu0
        %v4947 = vadd.f32 0.0, %v4946
        %v4948 = vpop.f32.mrb[0].mxu0
        %v4949 = vpop.f32.mrb[0].mxu0
        %v4950 = vadd.f32 0.0, %v4949
        %v4951 = vpop.f32.mrb[0].mxu0
        %4952 = vmatprep.mubr.bf16.mxu0 0
        %4953 = vmatmul.mubr.bf16.gmra.mrb[0].mxu0 %v4265
        %v4954 = vpop.f32.mrb[0].mxu0
        %v4955 = vadd.f32 0.0, %v4954
        %v4956 = vpop.f32.mrb[0].mxu0
        %v4957 = vpop.f32.mrb[0].mxu0
        %v4958 = vadd.f32 0.0, %v4957
        %v4959 = vpop.f32.mrb[0].mxu0
        %4960 = vmatprep.mubr.bf16.mxu0 0
        %4961 = vmatmul.mubr.bf16.gmra.mrb[0].mxu0 %v4268
        %v4962 = vpop.f32.mrb[0].mxu0
        %v4963 = vadd.f32 0.0, %v4962
        %v4964 = vpop.f32.mrb[0].mxu0
        %v4965 = vpop.f32.mrb[0].mxu0
        %v4966 = vadd.f32 0.0, %v4965
        %v4967 = vpop.f32.mrb[0].mxu0
        %4968 = vmatprep.mubr.bf16.mxu0 0
        %4969 = vmatmul.mubr.bf16.gmra.mrb[0].mxu0 %v4271
        %v4970 = vpop.f32.mrb[0].mxu0
        %v4971 = vadd.f32 0.0, %v4970
        %v4972 = vpop.f32.mrb[0].mxu0
        %v4973 = vpop.f32.mrb[0].mxu0
        %v4974 = vadd.f32 0.0, %v4973
        %v4975 = vpop.f32.mrb[0].mxu0
        %4976 = vmatprep.mubr.bf16.mxu0 0
        %4977 = vmatmul.mubr.bf16.gmra.mrb[0].mxu0 %v4274
        %v4978 = vpop.f32.mrb[0].mxu0
        %v4979 = vadd.f32 0.0, %v4978
        %v4980 = vpop.f32.mrb[0].mxu0
        %v4981 = vpop.f32.mrb[0].mxu0
        %v4982 = vadd.f32 0.0, %v4981
        %v4983 = vpop.f32.mrb[0].mxu0
        %4984 = vdwg.mxu0
        %v4985 = vld [vmem:[%s853] sm:$0xff]
        %v4986 = vld [vmem:[%s853 + $0x8] sm:$0xff]
        %v4987 = vld [vmem:[%s853 + $0x18] sm:$0xff]
        %v4988 = vld [vmem:[%s853 + $0x20] sm:$0xff]
        %v4989 = vld [vmem:[%s853 + $0x30] sm:$0xff]
        %v4990 = vld [vmem:[%s853 + $0x38] sm:$0xff]
        %v4991 = vld [vmem:[%s853 + $0x48] sm:$0xff]
        %v4992 = vld [vmem:[%s853 + $0x50] sm:$0xff]
        %v4993 = vld [vmem:[%s853 + $0x60] sm:$0xff]
        %v4994 = vld [vmem:[%s853 + $0x68] sm:$0xff]
        %v4995 = vld [vmem:[%s853 + $0x78] sm:$0xff]
        %v4996 = vld [vmem:[%s853 + $0x80] sm:$0xff]
        %v4997 = vld [vmem:[%s853 + $0x90] sm:$0xff]
        %v4998 = vld [vmem:[%s853 + $0x98] sm:$0xff]
        %v4999 = vld [vmem:[%s853 + $0xa8] sm:$0xff]
        %v5000 = vld [vmem:[%s853 + $0xb0] sm:$0xff]
        %v5001 = vld [vmem:[%s853 + $0xc0] sm:$0xff]
        %v5002 = vld [vmem:[%s853 + $0xc8] sm:$0xff]
        %v5003 = vld [vmem:[%s853 + $0xd8] sm:$0xff]
        %v5004 = vld [vmem:[%s853 + $0xe0] sm:$0xff]
        %v5005 = vld [vmem:[%s853 + $0xf0] sm:$0xff]
        %v5006 = vld [vmem:[%s853 + $0xf8] sm:$0xff]
        %v5007 = vld [vmem:[%s853 + $0x108] sm:$0xff]
        %v5008 = vld [vmem:[%s853 + $0x110] sm:$0xff]
        %v5009 = vld [vmem:[%s853 + $0x120] sm:$0xff]
        %v5010 = vld [vmem:[%s853 + $0x128] sm:$0xff]
        %v5011 = vld [vmem:[%s853 + $0x138] sm:$0xff]
        %v5012 = vld [vmem:[%s853 + $0x140] sm:$0xff]
        %v5013 = vld [vmem:[%s853 + $0x150] sm:$0xff]
        %v5014 = vld [vmem:[%s853 + $0x158] sm:$0xff]
        %v5015 = vld [vmem:[%s853 + $0x168] sm:$0xff]
        %v5016 = vld [vmem:[%s853 + $0x170] sm:$0xff]
        %v5017 = vadd.f32 %v4985, %v4859
        %v5018 = vadd.f32 %v4986, %v4862
        %v5019 = vadd.f32 %v4987, %v4867
        %v5020 = vadd.f32 %v4988, %v4870
        %v5021 = vadd.f32 %v4989, %v4875
        %v5022 = vadd.f32 %v4990, %v4878
        %v5023 = vadd.f32 %v4991, %v4883
        %v5024 = vadd.f32 %v4992, %v4886
        %v5025 = vadd.f32 %v4993, %v4891
        %v5026 = vadd.f32 %v4994, %v4894
        %v5027 = vadd.f32 %v4995, %v4899
        %v5028 = vadd.f32 %v4996, %v4902
        %v5029 = vadd.f32 %v4997, %v4907
        %v5030 = vadd.f32 %v4998, %v4910
        %v5031 = vadd.f32 %v4999, %v4915
        %v5032 = vadd.f32 %v5000, %v4918
        %v5033 = vadd.f32 %v5001, %v4923
        %v5034 = vadd.f32 %v5002, %v4926
        %v5035 = vadd.f32 %v5003, %v4931
        %v5036 = vadd.f32 %v5004, %v4934
        %v5037 = vadd.f32 %v5005, %v4939
        %v5038 = vadd.f32 %v5006, %v4942
        %v5039 = vadd.f32 %v5007, %v4947
        %v5040 = vadd.f32 %v5008, %v4950
        %v5041 = vadd.f32 %v5009, %v4955
        %v5042 = vadd.f32 %v5010, %v4958
        %v5043 = vadd.f32 %v5011, %v4963
        %v5044 = vadd.f32 %v5012, %v4966
        %v5045 = vadd.f32 %v5013, %v4971
        %v5046 = vadd.f32 %v5014, %v4974
        %v5047 = vadd.f32 %v5015, %v4979
        %v5048 = vadd.f32 %v5016, %v4982
        %5049 = vst.msk [vmem:[%s853] sm:$0xff] %vm348, %v5017
        %5050 = vst.msk [vmem:[%s853 + $0x8] sm:$0xff] %vm348, %v5018
        %5051 = vst.msk [vmem:[%s853 + $0x18] sm:$0xff] %vm348, %v5019
        %5052 = vst.msk [vmem:[%s853 + $0x20] sm:$0xff] %vm348, %v5020
        %5053 = vst.msk [vmem:[%s853 + $0x30] sm:$0xff] %vm348, %v5021
        %5054 = vst.msk [vmem:[%s853 + $0x38] sm:$0xff] %vm348, %v5022
        %5055 = vst.msk [vmem:[%s853 + $0x48] sm:$0xff] %vm348, %v5023
        %5056 = vst.msk [vmem:[%s853 + $0x50] sm:$0xff] %vm348, %v5024
        %5057 = vst.msk [vmem:[%s853 + $0x60] sm:$0xff] %vm348, %v5025
        %5058 = vst.msk [vmem:[%s853 + $0x68] sm:$0xff] %vm348, %v5026
        %5059 = vst.msk [vmem:[%s853 + $0x78] sm:$0xff] %vm348, %v5027
        %5060 = vst.msk [vmem:[%s853 + $0x80] sm:$0xff] %vm348, %v5028
        %5061 = vst.msk [vmem:[%s853 + $0x90] sm:$0xff] %vm348, %v5029
        %5062 = vst.msk [vmem:[%s853 + $0x98] sm:$0xff] %vm348, %v5030
        %5063 = vst.msk [vmem:[%s853 + $0xa8] sm:$0xff] %vm348, %v5031
        %5064 = vst.msk [vmem:[%s853 + $0xb0] sm:$0xff] %vm348, %v5032
        %5065 = vst.msk [vmem:[%s853 + $0xc0] sm:$0xff] %vm348, %v5033
        %5066 = vst.msk [vmem:[%s853 + $0xc8] sm:$0xff] %vm348, %v5034
        %5067 = vst.msk [vmem:[%s853 + $0xd8] sm:$0xff] %vm348, %v5035
        %5068 = vst.msk [vmem:[%s853 + $0xe0] sm:$0xff] %vm348, %v5036
        %5069 = vst.msk [vmem:[%s853 + $0xf0] sm:$0xff] %vm348, %v5037
        %5070 = vst.msk [vmem:[%s853 + $0xf8] sm:$0xff] %vm348, %v5038
        %5071 = vst.msk [vmem:[%s853 + $0x108] sm:$0xff] %vm348, %v5039
        %5072 = vst.msk [vmem:[%s853 + $0x110] sm:$0xff] %vm348, %v5040
        %5073 = vst.msk [vmem:[%s853 + $0x120] sm:$0xff] %vm348, %v5041
        %5074 = vst.msk [vmem:[%s853 + $0x128] sm:$0xff] %vm348, %v5042
        %5075 = vst.msk [vmem:[%s853 + $0x138] sm:$0xff] %vm348, %v5043
        %5076 = vst.msk [vmem:[%s853 + $0x140] sm:$0xff] %vm348, %v5044
        %5077 = vst.msk [vmem:[%s853 + $0x150] sm:$0xff] %vm348, %v5045
        %5078 = vst.msk [vmem:[%s853 + $0x158] sm:$0xff] %vm348, %v5046
        %5079 = vst.msk [vmem:[%s853 + $0x168] sm:$0xff] %vm348, %v5047
        %5080 = vst.msk [vmem:[%s853 + $0x170] sm:$0xff] %vm348, %v5048
        %s5081 = scalar_lea.vmem %s3, 48
        %v5082 = vld [vmem:[%s5081] sm:$0xf]
        %v5083 = vld [vmem:[%s5081 + $0x4] sm:$0xf]
        %v5084 = vld [vmem:[%s5081 + $0x8] sm:$0xf]
        %v5085 = vld [vmem:[%s5081 + $0xc] sm:$0xf]
        %v5090 = vunpack.c.l.b16 %v5082
        %v5091 = vunpack.c.l.b16 %v5083
        %v5092 = vunpack.c.l.b16 %v5084
        %v5093 = vunpack.c.l.b16 %v5085
        %v5094 = vpack.c.b16 %v5091, %v5090
        %v5095 = vpack.c.b16 %v5093, %v5092
        %5098 = vmatprep.subr.bf16.mxu0 0
        %5099 = vmatpush1.bf16.msra.mxu0 %v5094
        %5100 = vmatprep.subr.bf16.mxu0 0
        %5101 = vmatpush1.bf16.msra.mxu0 %v5095
        %5102 = vmatprep.subr.bf16.mxu0 0
        %5103 = vmatpush1.bf16.msra.mxu0 0
        %5104 = vmatprep.subr.bf16.mxu0 0
        %5105 = vmatpush1.bf16.msra.mxu0 0
        %5106 = vmatprep.subr.bf16.mxu0 0
        %5107 = vmatpush1.bf16.msra.mxu0 0
        %5108 = vmatprep.subr.bf16.mxu0 0
        %5109 = vmatpush1.bf16.msra.mxu0 0
        %5110 = vmatprep.subr.bf16.mxu0 0
        %5111 = vmatpush1.bf16.msra.mxu0 0
        %5112 = vmatprep.subr.bf16.mxu0 0
        %5113 = vmatpush1.bf16.msra.mxu0 0
        %5114 = vmatprep.subr.bf16.mxu0 0
        %5115 = vmatpush1.bf16.msra.mxu0 0
        %5116 = vmatprep.subr.bf16.mxu0 0
        %5117 = vmatpush1.bf16.msra.mxu0 0
        %5118 = vmatprep.subr.bf16.mxu0 0
        %5119 = vmatpush1.bf16.msra.mxu0 0
        %5120 = vmatprep.subr.bf16.mxu0 0
        %5121 = vmatpush1.bf16.msra.mxu0 0
        %5122 = vmatprep.subr.bf16.mxu0 0
        %5123 = vmatpush1.bf16.msra.mxu0 0
        %5124 = vmatprep.subr.bf16.mxu0 0
        %5125 = vmatpush1.bf16.msra.mxu0 0
        %5126 = vmatprep.subr.bf16.mxu0 0
        %5127 = vmatpush1.bf16.msra.mxu0 0
        %5128 = vmatprep.subr.bf16.mxu0 0
        %5129 = vmatpush1.bf16.msra.mxu0 0
        %5130 = vmatprep.mubr.bf16.mxu0 0
        %5131 = vmatmul.mubr.bf16.gmra.mrb[0].mxu0 %v4229
        %v5132 = vpop.f32.mrb[0].mxu0
        %v5133 = vadd.f32 0.0, %v5132
        %v5134 = vpop.f32.mrb[0].mxu0
        %v5135 = vpop.f32.mrb[0].mxu0
        %v5136 = vadd.f32 0.0, %v5135
        %v5137 = vpop.f32.mrb[0].mxu0
        %5138 = vmatprep.mubr.bf16.mxu0 0
        %5139 = vmatmul.mubr.bf16.gmra.mrb[0].mxu0 %v4232
        %v5140 = vpop.f32.mrb[0].mxu0
        %v5141 = vadd.f32 0.0, %v5140
        %v5142 = vpop.f32.mrb[0].mxu0
        %v5143 = vpop.f32.mrb[0].mxu0
        %v5144 = vadd.f32 0.0, %v5143
        %v5145 = vpop.f32.mrb[0].mxu0
        %5146 = vmatprep.mubr.bf16.mxu0 0
        %5147 = vmatmul.mubr.bf16.gmra.mrb[0].mxu0 %v4235
        %v5148 = vpop.f32.mrb[0].mxu0
        %v5149 = vadd.f32 0.0, %v5148
        %v5150 = vpop.f32.mrb[0].mxu0
        %v5151 = vpop.f32.mrb[0].mxu0
        %v5152 = vadd.f32 0.0, %v5151
        %v5153 = vpop.f32.mrb[0].mxu0
        %5154 = vmatprep.mubr.bf16.mxu0 0
        %5155 = vmatmul.mubr.bf16.gmra.mrb[0].mxu0 %v4238
        %v5156 = vpop.f32.mrb[0].mxu0
        %v5157 = vadd.f32 0.0, %v5156
        %v5158 = vpop.f32.mrb[0].mxu0
        %v5159 = vpop.f32.mrb[0].mxu0
        %v5160 = vadd.f32 0.0, %v5159
        %v5161 = vpop.f32.mrb[0].mxu0
        %5162 = vmatprep.mubr.bf16.mxu0 0
        %5163 = vmatmul.mubr.bf16.gmra.mrb[0].mxu0 %v4241
        %v5164 = vpop.f32.mrb[0].mxu0
        %v5165 = vadd.f32 0.0, %v5164
        %v5166 = vpop.f32.mrb[0].mxu0
        %v5167 = vpop.f32.mrb[0].mxu0
        %v5168 = vadd.f32 0.0, %v5167
        %v5169 = vpop.f32.mrb[0].mxu0
        %5170 = vmatprep.mubr.bf16.mxu0 0
        %5171 = vmatmul.mubr.bf16.gmra.mrb[0].mxu0 %v4244
        %v5172 = vpop.f32.mrb[0].mxu0
        %v5173 = vadd.f32 0.0, %v5172
        %v5174 = vpop.f32.mrb[0].mxu0
        %v5175 = vpop.f32.mrb[0].mxu0
        %v5176 = vadd.f32 0.0, %v5175
        %v5177 = vpop.f32.mrb[0].mxu0
        %5178 = vmatprep.mubr.bf16.mxu0 0
        %5179 = vmatmul.mubr.bf16.gmra.mrb[0].mxu0 %v4247
        %v5180 = vpop.f32.mrb[0].mxu0
        %v5181 = vadd.f32 0.0, %v5180
        %v5182 = vpop.f32.mrb[0].mxu0
        %v5183 = vpop.f32.mrb[0].mxu0
        %v5184 = vadd.f32 0.0, %v5183
        %v5185 = vpop.f32.mrb[0].mxu0
        %5186 = vmatprep.mubr.bf16.mxu0 0
        %5187 = vmatmul.mubr.bf16.gmra.mrb[0].mxu0 %v4250
        %v5188 = vpop.f32.mrb[0].mxu0
        %v5189 = vadd.f32 0.0, %v5188
        %v5190 = vpop.f32.mrb[0].mxu0
        %v5191 = vpop.f32.mrb[0].mxu0
        %v5192 = vadd.f32 0.0, %v5191
        %v5193 = vpop.f32.mrb[0].mxu0
        %5194 = vmatprep.mubr.bf16.mxu0 0
        %5195 = vmatmul.mubr.bf16.gmra.mrb[0].mxu0 %v4253
        %v5196 = vpop.f32.mrb[0].mxu0
        %v5197 = vadd.f32 0.0, %v5196
        %v5198 = vpop.f32.mrb[0].mxu0
        %v5199 = vpop.f32.mrb[0].mxu0
        %v5200 = vadd.f32 0.0, %v5199
        %v5201 = vpop.f32.mrb[0].mxu0
        %5202 = vmatprep.mubr.bf16.mxu0 0
        %5203 = vmatmul.mubr.bf16.gmra.mrb[0].mxu0 %v4256
        %v5204 = vpop.f32.mrb[0].mxu0
        %v5205 = vadd.f32 0.0, %v5204
        %v5206 = vpop.f32.mrb[0].mxu0
        %v5207 = vpop.f32.mrb[0].mxu0
        %v5208 = vadd.f32 0.0, %v5207
        %v5209 = vpop.f32.mrb[0].mxu0
        %5210 = vmatprep.mubr.bf16.mxu0 0
        %5211 = vmatmul.mubr.bf16.gmra.mrb[0].mxu0 %v4259
        %v5212 = vpop.f32.mrb[0].mxu0
        %v5213 = vadd.f32 0.0, %v5212
        %v5214 = vpop.f32.mrb[0].mxu0
        %v5215 = vpop.f32.mrb[0].mxu0
        %v5216 = vadd.f32 0.0, %v5215
        %v5217 = vpop.f32.mrb[0].mxu0
        %5218 = vmatprep.mubr.bf16.mxu0 0
        %5219 = vmatmul.mubr.bf16.gmra.mrb[0].mxu0 %v4262
        %v5220 = vpop.f32.mrb[0].mxu0
        %v5221 = vadd.f32 0.0, %v5220
        %v5222 = vpop.f32.mrb[0].mxu0
        %v5223 = vpop.f32.mrb[0].mxu0
        %v5224 = vadd.f32 0.0, %v5223
        %v5225 = vpop.f32.mrb[0].mxu0
        %5226 = vmatprep.mubr.bf16.mxu0 0
        %5227 = vmatmul.mubr.bf16.gmra.mrb[0].mxu0 %v4265
        %v5228 = vpop.f32.mrb[0].mxu0
        %v5229 = vadd.f32 0.0, %v5228
        %v5230 = vpop.f32.mrb[0].mxu0
        %v5231 = vpop.f32.mrb[0].mxu0
        %v5232 = vadd.f32 0.0, %v5231
        %v5233 = vpop.f32.mrb[0].mxu0
        %5234 = vmatprep.mubr.bf16.mxu0 0
        %5235 = vmatmul.mubr.bf16.gmra.mrb[0].mxu0 %v4268
        %v5236 = vpop.f32.mrb[0].mxu0
        %v5237 = vadd.f32 0.0, %v5236
        %v5238 = vpop.f32.mrb[0].mxu0
        %v5239 = vpop.f32.mrb[0].mxu0
        %v5240 = vadd.f32 0.0, %v5239
        %v5241 = vpop.f32.mrb[0].mxu0
        %5242 = vmatprep.mubr.bf16.mxu0 0
        %5243 = vmatmul.mubr.bf16.gmra.mrb[0].mxu0 %v4271
        %v5244 = vpop.f32.mrb[0].mxu0
        %v5245 = vadd.f32 0.0, %v5244
        %v5246 = vpop.f32.mrb[0].mxu0
        %v5247 = vpop.f32.mrb[0].mxu0
        %v5248 = vadd.f32 0.0, %v5247
        %v5249 = vpop.f32.mrb[0].mxu0
        %5250 = vmatprep.mubr.bf16.mxu0 0
        %5251 = vmatmul.mubr.bf16.gmra.mrb[0].mxu0 %v4274
        %v5252 = vpop.f32.mrb[0].mxu0
        %v5253 = vadd.f32 0.0, %v5252
        %v5254 = vpop.f32.mrb[0].mxu0
        %v5255 = vpop.f32.mrb[0].mxu0
        %v5256 = vadd.f32 0.0, %v5255
        %v5257 = vpop.f32.mrb[0].mxu0
        %5258 = vdwg.mxu0
        %v5259 = vld [vmem:[%s2012 + $0x2] sm:$0xff]
        %v5260 = vld [vmem:[%s2012 + $0xa] sm:$0xff]
        %v5261 = vld [vmem:[%s2012 + $0x1a] sm:$0xff]
        %v5262 = vld [vmem:[%s2012 + $0x22] sm:$0xff]
        %v5263 = vld [vmem:[%s2012 + $0x32] sm:$0xff]
        %v5264 = vld [vmem:[%s2012 + $0x3a] sm:$0xff]
        %v5265 = vld [vmem:[%s2012 + $0x4a] sm:$0xff]
        %v5266 = vld [vmem:[%s2012 + $0x52] sm:$0xff]
        %v5267 = vld [vmem:[%s2012 + $0x62] sm:$0xff]
        %v5268 = vld [vmem:[%s2012 + $0x6a] sm:$0xff]
        %v5269 = vld [vmem:[%s2012 + $0x7a] sm:$0xff]
        %v5270 = vld [vmem:[%s2012 + $0x82] sm:$0xff]
        %v5271 = vld [vmem:[%s2012 + $0x92] sm:$0xff]
        %v5272 = vld [vmem:[%s2012 + $0x9a] sm:$0xff]
        %v5273 = vld [vmem:[%s2012 + $0xaa] sm:$0xff]
        %v5274 = vld [vmem:[%s2012 + $0xb2] sm:$0xff]
        %v5275 = vld [vmem:[%s2012 + $0xc2] sm:$0xff]
        %v5276 = vld [vmem:[%s2012 + $0xca] sm:$0xff]
        %v5277 = vld [vmem:[%s2012 + $0xda] sm:$0xff]
        %v5278 = vld [vmem:[%s2012 + $0xe2] sm:$0xff]
        %v5279 = vld [vmem:[%s2012 + $0xf2] sm:$0xff]
        %v5280 = vld [vmem:[%s2012 + $0xfa] sm:$0xff]
        %v5281 = vld [vmem:[%s2012 + $0x10a] sm:$0xff]
        %v5282 = vld [vmem:[%s2012 + $0x112] sm:$0xff]
        %v5283 = vld [vmem:[%s2012 + $0x122] sm:$0xff]
        %v5284 = vld [vmem:[%s2012 + $0x12a] sm:$0xff]
        %v5285 = vld [vmem:[%s2012 + $0x13a] sm:$0xff]
        %v5286 = vld [vmem:[%s2012 + $0x142] sm:$0xff]
        %v5287 = vld [vmem:[%s2012 + $0x152] sm:$0xff]
        %v5288 = vld [vmem:[%s2012 + $0x15a] sm:$0xff]
        %v5289 = vld [vmem:[%s2012 + $0x16a] sm:$0xff]
        %v5290 = vld [vmem:[%s2012 + $0x172] sm:$0xff]
        %v5291 = vadd.f32 %v5259, %v5133
        %v5292 = vadd.f32 %v5260, %v5136
        %v5293 = vadd.f32 %v5261, %v5141
        %v5294 = vadd.f32 %v5262, %v5144
        %v5295 = vadd.f32 %v5263, %v5149
        %v5296 = vadd.f32 %v5264, %v5152
        %v5297 = vadd.f32 %v5265, %v5157
        %v5298 = vadd.f32 %v5266, %v5160
        %v5299 = vadd.f32 %v5267, %v5165
        %v5300 = vadd.f32 %v5268, %v5168
        %v5301 = vadd.f32 %v5269, %v5173
        %v5302 = vadd.f32 %v5270, %v5176
        %v5303 = vadd.f32 %v5271, %v5181
        %v5304 = vadd.f32 %v5272, %v5184
        %v5305 = vadd.f32 %v5273, %v5189
        %v5306 = vadd.f32 %v5274, %v5192
        %v5307 = vadd.f32 %v5275, %v5197
        %v5308 = vadd.f32 %v5276, %v5200
        %v5309 = vadd.f32 %v5277, %v5205
        %v5310 = vadd.f32 %v5278, %v5208
        %v5311 = vadd.f32 %v5279, %v5213
        %v5312 = vadd.f32 %v5280, %v5216
        %v5313 = vadd.f32 %v5281, %v5221
        %v5314 = vadd.f32 %v5282, %v5224
        %v5315 = vadd.f32 %v5283, %v5229
        %v5316 = vadd.f32 %v5284, %v5232
        %v5317 = vadd.f32 %v5285, %v5237
        %v5318 = vadd.f32 %v5286, %v5240
        %v5319 = vadd.f32 %v5287, %v5245
        %v5320 = vadd.f32 %v5288, %v5248
        %v5321 = vadd.f32 %v5289, %v5253
        %v5322 = vadd.f32 %v5290, %v5256
        %5323 = vst.msk [vmem:[%s2012 + $0x2] sm:$0xff] %vm348, %v5291
        %5324 = vst.msk [vmem:[%s2012 + $0xa] sm:$0xff] %vm348, %v5292
        %5325 = vst.msk [vmem:[%s2012 + $0x1a] sm:$0xff] %vm348, %v5293
        %5326 = vst.msk [vmem:[%s2012 + $0x22] sm:$0xff] %vm348, %v5294
        %5327 = vst.msk [vmem:[%s2012 + $0x32] sm:$0xff] %vm348, %v5295
        %5328 = vst.msk [vmem:[%s2012 + $0x3a] sm:$0xff] %vm348, %v5296
        %5329 = vst.msk [vmem:[%s2012 + $0x4a] sm:$0xff] %vm348, %v5297
        %5330 = vst.msk [vmem:[%s2012 + $0x52] sm:$0xff] %vm348, %v5298
        %5331 = vst.msk [vmem:[%s2012 + $0x62] sm:$0xff] %vm348, %v5299
        %5332 = vst.msk [vmem:[%s2012 + $0x6a] sm:$0xff] %vm348, %v5300
        %5333 = vst.msk [vmem:[%s2012 + $0x7a] sm:$0xff] %vm348, %v5301
        %5334 = vst.msk [vmem:[%s2012 + $0x82] sm:$0xff] %vm348, %v5302
        %5335 = vst.msk [vmem:[%s2012 + $0x92] sm:$0xff] %vm348, %v5303
        %5336 = vst.msk [vmem:[%s2012 + $0x9a] sm:$0xff] %vm348, %v5304
        %5337 = vst.msk [vmem:[%s2012 + $0xaa] sm:$0xff] %vm348, %v5305
        %5338 = vst.msk [vmem:[%s2012 + $0xb2] sm:$0xff] %vm348, %v5306
        %5339 = vst.msk [vmem:[%s2012 + $0xc2] sm:$0xff] %vm348, %v5307
        %5340 = vst.msk [vmem:[%s2012 + $0xca] sm:$0xff] %vm348, %v5308
        %5341 = vst.msk [vmem:[%s2012 + $0xda] sm:$0xff] %vm348, %v5309
        %5342 = vst.msk [vmem:[%s2012 + $0xe2] sm:$0xff] %vm348, %v5310
        %5343 = vst.msk [vmem:[%s2012 + $0xf2] sm:$0xff] %vm348, %v5311
        %5344 = vst.msk [vmem:[%s2012 + $0xfa] sm:$0xff] %vm348, %v5312
        %5345 = vst.msk [vmem:[%s2012 + $0x10a] sm:$0xff] %vm348, %v5313
        %5346 = vst.msk [vmem:[%s2012 + $0x112] sm:$0xff] %vm348, %v5314
        %5347 = vst.msk [vmem:[%s2012 + $0x122] sm:$0xff] %vm348, %v5315
        %5348 = vst.msk [vmem:[%s2012 + $0x12a] sm:$0xff] %vm348, %v5316
        %5349 = vst.msk [vmem:[%s2012 + $0x13a] sm:$0xff] %vm348, %v5317
        %5350 = vst.msk [vmem:[%s2012 + $0x142] sm:$0xff] %vm348, %v5318
        %5351 = vst.msk [vmem:[%s2012 + $0x152] sm:$0xff] %vm348, %v5319
        %5352 = vst.msk [vmem:[%s2012 + $0x15a] sm:$0xff] %vm348, %v5320
        %5353 = vst.msk [vmem:[%s2012 + $0x16a] sm:$0xff] %vm348, %v5321
        %5354 = vst.msk [vmem:[%s2012 + $0x172] sm:$0xff] %vm348, %v5322
        %s5355 = scalar_lea.vmem %s3, 64
        %v5356 = vld [vmem:[%s5355] sm:$0xf]
        %v5357 = vld [vmem:[%s5355 + $0x4] sm:$0xf]
        %v5358 = vld [vmem:[%s5355 + $0x8] sm:$0xf]
        %v5359 = vld [vmem:[%s5355 + $0xc] sm:$0xf]
        %v5364 = vunpack.c.l.b16 %v5356
        %v5365 = vunpack.c.l.b16 %v5357
        %v5366 = vunpack.c.l.b16 %v5358
        %v5367 = vunpack.c.l.b16 %v5359
        %v5368 = vpack.c.b16 %v5365, %v5364
        %v5369 = vpack.c.b16 %v5367, %v5366
        %5372 = vmatprep.subr.bf16.mxu0 0
        %5373 = vmatpush1.bf16.msra.mxu0 %v5368
        %5374 = vmatprep.subr.bf16.mxu0 0
        %5375 = vmatpush1.bf16.msra.mxu0 %v5369
        %5376 = vmatprep.subr.bf16.mxu0 0
        %5377 = vmatpush1.bf16.msra.mxu0 0
        %5378 = vmatprep.subr.bf16.mxu0 0
        %5379 = vmatpush1.bf16.msra.mxu0 0
        %5380 = vmatprep.subr.bf16.mxu0 0
        %5381 = vmatpush1.bf16.msra.mxu0 0
        %5382 = vmatprep.subr.bf16.mxu0 0
        %5383 = vmatpush1.bf16.msra.mxu0 0
        %5384 = vmatprep.subr.bf16.mxu0 0
        %5385 = vmatpush1.bf16.msra.mxu0 0
        %5386 = vmatprep.subr.bf16.mxu0 0
        %5387 = vmatpush1.bf16.msra.mxu0 0
        %5388 = vmatprep.subr.bf16.mxu0 0
        %5389 = vmatpush1.bf16.msra.mxu0 0
        %5390 = vmatprep.subr.bf16.mxu0 0
        %5391 = vmatpush1.bf16.msra.mxu0 0
        %5392 = vmatprep.subr.bf16.mxu0 0
        %5393 = vmatpush1.bf16.msra.mxu0 0
        %5394 = vmatprep.subr.bf16.mxu0 0
        %5395 = vmatpush1.bf16.msra.mxu0 0
        %5396 = vmatprep.subr.bf16.mxu0 0
        %5397 = vmatpush1.bf16.msra.mxu0 0
        %5398 = vmatprep.subr.bf16.mxu0 0
        %5399 = vmatpush1.bf16.msra.mxu0 0
        %5400 = vmatprep.subr.bf16.mxu0 0
        %5401 = vmatpush1.bf16.msra.mxu0 0
        %5402 = vmatprep.subr.bf16.mxu0 0
        %5403 = vmatpush1.bf16.msra.mxu0 0
        %5404 = vmatprep.mubr.bf16.mxu0 0
        %5405 = vmatmul.mubr.bf16.gmra.mrb[0].mxu0 %v4229
        %v5406 = vpop.f32.mrb[0].mxu0
        %v5407 = vadd.f32 0.0, %v5406
        %v5408 = vpop.f32.mrb[0].mxu0
        %v5409 = vpop.f32.mrb[0].mxu0
        %v5410 = vadd.f32 0.0, %v5409
        %v5411 = vpop.f32.mrb[0].mxu0
        %5412 = vmatprep.mubr.bf16.mxu0 0
        %5413 = vmatmul.mubr.bf16.gmra.mrb[0].mxu0 %v4232
        %v5414 = vpop.f32.mrb[0].mxu0
        %v5415 = vadd.f32 0.0, %v5414
        %v5416 = vpop.f32.mrb[0].mxu0
        %v5417 = vpop.f32.mrb[0].mxu0
        %v5418 = vadd.f32 0.0, %v5417
        %v5419 = vpop.f32.mrb[0].mxu0
        %5420 = vmatprep.mubr.bf16.mxu0 0
        %5421 = vmatmul.mubr.bf16.gmra.mrb[0].mxu0 %v4235
        %v5422 = vpop.f32.mrb[0].mxu0
        %v5423 = vadd.f32 0.0, %v5422
        %v5424 = vpop.f32.mrb[0].mxu0
        %v5425 = vpop.f32.mrb[0].mxu0
        %v5426 = vadd.f32 0.0, %v5425
        %v5427 = vpop.f32.mrb[0].mxu0
        %5428 = vmatprep.mubr.bf16.mxu0 0
        %5429 = vmatmul.mubr.bf16.gmra.mrb[0].mxu0 %v4238
        %v5430 = vpop.f32.mrb[0].mxu0
        %v5431 = vadd.f32 0.0, %v5430
        %v5432 = vpop.f32.mrb[0].mxu0
        %v5433 = vpop.f32.mrb[0].mxu0
        %v5434 = vadd.f32 0.0, %v5433
        %v5435 = vpop.f32.mrb[0].mxu0
        %5436 = vmatprep.mubr.bf16.mxu0 0
        %5437 = vmatmul.mubr.bf16.gmra.mrb[0].mxu0 %v4241
        %v5438 = vpop.f32.mrb[0].mxu0
        %v5439 = vadd.f32 0.0, %v5438
        %v5440 = vpop.f32.mrb[0].mxu0
        %v5441 = vpop.f32.mrb[0].mxu0
        %v5442 = vadd.f32 0.0, %v5441
        %v5443 = vpop.f32.mrb[0].mxu0
        %5444 = vmatprep.mubr.bf16.mxu0 0
        %5445 = vmatmul.mubr.bf16.gmra.mrb[0].mxu0 %v4244
        %v5446 = vpop.f32.mrb[0].mxu0
        %v5447 = vadd.f32 0.0, %v5446
        %v5448 = vpop.f32.mrb[0].mxu0
        %v5449 = vpop.f32.mrb[0].mxu0
        %v5450 = vadd.f32 0.0, %v5449
        %v5451 = vpop.f32.mrb[0].mxu0
        %5452 = vmatprep.mubr.bf16.mxu0 0
        %5453 = vmatmul.mubr.bf16.gmra.mrb[0].mxu0 %v4247
        %v5454 = vpop.f32.mrb[0].mxu0
        %v5455 = vadd.f32 0.0, %v5454
        %v5456 = vpop.f32.mrb[0].mxu0
        %v5457 = vpop.f32.mrb[0].mxu0
        %v5458 = vadd.f32 0.0, %v5457
        %v5459 = vpop.f32.mrb[0].mxu0
        %5460 = vmatprep.mubr.bf16.mxu0 0
        %5461 = vmatmul.mubr.bf16.gmra.mrb[0].mxu0 %v4250
        %v5462 = vpop.f32.mrb[0].mxu0
        %v5463 = vadd.f32 0.0, %v5462
        %v5464 = vpop.f32.mrb[0].mxu0
        %v5465 = vpop.f32.mrb[0].mxu0
        %v5466 = vadd.f32 0.0, %v5465
        %v5467 = vpop.f32.mrb[0].mxu0
        %5468 = vmatprep.mubr.bf16.mxu0 0
        %5469 = vmatmul.mubr.bf16.gmra.mrb[0].mxu0 %v4253
        %v5470 = vpop.f32.mrb[0].mxu0
        %v5471 = vadd.f32 0.0, %v5470
        %v5472 = vpop.f32.mrb[0].mxu0
        %v5473 = vpop.f32.mrb[0].mxu0
        %v5474 = vadd.f32 0.0, %v5473
        %v5475 = vpop.f32.mrb[0].mxu0
        %5476 = vmatprep.mubr.bf16.mxu0 0
        %5477 = vmatmul.mubr.bf16.gmra.mrb[0].mxu0 %v4256
        %v5478 = vpop.f32.mrb[0].mxu0
        %v5479 = vadd.f32 0.0, %v5478
        %v5480 = vpop.f32.mrb[0].mxu0
        %v5481 = vpop.f32.mrb[0].mxu0
        %v5482 = vadd.f32 0.0, %v5481
        %v5483 = vpop.f32.mrb[0].mxu0
        %5484 = vmatprep.mubr.bf16.mxu0 0
        %5485 = vmatmul.mubr.bf16.gmra.mrb[0].mxu0 %v4259
        %v5486 = vpop.f32.mrb[0].mxu0
        %v5487 = vadd.f32 0.0, %v5486
        %v5488 = vpop.f32.mrb[0].mxu0
        %v5489 = vpop.f32.mrb[0].mxu0
        %v5490 = vadd.f32 0.0, %v5489
        %v5491 = vpop.f32.mrb[0].mxu0
        %5492 = vmatprep.mubr.bf16.mxu0 0
        %5493 = vmatmul.mubr.bf16.gmra.mrb[0].mxu0 %v4262
        %v5494 = vpop.f32.mrb[0].mxu0
        %v5495 = vadd.f32 0.0, %v5494
        %v5496 = vpop.f32.mrb[0].mxu0
        %v5497 = vpop.f32.mrb[0].mxu0
        %v5498 = vadd.f32 0.0, %v5497
        %v5499 = vpop.f32.mrb[0].mxu0
        %5500 = vmatprep.mubr.bf16.mxu0 0
        %5501 = vmatmul.mubr.bf16.gmra.mrb[0].mxu0 %v4265
        %v5502 = vpop.f32.mrb[0].mxu0
        %v5503 = vadd.f32 0.0, %v5502
        %v5504 = vpop.f32.mrb[0].mxu0
        %v5505 = vpop.f32.mrb[0].mxu0
        %v5506 = vadd.f32 0.0, %v5505
        %v5507 = vpop.f32.mrb[0].mxu0
        %5508 = vmatprep.mubr.bf16.mxu0 0
        %5509 = vmatmul.mubr.bf16.gmra.mrb[0].mxu0 %v4268
        %v5510 = vpop.f32.mrb[0].mxu0
        %v5511 = vadd.f32 0.0, %v5510
        %v5512 = vpop.f32.mrb[0].mxu0
        %v5513 = vpop.f32.mrb[0].mxu0
        %v5514 = vadd.f32 0.0, %v5513
        %v5515 = vpop.f32.mrb[0].mxu0
        %5516 = vmatprep.mubr.bf16.mxu0 0
        %5517 = vmatmul.mubr.bf16.gmra.mrb[0].mxu0 %v4271
        %v5518 = vpop.f32.mrb[0].mxu0
        %v5519 = vadd.f32 0.0, %v5518
        %v5520 = vpop.f32.mrb[0].mxu0
        %v5521 = vpop.f32.mrb[0].mxu0
        %v5522 = vadd.f32 0.0, %v5521
        %v5523 = vpop.f32.mrb[0].mxu0
        %5524 = vmatprep.mubr.bf16.mxu0 0
        %5525 = vmatmul.mubr.bf16.gmra.mrb[0].mxu0 %v4274
        %v5526 = vpop.f32.mrb[0].mxu0
        %v5527 = vadd.f32 0.0, %v5526
        %v5528 = vpop.f32.mrb[0].mxu0
        %v5529 = vpop.f32.mrb[0].mxu0
        %v5530 = vadd.f32 0.0, %v5529
        %v5531 = vpop.f32.mrb[0].mxu0
        %5532 = vdwg.mxu0
        %v5533 = vld [vmem:[%s2012 + $0x1] sm:$0xff]
        %v5534 = vld [vmem:[%s2012 + $0x9] sm:$0xff]
        %v5535 = vld [vmem:[%s2012 + $0x19] sm:$0xff]
        %v5536 = vld [vmem:[%s2012 + $0x21] sm:$0xff]
        %v5537 = vld [vmem:[%s2012 + $0x31] sm:$0xff]
        %v5538 = vld [vmem:[%s2012 + $0x39] sm:$0xff]
        %v5539 = vld [vmem:[%s2012 + $0x49] sm:$0xff]
        %v5540 = vld [vmem:[%s2012 + $0x51] sm:$0xff]
        %v5541 = vld [vmem:[%s2012 + $0x61] sm:$0xff]
        %v5542 = vld [vmem:[%s2012 + $0x69] sm:$0xff]
        %v5543 = vld [vmem:[%s2012 + $0x79] sm:$0xff]
        %v5544 = vld [vmem:[%s2012 + $0x81] sm:$0xff]
        %v5545 = vld [vmem:[%s2012 + $0x91] sm:$0xff]
        %v5546 = vld [vmem:[%s2012 + $0x99] sm:$0xff]
        %v5547 = vld [vmem:[%s2012 + $0xa9] sm:$0xff]
        %v5548 = vld [vmem:[%s2012 + $0xb1] sm:$0xff]
        %v5549 = vld [vmem:[%s2012 + $0xc1] sm:$0xff]
        %v5550 = vld [vmem:[%s2012 + $0xc9] sm:$0xff]
        %v5551 = vld [vmem:[%s2012 + $0xd9] sm:$0xff]
        %v5552 = vld [vmem:[%s2012 + $0xe1] sm:$0xff]
        %v5553 = vld [vmem:[%s2012 + $0xf1] sm:$0xff]
        %v5554 = vld [vmem:[%s2012 + $0xf9] sm:$0xff]
        %v5555 = vld [vmem:[%s2012 + $0x109] sm:$0xff]
        %v5556 = vld [vmem:[%s2012 + $0x111] sm:$0xff]
        %v5557 = vld [vmem:[%s2012 + $0x121] sm:$0xff]
        %v5558 = vld [vmem:[%s2012 + $0x129] sm:$0xff]
        %v5559 = vld [vmem:[%s2012 + $0x139] sm:$0xff]
        %v5560 = vld [vmem:[%s2012 + $0x141] sm:$0xff]
        %v5561 = vld [vmem:[%s2012 + $0x151] sm:$0xff]
        %v5562 = vld [vmem:[%s2012 + $0x159] sm:$0xff]
        %v5563 = vld [vmem:[%s2012 + $0x169] sm:$0xff]
        %v5564 = vld [vmem:[%s2012 + $0x171] sm:$0xff]
        %v5565 = vadd.f32 %v5533, %v5407
        %v5566 = vadd.f32 %v5534, %v5410
        %v5567 = vadd.f32 %v5535, %v5415
        %v5568 = vadd.f32 %v5536, %v5418
        %v5569 = vadd.f32 %v5537, %v5423
        %v5570 = vadd.f32 %v5538, %v5426
        %v5571 = vadd.f32 %v5539, %v5431
        %v5572 = vadd.f32 %v5540, %v5434
        %v5573 = vadd.f32 %v5541, %v5439
        %v5574 = vadd.f32 %v5542, %v5442
        %v5575 = vadd.f32 %v5543, %v5447
        %v5576 = vadd.f32 %v5544, %v5450
        %v5577 = vadd.f32 %v5545, %v5455
        %v5578 = vadd.f32 %v5546, %v5458
        %v5579 = vadd.f32 %v5547, %v5463
        %v5580 = vadd.f32 %v5548, %v5466
        %v5581 = vadd.f32 %v5549, %v5471
        %v5582 = vadd.f32 %v5550, %v5474
        %v5583 = vadd.f32 %v5551, %v5479
        %v5584 = vadd.f32 %v5552, %v5482
        %v5585 = vadd.f32 %v5553, %v5487
        %v5586 = vadd.f32 %v5554, %v5490
        %v5587 = vadd.f32 %v5555, %v5495
        %v5588 = vadd.f32 %v5556, %v5498
        %v5589 = vadd.f32 %v5557, %v5503
        %v5590 = vadd.f32 %v5558, %v5506
        %v5591 = vadd.f32 %v5559, %v5511
        %v5592 = vadd.f32 %v5560, %v5514
        %v5593 = vadd.f32 %v5561, %v5519
        %v5594 = vadd.f32 %v5562, %v5522
        %v5595 = vadd.f32 %v5563, %v5527
        %v5596 = vadd.f32 %v5564, %v5530
        %5597 = vst.msk [vmem:[%s2012 + $0x1] sm:$0xff] %vm348, %v5565
        %5598 = vst.msk [vmem:[%s2012 + $0x9] sm:$0xff] %vm348, %v5566
        %5599 = vst.msk [vmem:[%s2012 + $0x19] sm:$0xff] %vm348, %v5567
        %5600 = vst.msk [vmem:[%s2012 + $0x21] sm:$0xff] %vm348, %v5568
        %5601 = vst.msk [vmem:[%s2012 + $0x31] sm:$0xff] %vm348, %v5569
        %5602 = vst.msk [vmem:[%s2012 + $0x39] sm:$0xff] %vm348, %v5570
        %5603 = vst.msk [vmem:[%s2012 + $0x49] sm:$0xff] %vm348, %v5571
        %5604 = vst.msk [vmem:[%s2012 + $0x51] sm:$0xff] %vm348, %v5572
        %5605 = vst.msk [vmem:[%s2012 + $0x61] sm:$0xff] %vm348, %v5573
        %5606 = vst.msk [vmem:[%s2012 + $0x69] sm:$0xff] %vm348, %v5574
        %5607 = vst.msk [vmem:[%s2012 + $0x79] sm:$0xff] %vm348, %v5575
        %5608 = vst.msk [vmem:[%s2012 + $0x81] sm:$0xff] %vm348, %v5576
        %5609 = vst.msk [vmem:[%s2012 + $0x91] sm:$0xff] %vm348, %v5577
        %5610 = vst.msk [vmem:[%s2012 + $0x99] sm:$0xff] %vm348, %v5578
        %5611 = vst.msk [vmem:[%s2012 + $0xa9] sm:$0xff] %vm348, %v5579
        %5612 = vst.msk [vmem:[%s2012 + $0xb1] sm:$0xff] %vm348, %v5580
        %5613 = vst.msk [vmem:[%s2012 + $0xc1] sm:$0xff] %vm348, %v5581
        %5614 = vst.msk [vmem:[%s2012 + $0xc9] sm:$0xff] %vm348, %v5582
        %5615 = vst.msk [vmem:[%s2012 + $0xd9] sm:$0xff] %vm348, %v5583
        %5616 = vst.msk [vmem:[%s2012 + $0xe1] sm:$0xff] %vm348, %v5584
        %5617 = vst.msk [vmem:[%s2012 + $0xf1] sm:$0xff] %vm348, %v5585
        %5618 = vst.msk [vmem:[%s2012 + $0xf9] sm:$0xff] %vm348, %v5586
        %5619 = vst.msk [vmem:[%s2012 + $0x109] sm:$0xff] %vm348, %v5587
        %5620 = vst.msk [vmem:[%s2012 + $0x111] sm:$0xff] %vm348, %v5588
        %5621 = vst.msk [vmem:[%s2012 + $0x121] sm:$0xff] %vm348, %v5589
        %5622 = vst.msk [vmem:[%s2012 + $0x129] sm:$0xff] %vm348, %v5590
        %5623 = vst.msk [vmem:[%s2012 + $0x139] sm:$0xff] %vm348, %v5591
        %5624 = vst.msk [vmem:[%s2012 + $0x141] sm:$0xff] %vm348, %v5592
        %5625 = vst.msk [vmem:[%s2012 + $0x151] sm:$0xff] %vm348, %v5593
        %5626 = vst.msk [vmem:[%s2012 + $0x159] sm:$0xff] %vm348, %v5594
        %5627 = vst.msk [vmem:[%s2012 + $0x169] sm:$0xff] %vm348, %v5595
        %5628 = vst.msk [vmem:[%s2012 + $0x171] sm:$0xff] %vm348, %v5596
        %s5629 = scalar_lea.vmem %s3, 80
        %v5630 = vld [vmem:[%s5629] sm:$0xf]
        %v5631 = vld [vmem:[%s5629 + $0x4] sm:$0xf]
        %v5632 = vld [vmem:[%s5629 + $0x8] sm:$0xf]
        %v5633 = vld [vmem:[%s5629 + $0xc] sm:$0xf]
        %v5638 = vunpack.c.l.b16 %v5630
        %v5639 = vunpack.c.l.b16 %v5631
        %v5640 = vunpack.c.l.b16 %v5632
        %v5641 = vunpack.c.l.b16 %v5633
        %v5642 = vpack.c.b16 %v5639, %v5638
        %v5643 = vpack.c.b16 %v5641, %v5640
        %5646 = vmatprep.subr.bf16.mxu0 0
        %5647 = vmatpush1.bf16.msra.mxu0 %v5642
        %5648 = vmatprep.subr.bf16.mxu0 0
        %5649 = vmatpush1.bf16.msra.mxu0 %v5643
        %5650 = vmatprep.subr.bf16.mxu0 0
        %5651 = vmatpush1.bf16.msra.mxu0 0
        %5652 = vmatprep.subr.bf16.mxu0 0
        %5653 = vmatpush1.bf16.msra.mxu0 0
        %5654 = vmatprep.subr.bf16.mxu0 0
        %5655 = vmatpush1.bf16.msra.mxu0 0
        %5656 = vmatprep.subr.bf16.mxu0 0
        %5657 = vmatpush1.bf16.msra.mxu0 0
        %5658 = vmatprep.subr.bf16.mxu0 0
        %5659 = vmatpush1.bf16.msra.mxu0 0
        %5660 = vmatprep.subr.bf16.mxu0 0
        %5661 = vmatpush1.bf16.msra.mxu0 0
        %5662 = vmatprep.subr.bf16.mxu0 0
        %5663 = vmatpush1.bf16.msra.mxu0 0
        %5664 = vmatprep.subr.bf16.mxu0 0
        %5665 = vmatpush1.bf16.msra.mxu0 0
        %5666 = vmatprep.subr.bf16.mxu0 0
        %5667 = vmatpush1.bf16.msra.mxu0 0
        %5668 = vmatprep.subr.bf16.mxu0 0
        %5669 = vmatpush1.bf16.msra.mxu0 0
        %5670 = vmatprep.subr.bf16.mxu0 0
        %5671 = vmatpush1.bf16.msra.mxu0 0
        %5672 = vmatprep.subr.bf16.mxu0 0
        %5673 = vmatpush1.bf16.msra.mxu0 0
        %5674 = vmatprep.subr.bf16.mxu0 0
        %5675 = vmatpush1.bf16.msra.mxu0 0
        %5676 = vmatprep.subr.bf16.mxu0 0
        %5677 = vmatpush1.bf16.msra.mxu0 0
        %5678 = vmatprep.mubr.bf16.mxu0 0
        %5679 = vmatmul.mubr.bf16.gmra.mrb[0].mxu0 %v4229
        %v5680 = vpop.f32.mrb[0].mxu0
        %v5681 = vadd.f32 0.0, %v5680
        %v5682 = vpop.f32.mrb[0].mxu0
        %v5683 = vpop.f32.mrb[0].mxu0
        %v5684 = vadd.f32 0.0, %v5683
        %v5685 = vpop.f32.mrb[0].mxu0
        %5686 = vmatprep.mubr.bf16.mxu0 0
        %5687 = vmatmul.mubr.bf16.gmra.mrb[0].mxu0 %v4232
        %v5688 = vpop.f32.mrb[0].mxu0
        %v5689 = vadd.f32 0.0, %v5688
        %v5690 = vpop.f32.mrb[0].mxu0
        %v5691 = vpop.f32.mrb[0].mxu0
        %v5692 = vadd.f32 0.0, %v5691
        %v5693 = vpop.f32.mrb[0].mxu0
        %5694 = vmatprep.mubr.bf16.mxu0 0
        %5695 = vmatmul.mubr.bf16.gmra.mrb[0].mxu0 %v4235
        %v5696 = vpop.f32.mrb[0].mxu0
        %v5697 = vadd.f32 0.0, %v5696
        %v5698 = vpop.f32.mrb[0].mxu0
        %v5699 = vpop.f32.mrb[0].mxu0
        %v5700 = vadd.f32 0.0, %v5699
        %v5701 = vpop.f32.mrb[0].mxu0
        %5702 = vmatprep.mubr.bf16.mxu0 0
        %5703 = vmatmul.mubr.bf16.gmra.mrb[0].mxu0 %v4238
        %v5704 = vpop.f32.mrb[0].mxu0
        %v5705 = vadd.f32 0.0, %v5704
        %v5706 = vpop.f32.mrb[0].mxu0
        %v5707 = vpop.f32.mrb[0].mxu0
        %v5708 = vadd.f32 0.0, %v5707
        %v5709 = vpop.f32.mrb[0].mxu0
        %5710 = vmatprep.mubr.bf16.mxu0 0
        %5711 = vmatmul.mubr.bf16.gmra.mrb[0].mxu0 %v4241
        %v5712 = vpop.f32.mrb[0].mxu0
        %v5713 = vadd.f32 0.0, %v5712
        %v5714 = vpop.f32.mrb[0].mxu0
        %v5715 = vpop.f32.mrb[0].mxu0
        %v5716 = vadd.f32 0.0, %v5715
        %v5717 = vpop.f32.mrb[0].mxu0
        %5718 = vmatprep.mubr.bf16.mxu0 0
        %5719 = vmatmul.mubr.bf16.gmra.mrb[0].mxu0 %v4244
        %v5720 = vpop.f32.mrb[0].mxu0
        %v5721 = vadd.f32 0.0, %v5720
        %v5722 = vpop.f32.mrb[0].mxu0
        %v5723 = vpop.f32.mrb[0].mxu0
        %v5724 = vadd.f32 0.0, %v5723
        %v5725 = vpop.f32.mrb[0].mxu0
        %5726 = vmatprep.mubr.bf16.mxu0 0
        %5727 = vmatmul.mubr.bf16.gmra.mrb[0].mxu0 %v4247
        %v5728 = vpop.f32.mrb[0].mxu0
        %v5729 = vadd.f32 0.0, %v5728
        %v5730 = vpop.f32.mrb[0].mxu0
        %v5731 = vpop.f32.mrb[0].mxu0
        %v5732 = vadd.f32 0.0, %v5731
        %v5733 = vpop.f32.mrb[0].mxu0
        %5734 = vmatprep.mubr.bf16.mxu0 0
        %5735 = vmatmul.mubr.bf16.gmra.mrb[0].mxu0 %v4250
        %v5736 = vpop.f32.mrb[0].mxu0
        %v5737 = vadd.f32 0.0, %v5736
        %v5738 = vpop.f32.mrb[0].mxu0
        %v5739 = vpop.f32.mrb[0].mxu0
        %v5740 = vadd.f32 0.0, %v5739
        %v5741 = vpop.f32.mrb[0].mxu0
        %5742 = vmatprep.mubr.bf16.mxu0 0
        %5743 = vmatmul.mubr.bf16.gmra.mrb[0].mxu0 %v4253
        %v5744 = vpop.f32.mrb[0].mxu0
        %v5745 = vadd.f32 0.0, %v5744
        %v5746 = vpop.f32.mrb[0].mxu0
        %v5747 = vpop.f32.mrb[0].mxu0
        %v5748 = vadd.f32 0.0, %v5747
        %v5749 = vpop.f32.mrb[0].mxu0
        %5750 = vmatprep.mubr.bf16.mxu0 0
        %5751 = vmatmul.mubr.bf16.gmra.mrb[0].mxu0 %v4256
        %v5752 = vpop.f32.mrb[0].mxu0
        %v5753 = vadd.f32 0.0, %v5752
        %v5754 = vpop.f32.mrb[0].mxu0
        %v5755 = vpop.f32.mrb[0].mxu0
        %v5756 = vadd.f32 0.0, %v5755
        %v5757 = vpop.f32.mrb[0].mxu0
        %5758 = vmatprep.mubr.bf16.mxu0 0
        %5759 = vmatmul.mubr.bf16.gmra.mrb[0].mxu0 %v4259
        %v5760 = vpop.f32.mrb[0].mxu0
        %v5761 = vadd.f32 0.0, %v5760
        %v5762 = vpop.f32.mrb[0].mxu0
        %v5763 = vpop.f32.mrb[0].mxu0
        %v5764 = vadd.f32 0.0, %v5763
        %v5765 = vpop.f32.mrb[0].mxu0
        %5766 = vmatprep.mubr.bf16.mxu0 0
        %5767 = vmatmul.mubr.bf16.gmra.mrb[0].mxu0 %v4262
        %v5768 = vpop.f32.mrb[0].mxu0
        %v5769 = vadd.f32 0.0, %v5768
        %v5770 = vpop.f32.mrb[0].mxu0
        %v5771 = vpop.f32.mrb[0].mxu0
        %v5772 = vadd.f32 0.0, %v5771
        %v5773 = vpop.f32.mrb[0].mxu0
        %5774 = vmatprep.mubr.bf16.mxu0 0
        %5775 = vmatmul.mubr.bf16.gmra.mrb[0].mxu0 %v4265
        %v5776 = vpop.f32.mrb[0].mxu0
        %v5777 = vadd.f32 0.0, %v5776
        %v5778 = vpop.f32.mrb[0].mxu0
        %v5779 = vpop.f32.mrb[0].mxu0
        %v5780 = vadd.f32 0.0, %v5779
        %v5781 = vpop.f32.mrb[0].mxu0
        %5782 = vmatprep.mubr.bf16.mxu0 0
        %5783 = vmatmul.mubr.bf16.gmra.mrb[0].mxu0 %v4268
        %v5784 = vpop.f32.mrb[0].mxu0
        %v5785 = vadd.f32 0.0, %v5784
        %v5786 = vpop.f32.mrb[0].mxu0
        %v5787 = vpop.f32.mrb[0].mxu0
        %v5788 = vadd.f32 0.0, %v5787
        %v5789 = vpop.f32.mrb[0].mxu0
        %5790 = vmatprep.mubr.bf16.mxu0 0
        %5791 = vmatmul.mubr.bf16.gmra.mrb[0].mxu0 %v4271
        %v5792 = vpop.f32.mrb[0].mxu0
        %v5793 = vadd.f32 0.0, %v5792
        %v5794 = vpop.f32.mrb[0].mxu0
        %v5795 = vpop.f32.mrb[0].mxu0
        %v5796 = vadd.f32 0.0, %v5795
        %v5797 = vpop.f32.mrb[0].mxu0
        %5798 = vmatprep.mubr.bf16.mxu0 0
        %5799 = vmatmul.mubr.bf16.gmra.mrb[0].mxu0 %v4274
        %v5800 = vpop.f32.mrb[0].mxu0
        %v5801 = vadd.f32 0.0, %v5800
        %v5802 = vpop.f32.mrb[0].mxu0
        %v5803 = vpop.f32.mrb[0].mxu0
        %v5804 = vadd.f32 0.0, %v5803
        %v5805 = vpop.f32.mrb[0].mxu0
        %5806 = vdwg.mxu0
        %v5807 = vld [vmem:[%s2012] sm:$0xff]
        %v5808 = vld [vmem:[%s2012 + $0x8] sm:$0xff]
        %v5809 = vld [vmem:[%s2012 + $0x18] sm:$0xff]
        %v5810 = vld [vmem:[%s2012 + $0x20] sm:$0xff]
        %v5811 = vld [vmem:[%s2012 + $0x30] sm:$0xff]
        %v5812 = vld [vmem:[%s2012 + $0x38] sm:$0xff]
        %v5813 = vld [vmem:[%s2012 + $0x48] sm:$0xff]
        %v5814 = vld [vmem:[%s2012 + $0x50] sm:$0xff]
        %v5815 = vld [vmem:[%s2012 + $0x60] sm:$0xff]
        %v5816 = vld [vmem:[%s2012 + $0x68] sm:$0xff]
        %v5817 = vld [vmem:[%s2012 + $0x78] sm:$0xff]
        %v5818 = vld [vmem:[%s2012 + $0x80] sm:$0xff]
        %v5819 = vld [vmem:[%s2012 + $0x90] sm:$0xff]
        %v5820 = vld [vmem:[%s2012 + $0x98] sm:$0xff]
        %v5821 = vld [vmem:[%s2012 + $0xa8] sm:$0xff]
        %v5822 = vld [vmem:[%s2012 + $0xb0] sm:$0xff]
        %v5823 = vld [vmem:[%s2012 + $0xc0] sm:$0xff]
        %v5824 = vld [vmem:[%s2012 + $0xc8] sm:$0xff]
        %v5825 = vld [vmem:[%s2012 + $0xd8] sm:$0xff]
        %v5826 = vld [vmem:[%s2012 + $0xe0] sm:$0xff]
        %v5827 = vld [vmem:[%s2012 + $0xf0] sm:$0xff]
        %v5828 = vld [vmem:[%s2012 + $0xf8] sm:$0xff]
        %v5829 = vld [vmem:[%s2012 + $0x108] sm:$0xff]
        %v5830 = vld [vmem:[%s2012 + $0x110] sm:$0xff]
        %v5831 = vld [vmem:[%s2012 + $0x120] sm:$0xff]
        %v5832 = vld [vmem:[%s2012 + $0x128] sm:$0xff]
        %v5833 = vld [vmem:[%s2012 + $0x138] sm:$0xff]
        %v5834 = vld [vmem:[%s2012 + $0x140] sm:$0xff]
        %v5835 = vld [vmem:[%s2012 + $0x150] sm:$0xff]
        %v5836 = vld [vmem:[%s2012 + $0x158] sm:$0xff]
        %v5837 = vld [vmem:[%s2012 + $0x168] sm:$0xff]
        %v5838 = vld [vmem:[%s2012 + $0x170] sm:$0xff]
        %v5839 = vadd.f32 %v5807, %v5681
        %v5840 = vadd.f32 %v5808, %v5684
        %v5841 = vadd.f32 %v5809, %v5689
        %v5842 = vadd.f32 %v5810, %v5692
        %v5843 = vadd.f32 %v5811, %v5697
        %v5844 = vadd.f32 %v5812, %v5700
        %v5845 = vadd.f32 %v5813, %v5705
        %v5846 = vadd.f32 %v5814, %v5708
        %v5847 = vadd.f32 %v5815, %v5713
        %v5848 = vadd.f32 %v5816, %v5716
        %v5849 = vadd.f32 %v5817, %v5721
        %v5850 = vadd.f32 %v5818, %v5724
        %v5851 = vadd.f32 %v5819, %v5729
        %v5852 = vadd.f32 %v5820, %v5732
        %v5853 = vadd.f32 %v5821, %v5737
        %v5854 = vadd.f32 %v5822, %v5740
        %v5855 = vadd.f32 %v5823, %v5745
        %v5856 = vadd.f32 %v5824, %v5748
        %v5857 = vadd.f32 %v5825, %v5753
        %v5858 = vadd.f32 %v5826, %v5756
        %v5859 = vadd.f32 %v5827, %v5761
        %v5860 = vadd.f32 %v5828, %v5764
        %v5861 = vadd.f32 %v5829, %v5769
        %v5862 = vadd.f32 %v5830, %v5772
        %v5863 = vadd.f32 %v5831, %v5777
        %v5864 = vadd.f32 %v5832, %v5780
        %v5865 = vadd.f32 %v5833, %v5785
        %v5866 = vadd.f32 %v5834, %v5788
        %v5867 = vadd.f32 %v5835, %v5793
        %v5868 = vadd.f32 %v5836, %v5796
        %v5869 = vadd.f32 %v5837, %v5801
        %v5870 = vadd.f32 %v5838, %v5804
        %5871 = vst.msk [vmem:[%s2012] sm:$0xff] %vm348, %v5839
        %5872 = vst.msk [vmem:[%s2012 + $0x8] sm:$0xff] %vm348, %v5840
        %5873 = vst.msk [vmem:[%s2012 + $0x18] sm:$0xff] %vm348, %v5841
        %5874 = vst.msk [vmem:[%s2012 + $0x20] sm:$0xff] %vm348, %v5842
        %5875 = vst.msk [vmem:[%s2012 + $0x30] sm:$0xff] %vm348, %v5843
        %5876 = vst.msk [vmem:[%s2012 + $0x38] sm:$0xff] %vm348, %v5844
        %5877 = vst.msk [vmem:[%s2012 + $0x48] sm:$0xff] %vm348, %v5845
        %5878 = vst.msk [vmem:[%s2012 + $0x50] sm:$0xff] %vm348, %v5846
        %5879 = vst.msk [vmem:[%s2012 + $0x60] sm:$0xff] %vm348, %v5847
        %5880 = vst.msk [vmem:[%s2012 + $0x68] sm:$0xff] %vm348, %v5848
        %5881 = vst.msk [vmem:[%s2012 + $0x78] sm:$0xff] %vm348, %v5849
        %5882 = vst.msk [vmem:[%s2012 + $0x80] sm:$0xff] %vm348, %v5850
        %5883 = vst.msk [vmem:[%s2012 + $0x90] sm:$0xff] %vm348, %v5851
        %5884 = vst.msk [vmem:[%s2012 + $0x98] sm:$0xff] %vm348, %v5852
        %5885 = vst.msk [vmem:[%s2012 + $0xa8] sm:$0xff] %vm348, %v5853
        %5886 = vst.msk [vmem:[%s2012 + $0xb0] sm:$0xff] %vm348, %v5854
        %5887 = vst.msk [vmem:[%s2012 + $0xc0] sm:$0xff] %vm348, %v5855
        %5888 = vst.msk [vmem:[%s2012 + $0xc8] sm:$0xff] %vm348, %v5856
        %5889 = vst.msk [vmem:[%s2012 + $0xd8] sm:$0xff] %vm348, %v5857
        %5890 = vst.msk [vmem:[%s2012 + $0xe0] sm:$0xff] %vm348, %v5858
        %5891 = vst.msk [vmem:[%s2012 + $0xf0] sm:$0xff] %vm348, %v5859
        %5892 = vst.msk [vmem:[%s2012 + $0xf8] sm:$0xff] %vm348, %v5860
        %5893 = vst.msk [vmem:[%s2012 + $0x108] sm:$0xff] %vm348, %v5861
        %5894 = vst.msk [vmem:[%s2012 + $0x110] sm:$0xff] %vm348, %v5862
        %5895 = vst.msk [vmem:[%s2012 + $0x120] sm:$0xff] %vm348, %v5863
        %5896 = vst.msk [vmem:[%s2012 + $0x128] sm:$0xff] %vm348, %v5864
        %5897 = vst.msk [vmem:[%s2012 + $0x138] sm:$0xff] %vm348, %v5865
        %5898 = vst.msk [vmem:[%s2012 + $0x140] sm:$0xff] %vm348, %v5866
        %5899 = vst.msk [vmem:[%s2012 + $0x150] sm:$0xff] %vm348, %v5867
        %5900 = vst.msk [vmem:[%s2012 + $0x158] sm:$0xff] %vm348, %v5868
        %5901 = vst.msk [vmem:[%s2012 + $0x168] sm:$0xff] %vm348, %v5869
        %5902 = vst.msk [vmem:[%s2012 + $0x170] sm:$0xff] %vm348, %v5870
        %s5903 = scalar_lea.vmem %s3, 96
        %v5904 = vld [vmem:[%s5903] sm:$0xf]
        %v5905 = vld [vmem:[%s5903 + $0x4] sm:$0xf]
        %v5906 = vld [vmem:[%s5903 + $0x8] sm:$0xf]
        %v5907 = vld [vmem:[%s5903 + $0xc] sm:$0xf]
        %v5912 = vunpack.c.l.b16 %v5904
        %v5913 = vunpack.c.l.b16 %v5905
        %v5914 = vunpack.c.l.b16 %v5906
        %v5915 = vunpack.c.l.b16 %v5907
        %v5916 = vpack.c.b16 %v5913, %v5912
        %v5917 = vpack.c.b16 %v5915, %v5914
        %5920 = vmatprep.subr.bf16.mxu0 0
        %5921 = vmatpush1.bf16.msra.mxu0 %v5916
        %5922 = vmatprep.subr.bf16.mxu0 0
        %5923 = vmatpush1.bf16.msra.mxu0 %v5917
        %5924 = vmatprep.subr.bf16.mxu0 0
        %5925 = vmatpush1.bf16.msra.mxu0 0
        %5926 = vmatprep.subr.bf16.mxu0 0
        %5927 = vmatpush1.bf16.msra.mxu0 0
        %5928 = vmatprep.subr.bf16.mxu0 0
        %5929 = vmatpush1.bf16.msra.mxu0 0
        %5930 = vmatprep.subr.bf16.mxu0 0
        %5931 = vmatpush1.bf16.msra.mxu0 0
        %5932 = vmatprep.subr.bf16.mxu0 0
        %5933 = vmatpush1.bf16.msra.mxu0 0
        %5934 = vmatprep.subr.bf16.mxu0 0
        %5935 = vmatpush1.bf16.msra.mxu0 0
        %5936 = vmatprep.subr.bf16.mxu0 0
        %5937 = vmatpush1.bf16.msra.mxu0 0
        %5938 = vmatprep.subr.bf16.mxu0 0
        %5939 = vmatpush1.bf16.msra.mxu0 0
        %5940 = vmatprep.subr.bf16.mxu0 0
        %5941 = vmatpush1.bf16.msra.mxu0 0
        %5942 = vmatprep.subr.bf16.mxu0 0
        %5943 = vmatpush1.bf16.msra.mxu0 0
        %5944 = vmatprep.subr.bf16.mxu0 0
        %5945 = vmatpush1.bf16.msra.mxu0 0
        %5946 = vmatprep.subr.bf16.mxu0 0
        %5947 = vmatpush1.bf16.msra.mxu0 0
        %5948 = vmatprep.subr.bf16.mxu0 0
        %5949 = vmatpush1.bf16.msra.mxu0 0
        %5950 = vmatprep.subr.bf16.mxu0 0
        %5951 = vmatpush1.bf16.msra.mxu0 0
        %5952 = vmatprep.mubr.bf16.mxu0 0
        %5953 = vmatmul.mubr.bf16.gmra.mrb[0].mxu0 %v4229
        %v5954 = vpop.f32.mrb[0].mxu0
        %v5955 = vadd.f32 0.0, %v5954
        %v5956 = vpop.f32.mrb[0].mxu0
        %v5957 = vpop.f32.mrb[0].mxu0
        %v5958 = vadd.f32 0.0, %v5957
        %v5959 = vpop.f32.mrb[0].mxu0
        %5960 = vmatprep.mubr.bf16.mxu0 0
        %5961 = vmatmul.mubr.bf16.gmra.mrb[0].mxu0 %v4232
        %v5962 = vpop.f32.mrb[0].mxu0
        %v5963 = vadd.f32 0.0, %v5962
        %v5964 = vpop.f32.mrb[0].mxu0
        %v5965 = vpop.f32.mrb[0].mxu0
        %v5966 = vadd.f32 0.0, %v5965
        %v5967 = vpop.f32.mrb[0].mxu0
        %5968 = vmatprep.mubr.bf16.mxu0 0
        %5969 = vmatmul.mubr.bf16.gmra.mrb[0].mxu0 %v4235
        %v5970 = vpop.f32.mrb[0].mxu0
        %v5971 = vadd.f32 0.0, %v5970
        %v5972 = vpop.f32.mrb[0].mxu0
        %v5973 = vpop.f32.mrb[0].mxu0
        %v5974 = vadd.f32 0.0, %v5973
        %v5975 = vpop.f32.mrb[0].mxu0
        %5976 = vmatprep.mubr.bf16.mxu0 0
        %5977 = vmatmul.mubr.bf16.gmra.mrb[0].mxu0 %v4238
        %v5978 = vpop.f32.mrb[0].mxu0
        %v5979 = vadd.f32 0.0, %v5978
        %v5980 = vpop.f32.mrb[0].mxu0
        %v5981 = vpop.f32.mrb[0].mxu0
        %v5982 = vadd.f32 0.0, %v5981
        %v5983 = vpop.f32.mrb[0].mxu0
        %5984 = vmatprep.mubr.bf16.mxu0 0
        %5985 = vmatmul.mubr.bf16.gmra.mrb[0].mxu0 %v4241
        %v5986 = vpop.f32.mrb[0].mxu0
        %v5987 = vadd.f32 0.0, %v5986
        %v5988 = vpop.f32.mrb[0].mxu0
        %v5989 = vpop.f32.mrb[0].mxu0
        %v5990 = vadd.f32 0.0, %v5989
        %v5991 = vpop.f32.mrb[0].mxu0
        %5992 = vmatprep.mubr.bf16.mxu0 0
        %5993 = vmatmul.mubr.bf16.gmra.mrb[0].mxu0 %v4244
        %v5994 = vpop.f32.mrb[0].mxu0
        %v5995 = vadd.f32 0.0, %v5994
        %v5996 = vpop.f32.mrb[0].mxu0
        %v5997 = vpop.f32.mrb[0].mxu0
        %v5998 = vadd.f32 0.0, %v5997
        %v5999 = vpop.f32.mrb[0].mxu0
        %6000 = vmatprep.mubr.bf16.mxu0 0
        %6001 = vmatmul.mubr.bf16.gmra.mrb[0].mxu0 %v4247
        %v6002 = vpop.f32.mrb[0].mxu0
        %v6003 = vadd.f32 0.0, %v6002
        %v6004 = vpop.f32.mrb[0].mxu0
        %v6005 = vpop.f32.mrb[0].mxu0
        %v6006 = vadd.f32 0.0, %v6005
        %v6007 = vpop.f32.mrb[0].mxu0
        %6008 = vmatprep.mubr.bf16.mxu0 0
        %6009 = vmatmul.mubr.bf16.gmra.mrb[0].mxu0 %v4250
        %v6010 = vpop.f32.mrb[0].mxu0
        %v6011 = vadd.f32 0.0, %v6010
        %v6012 = vpop.f32.mrb[0].mxu0
        %v6013 = vpop.f32.mrb[0].mxu0
        %v6014 = vadd.f32 0.0, %v6013
        %v6015 = vpop.f32.mrb[0].mxu0
        %6016 = vmatprep.mubr.bf16.mxu0 0
        %6017 = vmatmul.mubr.bf16.gmra.mrb[0].mxu0 %v4253
        %v6018 = vpop.f32.mrb[0].mxu0
        %v6019 = vadd.f32 0.0, %v6018
        %v6020 = vpop.f32.mrb[0].mxu0
        %v6021 = vpop.f32.mrb[0].mxu0
        %v6022 = vadd.f32 0.0, %v6021
        %v6023 = vpop.f32.mrb[0].mxu0
        %6024 = vmatprep.mubr.bf16.mxu0 0
        %6025 = vmatmul.mubr.bf16.gmra.mrb[0].mxu0 %v4256
        %v6026 = vpop.f32.mrb[0].mxu0
        %v6027 = vadd.f32 0.0, %v6026
        %v6028 = vpop.f32.mrb[0].mxu0
        %v6029 = vpop.f32.mrb[0].mxu0
        %v6030 = vadd.f32 0.0, %v6029
        %v6031 = vpop.f32.mrb[0].mxu0
        %6032 = vmatprep.mubr.bf16.mxu0 0
        %6033 = vmatmul.mubr.bf16.gmra.mrb[0].mxu0 %v4259
        %v6034 = vpop.f32.mrb[0].mxu0
        %v6035 = vadd.f32 0.0, %v6034
        %v6036 = vpop.f32.mrb[0].mxu0
        %v6037 = vpop.f32.mrb[0].mxu0
        %v6038 = vadd.f32 0.0, %v6037
        %v6039 = vpop.f32.mrb[0].mxu0
        %6040 = vmatprep.mubr.bf16.mxu0 0
        %6041 = vmatmul.mubr.bf16.gmra.mrb[0].mxu0 %v4262
        %v6042 = vpop.f32.mrb[0].mxu0
        %v6043 = vadd.f32 0.0, %v6042
        %v6044 = vpop.f32.mrb[0].mxu0
        %v6045 = vpop.f32.mrb[0].mxu0
        %v6046 = vadd.f32 0.0, %v6045
        %v6047 = vpop.f32.mrb[0].mxu0
        %6048 = vmatprep.mubr.bf16.mxu0 0
        %6049 = vmatmul.mubr.bf16.gmra.mrb[0].mxu0 %v4265
        %v6050 = vpop.f32.mrb[0].mxu0
        %v6051 = vadd.f32 0.0, %v6050
        %v6052 = vpop.f32.mrb[0].mxu0
        %v6053 = vpop.f32.mrb[0].mxu0
        %v6054 = vadd.f32 0.0, %v6053
        %v6055 = vpop.f32.mrb[0].mxu0
        %6056 = vmatprep.mubr.bf16.mxu0 0
        %6057 = vmatmul.mubr.bf16.gmra.mrb[0].mxu0 %v4268
        %v6058 = vpop.f32.mrb[0].mxu0
        %v6059 = vadd.f32 0.0, %v6058
        %v6060 = vpop.f32.mrb[0].mxu0
        %v6061 = vpop.f32.mrb[0].mxu0
        %v6062 = vadd.f32 0.0, %v6061
        %v6063 = vpop.f32.mrb[0].mxu0
        %6064 = vmatprep.mubr.bf16.mxu0 0
        %6065 = vmatmul.mubr.bf16.gmra.mrb[0].mxu0 %v4271
        %v6066 = vpop.f32.mrb[0].mxu0
        %v6067 = vadd.f32 0.0, %v6066
        %v6068 = vpop.f32.mrb[0].mxu0
        %v6069 = vpop.f32.mrb[0].mxu0
        %v6070 = vadd.f32 0.0, %v6069
        %v6071 = vpop.f32.mrb[0].mxu0
        %6072 = vmatprep.mubr.bf16.mxu0 0
        %6073 = vmatmul.mubr.bf16.gmra.mrb[0].mxu0 %v4274
        %v6074 = vpop.f32.mrb[0].mxu0
        %v6075 = vadd.f32 0.0, %v6074
        %v6076 = vpop.f32.mrb[0].mxu0
        %v6077 = vpop.f32.mrb[0].mxu0
        %v6078 = vadd.f32 0.0, %v6077
        %v6079 = vpop.f32.mrb[0].mxu0
        %6080 = vdwg.mxu0
        %v6081 = vld [vmem:[#allocation2 + $0x2] sm:$0xff]
        %v6082 = vld [vmem:[#allocation2 + $0xa] sm:$0xff]
        %v6083 = vld [vmem:[#allocation2 + $0x1a] sm:$0xff]
        %v6084 = vld [vmem:[#allocation2 + $0x22] sm:$0xff]
        %v6085 = vld [vmem:[#allocation2 + $0x32] sm:$0xff]
        %v6086 = vld [vmem:[#allocation2 + $0x3a] sm:$0xff]
        %v6087 = vld [vmem:[#allocation2 + $0x4a] sm:$0xff]
        %v6088 = vld [vmem:[#allocation2 + $0x52] sm:$0xff]
        %v6089 = vld [vmem:[#allocation2 + $0x62] sm:$0xff]
        %v6090 = vld [vmem:[#allocation2 + $0x6a] sm:$0xff]
        %v6091 = vld [vmem:[#allocation2 + $0x7a] sm:$0xff]
        %v6092 = vld [vmem:[#allocation2 + $0x82] sm:$0xff]
        %v6093 = vld [vmem:[#allocation2 + $0x92] sm:$0xff]
        %v6094 = vld [vmem:[#allocation2 + $0x9a] sm:$0xff]
        %v6095 = vld [vmem:[#allocation2 + $0xaa] sm:$0xff]
        %v6096 = vld [vmem:[#allocation2 + $0xb2] sm:$0xff]
        %v6097 = vld [vmem:[#allocation2 + $0xc2] sm:$0xff]
        %v6098 = vld [vmem:[#allocation2 + $0xca] sm:$0xff]
        %v6099 = vld [vmem:[#allocation2 + $0xda] sm:$0xff]
        %v6100 = vld [vmem:[#allocation2 + $0xe2] sm:$0xff]
        %v6101 = vld [vmem:[#allocation2 + $0xf2] sm:$0xff]
        %v6102 = vld [vmem:[#allocation2 + $0xfa] sm:$0xff]
        %v6103 = vld [vmem:[#allocation2 + $0x10a] sm:$0xff]
        %v6104 = vld [vmem:[#allocation2 + $0x112] sm:$0xff]
        %v6105 = vld [vmem:[#allocation2 + $0x122] sm:$0xff]
        %v6106 = vld [vmem:[#allocation2 + $0x12a] sm:$0xff]
        %v6107 = vld [vmem:[#allocation2 + $0x13a] sm:$0xff]
        %v6108 = vld [vmem:[#allocation2 + $0x142] sm:$0xff]
        %v6109 = vld [vmem:[#allocation2 + $0x152] sm:$0xff]
        %v6110 = vld [vmem:[#allocation2 + $0x15a] sm:$0xff]
        %v6111 = vld [vmem:[#allocation2 + $0x16a] sm:$0xff]
        %v6112 = vld [vmem:[#allocation2 + $0x172] sm:$0xff]
        %v6113 = vadd.f32 %v6081, %v5955
        %v6114 = vadd.f32 %v6082, %v5958
        %v6115 = vadd.f32 %v6083, %v5963
        %v6116 = vadd.f32 %v6084, %v5966
        %v6117 = vadd.f32 %v6085, %v5971
        %v6118 = vadd.f32 %v6086, %v5974
        %v6119 = vadd.f32 %v6087, %v5979
        %v6120 = vadd.f32 %v6088, %v5982
        %v6121 = vadd.f32 %v6089, %v5987
        %v6122 = vadd.f32 %v6090, %v5990
        %v6123 = vadd.f32 %v6091, %v5995
        %v6124 = vadd.f32 %v6092, %v5998
        %v6125 = vadd.f32 %v6093, %v6003
        %v6126 = vadd.f32 %v6094, %v6006
        %v6127 = vadd.f32 %v6095, %v6011
        %v6128 = vadd.f32 %v6096, %v6014
        %v6129 = vadd.f32 %v6097, %v6019
        %v6130 = vadd.f32 %v6098, %v6022
        %v6131 = vadd.f32 %v6099, %v6027
        %v6132 = vadd.f32 %v6100, %v6030
        %v6133 = vadd.f32 %v6101, %v6035
        %v6134 = vadd.f32 %v6102, %v6038
        %v6135 = vadd.f32 %v6103, %v6043
        %v6136 = vadd.f32 %v6104, %v6046
        %v6137 = vadd.f32 %v6105, %v6051
        %v6138 = vadd.f32 %v6106, %v6054
        %v6139 = vadd.f32 %v6107, %v6059
        %v6140 = vadd.f32 %v6108, %v6062
        %v6141 = vadd.f32 %v6109, %v6067
        %v6142 = vadd.f32 %v6110, %v6070
        %v6143 = vadd.f32 %v6111, %v6075
        %v6144 = vadd.f32 %v6112, %v6078
        %6145 = vst.msk [vmem:[#allocation2 + $0x2] sm:$0xff] %vm348, %v6113
        %6146 = vst.msk [vmem:[#allocation2 + $0xa] sm:$0xff] %vm348, %v6114
        %6147 = vst.msk [vmem:[#allocation2 + $0x1a] sm:$0xff] %vm348, %v6115
        %6148 = vst.msk [vmem:[#allocation2 + $0x22] sm:$0xff] %vm348, %v6116
        %6149 = vst.msk [vmem:[#allocation2 + $0x32] sm:$0xff] %vm348, %v6117
        %6150 = vst.msk [vmem:[#allocation2 + $0x3a] sm:$0xff] %vm348, %v6118
        %6151 = vst.msk [vmem:[#allocation2 + $0x4a] sm:$0xff] %vm348, %v6119
        %6152 = vst.msk [vmem:[#allocation2 + $0x52] sm:$0xff] %vm348, %v6120
        %6153 = vst.msk [vmem:[#allocation2 + $0x62] sm:$0xff] %vm348, %v6121
        %6154 = vst.msk [vmem:[#allocation2 + $0x6a] sm:$0xff] %vm348, %v6122
        %6155 = vst.msk [vmem:[#allocation2 + $0x7a] sm:$0xff] %vm348, %v6123
        %6156 = vst.msk [vmem:[#allocation2 + $0x82] sm:$0xff] %vm348, %v6124
        %6157 = vst.msk [vmem:[#allocation2 + $0x92] sm:$0xff] %vm348, %v6125
        %6158 = vst.msk [vmem:[#allocation2 + $0x9a] sm:$0xff] %vm348, %v6126
        %6159 = vst.msk [vmem:[#allocation2 + $0xaa] sm:$0xff] %vm348, %v6127
        %6160 = vst.msk [vmem:[#allocation2 + $0xb2] sm:$0xff] %vm348, %v6128
        %6161 = vst.msk [vmem:[#allocation2 + $0xc2] sm:$0xff] %vm348, %v6129
        %6162 = vst.msk [vmem:[#allocation2 + $0xca] sm:$0xff] %vm348, %v6130
        %6163 = vst.msk [vmem:[#allocation2 + $0xda] sm:$0xff] %vm348, %v6131
        %6164 = vst.msk [vmem:[#allocation2 + $0xe2] sm:$0xff] %vm348, %v6132
        %6165 = vst.msk [vmem:[#allocation2 + $0xf2] sm:$0xff] %vm348, %v6133
        %6166 = vst.msk [vmem:[#allocation2 + $0xfa] sm:$0xff] %vm348, %v6134
        %6167 = vst.msk [vmem:[#allocation2 + $0x10a] sm:$0xff] %vm348, %v6135
        %6168 = vst.msk [vmem:[#allocation2 + $0x112] sm:$0xff] %vm348, %v6136
        %6169 = vst.msk [vmem:[#allocation2 + $0x122] sm:$0xff] %vm348, %v6137
        %6170 = vst.msk [vmem:[#allocation2 + $0x12a] sm:$0xff] %vm348, %v6138
        %6171 = vst.msk [vmem:[#allocation2 + $0x13a] sm:$0xff] %vm348, %v6139
        %6172 = vst.msk [vmem:[#allocation2 + $0x142] sm:$0xff] %vm348, %v6140
        %6173 = vst.msk [vmem:[#allocation2 + $0x152] sm:$0xff] %vm348, %v6141
        %6174 = vst.msk [vmem:[#allocation2 + $0x15a] sm:$0xff] %vm348, %v6142
        %6175 = vst.msk [vmem:[#allocation2 + $0x16a] sm:$0xff] %vm348, %v6143
        %6176 = vst.msk [vmem:[#allocation2 + $0x172] sm:$0xff] %vm348, %v6144
        %s6177 = scalar_lea.vmem %s3, 112
        %v6178 = vld [vmem:[%s6177] sm:$0xf]
        %v6179 = vld [vmem:[%s6177 + $0x4] sm:$0xf]
        %v6180 = vld [vmem:[%s6177 + $0x8] sm:$0xf]
        %v6181 = vld [vmem:[%s6177 + $0xc] sm:$0xf]
        %v6186 = vunpack.c.l.b16 %v6178
        %v6187 = vunpack.c.l.b16 %v6179
        %v6188 = vunpack.c.l.b16 %v6180
        %v6189 = vunpack.c.l.b16 %v6181
        %v6190 = vpack.c.b16 %v6187, %v6186
        %v6191 = vpack.c.b16 %v6189, %v6188
        %6194 = vmatprep.subr.bf16.mxu0 0
        %6195 = vmatpush1.bf16.msra.mxu0 %v6190
        %6196 = vmatprep.subr.bf16.mxu0 0
        %6197 = vmatpush1.bf16.msra.mxu0 %v6191
        %6198 = vmatprep.subr.bf16.mxu0 0
        %6199 = vmatpush1.bf16.msra.mxu0 0
        %6200 = vmatprep.subr.bf16.mxu0 0
        %6201 = vmatpush1.bf16.msra.mxu0 0
        %6202 = vmatprep.subr.bf16.mxu0 0
        %6203 = vmatpush1.bf16.msra.mxu0 0
        %6204 = vmatprep.subr.bf16.mxu0 0
        %6205 = vmatpush1.bf16.msra.mxu0 0
        %6206 = vmatprep.subr.bf16.mxu0 0
        %6207 = vmatpush1.bf16.msra.mxu0 0
        %6208 = vmatprep.subr.bf16.mxu0 0
        %6209 = vmatpush1.bf16.msra.mxu0 0
        %6210 = vmatprep.subr.bf16.mxu0 0
        %6211 = vmatpush1.bf16.msra.mxu0 0
        %6212 = vmatprep.subr.bf16.mxu0 0
        %6213 = vmatpush1.bf16.msra.mxu0 0
        %6214 = vmatprep.subr.bf16.mxu0 0
        %6215 = vmatpush1.bf16.msra.mxu0 0
        %6216 = vmatprep.subr.bf16.mxu0 0
        %6217 = vmatpush1.bf16.msra.mxu0 0
        %6218 = vmatprep.subr.bf16.mxu0 0
        %6219 = vmatpush1.bf16.msra.mxu0 0
        %6220 = vmatprep.subr.bf16.mxu0 0
        %6221 = vmatpush1.bf16.msra.mxu0 0
        %6222 = vmatprep.subr.bf16.mxu0 0
        %6223 = vmatpush1.bf16.msra.mxu0 0
        %6224 = vmatprep.subr.bf16.mxu0 0
        %6225 = vmatpush1.bf16.msra.mxu0 0
        %6226 = vmatprep.mubr.bf16.mxu0 0
        %6227 = vmatmul.mubr.bf16.gmra.mrb[0].mxu0 %v4229
        %v6228 = vpop.f32.mrb[0].mxu0
        %v6229 = vadd.f32 0.0, %v6228
        %v6230 = vpop.f32.mrb[0].mxu0
        %v6231 = vpop.f32.mrb[0].mxu0
        %v6232 = vadd.f32 0.0, %v6231
        %v6233 = vpop.f32.mrb[0].mxu0
        %6234 = vmatprep.mubr.bf16.mxu0 0
        %6235 = vmatmul.mubr.bf16.gmra.mrb[0].mxu0 %v4232
        %v6236 = vpop.f32.mrb[0].mxu0
        %v6237 = vadd.f32 0.0, %v6236
        %v6238 = vpop.f32.mrb[0].mxu0
        %v6239 = vpop.f32.mrb[0].mxu0
        %v6240 = vadd.f32 0.0, %v6239
        %v6241 = vpop.f32.mrb[0].mxu0
        %6242 = vmatprep.mubr.bf16.mxu0 0
        %6243 = vmatmul.mubr.bf16.gmra.mrb[0].mxu0 %v4235
        %v6244 = vpop.f32.mrb[0].mxu0
        %v6245 = vadd.f32 0.0, %v6244
        %v6246 = vpop.f32.mrb[0].mxu0
        %v6247 = vpop.f32.mrb[0].mxu0
        %v6248 = vadd.f32 0.0, %v6247
        %v6249 = vpop.f32.mrb[0].mxu0
        %6250 = vmatprep.mubr.bf16.mxu0 0
        %6251 = vmatmul.mubr.bf16.gmra.mrb[0].mxu0 %v4238
        %v6252 = vpop.f32.mrb[0].mxu0
        %v6253 = vadd.f32 0.0, %v6252
        %v6254 = vpop.f32.mrb[0].mxu0
        %v6255 = vpop.f32.mrb[0].mxu0
        %v6256 = vadd.f32 0.0, %v6255
        %v6257 = vpop.f32.mrb[0].mxu0
        %6258 = vmatprep.mubr.bf16.mxu0 0
        %6259 = vmatmul.mubr.bf16.gmra.mrb[0].mxu0 %v4241
        %v6260 = vpop.f32.mrb[0].mxu0
        %v6261 = vadd.f32 0.0, %v6260
        %v6262 = vpop.f32.mrb[0].mxu0
        %v6263 = vpop.f32.mrb[0].mxu0
        %v6264 = vadd.f32 0.0, %v6263
        %v6265 = vpop.f32.mrb[0].mxu0
        %6266 = vmatprep.mubr.bf16.mxu0 0
        %6267 = vmatmul.mubr.bf16.gmra.mrb[0].mxu0 %v4244
        %v6268 = vpop.f32.mrb[0].mxu0
        %v6269 = vadd.f32 0.0, %v6268
        %v6270 = vpop.f32.mrb[0].mxu0
        %v6271 = vpop.f32.mrb[0].mxu0
        %v6272 = vadd.f32 0.0, %v6271
        %v6273 = vpop.f32.mrb[0].mxu0
        %6274 = vmatprep.mubr.bf16.mxu0 0
        %6275 = vmatmul.mubr.bf16.gmra.mrb[0].mxu0 %v4247
        %v6276 = vpop.f32.mrb[0].mxu0
        %v6277 = vadd.f32 0.0, %v6276
        %v6278 = vpop.f32.mrb[0].mxu0
        %v6279 = vpop.f32.mrb[0].mxu0
        %v6280 = vadd.f32 0.0, %v6279
        %v6281 = vpop.f32.mrb[0].mxu0
        %6282 = vmatprep.mubr.bf16.mxu0 0
        %6283 = vmatmul.mubr.bf16.gmra.mrb[0].mxu0 %v4250
        %v6284 = vpop.f32.mrb[0].mxu0
        %v6285 = vadd.f32 0.0, %v6284
        %v6286 = vpop.f32.mrb[0].mxu0
        %v6287 = vpop.f32.mrb[0].mxu0
        %v6288 = vadd.f32 0.0, %v6287
        %v6289 = vpop.f32.mrb[0].mxu0
        %6290 = vmatprep.mubr.bf16.mxu0 0
        %6291 = vmatmul.mubr.bf16.gmra.mrb[0].mxu0 %v4253
        %v6292 = vpop.f32.mrb[0].mxu0
        %v6293 = vadd.f32 0.0, %v6292
        %v6294 = vpop.f32.mrb[0].mxu0
        %v6295 = vpop.f32.mrb[0].mxu0
        %v6296 = vadd.f32 0.0, %v6295
        %v6297 = vpop.f32.mrb[0].mxu0
        %6298 = vmatprep.mubr.bf16.mxu0 0
        %6299 = vmatmul.mubr.bf16.gmra.mrb[0].mxu0 %v4256
        %v6300 = vpop.f32.mrb[0].mxu0
        %v6301 = vadd.f32 0.0, %v6300
        %v6302 = vpop.f32.mrb[0].mxu0
        %v6303 = vpop.f32.mrb[0].mxu0
        %v6304 = vadd.f32 0.0, %v6303
        %v6305 = vpop.f32.mrb[0].mxu0
        %6306 = vmatprep.mubr.bf16.mxu0 0
        %6307 = vmatmul.mubr.bf16.gmra.mrb[0].mxu0 %v4259
        %v6308 = vpop.f32.mrb[0].mxu0
        %v6309 = vadd.f32 0.0, %v6308
        %v6310 = vpop.f32.mrb[0].mxu0
        %v6311 = vpop.f32.mrb[0].mxu0
        %v6312 = vadd.f32 0.0, %v6311
        %v6313 = vpop.f32.mrb[0].mxu0
        %6314 = vmatprep.mubr.bf16.mxu0 0
        %6315 = vmatmul.mubr.bf16.gmra.mrb[0].mxu0 %v4262
        %v6316 = vpop.f32.mrb[0].mxu0
        %v6317 = vadd.f32 0.0, %v6316
        %v6318 = vpop.f32.mrb[0].mxu0
        %v6319 = vpop.f32.mrb[0].mxu0
        %v6320 = vadd.f32 0.0, %v6319
        %v6321 = vpop.f32.mrb[0].mxu0
        %6322 = vmatprep.mubr.bf16.mxu0 0
        %6323 = vmatmul.mubr.bf16.gmra.mrb[0].mxu0 %v4265
        %v6324 = vpop.f32.mrb[0].mxu0
        %v6325 = vadd.f32 0.0, %v6324
        %v6326 = vpop.f32.mrb[0].mxu0
        %v6327 = vpop.f32.mrb[0].mxu0
        %v6328 = vadd.f32 0.0, %v6327
        %v6329 = vpop.f32.mrb[0].mxu0
        %6330 = vmatprep.mubr.bf16.mxu0 0
        %6331 = vmatmul.mubr.bf16.gmra.mrb[0].mxu0 %v4268
        %v6332 = vpop.f32.mrb[0].mxu0
        %v6333 = vadd.f32 0.0, %v6332
        %v6334 = vpop.f32.mrb[0].mxu0
        %v6335 = vpop.f32.mrb[0].mxu0
        %v6336 = vadd.f32 0.0, %v6335
        %v6337 = vpop.f32.mrb[0].mxu0
        %6338 = vmatprep.mubr.bf16.mxu0 0
        %6339 = vmatmul.mubr.bf16.gmra.mrb[0].mxu0 %v4271
        %v6340 = vpop.f32.mrb[0].mxu0
        %v6341 = vadd.f32 0.0, %v6340
        %v6342 = vpop.f32.mrb[0].mxu0
        %v6343 = vpop.f32.mrb[0].mxu0
        %v6344 = vadd.f32 0.0, %v6343
        %v6345 = vpop.f32.mrb[0].mxu0
        %6346 = vmatprep.mubr.bf16.mxu0 0
        %6347 = vmatmul.mubr.bf16.gmra.mrb[0].mxu0 %v4274
        %v6348 = vpop.f32.mrb[0].mxu0
        %v6349 = vadd.f32 0.0, %v6348
        %v6350 = vpop.f32.mrb[0].mxu0
        %v6351 = vpop.f32.mrb[0].mxu0
        %v6352 = vadd.f32 0.0, %v6351
        %v6353 = vpop.f32.mrb[0].mxu0
        %6354 = vdwg.mxu0
        %v6355 = vld [vmem:[#allocation2 + $0x1] sm:$0xff]
        %v6356 = vld [vmem:[#allocation2 + $0x9] sm:$0xff]
        %v6357 = vld [vmem:[#allocation2 + $0x19] sm:$0xff]
        %v6358 = vld [vmem:[#allocation2 + $0x21] sm:$0xff]
        %v6359 = vld [vmem:[#allocation2 + $0x31] sm:$0xff]
        %v6360 = vld [vmem:[#allocation2 + $0x39] sm:$0xff]
        %v6361 = vld [vmem:[#allocation2 + $0x49] sm:$0xff]
        %v6362 = vld [vmem:[#allocation2 + $0x51] sm:$0xff]
        %v6363 = vld [vmem:[#allocation2 + $0x61] sm:$0xff]
        %v6364 = vld [vmem:[#allocation2 + $0x69] sm:$0xff]
        %v6365 = vld [vmem:[#allocation2 + $0x79] sm:$0xff]
        %v6366 = vld [vmem:[#allocation2 + $0x81] sm:$0xff]
        %v6367 = vld [vmem:[#allocation2 + $0x91] sm:$0xff]
        %v6368 = vld [vmem:[#allocation2 + $0x99] sm:$0xff]
        %v6369 = vld [vmem:[#allocation2 + $0xa9] sm:$0xff]
        %v6370 = vld [vmem:[#allocation2 + $0xb1] sm:$0xff]
        %v6371 = vld [vmem:[#allocation2 + $0xc1] sm:$0xff]
        %v6372 = vld [vmem:[#allocation2 + $0xc9] sm:$0xff]
        %v6373 = vld [vmem:[#allocation2 + $0xd9] sm:$0xff]
        %v6374 = vld [vmem:[#allocation2 + $0xe1] sm:$0xff]
        %v6375 = vld [vmem:[#allocation2 + $0xf1] sm:$0xff]
        %v6376 = vld [vmem:[#allocation2 + $0xf9] sm:$0xff]
        %v6377 = vld [vmem:[#allocation2 + $0x109] sm:$0xff]
        %v6378 = vld [vmem:[#allocation2 + $0x111] sm:$0xff]
        %v6379 = vld [vmem:[#allocation2 + $0x121] sm:$0xff]
        %v6380 = vld [vmem:[#allocation2 + $0x129] sm:$0xff]
        %v6381 = vld [vmem:[#allocation2 + $0x139] sm:$0xff]
        %v6382 = vld [vmem:[#allocation2 + $0x141] sm:$0xff]
        %v6383 = vld [vmem:[#allocation2 + $0x151] sm:$0xff]
        %v6384 = vld [vmem:[#allocation2 + $0x159] sm:$0xff]
        %v6385 = vld [vmem:[#allocation2 + $0x169] sm:$0xff]
        %v6386 = vld [vmem:[#allocation2 + $0x171] sm:$0xff]
        %v6387 = vadd.f32 %v6355, %v6229
        %v6388 = vadd.f32 %v6356, %v6232
        %v6389 = vadd.f32 %v6357, %v6237
        %v6390 = vadd.f32 %v6358, %v6240
        %v6391 = vadd.f32 %v6359, %v6245
        %v6392 = vadd.f32 %v6360, %v6248
        %v6393 = vadd.f32 %v6361, %v6253
        %v6394 = vadd.f32 %v6362, %v6256
        %v6395 = vadd.f32 %v6363, %v6261
        %v6396 = vadd.f32 %v6364, %v6264
        %v6397 = vadd.f32 %v6365, %v6269
        %v6398 = vadd.f32 %v6366, %v6272
        %v6399 = vadd.f32 %v6367, %v6277
        %v6400 = vadd.f32 %v6368, %v6280
        %v6401 = vadd.f32 %v6369, %v6285
        %v6402 = vadd.f32 %v6370, %v6288
        %v6403 = vadd.f32 %v6371, %v6293
        %v6404 = vadd.f32 %v6372, %v6296
        %v6405 = vadd.f32 %v6373, %v6301
        %v6406 = vadd.f32 %v6374, %v6304
        %v6407 = vadd.f32 %v6375, %v6309
        %v6408 = vadd.f32 %v6376, %v6312
        %v6409 = vadd.f32 %v6377, %v6317
        %v6410 = vadd.f32 %v6378, %v6320
        %v6411 = vadd.f32 %v6379, %v6325
        %v6412 = vadd.f32 %v6380, %v6328
        %v6413 = vadd.f32 %v6381, %v6333
        %v6414 = vadd.f32 %v6382, %v6336
        %v6415 = vadd.f32 %v6383, %v6341
        %v6416 = vadd.f32 %v6384, %v6344
        %v6417 = vadd.f32 %v6385, %v6349
        %v6418 = vadd.f32 %v6386, %v6352
        %6419 = vst.msk [vmem:[#allocation2 + $0x1] sm:$0xff] %vm348, %v6387
        %6420 = vst.msk [vmem:[#allocation2 + $0x9] sm:$0xff] %vm348, %v6388
        %6421 = vst.msk [vmem:[#allocation2 + $0x19] sm:$0xff] %vm348, %v6389
        %6422 = vst.msk [vmem:[#allocation2 + $0x21] sm:$0xff] %vm348, %v6390
        %6423 = vst.msk [vmem:[#allocation2 + $0x31] sm:$0xff] %vm348, %v6391
        %6424 = vst.msk [vmem:[#allocation2 + $0x39] sm:$0xff] %vm348, %v6392
        %6425 = vst.msk [vmem:[#allocation2 + $0x49] sm:$0xff] %vm348, %v6393
        %6426 = vst.msk [vmem:[#allocation2 + $0x51] sm:$0xff] %vm348, %v6394
        %6427 = vst.msk [vmem:[#allocation2 + $0x61] sm:$0xff] %vm348, %v6395
        %6428 = vst.msk [vmem:[#allocation2 + $0x69] sm:$0xff] %vm348, %v6396
        %6429 = vst.msk [vmem:[#allocation2 + $0x79] sm:$0xff] %vm348, %v6397
        %6430 = vst.msk [vmem:[#allocation2 + $0x81] sm:$0xff] %vm348, %v6398
        %6431 = vst.msk [vmem:[#allocation2 + $0x91] sm:$0xff] %vm348, %v6399
        %6432 = vst.msk [vmem:[#allocation2 + $0x99] sm:$0xff] %vm348, %v6400
        %6433 = vst.msk [vmem:[#allocation2 + $0xa9] sm:$0xff] %vm348, %v6401
        %6434 = vst.msk [vmem:[#allocation2 + $0xb1] sm:$0xff] %vm348, %v6402
        %6435 = vst.msk [vmem:[#allocation2 + $0xc1] sm:$0xff] %vm348, %v6403
        %6436 = vst.msk [vmem:[#allocation2 + $0xc9] sm:$0xff] %vm348, %v6404
        %6437 = vst.msk [vmem:[#allocation2 + $0xd9] sm:$0xff] %vm348, %v6405
        %6438 = vst.msk [vmem:[#allocation2 + $0xe1] sm:$0xff] %vm348, %v6406
        %6439 = vst.msk [vmem:[#allocation2 + $0xf1] sm:$0xff] %vm348, %v6407
        %6440 = vst.msk [vmem:[#allocation2 + $0xf9] sm:$0xff] %vm348, %v6408
        %6441 = vst.msk [vmem:[#allocation2 + $0x109] sm:$0xff] %vm348, %v6409
        %6442 = vst.msk [vmem:[#allocation2 + $0x111] sm:$0xff] %vm348, %v6410
        %6443 = vst.msk [vmem:[#allocation2 + $0x121] sm:$0xff] %vm348, %v6411
        %6444 = vst.msk [vmem:[#allocation2 + $0x129] sm:$0xff] %vm348, %v6412
        %6445 = vst.msk [vmem:[#allocation2 + $0x139] sm:$0xff] %vm348, %v6413
        %6446 = vst.msk [vmem:[#allocation2 + $0x141] sm:$0xff] %vm348, %v6414
        %6447 = vst.msk [vmem:[#allocation2 + $0x151] sm:$0xff] %vm348, %v6415
        %6448 = vst.msk [vmem:[#allocation2 + $0x159] sm:$0xff] %vm348, %v6416
        %6449 = vst.msk [vmem:[#allocation2 + $0x169] sm:$0xff] %vm348, %v6417
        %6450 = vst.msk [vmem:[#allocation2 + $0x171] sm:$0xff] %vm348, %v6418
        %s6451 = scalar_lea.vmem %s3, 128
        %v6452 = vld [vmem:[%s6451] sm:$0xf]
        %v6453 = vld [vmem:[%s6451 + $0x4] sm:$0xf]
        %v6454 = vld [vmem:[%s6451 + $0x8] sm:$0xf]
        %v6455 = vld [vmem:[%s6451 + $0xc] sm:$0xf]
        %v6460 = vunpack.c.l.b16 %v6452
        %v6461 = vunpack.c.l.b16 %v6453
        %v6462 = vunpack.c.l.b16 %v6454
        %v6463 = vunpack.c.l.b16 %v6455
        %v6464 = vpack.c.b16 %v6461, %v6460
        %v6465 = vpack.c.b16 %v6463, %v6462
        %6468 = vmatprep.subr.bf16.mxu0 0
        %6469 = vmatpush1.bf16.msra.mxu0 %v6464
        %6470 = vmatprep.subr.bf16.mxu0 0
        %6471 = vmatpush1.bf16.msra.mxu0 %v6465
        %6472 = vmatprep.subr.bf16.mxu0 0
        %6473 = vmatpush1.bf16.msra.mxu0 0
        %6474 = vmatprep.subr.bf16.mxu0 0
        %6475 = vmatpush1.bf16.msra.mxu0 0
        %6476 = vmatprep.subr.bf16.mxu0 0
        %6477 = vmatpush1.bf16.msra.mxu0 0
        %6478 = vmatprep.subr.bf16.mxu0 0
        %6479 = vmatpush1.bf16.msra.mxu0 0
        %6480 = vmatprep.subr.bf16.mxu0 0
        %6481 = vmatpush1.bf16.msra.mxu0 0
        %6482 = vmatprep.subr.bf16.mxu0 0
        %6483 = vmatpush1.bf16.msra.mxu0 0
        %6484 = vmatprep.subr.bf16.mxu0 0
        %6485 = vmatpush1.bf16.msra.mxu0 0
        %6486 = vmatprep.subr.bf16.mxu0 0
        %6487 = vmatpush1.bf16.msra.mxu0 0
        %6488 = vmatprep.subr.bf16.mxu0 0
        %6489 = vmatpush1.bf16.msra.mxu0 0
        %6490 = vmatprep.subr.bf16.mxu0 0
        %6491 = vmatpush1.bf16.msra.mxu0 0
        %6492 = vmatprep.subr.bf16.mxu0 0
        %6493 = vmatpush1.bf16.msra.mxu0 0
        %6494 = vmatprep.subr.bf16.mxu0 0
        %6495 = vmatpush1.bf16.msra.mxu0 0
        %6496 = vmatprep.subr.bf16.mxu0 0
        %6497 = vmatpush1.bf16.msra.mxu0 0
        %6498 = vmatprep.subr.bf16.mxu0 0
        %6499 = vmatpush1.bf16.msra.mxu0 0
        %6500 = vmatprep.mubr.bf16.mxu0 0
        %6501 = vmatmul.mubr.bf16.gmra.mrb[0].mxu0 %v4229
        %v6502 = vpop.f32.mrb[0].mxu0
        %v6503 = vadd.f32 0.0, %v6502
        %v6504 = vpop.f32.mrb[0].mxu0
        %v6505 = vpop.f32.mrb[0].mxu0
        %v6506 = vadd.f32 0.0, %v6505
        %v6507 = vpop.f32.mrb[0].mxu0
        %6508 = vmatprep.mubr.bf16.mxu0 0
        %6509 = vmatmul.mubr.bf16.gmra.mrb[0].mxu0 %v4232
        %v6510 = vpop.f32.mrb[0].mxu0
        %v6511 = vadd.f32 0.0, %v6510
        %v6512 = vpop.f32.mrb[0].mxu0
        %v6513 = vpop.f32.mrb[0].mxu0
        %v6514 = vadd.f32 0.0, %v6513
        %v6515 = vpop.f32.mrb[0].mxu0
        %6516 = vmatprep.mubr.bf16.mxu0 0
        %6517 = vmatmul.mubr.bf16.gmra.mrb[0].mxu0 %v4235
        %v6518 = vpop.f32.mrb[0].mxu0
        %v6519 = vadd.f32 0.0, %v6518
        %v6520 = vpop.f32.mrb[0].mxu0
        %v6521 = vpop.f32.mrb[0].mxu0
        %v6522 = vadd.f32 0.0, %v6521
        %v6523 = vpop.f32.mrb[0].mxu0
        %6524 = vmatprep.mubr.bf16.mxu0 0
        %6525 = vmatmul.mubr.bf16.gmra.mrb[0].mxu0 %v4238
        %v6526 = vpop.f32.mrb[0].mxu0
        %v6527 = vadd.f32 0.0, %v6526
        %v6528 = vpop.f32.mrb[0].mxu0
        %v6529 = vpop.f32.mrb[0].mxu0
        %v6530 = vadd.f32 0.0, %v6529
        %v6531 = vpop.f32.mrb[0].mxu0
        %6532 = vmatprep.mubr.bf16.mxu0 0
        %6533 = vmatmul.mubr.bf16.gmra.mrb[0].mxu0 %v4241
        %v6534 = vpop.f32.mrb[0].mxu0
        %v6535 = vadd.f32 0.0, %v6534
        %v6536 = vpop.f32.mrb[0].mxu0
        %v6537 = vpop.f32.mrb[0].mxu0
        %v6538 = vadd.f32 0.0, %v6537
        %v6539 = vpop.f32.mrb[0].mxu0
        %6540 = vmatprep.mubr.bf16.mxu0 0
        %6541 = vmatmul.mubr.bf16.gmra.mrb[0].mxu0 %v4244
        %v6542 = vpop.f32.mrb[0].mxu0
        %v6543 = vadd.f32 0.0, %v6542
        %v6544 = vpop.f32.mrb[0].mxu0
        %v6545 = vpop.f32.mrb[0].mxu0
        %v6546 = vadd.f32 0.0, %v6545
        %v6547 = vpop.f32.mrb[0].mxu0
        %6548 = vmatprep.mubr.bf16.mxu0 0
        %6549 = vmatmul.mubr.bf16.gmra.mrb[0].mxu0 %v4247
        %v6550 = vpop.f32.mrb[0].mxu0
        %v6551 = vadd.f32 0.0, %v6550
        %v6552 = vpop.f32.mrb[0].mxu0
        %v6553 = vpop.f32.mrb[0].mxu0
        %v6554 = vadd.f32 0.0, %v6553
        %v6555 = vpop.f32.mrb[0].mxu0
        %6556 = vmatprep.mubr.bf16.mxu0 0
        %6557 = vmatmul.mubr.bf16.gmra.mrb[0].mxu0 %v4250
        %v6558 = vpop.f32.mrb[0].mxu0
        %v6559 = vadd.f32 0.0, %v6558
        %v6560 = vpop.f32.mrb[0].mxu0
        %v6561 = vpop.f32.mrb[0].mxu0
        %v6562 = vadd.f32 0.0, %v6561
        %v6563 = vpop.f32.mrb[0].mxu0
        %6564 = vmatprep.mubr.bf16.mxu0 0
        %6565 = vmatmul.mubr.bf16.gmra.mrb[0].mxu0 %v4253
        %v6566 = vpop.f32.mrb[0].mxu0
        %v6567 = vadd.f32 0.0, %v6566
        %v6568 = vpop.f32.mrb[0].mxu0
        %v6569 = vpop.f32.mrb[0].mxu0
        %v6570 = vadd.f32 0.0, %v6569
        %v6571 = vpop.f32.mrb[0].mxu0
        %6572 = vmatprep.mubr.bf16.mxu0 0
        %6573 = vmatmul.mubr.bf16.gmra.mrb[0].mxu0 %v4256
        %v6574 = vpop.f32.mrb[0].mxu0
        %v6575 = vadd.f32 0.0, %v6574
        %v6576 = vpop.f32.mrb[0].mxu0
        %v6577 = vpop.f32.mrb[0].mxu0
        %v6578 = vadd.f32 0.0, %v6577
        %v6579 = vpop.f32.mrb[0].mxu0
        %6580 = vmatprep.mubr.bf16.mxu0 0
        %6581 = vmatmul.mubr.bf16.gmra.mrb[0].mxu0 %v4259
        %v6582 = vpop.f32.mrb[0].mxu0
        %v6583 = vadd.f32 0.0, %v6582
        %v6584 = vpop.f32.mrb[0].mxu0
        %v6585 = vpop.f32.mrb[0].mxu0
        %v6586 = vadd.f32 0.0, %v6585
        %v6587 = vpop.f32.mrb[0].mxu0
        %6588 = vmatprep.mubr.bf16.mxu0 0
        %6589 = vmatmul.mubr.bf16.gmra.mrb[0].mxu0 %v4262
        %v6590 = vpop.f32.mrb[0].mxu0
        %v6591 = vadd.f32 0.0, %v6590
        %v6592 = vpop.f32.mrb[0].mxu0
        %v6593 = vpop.f32.mrb[0].mxu0
        %v6594 = vadd.f32 0.0, %v6593
        %v6595 = vpop.f32.mrb[0].mxu0
        %6596 = vmatprep.mubr.bf16.mxu0 0
        %6597 = vmatmul.mubr.bf16.gmra.mrb[0].mxu0 %v4265
        %v6598 = vpop.f32.mrb[0].mxu0
        %v6599 = vadd.f32 0.0, %v6598
        %v6600 = vpop.f32.mrb[0].mxu0
        %v6601 = vpop.f32.mrb[0].mxu0
        %v6602 = vadd.f32 0.0, %v6601
        %v6603 = vpop.f32.mrb[0].mxu0
        %6604 = vmatprep.mubr.bf16.mxu0 0
        %6605 = vmatmul.mubr.bf16.gmra.mrb[0].mxu0 %v4268
        %v6606 = vpop.f32.mrb[0].mxu0
        %v6607 = vadd.f32 0.0, %v6606
        %v6608 = vpop.f32.mrb[0].mxu0
        %v6609 = vpop.f32.mrb[0].mxu0
        %v6610 = vadd.f32 0.0, %v6609
        %v6611 = vpop.f32.mrb[0].mxu0
        %6612 = vmatprep.mubr.bf16.mxu0 0
        %6613 = vmatmul.mubr.bf16.gmra.mrb[0].mxu0 %v4271
        %v6614 = vpop.f32.mrb[0].mxu0
        %v6615 = vadd.f32 0.0, %v6614
        %v6616 = vpop.f32.mrb[0].mxu0
        %v6617 = vpop.f32.mrb[0].mxu0
        %v6618 = vadd.f32 0.0, %v6617
        %v6619 = vpop.f32.mrb[0].mxu0
        %6620 = vmatprep.mubr.bf16.mxu0 0
        %6621 = vmatmul.mubr.bf16.gmra.mrb[0].mxu0 %v4274
        %v6622 = vpop.f32.mrb[0].mxu0
        %v6623 = vadd.f32 0.0, %v6622
        %v6624 = vpop.f32.mrb[0].mxu0
        %v6625 = vpop.f32.mrb[0].mxu0
        %v6626 = vadd.f32 0.0, %v6625
        %v6627 = vpop.f32.mrb[0].mxu0
        %6628 = vdwg.mxu0
        %v6629 = vld [vmem:[#allocation2] sm:$0xff]
        %v6630 = vld [vmem:[#allocation2 + $0x8] sm:$0xff]
        %v6631 = vld [vmem:[#allocation2 + $0x18] sm:$0xff]
        %v6632 = vld [vmem:[#allocation2 + $0x20] sm:$0xff]
        %v6633 = vld [vmem:[#allocation2 + $0x30] sm:$0xff]
        %v6634 = vld [vmem:[#allocation2 + $0x38] sm:$0xff]
        %v6635 = vld [vmem:[#allocation2 + $0x48] sm:$0xff]
        %v6636 = vld [vmem:[#allocation2 + $0x50] sm:$0xff]
        %v6637 = vld [vmem:[#allocation2 + $0x60] sm:$0xff]
        %v6638 = vld [vmem:[#allocation2 + $0x68] sm:$0xff]
        %v6639 = vld [vmem:[#allocation2 + $0x78] sm:$0xff]
        %v6640 = vld [vmem:[#allocation2 + $0x80] sm:$0xff]
        %v6641 = vld [vmem:[#allocation2 + $0x90] sm:$0xff]
        %v6642 = vld [vmem:[#allocation2 + $0x98] sm:$0xff]
        %v6643 = vld [vmem:[#allocation2 + $0xa8] sm:$0xff]
        %v6644 = vld [vmem:[#allocation2 + $0xb0] sm:$0xff]
        %v6645 = vld [vmem:[#allocation2 + $0xc0] sm:$0xff]
        %v6646 = vld [vmem:[#allocation2 + $0xc8] sm:$0xff]
        %v6647 = vld [vmem:[#allocation2 + $0xd8] sm:$0xff]
        %v6648 = vld [vmem:[#allocation2 + $0xe0] sm:$0xff]
        %v6649 = vld [vmem:[#allocation2 + $0xf0] sm:$0xff]
        %v6650 = vld [vmem:[#allocation2 + $0xf8] sm:$0xff]
        %v6651 = vld [vmem:[#allocation2 + $0x108] sm:$0xff]
        %v6652 = vld [vmem:[#allocation2 + $0x110] sm:$0xff]
        %v6653 = vld [vmem:[#allocation2 + $0x120] sm:$0xff]
        %v6654 = vld [vmem:[#allocation2 + $0x128] sm:$0xff]
        %v6655 = vld [vmem:[#allocation2 + $0x138] sm:$0xff]
        %v6656 = vld [vmem:[#allocation2 + $0x140] sm:$0xff]
        %v6657 = vld [vmem:[#allocation2 + $0x150] sm:$0xff]
        %v6658 = vld [vmem:[#allocation2 + $0x158] sm:$0xff]
        %v6659 = vld [vmem:[#allocation2 + $0x168] sm:$0xff]
        %v6660 = vld [vmem:[#allocation2 + $0x170] sm:$0xff]
        %v6661 = vadd.f32 %v6629, %v6503
        %v6662 = vadd.f32 %v6630, %v6506
        %v6663 = vadd.f32 %v6631, %v6511
        %v6664 = vadd.f32 %v6632, %v6514
        %v6665 = vadd.f32 %v6633, %v6519
        %v6666 = vadd.f32 %v6634, %v6522
        %v6667 = vadd.f32 %v6635, %v6527
        %v6668 = vadd.f32 %v6636, %v6530
        %v6669 = vadd.f32 %v6637, %v6535
        %v6670 = vadd.f32 %v6638, %v6538
        %v6671 = vadd.f32 %v6639, %v6543
        %v6672 = vadd.f32 %v6640, %v6546
        %v6673 = vadd.f32 %v6641, %v6551
        %v6674 = vadd.f32 %v6642, %v6554
        %v6675 = vadd.f32 %v6643, %v6559
        %v6676 = vadd.f32 %v6644, %v6562
        %v6677 = vadd.f32 %v6645, %v6567
        %v6678 = vadd.f32 %v6646, %v6570
        %v6679 = vadd.f32 %v6647, %v6575
        %v6680 = vadd.f32 %v6648, %v6578
        %v6681 = vadd.f32 %v6649, %v6583
        %v6682 = vadd.f32 %v6650, %v6586
        %v6683 = vadd.f32 %v6651, %v6591
        %v6684 = vadd.f32 %v6652, %v6594
        %v6685 = vadd.f32 %v6653, %v6599
        %v6686 = vadd.f32 %v6654, %v6602
        %v6687 = vadd.f32 %v6655, %v6607
        %v6688 = vadd.f32 %v6656, %v6610
        %v6689 = vadd.f32 %v6657, %v6615
        %v6690 = vadd.f32 %v6658, %v6618
        %v6691 = vadd.f32 %v6659, %v6623
        %v6692 = vadd.f32 %v6660, %v6626
        %6693 = vst.msk [vmem:[#allocation2] sm:$0xff] %vm348, %v6661
        %6694 = vst.msk [vmem:[#allocation2 + $0x8] sm:$0xff] %vm348, %v6662
        %6695 = vst.msk [vmem:[#allocation2 + $0x18] sm:$0xff] %vm348, %v6663
        %6696 = vst.msk [vmem:[#allocation2 + $0x20] sm:$0xff] %vm348, %v6664
        %6697 = vst.msk [vmem:[#allocation2 + $0x30] sm:$0xff] %vm348, %v6665
        %6698 = vst.msk [vmem:[#allocation2 + $0x38] sm:$0xff] %vm348, %v6666
        %6699 = vst.msk [vmem:[#allocation2 + $0x48] sm:$0xff] %vm348, %v6667
        %6700 = vst.msk [vmem:[#allocation2 + $0x50] sm:$0xff] %vm348, %v6668
        %6701 = vst.msk [vmem:[#allocation2 + $0x60] sm:$0xff] %vm348, %v6669
        %6702 = vst.msk [vmem:[#allocation2 + $0x68] sm:$0xff] %vm348, %v6670
        %6703 = vst.msk [vmem:[#allocation2 + $0x78] sm:$0xff] %vm348, %v6671
        %6704 = vst.msk [vmem:[#allocation2 + $0x80] sm:$0xff] %vm348, %v6672
        %6705 = vst.msk [vmem:[#allocation2 + $0x90] sm:$0xff] %vm348, %v6673
        %6706 = vst.msk [vmem:[#allocation2 + $0x98] sm:$0xff] %vm348, %v6674
        %6707 = vst.msk [vmem:[#allocation2 + $0xa8] sm:$0xff] %vm348, %v6675
        %6708 = vst.msk [vmem:[#allocation2 + $0xb0] sm:$0xff] %vm348, %v6676
        %6709 = vst.msk [vmem:[#allocation2 + $0xc0] sm:$0xff] %vm348, %v6677
        %6710 = vst.msk [vmem:[#allocation2 + $0xc8] sm:$0xff] %vm348, %v6678
        %6711 = vst.msk [vmem:[#allocation2 + $0xd8] sm:$0xff] %vm348, %v6679
        %6712 = vst.msk [vmem:[#allocation2 + $0xe0] sm:$0xff] %vm348, %v6680
        %6713 = vst.msk [vmem:[#allocation2 + $0xf0] sm:$0xff] %vm348, %v6681
        %6714 = vst.msk [vmem:[#allocation2 + $0xf8] sm:$0xff] %vm348, %v6682
        %6715 = vst.msk [vmem:[#allocation2 + $0x108] sm:$0xff] %vm348, %v6683
        %6716 = vst.msk [vmem:[#allocation2 + $0x110] sm:$0xff] %vm348, %v6684
        %6717 = vst.msk [vmem:[#allocation2 + $0x120] sm:$0xff] %vm348, %v6685
        %6718 = vst.msk [vmem:[#allocation2 + $0x128] sm:$0xff] %vm348, %v6686
        %6719 = vst.msk [vmem:[#allocation2 + $0x138] sm:$0xff] %vm348, %v6687
        %6720 = vst.msk [vmem:[#allocation2 + $0x140] sm:$0xff] %vm348, %v6688
        %6721 = vst.msk [vmem:[#allocation2 + $0x150] sm:$0xff] %vm348, %v6689
        %6722 = vst.msk [vmem:[#allocation2 + $0x158] sm:$0xff] %vm348, %v6690
        %6723 = vst.msk [vmem:[#allocation2 + $0x168] sm:$0xff] %vm348, %v6691
        %6724 = vst.msk [vmem:[#allocation2 + $0x170] sm:$0xff] %vm348, %v6692
        %v6725 = vld [vmem:[%s2012 + $0x1] sm:$0xff]
        %v6726 = vld [vmem:[%s2012 + $0x9] sm:$0xff]
        %v6727 = vld [vmem:[%s2012 + $0x19] sm:$0xff]
        %v6728 = vld [vmem:[%s2012 + $0x21] sm:$0xff]
        %v6729 = vld [vmem:[%s2012 + $0x31] sm:$0xff]
        %v6730 = vld [vmem:[%s2012 + $0x39] sm:$0xff]
        %v6731 = vld [vmem:[%s2012 + $0x49] sm:$0xff]
        %v6732 = vld [vmem:[%s2012 + $0x51] sm:$0xff]
        %v6733 = vld [vmem:[%s2012 + $0x61] sm:$0xff]
        %v6734 = vld [vmem:[%s2012 + $0x69] sm:$0xff]
        %v6735 = vld [vmem:[%s2012 + $0x79] sm:$0xff]
        %v6736 = vld [vmem:[%s2012 + $0x81] sm:$0xff]
        %v6737 = vld [vmem:[%s2012 + $0x91] sm:$0xff]
        %v6738 = vld [vmem:[%s2012 + $0x99] sm:$0xff]
        %v6739 = vld [vmem:[%s2012 + $0xa9] sm:$0xff]
        %v6740 = vld [vmem:[%s2012 + $0xb1] sm:$0xff]
        %v6741 = vld [vmem:[%s2012 + $0xc1] sm:$0xff]
        %v6742 = vld [vmem:[%s2012 + $0xc9] sm:$0xff]
        %v6743 = vld [vmem:[%s2012 + $0xd9] sm:$0xff]
        %v6744 = vld [vmem:[%s2012 + $0xe1] sm:$0xff]
        %v6745 = vld [vmem:[%s2012 + $0xf1] sm:$0xff]
        %v6746 = vld [vmem:[%s2012 + $0xf9] sm:$0xff]
        %v6747 = vld [vmem:[%s2012 + $0x109] sm:$0xff]
        %v6748 = vld [vmem:[%s2012 + $0x111] sm:$0xff]
        %v6749 = vld [vmem:[%s2012 + $0x121] sm:$0xff]
        %v6750 = vld [vmem:[%s2012 + $0x129] sm:$0xff]
        %v6751 = vld [vmem:[%s2012 + $0x139] sm:$0xff]
        %v6752 = vld [vmem:[%s2012 + $0x141] sm:$0xff]
        %v6753 = vld [vmem:[%s2012 + $0x151] sm:$0xff]
        %v6754 = vld [vmem:[%s2012 + $0x159] sm:$0xff]
        %v6755 = vld [vmem:[%s2012 + $0x169] sm:$0xff]
        %v6756 = vld [vmem:[%s2012 + $0x171] sm:$0xff]
        %v6757 = vld [vmem:[%s4] sm:$0x1]
        %v6759 = vlaneseq
        %v6760 = vshrl.u32 %v6759, 7
        %v6761 = vsub.s32 0, %v6760
        %v6762 = vrot.slane %v6757, %v6761
        %v6764 = vadd.f32 %v6725, %v6762
        %v6765 = vadd.f32 %v6726, %v6762
        %v6766 = vadd.f32 %v6727, %v6762
        %v6767 = vadd.f32 %v6728, %v6762
        %v6768 = vadd.f32 %v6729, %v6762
        %v6769 = vadd.f32 %v6730, %v6762
        %v6770 = vadd.f32 %v6731, %v6762
        %v6771 = vadd.f32 %v6732, %v6762
        %v6772 = vadd.f32 %v6733, %v6762
        %v6773 = vadd.f32 %v6734, %v6762
        %v6774 = vadd.f32 %v6735, %v6762
        %v6775 = vadd.f32 %v6736, %v6762
        %v6776 = vadd.f32 %v6737, %v6762
        %v6777 = vadd.f32 %v6738, %v6762
        %v6778 = vadd.f32 %v6739, %v6762
        %v6779 = vadd.f32 %v6740, %v6762
        %v6780 = vadd.f32 %v6741, %v6762
        %v6781 = vadd.f32 %v6742, %v6762
        %v6782 = vadd.f32 %v6743, %v6762
        %v6783 = vadd.f32 %v6744, %v6762
        %v6784 = vadd.f32 %v6745, %v6762
        %v6785 = vadd.f32 %v6746, %v6762
        %v6786 = vadd.f32 %v6747, %v6762
        %v6787 = vadd.f32 %v6748, %v6762
        %v6788 = vadd.f32 %v6749, %v6762
        %v6789 = vadd.f32 %v6750, %v6762
        %v6790 = vadd.f32 %v6751, %v6762
        %v6791 = vadd.f32 %v6752, %v6762
        %v6792 = vadd.f32 %v6753, %v6762
        %v6793 = vadd.f32 %v6754, %v6762
        %v6794 = vadd.f32 %v6755, %v6762
        %v6795 = vadd.f32 %v6756, %v6762
        %v6796 = vmax.f32 %v6764, 0.0
        %v6797 = vmax.f32 %v6765, 0.0
        %v6798 = vmax.f32 %v6766, 0.0
        %v6799 = vmax.f32 %v6767, 0.0
        %v6800 = vmax.f32 %v6768, 0.0
        %v6801 = vmax.f32 %v6769, 0.0
        %v6802 = vmax.f32 %v6770, 0.0
        %v6803 = vmax.f32 %v6771, 0.0
        %v6804 = vmax.f32 %v6772, 0.0
        %v6805 = vmax.f32 %v6773, 0.0
        %v6806 = vmax.f32 %v6774, 0.0
        %v6807 = vmax.f32 %v6775, 0.0
        %v6808 = vmax.f32 %v6776, 0.0
        %v6809 = vmax.f32 %v6777, 0.0
        %v6810 = vmax.f32 %v6778, 0.0
        %v6811 = vmax.f32 %v6779, 0.0
        %v6812 = vmax.f32 %v6780, 0.0
        %v6813 = vmax.f32 %v6781, 0.0
        %v6814 = vmax.f32 %v6782, 0.0
        %v6815 = vmax.f32 %v6783, 0.0
        %v6816 = vmax.f32 %v6784, 0.0
        %v6817 = vmax.f32 %v6785, 0.0
        %v6818 = vmax.f32 %v6786, 0.0
        %v6819 = vmax.f32 %v6787, 0.0
        %v6820 = vmax.f32 %v6788, 0.0
        %v6821 = vmax.f32 %v6789, 0.0
        %v6822 = vmax.f32 %v6790, 0.0
        %v6823 = vmax.f32 %v6791, 0.0
        %v6824 = vmax.f32 %v6792, 0.0
        %v6825 = vmax.f32 %v6793, 0.0
        %v6826 = vmax.f32 %v6794, 0.0
        %v6827 = vmax.f32 %v6795, 0.0
        %v6828 = vpack.c.bf16 %v6797, %v6796
        %v6829 = vpack.c.bf16 %v6799, %v6798
        %v6830 = vpack.c.bf16 %v6801, %v6800
        %v6831 = vpack.c.bf16 %v6803, %v6802
        %v6832 = vpack.c.bf16 %v6805, %v6804
        %v6833 = vpack.c.bf16 %v6807, %v6806
        %v6834 = vpack.c.bf16 %v6809, %v6808
        %v6835 = vpack.c.bf16 %v6811, %v6810
        %v6836 = vpack.c.bf16 %v6813, %v6812
        %v6837 = vpack.c.bf16 %v6815, %v6814
        %v6838 = vpack.c.bf16 %v6817, %v6816
        %v6839 = vpack.c.bf16 %v6819, %v6818
        %v6840 = vpack.c.bf16 %v6821, %v6820
        %v6841 = vpack.c.bf16 %v6823, %v6822
        %v6842 = vpack.c.bf16 %v6825, %v6824
        %v6843 = vpack.c.bf16 %v6827, %v6826
        %v6860 = vunpack.c.l.b16 %v6828
        %v6861 = vunpack.c.h.b16 %v6828
        %v6862 = vunpack.c.l.b16 %v6829
        %v6863 = vunpack.c.h.b16 %v6829
        %v6864 = vunpack.c.l.b16 %v6830
        %v6865 = vunpack.c.h.b16 %v6830
        %v6866 = vunpack.c.l.b16 %v6831
        %v6867 = vunpack.c.h.b16 %v6831
        %v6868 = vunpack.c.l.b16 %v6832
        %v6869 = vunpack.c.h.b16 %v6832
        %v6870 = vunpack.c.l.b16 %v6833
        %v6871 = vunpack.c.h.b16 %v6833
        %v6872 = vunpack.c.l.b16 %v6834
        %v6873 = vunpack.c.h.b16 %v6834
        %v6874 = vunpack.c.l.b16 %v6835
        %v6875 = vunpack.c.h.b16 %v6835
        %v6876 = vunpack.c.l.b16 %v6836
        %v6877 = vunpack.c.h.b16 %v6836
        %v6878 = vunpack.c.l.b16 %v6837
        %v6879 = vunpack.c.h.b16 %v6837
        %v6880 = vunpack.c.l.b16 %v6838
        %v6881 = vunpack.c.h.b16 %v6838
        %v6882 = vunpack.c.l.b16 %v6839
        %v6883 = vunpack.c.h.b16 %v6839
        %v6884 = vunpack.c.l.b16 %v6840
        %v6885 = vunpack.c.h.b16 %v6840
        %v6886 = vunpack.c.l.b16 %v6841
        %v6887 = vunpack.c.h.b16 %v6841
        %v6888 = vunpack.c.l.b16 %v6842
        %v6889 = vunpack.c.h.b16 %v6842
        %v6890 = vunpack.c.l.b16 %v6843
        %v6891 = vunpack.c.h.b16 %v6843
        %v6892 = vpack.c.b16 %v6860, %v6860
        %v6893 = vpack.c.b16 %v6861, %v6861
        %v6894 = vpack.c.b16 %v6862, %v6862
        %v6895 = vpack.c.b16 %v6863, %v6863
        %v6896 = vpack.c.b16 %v6864, %v6864
        %v6897 = vpack.c.b16 %v6865, %v6865
        %v6898 = vpack.c.b16 %v6866, %v6866
        %v6899 = vpack.c.b16 %v6867, %v6867
        %v6900 = vpack.c.b16 %v6868, %v6868
        %v6901 = vpack.c.b16 %v6869, %v6869
        %v6902 = vpack.c.b16 %v6870, %v6870
        %v6903 = vpack.c.b16 %v6871, %v6871
        %v6904 = vpack.c.b16 %v6872, %v6872
        %v6905 = vpack.c.b16 %v6873, %v6873
        %v6906 = vpack.c.b16 %v6874, %v6874
        %v6907 = vpack.c.b16 %v6875, %v6875
        %v6908 = vpack.c.b16 %v6876, %v6876
        %v6909 = vpack.c.b16 %v6877, %v6877
        %v6910 = vpack.c.b16 %v6878, %v6878
        %v6911 = vpack.c.b16 %v6879, %v6879
        %v6912 = vpack.c.b16 %v6880, %v6880
        %v6913 = vpack.c.b16 %v6881, %v6881
        %v6914 = vpack.c.b16 %v6882, %v6882
        %v6915 = vpack.c.b16 %v6883, %v6883
        %v6916 = vpack.c.b16 %v6884, %v6884
        %v6917 = vpack.c.b16 %v6885, %v6885
        %v6918 = vpack.c.b16 %v6886, %v6886
        %v6919 = vpack.c.b16 %v6887, %v6887
        %v6920 = vpack.c.b16 %v6888, %v6888
        %v6921 = vpack.c.b16 %v6889, %v6889
        %v6922 = vpack.c.b16 %v6890, %v6890
        %v6923 = vpack.c.b16 %v6891, %v6891
        %vm6956 = vcmask 257024
        %6957 = vst.msk [vmem:[%s302] sm:$0xf] %vm6956, %v6892
        %6958 = vst.msk [vmem:[%s302 + $0x4] sm:$0xf] %vm6956, %v6893
        %6959 = vst.msk [vmem:[%s302 + $0x8] sm:$0xf] %vm6956, %v6894
        %6960 = vst.msk [vmem:[%s302 + $0xc] sm:$0xf] %vm6956, %v6895
        %6961 = vst.msk [vmem:[%s302 + $0x10] sm:$0xf] %vm6956, %v6896
        %6962 = vst.msk [vmem:[%s302 + $0x14] sm:$0xf] %vm6956, %v6897
        %6963 = vst.msk [vmem:[%s302 + $0x18] sm:$0xf] %vm6956, %v6898
        %6964 = vst.msk [vmem:[%s302 + $0x1c] sm:$0xf] %vm6956, %v6899
        %6965 = vst.msk [vmem:[%s302 + $0x20] sm:$0xf] %vm6956, %v6900
        %6966 = vst.msk [vmem:[%s302 + $0x24] sm:$0xf] %vm6956, %v6901
        %6967 = vst.msk [vmem:[%s302 + $0x28] sm:$0xf] %vm6956, %v6902
        %6968 = vst.msk [vmem:[%s302 + $0x2c] sm:$0xf] %vm6956, %v6903
        %6969 = vst.msk [vmem:[%s302 + $0x30] sm:$0xf] %vm6956, %v6904
        %6970 = vst.msk [vmem:[%s302 + $0x34] sm:$0xf] %vm6956, %v6905
        %6971 = vst.msk [vmem:[%s302 + $0x38] sm:$0xf] %vm6956, %v6906
        %6972 = vst.msk [vmem:[%s302 + $0x3c] sm:$0xf] %vm6956, %v6907
        %6973 = vst.msk [vmem:[%s302 + $0x40] sm:$0xf] %vm6956, %v6908
        %6974 = vst.msk [vmem:[%s302 + $0x44] sm:$0xf] %vm6956, %v6909
        %6975 = vst.msk [vmem:[%s302 + $0x48] sm:$0xf] %vm6956, %v6910
        %6976 = vst.msk [vmem:[%s302 + $0x4c] sm:$0xf] %vm6956, %v6911
        %6977 = vst.msk [vmem:[%s302 + $0x50] sm:$0xf] %vm6956, %v6912
        %6978 = vst.msk [vmem:[%s302 + $0x54] sm:$0xf] %vm6956, %v6913
        %6979 = vst.msk [vmem:[%s302 + $0x58] sm:$0xf] %vm6956, %v6914
        %6980 = vst.msk [vmem:[%s302 + $0x5c] sm:$0xf] %vm6956, %v6915
        %6981 = vst.msk [vmem:[%s302 + $0x60] sm:$0xf] %vm6956, %v6916
        %6982 = vst.msk [vmem:[%s302 + $0x64] sm:$0xf] %vm6956, %v6917
        %6983 = vst.msk [vmem:[%s302 + $0x68] sm:$0xf] %vm6956, %v6918
        %6984 = vst.msk [vmem:[%s302 + $0x6c] sm:$0xf] %vm6956, %v6919
        %6985 = vst.msk [vmem:[%s302 + $0x70] sm:$0xf] %vm6956, %v6920
        %6986 = vst.msk [vmem:[%s302 + $0x74] sm:$0xf] %vm6956, %v6921
        %6987 = vst.msk [vmem:[%s302 + $0x78] sm:$0xf] %vm6956, %v6922
        %6988 = vst.msk [vmem:[%s302 + $0x7c] sm:$0xf] %vm6956, %v6923
        %v6989 = vld [vmem:[%s5] sm:$0xf]
        %v6990 = vld [vmem:[%s5 + $0x4] sm:$0xf]
        %v6991 = vld [vmem:[%s5 + $0x8] sm:$0xf]
        %v6992 = vld [vmem:[%s5 + $0xc] sm:$0xf]
        %v6993 = vld [vmem:[%s6] sm:$0x1]
        %v6995 = vlaneseq
        %v6996 = vshrl.u32 %v6995, 7
        %v6997 = vsub.s32 0, %v6996
        %v6998 = vrot.slane %v6993, %v6997
        %v7004 = vunpack.c.l.b16 %v6989
        %v7005 = vunpack.c.l.b16 %v6990
        %v7006 = vunpack.c.l.b16 %v6991
        %v7007 = vunpack.c.l.b16 %v6992
        %v7008 = vpack.c.b16 %v7005, %v7004
        %v7009 = vpack.c.b16 %v7007, %v7006
        %v7013 = vsel %vm348, %v6828, 0
        %v7016 = vsel %vm348, %v6829, 0
        %v7019 = vsel %vm348, %v6830, 0
        %v7022 = vsel %vm348, %v6831, 0
        %v7025 = vsel %vm348, %v6832, 0
        %v7028 = vsel %vm348, %v6833, 0
        %v7031 = vsel %vm348, %v6834, 0
        %v7034 = vsel %vm348, %v6835, 0
        %v7037 = vsel %vm348, %v6836, 0
        %v7040 = vsel %vm348, %v6837, 0
        %v7043 = vsel %vm348, %v6838, 0
        %v7046 = vsel %vm348, %v6839, 0
        %v7049 = vsel %vm348, %v6840, 0
        %v7052 = vsel %vm348, %v6841, 0
        %v7055 = vsel %vm348, %v6842, 0
        %v7058 = vsel %vm348, %v6843, 0
        %7060 = vmatprep.subr.bf16.mxu0 0
        %7061 = vmatpush1.bf16.msra.mxu0 %v7008
        %7062 = vmatprep.subr.bf16.mxu0 0
        %7063 = vmatpush1.bf16.msra.mxu0 %v7009
        %7064 = vmatprep.subr.bf16.mxu0 0
        %7065 = vmatpush1.bf16.msra.mxu0 0
        %7066 = vmatprep.subr.bf16.mxu0 0
        %7067 = vmatpush1.bf16.msra.mxu0 0
        %7068 = vmatprep.subr.bf16.mxu0 0
        %7069 = vmatpush1.bf16.msra.mxu0 0
        %7070 = vmatprep.subr.bf16.mxu0 0
        %7071 = vmatpush1.bf16.msra.mxu0 0
        %7072 = vmatprep.subr.bf16.mxu0 0
        %7073 = vmatpush1.bf16.msra.mxu0 0
        %7074 = vmatprep.subr.bf16.mxu0 0
        %7075 = vmatpush1.bf16.msra.mxu0 0
        %7076 = vmatprep.subr.bf16.mxu0 0
        %7077 = vmatpush1.bf16.msra.mxu0 0
        %7078 = vmatprep.subr.bf16.mxu0 0
        %7079 = vmatpush1.bf16.msra.mxu0 0
        %7080 = vmatprep.subr.bf16.mxu0 0
        %7081 = vmatpush1.bf16.msra.mxu0 0
        %7082 = vmatprep.subr.bf16.mxu0 0
        %7083 = vmatpush1.bf16.msra.mxu0 0
        %7084 = vmatprep.subr.bf16.mxu0 0
        %7085 = vmatpush1.bf16.msra.mxu0 0
        %7086 = vmatprep.subr.bf16.mxu0 0
        %7087 = vmatpush1.bf16.msra.mxu0 0
        %7088 = vmatprep.subr.bf16.mxu0 0
        %7089 = vmatpush1.bf16.msra.mxu0 0
        %7090 = vmatprep.subr.bf16.mxu0 0
        %7091 = vmatpush1.bf16.msra.mxu0 0
        %7092 = vmatprep.mubr.bf16.mxu0 0
        %7093 = vmatmul.mubr.bf16.gmra.mrb[0].mxu0 %v7013
        %v7094 = vpop.f32.mrb[0].mxu0
        %v7095 = vadd.f32 %v6998, %v7094
        %v7096 = vpop.f32.mrb[0].mxu0
        %v7097 = vpop.f32.mrb[0].mxu0
        %v7098 = vadd.f32 %v6998, %v7097
        %v7099 = vpop.f32.mrb[0].mxu0
        %7100 = vmatprep.mubr.bf16.mxu0 0
        %7101 = vmatmul.mubr.bf16.gmra.mrb[0].mxu0 %v7016
        %v7102 = vpop.f32.mrb[0].mxu0
        %v7103 = vadd.f32 %v6998, %v7102
        %v7104 = vpop.f32.mrb[0].mxu0
        %v7105 = vpop.f32.mrb[0].mxu0
        %v7106 = vadd.f32 %v6998, %v7105
        %v7107 = vpop.f32.mrb[0].mxu0
        %7108 = vmatprep.mubr.bf16.mxu0 0
        %7109 = vmatmul.mubr.bf16.gmra.mrb[0].mxu0 %v7019
        %v7110 = vpop.f32.mrb[0].mxu0
        %v7111 = vadd.f32 %v6998, %v7110
        %v7112 = vpop.f32.mrb[0].mxu0
        %v7113 = vpop.f32.mrb[0].mxu0
        %v7114 = vadd.f32 %v6998, %v7113
        %v7115 = vpop.f32.mrb[0].mxu0
        %7116 = vmatprep.mubr.bf16.mxu0 0
        %7117 = vmatmul.mubr.bf16.gmra.mrb[0].mxu0 %v7022
        %v7118 = vpop.f32.mrb[0].mxu0
        %v7119 = vadd.f32 %v6998, %v7118
        %v7120 = vpop.f32.mrb[0].mxu0
        %v7121 = vpop.f32.mrb[0].mxu0
        %v7122 = vadd.f32 %v6998, %v7121
        %v7123 = vpop.f32.mrb[0].mxu0
        %7124 = vmatprep.mubr.bf16.mxu0 0
        %7125 = vmatmul.mubr.bf16.gmra.mrb[0].mxu0 %v7025
        %v7126 = vpop.f32.mrb[0].mxu0
        %v7127 = vadd.f32 %v6998, %v7126
        %v7128 = vpop.f32.mrb[0].mxu0
        %v7129 = vpop.f32.mrb[0].mxu0
        %v7130 = vadd.f32 %v6998, %v7129
        %v7131 = vpop.f32.mrb[0].mxu0
        %7132 = vmatprep.mubr.bf16.mxu0 0
        %7133 = vmatmul.mubr.bf16.gmra.mrb[0].mxu0 %v7028
        %v7134 = vpop.f32.mrb[0].mxu0
        %v7135 = vadd.f32 %v6998, %v7134
        %v7136 = vpop.f32.mrb[0].mxu0
        %v7137 = vpop.f32.mrb[0].mxu0
        %v7138 = vadd.f32 %v6998, %v7137
        %v7139 = vpop.f32.mrb[0].mxu0
        %7140 = vmatprep.mubr.bf16.mxu0 0
        %7141 = vmatmul.mubr.bf16.gmra.mrb[0].mxu0 %v7031
        %v7142 = vpop.f32.mrb[0].mxu0
        %v7143 = vadd.f32 %v6998, %v7142
        %v7144 = vpop.f32.mrb[0].mxu0
        %v7145 = vpop.f32.mrb[0].mxu0
        %v7146 = vadd.f32 %v6998, %v7145
        %v7147 = vpop.f32.mrb[0].mxu0
        %7148 = vmatprep.mubr.bf16.mxu0 0
        %7149 = vmatmul.mubr.bf16.gmra.mrb[0].mxu0 %v7034
        %v7150 = vpop.f32.mrb[0].mxu0
        %v7151 = vadd.f32 %v6998, %v7150
        %v7152 = vpop.f32.mrb[0].mxu0
        %v7153 = vpop.f32.mrb[0].mxu0
        %v7154 = vadd.f32 %v6998, %v7153
        %v7155 = vpop.f32.mrb[0].mxu0
        %7156 = vmatprep.mubr.bf16.mxu0 0
        %7157 = vmatmul.mubr.bf16.gmra.mrb[0].mxu0 %v7037
        %v7158 = vpop.f32.mrb[0].mxu0
        %v7159 = vadd.f32 %v6998, %v7158
        %v7160 = vpop.f32.mrb[0].mxu0
        %v7161 = vpop.f32.mrb[0].mxu0
        %v7162 = vadd.f32 %v6998, %v7161
        %v7163 = vpop.f32.mrb[0].mxu0
        %7164 = vmatprep.mubr.bf16.mxu0 0
        %7165 = vmatmul.mubr.bf16.gmra.mrb[0].mxu0 %v7040
        %v7166 = vpop.f32.mrb[0].mxu0
        %v7167 = vadd.f32 %v6998, %v7166
        %v7168 = vpop.f32.mrb[0].mxu0
        %v7169 = vpop.f32.mrb[0].mxu0
        %v7170 = vadd.f32 %v6998, %v7169
        %v7171 = vpop.f32.mrb[0].mxu0
        %7172 = vmatprep.mubr.bf16.mxu0 0
        %7173 = vmatmul.mubr.bf16.gmra.mrb[0].mxu0 %v7043
        %v7174 = vpop.f32.mrb[0].mxu0
        %v7175 = vadd.f32 %v6998, %v7174
        %v7176 = vpop.f32.mrb[0].mxu0
        %v7177 = vpop.f32.mrb[0].mxu0
        %v7178 = vadd.f32 %v6998, %v7177
        %v7179 = vpop.f32.mrb[0].mxu0
        %7180 = vmatprep.mubr.bf16.mxu0 0
        %7181 = vmatmul.mubr.bf16.gmra.mrb[0].mxu0 %v7046
        %v7182 = vpop.f32.mrb[0].mxu0
        %v7183 = vadd.f32 %v6998, %v7182
        %v7184 = vpop.f32.mrb[0].mxu0
        %v7185 = vpop.f32.mrb[0].mxu0
        %v7186 = vadd.f32 %v6998, %v7185
        %v7187 = vpop.f32.mrb[0].mxu0
        %7188 = vmatprep.mubr.bf16.mxu0 0
        %7189 = vmatmul.mubr.bf16.gmra.mrb[0].mxu0 %v7049
        %v7190 = vpop.f32.mrb[0].mxu0
        %v7191 = vadd.f32 %v6998, %v7190
        %v7192 = vpop.f32.mrb[0].mxu0
        %v7193 = vpop.f32.mrb[0].mxu0
        %v7194 = vadd.f32 %v6998, %v7193
        %v7195 = vpop.f32.mrb[0].mxu0
        %7196 = vmatprep.mubr.bf16.mxu0 0
        %7197 = vmatmul.mubr.bf16.gmra.mrb[0].mxu0 %v7052
        %v7198 = vpop.f32.mrb[0].mxu0
        %v7199 = vadd.f32 %v6998, %v7198
        %v7200 = vpop.f32.mrb[0].mxu0
        %v7201 = vpop.f32.mrb[0].mxu0
        %v7202 = vadd.f32 %v6998, %v7201
        %v7203 = vpop.f32.mrb[0].mxu0
        %7204 = vmatprep.mubr.bf16.mxu0 0
        %7205 = vmatmul.mubr.bf16.gmra.mrb[0].mxu0 %v7055
        %v7206 = vpop.f32.mrb[0].mxu0
        %v7207 = vadd.f32 %v6998, %v7206
        %v7208 = vpop.f32.mrb[0].mxu0
        %v7209 = vpop.f32.mrb[0].mxu0
        %v7210 = vadd.f32 %v6998, %v7209
        %v7211 = vpop.f32.mrb[0].mxu0
        %7212 = vmatprep.mubr.bf16.mxu0 0
        %7213 = vmatmul.mubr.bf16.gmra.mrb[0].mxu0 %v7058
        %v7214 = vpop.f32.mrb[0].mxu0
        %v7215 = vadd.f32 %v6998, %v7214
        %v7216 = vpop.f32.mrb[0].mxu0
        %v7217 = vpop.f32.mrb[0].mxu0
        %v7218 = vadd.f32 %v6998, %v7217
        %v7219 = vpop.f32.mrb[0].mxu0
        %7220 = vdwg.mxu0
        %v7221 = vmax.f32 %v7095, 0.0
        %v7222 = vmax.f32 %v7098, 0.0
        %v7223 = vmax.f32 %v7103, 0.0
        %v7224 = vmax.f32 %v7106, 0.0
        %v7225 = vmax.f32 %v7111, 0.0
        %v7226 = vmax.f32 %v7114, 0.0
        %v7227 = vmax.f32 %v7119, 0.0
        %v7228 = vmax.f32 %v7122, 0.0
        %v7229 = vmax.f32 %v7127, 0.0
        %v7230 = vmax.f32 %v7130, 0.0
        %v7231 = vmax.f32 %v7135, 0.0
        %v7232 = vmax.f32 %v7138, 0.0
        %v7233 = vmax.f32 %v7143, 0.0
        %v7234 = vmax.f32 %v7146, 0.0
        %v7235 = vmax.f32 %v7151, 0.0
        %v7236 = vmax.f32 %v7154, 0.0
        %v7237 = vmax.f32 %v7159, 0.0
        %v7238 = vmax.f32 %v7162, 0.0
        %v7239 = vmax.f32 %v7167, 0.0
        %v7240 = vmax.f32 %v7170, 0.0
        %v7241 = vmax.f32 %v7175, 0.0
        %v7242 = vmax.f32 %v7178, 0.0
        %v7243 = vmax.f32 %v7183, 0.0
        %v7244 = vmax.f32 %v7186, 0.0
        %v7245 = vmax.f32 %v7191, 0.0
        %v7246 = vmax.f32 %v7194, 0.0
        %v7247 = vmax.f32 %v7199, 0.0
        %v7248 = vmax.f32 %v7202, 0.0
        %v7249 = vmax.f32 %v7207, 0.0
        %v7250 = vmax.f32 %v7210, 0.0
        %v7251 = vmax.f32 %v7215, 0.0
        %v7252 = vmax.f32 %v7218, 0.0
        %v7253 = vpack.c.bf16 %v7222, %v7221
        %v7254 = vpack.c.bf16 %v7224, %v7223
        %v7255 = vpack.c.bf16 %v7226, %v7225
        %v7256 = vpack.c.bf16 %v7228, %v7227
        %v7257 = vpack.c.bf16 %v7230, %v7229
        %v7258 = vpack.c.bf16 %v7232, %v7231
        %v7259 = vpack.c.bf16 %v7234, %v7233
        %v7260 = vpack.c.bf16 %v7236, %v7235
        %v7261 = vpack.c.bf16 %v7238, %v7237
        %v7262 = vpack.c.bf16 %v7240, %v7239
        %v7263 = vpack.c.bf16 %v7242, %v7241
        %v7264 = vpack.c.bf16 %v7244, %v7243
        %v7265 = vpack.c.bf16 %v7246, %v7245
        %v7266 = vpack.c.bf16 %v7248, %v7247
        %v7267 = vpack.c.bf16 %v7250, %v7249
        %v7268 = vpack.c.bf16 %v7252, %v7251
        %v7285 = vunpack.c.l.b16 %v7253
        %v7286 = vunpack.c.h.b16 %v7253
        %v7287 = vunpack.c.l.b16 %v7254
        %v7288 = vunpack.c.h.b16 %v7254
        %v7289 = vunpack.c.l.b16 %v7255
        %v7290 = vunpack.c.h.b16 %v7255
        %v7291 = vunpack.c.l.b16 %v7256
        %v7292 = vunpack.c.h.b16 %v7256
        %v7293 = vunpack.c.l.b16 %v7257
        %v7294 = vunpack.c.h.b16 %v7257
        %v7295 = vunpack.c.l.b16 %v7258
        %v7296 = vunpack.c.h.b16 %v7258
        %v7297 = vunpack.c.l.b16 %v7259
        %v7298 = vunpack.c.h.b16 %v7259
        %v7299 = vunpack.c.l.b16 %v7260
        %v7300 = vunpack.c.h.b16 %v7260
        %v7301 = vunpack.c.l.b16 %v7261
        %v7302 = vunpack.c.h.b16 %v7261
        %v7303 = vunpack.c.l.b16 %v7262
        %v7304 = vunpack.c.h.b16 %v7262
        %v7305 = vunpack.c.l.b16 %v7263
        %v7306 = vunpack.c.h.b16 %v7263
        %v7307 = vunpack.c.l.b16 %v7264
        %v7308 = vunpack.c.h.b16 %v7264
        %v7309 = vunpack.c.l.b16 %v7265
        %v7310 = vunpack.c.h.b16 %v7265
        %v7311 = vunpack.c.l.b16 %v7266
        %v7312 = vunpack.c.h.b16 %v7266
        %v7313 = vunpack.c.l.b16 %v7267
        %v7314 = vunpack.c.h.b16 %v7267
        %v7315 = vunpack.c.l.b16 %v7268
        %v7316 = vunpack.c.h.b16 %v7268
        %v7317 = vpack.c.b16 %v7285, %v7285
        %v7318 = vpack.c.b16 %v7286, %v7286
        %v7319 = vpack.c.b16 %v7287, %v7287
        %v7320 = vpack.c.b16 %v7288, %v7288
        %v7321 = vpack.c.b16 %v7289, %v7289
        %v7322 = vpack.c.b16 %v7290, %v7290
        %v7323 = vpack.c.b16 %v7291, %v7291
        %v7324 = vpack.c.b16 %v7292, %v7292
        %v7325 = vpack.c.b16 %v7293, %v7293
        %v7326 = vpack.c.b16 %v7294, %v7294
        %v7327 = vpack.c.b16 %v7295, %v7295
        %v7328 = vpack.c.b16 %v7296, %v7296
        %v7329 = vpack.c.b16 %v7297, %v7297
        %v7330 = vpack.c.b16 %v7298, %v7298
        %v7331 = vpack.c.b16 %v7299, %v7299
        %v7332 = vpack.c.b16 %v7300, %v7300
        %v7333 = vpack.c.b16 %v7301, %v7301
        %v7334 = vpack.c.b16 %v7302, %v7302
        %v7335 = vpack.c.b16 %v7303, %v7303
        %v7336 = vpack.c.b16 %v7304, %v7304
        %v7337 = vpack.c.b16 %v7305, %v7305
        %v7338 = vpack.c.b16 %v7306, %v7306
        %v7339 = vpack.c.b16 %v7307, %v7307
        %v7340 = vpack.c.b16 %v7308, %v7308
        %v7341 = vpack.c.b16 %v7309, %v7309
        %v7342 = vpack.c.b16 %v7310, %v7310
        %v7343 = vpack.c.b16 %v7311, %v7311
        %v7344 = vpack.c.b16 %v7312, %v7312
        %v7345 = vpack.c.b16 %v7313, %v7313
        %v7346 = vpack.c.b16 %v7314, %v7314
        %v7347 = vpack.c.b16 %v7315, %v7315
        %v7348 = vpack.c.b16 %v7316, %v7316
        %7381 = vst.msk [vmem:[%s309] sm:$0xf] %vm6956, %v7317
        %7382 = vst.msk [vmem:[%s309 + $0x4] sm:$0xf] %vm6956, %v7318
        %7383 = vst.msk [vmem:[%s309 + $0x8] sm:$0xf] %vm6956, %v7319
        %7384 = vst.msk [vmem:[%s309 + $0xc] sm:$0xf] %vm6956, %v7320
        %7385 = vst.msk [vmem:[%s309 + $0x10] sm:$0xf] %vm6956, %v7321
        %7386 = vst.msk [vmem:[%s309 + $0x14] sm:$0xf] %vm6956, %v7322
        %7387 = vst.msk [vmem:[%s309 + $0x18] sm:$0xf] %vm6956, %v7323
        %7388 = vst.msk [vmem:[%s309 + $0x1c] sm:$0xf] %vm6956, %v7324
        %7389 = vst.msk [vmem:[%s309 + $0x20] sm:$0xf] %vm6956, %v7325
        %7390 = vst.msk [vmem:[%s309 + $0x24] sm:$0xf] %vm6956, %v7326
        %7391 = vst.msk [vmem:[%s309 + $0x28] sm:$0xf] %vm6956, %v7327
        %7392 = vst.msk [vmem:[%s309 + $0x2c] sm:$0xf] %vm6956, %v7328
        %7393 = vst.msk [vmem:[%s309 + $0x30] sm:$0xf] %vm6956, %v7329
        %7394 = vst.msk [vmem:[%s309 + $0x34] sm:$0xf] %vm6956, %v7330
        %7395 = vst.msk [vmem:[%s309 + $0x38] sm:$0xf] %vm6956, %v7331
        %7396 = vst.msk [vmem:[%s309 + $0x3c] sm:$0xf] %vm6956, %v7332
        %7397 = vst.msk [vmem:[%s309 + $0x40] sm:$0xf] %vm6956, %v7333
        %7398 = vst.msk [vmem:[%s309 + $0x44] sm:$0xf] %vm6956, %v7334
        %7399 = vst.msk [vmem:[%s309 + $0x48] sm:$0xf] %vm6956, %v7335
        %7400 = vst.msk [vmem:[%s309 + $0x4c] sm:$0xf] %vm6956, %v7336
        %7401 = vst.msk [vmem:[%s309 + $0x50] sm:$0xf] %vm6956, %v7337
        %7402 = vst.msk [vmem:[%s309 + $0x54] sm:$0xf] %vm6956, %v7338
        %7403 = vst.msk [vmem:[%s309 + $0x58] sm:$0xf] %vm6956, %v7339
        %7404 = vst.msk [vmem:[%s309 + $0x5c] sm:$0xf] %vm6956, %v7340
        %7405 = vst.msk [vmem:[%s309 + $0x60] sm:$0xf] %vm6956, %v7341
        %7406 = vst.msk [vmem:[%s309 + $0x64] sm:$0xf] %vm6956, %v7342
        %7407 = vst.msk [vmem:[%s309 + $0x68] sm:$0xf] %vm6956, %v7343
        %7408 = vst.msk [vmem:[%s309 + $0x6c] sm:$0xf] %vm6956, %v7344
        %7409 = vst.msk [vmem:[%s309 + $0x70] sm:$0xf] %vm6956, %v7345
        %7410 = vst.msk [vmem:[%s309 + $0x74] sm:$0xf] %vm6956, %v7346
        %7411 = vst.msk [vmem:[%s309 + $0x78] sm:$0xf] %vm6956, %v7347
        %7412 = vst.msk [vmem:[%s309 + $0x7c] sm:$0xf] %vm6956, %v7348
        %s7413 = sand.u32 %s186, 1
        %s7414 = scalar_lea.sflag [#allocation4], %s7413
        %s7415 = sand.u32 %s186, 1
        %s7416 = smul.addr %s7415, 128
        %s7417 = scalar_lea.vmem [#allocation3], %s7416
        %s7418 = sand.u32 %s212, 1
        %s7419 = scalar_lea.sflag [#allocation6], %s7418
        %s7420 = sand.u32 %s212, 1
        %s7421 = smul.addr %s7420, 128
        %s7422 = scalar_lea.vmem [#allocation5], %s7421
        // Predicated region
        $region49: #{tpu_custom_call.1} parent=47 // pred_check
          %p7423 = pneg %p196
        $region50: #{tpu_custom_call.1} parent=47 // pred_check_branch
          %7425 = sbr.rel (%p7423) target = $region52
        $region51: #{tpu_custom_call.1} parent=47 // pred_region
          %s7427 = ssub.s32 2048, 2048
          %7428 = vsyncadd %s7414, %s7427
          %s7429 = smul.addr %s26, 32
          %s7430 = smul.addr %s7429, 64
          %s7431 = scalar_lea.hbm %s7, %s7430
          %s7432 = sshll.u32 %s7417, 4
          %s7433 = int_to_ptr.vmem [resolvable:$true] %s7432
          %7438 = dma.vmem_to_hbm [thread:$0]  %s7433, 2048, %s7431, %s7414, 64, 64, 4
        $region52: #{tpu_custom_call.1} parent=47 // pred_fallthru
          _
        // Predicated region
        $region53: #{tpu_custom_call.1} parent=47 // pred_check
          %p7439 = pneg %p222
        $region54: #{tpu_custom_call.1} parent=47 // pred_check_branch
          %7441 = sbr.rel (%p7439) target = $region56
        $region55: #{tpu_custom_call.1} parent=47 // pred_region
          %s7443 = ssub.s32 2048, 2048
          %7444 = vsyncadd %s7419, %s7443
          %s7445 = smul.addr %s26, 32
          %s7446 = smul.addr %s7445, 64
          %s7447 = scalar_lea.hbm %s8, %s7446
          %s7448 = sshll.u32 %s7422, 4
          %s7449 = int_to_ptr.vmem [resolvable:$true] %s7448
          %7454 = dma.vmem_to_hbm [thread:$0]  %s7449, 2048, %s7447, %s7419, 64, 64, 4
        $region56: #{tpu_custom_call.1} parent=47 // pred_fallthru
          _
      $region48: #{tpu_custom_call.1} parent=5 // pred_fallthru
        _
      %p7455 = scmp.le.s32.totalorder 2, %s21
      // Predicated region
      $region57: #{tpu_custom_call.1} parent=5 // pred_check
        %p7456 = pneg %p7455
      $region58: #{tpu_custom_call.1} parent=5 // pred_check_branch
        %7458 = sbr.rel (%p7456) target = $region60
      $region59: #{tpu_custom_call.1} parent=5 // pred_region
        %s7459 = ssub.s32 %s21, 2
        // Predicated region
        $region61: #{tpu_custom_call.1} parent=59 // pred_check
          %p7460 = pneg %p202
        $region62: #{tpu_custom_call.1} parent=59 // pred_check_branch
          %7462 = sbr.rel (%p7460) target = $region64
        $region63: #{tpu_custom_call.1} parent=59 // pred_region
          %s7463 = sand.u32 %s187, 1
          %s7464 = scalar_lea.sflag [#allocation4], %s7463
          %s7465 = sand.u32 %s187, 1
          %s7466 = smul.addr %s7465, 128
          %s7467 = scalar_lea.vmem [#allocation3], %s7466
          %7468 = dma.done %s7464, 2048
        $region64: #{tpu_custom_call.1} parent=59 // pred_fallthru
          _
        // Predicated region
        $region65: #{tpu_custom_call.1} parent=59 // pred_check
          %p7469 = pneg %p228
        $region66: #{tpu_custom_call.1} parent=59 // pred_check_branch
          %7471 = sbr.rel (%p7469) target = $region68
        $region67: #{tpu_custom_call.1} parent=59 // pred_region
          %s7472 = sand.u32 %s213, 1
          %s7473 = scalar_lea.sflag [#allocation6], %s7472
          %s7474 = sand.u32 %s213, 1
          %s7475 = smul.addr %s7474, 128
          %s7476 = scalar_lea.vmem [#allocation5], %s7475
          %7477 = dma.done %s7473, 2048
        $region68: #{tpu_custom_call.1} parent=59 // pred_fallthru
          _
      $region60: #{tpu_custom_call.1} parent=5 // pred_fallthru
        _
    $region6: #{tpu_custom_call.1} parent=1 // loop_footer
      %s25 = sadd.s32 1, %s21
    $region7: #{tpu_custom_call.1} parent=1 // loop_footer_branch
      %20 = sbr.rel target = $region3
    $region8: #{tpu_custom_call.1} parent=1 // loop_exit
      _
    %7478 = vsyncpa [#allocation4], 1
    %s7479 = scalar_lea.sflag [#allocation4], 1
    %7480 = vsyncpa %s7479, 1
    %7481 = vsyncpa [#allocation6], 1
    %s7482 = scalar_lea.sflag [#allocation6], 1
    %7483 = vsyncpa %s7482, 1

</llo_original>
